<compile_context>
chip_gen: v6e
topology: v6e:2x2x1
jax: 0.10.0
libtpu: 0.0.40
codegen_flags: <defaults>
</compile_context>

<pallas_src>
import math
import functools

import jax
import jax.numpy as jnp
from jax.experimental import pallas as pl
from jax.experimental.pallas import tpu as pltpu


# ----------------------------- Pallas kernel -----------------------------

def _decoder_layer_kernel(
        tgt_in, mem_in, pos_in, qpos_in,
        sa_wqk, sa_bqk, sa_wv, sa_bv, sa_wo, sa_bo,
        ca_wq, ca_bq, ca_wk, ca_bk, ca_wv, ca_bv, ca_wo, ca_bo,
        w1_r, b1_r, w2_r, b2_r, lnw_r, lnb_r, fnw_r, fnb_r,
        *out_and_scratch,
        nhead, N, eps, collect, apply_final_norm):
    if collect:
        out_ref, inter_ref, tgt_sc, memk_sc = out_and_scratch
    else:
        out_ref, tgt_sc, memk_sc = out_and_scratch
        inter_ref = None

    f32 = jnp.float32
    E = tgt_in.shape[-1]
    hd = E // nhead
    l = pl.program_id(0)
    last = pl.num_programs(0) - 1

    def _ln(x, g, b):
        xm = x - jnp.mean(x, axis=-1, keepdims=True)
        var = jnp.mean(xm * xm, axis=-1, keepdims=True)
        return xm * jax.lax.rsqrt(var + eps) * g + b

    def _proj(x, w, b):
        # x: (N, L, E) f32 value; w: (E, K) (possibly bf16); b: (1, K) f32.
        # Leading-axis batch indexing is free; each dot is a full-width 2-D
        # MXU matmul with f32 accumulation.
        y = jnp.stack(
            [jnp.dot(x[n].astype(w.dtype), w, preferred_element_type=f32)
             for n in range(N)], axis=0)
        return y + b

    def _attn(qp, kp, vp, wo, bo):
        # qp: (N, Lq, E) already scaled; kp, vp: (N, Lk, E).
        heads = []
        for h in range(nhead):                         # static: short unroll
            sl = slice(h * hd, (h + 1) * hd)
            # scores, batched over N:  'nqd,nkd->nqk'
            s = jax.lax.dot_general(
                qp[..., sl], kp[..., sl],
                (((2,), (2,)), ((0,), (0,))), preferred_element_type=f32)
            s = s - jnp.max(s, axis=-1, keepdims=True)
            p = jnp.exp(s)
            den = jnp.sum(p, axis=-1, keepdims=True)
            r = pl.reciprocal(den, approx=True)        # EUP slot
            r = r * (2.0 - den * r)                    # one Newton step -> ~f32 exact
            # PV, batched over N:  'nqk,nkd->nqd'
            o = jax.lax.dot_general(
                p, vp[..., sl],
                (((2,), (1,)), ((0,), (0,))), preferred_element_type=f32)
            heads.append(o * r)
        o = jnp.concatenate(heads, axis=-1)            # (N, Lq, E), contiguous head cols
        return _proj(o, wo, bo)                        # single out-proj (contraction = E)

    # ---- init residual stream & pos-encoded memory (first layer only) ----
    @pl.when(l == 0)
    def _():
        tgt_sc[...] = tgt_in[...].astype(f32)
        memk_sc[...] = mem_in[...].astype(f32) + pos_in[...].astype(f32)

    tgt = tgt_sc[...]                                  # (N, Lq, E) carried across layers
    qpos = qpos_in[...].astype(f32)
    memv = mem_in[...].astype(f32)                     # (N, Lm, E)
    memk = memk_sc[...]

    lnw = lnw_r[0]                                     # (3, 1, E)
    lnb = lnb_r[0]

    # ---------- self attention: q = k = tgt + query_pos, v = tgt ----------
    q_in = tgt + qpos
    qk = _proj(q_in, sa_wqk[0], sa_bqk[0])             # fused Q|K in-proj -> (N, Lq, 2E)
    vp = _proj(tgt, sa_wv[0], sa_bv[0])
    sa = _attn(qk[..., :E], qk[..., E:], vp, sa_wo[0], sa_bo[0])
    tgt = _ln(tgt + sa, lnw[0], lnb[0])

    # ---- cross attention: q = tgt + query_pos, k = memory + pos, v = memory ----
    qp = _proj(tgt + qpos, ca_wq[0], ca_bq[0])
    kp = _proj(memk, ca_wk[0], ca_bk[0])
    vp = _proj(memv, ca_wv[0], ca_bv[0])
    ca = _attn(qp, kp, vp, ca_wo[0], ca_bo[0])
    tgt = _ln(tgt + ca, lnw[1], lnb[1])

    # -------------------------------- FFN --------------------------------
    hid = jnp.maximum(_proj(tgt, w1_r[0], b1_r[0]), 0.0)
    ff = _proj(hid, w2_r[0], b2_r[0])
    tgt = _ln(tgt + ff, lnw[2], lnb[2])

    tgt_sc[...] = tgt                                  # carry to next layer

    fnw = fnw_r[...]
    fnb = fnb_r[...]

    @pl.when(l == last)
    def _():
        if apply_final_norm:
            # output[0] = norm(output[0])  (query position 0 only -- per spec)
            normed = _ln(tgt, fnw, fnb)
            row0 = jax.lax.broadcasted_iota(jnp.int32, (tgt.shape[1], E), 0) == 0
            final = jnp.where(row0, normed, tgt)       # single full-block select/store
        else:
            final = tgt
        out_ref[...] = final.astype(out_ref.dtype)
        if collect:
            # spec: intermediate.pop(); intermediate.append(output)
            inter_ref[0] = final.astype(inter_ref.dtype)

    if collect:
        @pl.when(l != last)
        def _():
            v = _ln(tgt, fnw, fnb) if apply_final_norm else tgt
            inter_ref[0] = v.astype(inter_ref.dtype)


# ----------------------- one-time weight packing --------------------------

def pack_decoder_params(layer_params, norm_params, nhead,
                        param_dtype=jnp.float32):
    """Re-pack decoder weights ONCE at parameter-load time.

    Pre-transposes all projection weights, fuses the self-attention Q|K
    in-projection, folds 1/sqrt(head_dim) into the Q weight & bias, and stacks
    everything over layers so the kernel can stream one layer per grid step.
    Set param_dtype=jnp.bfloat16 on v6e/v7x to halve the weight footprint
    (f32 accumulation is kept inside the kernel; LN/softmax stay f32).
    """
    E = layer_params[0]["sa_wo"].shape[0]
    hd = E // nhead
    scale = 1.0 / math.sqrt(hd)
    f32 = jnp.float32

    def stkw(fn):  # matmul weights -> param_dtype
        return jnp.stack([fn(p) for p in layer_params]).astype(param_dtype)

    def stkf(fn):  # biases / LN params -> f32
        return jnp.stack([fn(p) for p in layer_params]).astype(f32)

    packed = dict(
        sa_wqk=stkw(lambda p: jnp.concatenate(
            [p["sa_wqkv"][0:E].T * scale, p["sa_wqkv"][E:2 * E].T], axis=1)),
        sa_bqk=stkf(lambda p: jnp.concatenate(
            [p["sa_bqkv"][0:E] * scale, p["sa_bqkv"][E:2 * E]]).reshape(1, 2 * E)),
        sa_wv=stkw(lambda p: p["sa_wqkv"][2 * E:].T),
        sa_bv=stkf(lambda p: p["sa_bqkv"][2 * E:].reshape(1, E)),
        sa_wo=stkw(lambda p: p["sa_wo"].T),
        sa_bo=stkf(lambda p: p["sa_bo"].reshape(1, E)),
        ca_wq=stkw(lambda p: p["ca_wqkv"][0:E].T * scale),
        ca_bq=stkf(lambda p: (p["ca_bqkv"][0:E] * scale).reshape(1, E)),
        ca_wk=stkw(lambda p: p["ca_wqkv"][E:2 * E].T),
        ca_bk=stkf(lambda p: p["ca_bqkv"][E:2 * E].reshape(1, E)),
        ca_wv=stkw(lambda p: p["ca_wqkv"][2 * E:].T),
        ca_bv=stkf(lambda p: p["ca_bqkv"][2 * E:].reshape(1, E)),
        ca_wo=stkw(lambda p: p["ca_wo"].T),
        ca_bo=stkf(lambda p: p["ca_bo"].reshape(1, E)),
        w1=stkw(lambda p: p["lin1_w"].T),
        b1=stkf(lambda p: p["lin1_b"].reshape(1, -1)),
        w2=stkw(lambda p: p["lin2_w"].T),
        b2=stkf(lambda p: p["lin2_b"].reshape(1, E)),
        ln_w=stkf(lambda p: jnp.stack([p["norm1_w"].reshape(1, E),
                                       p["norm2_w"].reshape(1, E),
                                       p["norm3_w"].reshape(1, E)])),
        ln_b=stkf(lambda p: jnp.stack([p["norm1_b"].reshape(1, E),
                                       p["norm2_b"].reshape(1, E),
                                       p["norm3_b"].reshape(1, E)])),
    )
    has_final = norm_params is not None
    fw = norm_params["w"] if has_final else jnp.ones((E,), f32)
    fb = norm_params["b"] if has_final else jnp.zeros((E,), f32)
    packed["fn_w"] = fw.reshape(1, E).astype(f32)
    packed["fn_b"] = fb.reshape(1, E).astype(f32)
    packed["has_final_norm"] = has_final
    packed["num_layers"] = len(layer_params)
    packed["nhead"] = nhead
    return packed


# -------------------------------- wrapper ---------------------------------

def transformer_decoder_forward(tgt, memory, packed, pos=None, query_pos=None,
                                return_intermediate=False, eps=1e-5):
    Lq, N, E = tgt.shape
    Lm = memory.shape[0]
    NL = packed["num_layers"]
    nhead = packed["nhead"]
    F = packed["w1"].shape[-1]
    dtype = tgt.dtype
    has_final = packed["has_final_norm"]

    # (L, N, E) -> (N, L, E) once per forward.
    t3 = jnp.transpose(tgt, (1, 0, 2))
    m3 = jnp.transpose(memory, (1, 0, 2))
    p3 = jnp.transpose(pos, (1, 0, 2)) if pos is not None else jnp.zeros_like(m3)
    q3 = jnp.transpose(query_pos, (1, 0, 2)) if query_pos is not None else jnp.zeros_like(t3)

    def layer_spec(*shape):        # streamed per-layer tensor
        nd = len(shape)
        return pl.BlockSpec((1,) + tuple(shape), lambda l: (l,) + (0,) * nd)

    def const_spec(*shape):        # resident across all layer steps
        nd = len(shape)
        return pl.BlockSpec(tuple(shape), lambda l: (0,) * nd)

    in_specs = [
        const_spec(N, Lq, E),                       # tgt
        const_spec(N, Lm, E),                       # memory
        const_spec(N, Lm, E),                       # pos
        const_spec(N, Lq, E),                       # query_pos
        layer_spec(E, 2 * E), layer_spec(1, 2 * E),  # sa_wqk, sa_bqk
        layer_spec(E, E), layer_spec(1, E),          # sa_wv, sa_bv
        layer_spec(E, E), layer_spec(1, E),          # sa_wo, sa_bo
        layer_spec(E, E), layer_spec(1, E),          # ca_wq, ca_bq
        layer_spec(E, E), layer_spec(1, E),          # ca_wk, ca_bk
        layer_spec(E, E), layer_spec(1, E),          # ca_wv, ca_bv
        layer_spec(E, E), layer_spec(1, E),          # ca_wo, ca_bo
        layer_spec(E, F), layer_spec(1, F),          # w1, b1
        layer_spec(F, E), layer_spec(1, E),          # w2, b2
        layer_spec(3, 1, E), layer_spec(3, 1, E),    # ln_w, ln_b
        const_spec(1, E), const_spec(1, E),          # fn_w, fn_b
    ]

    out_specs = const_spec(N, Lq, E)
    out_shape = jax.ShapeDtypeStruct((N, Lq, E), dtype)
    if return_intermediate:
        out_specs = [out_specs,
                     pl.BlockSpec((1, N, Lq, E), lambda l: (l, 0, 0, 0))]
        out_shape = (out_shape, jax.ShapeDtypeStruct((NL, N, Lq, E), dtype))

    # Advisory cost estimate so XLA schedules neighbors sensibly.
    flops = NL * N * (12 * Lq * E * E + 4 * Lm * E * E
                      + 4 * Lq * Lq * E + 4 * Lq * Lm * E + 4 * Lq * E * F)
    transc = NL * N * nhead * (Lq * Lq + Lq * Lm)
    w_bytes = sum(int(v.size) * v.dtype.itemsize
                  for v in packed.values() if hasattr(v, "dtype"))
    a_bytes = 4 * (t3.size + m3.size + p3.size + q3.size + N * Lq * E)
    if return_intermediate:
        a_bytes += 4 * NL * N * Lq * E
    cost = pl.CostEstimate(flops=int(flops), transcendentals=int(transc),
                           bytes_accessed=int(w_bytes + a_bytes))

    kernel = functools.partial(
        _decoder_layer_kernel, nhead=nhead, N=N, eps=eps,
        collect=return_intermediate, apply_final_norm=has_final)

    # NOTE: on v7x a leading "parallel" grid axis over batch/query blocks can
    # shard work across the two TensorCores; kept single-core here since
    # v5e/v6e have one TC and the activations are tiny.
    res = pl.pallas_call(
        kernel,
        out_shape=out_shape,
        grid_spec=pltpu.PrefetchScalarGridSpec(
            num_scalar_prefetch=0,
            grid=(NL,),
            in_specs=in_specs,
            out_specs=out_specs,
            scratch_shapes=[pltpu.VMEM((N, Lq, E), jnp.float32),   # residual stream
                            pltpu.VMEM((N, Lm, E), jnp.float32)],  # memory + pos
        ),
        compiler_params=pltpu.CompilerParams(
            dimension_semantics=("arbitrary",)),
        cost_estimate=cost,
    )(t3, m3, p3, q3,
      packed["sa_wqk"], packed["sa_bqk"], packed["sa_wv"], packed["sa_bv"],
      packed["sa_wo"], packed["sa_bo"],
      packed["ca_wq"], packed["ca_bq"], packed["ca_wk"], packed["ca_bk"],
      packed["ca_wv"], packed["ca_bv"], packed["ca_wo"], packed["ca_bo"],
      packed["w1"], packed["b1"], packed["w2"], packed["b2"],
      packed["ln_w"], packed["ln_b"], packed["fn_w"], packed["fn_b"])

    if return_intermediate:
        _, inter = res
        return jnp.transpose(inter, (0, 2, 1, 3))      # (NL, Lq, N, E)
    return jnp.transpose(res, (1, 0, 2))               # (Lq, N, E)


# --------------------------- pure-JAX reference ----------------------------

def _mha_ref(q, k, v, wqkv, bqkv, wo, bo, nhead):
    Lq, N, E = q.shape
    Lk = k.shape[0]
    hd = E // nhead
    qp = jnp.einsum("lne,fe->lnf", q, wqkv[:E]) + bqkv[:E]
    kp = jnp.einsum("lne,fe->lnf", k, wqkv[E:2 * E]) + bqkv[E:2 * E]
    vp = jnp.einsum("lne,fe->lnf", v, wqkv[2 * E:]) + bqkv[2 * E:]
    qh = (qp / math.sqrt(hd)).reshape(Lq, N, nhead, hd)
    kh = kp.reshape(Lk, N, nhead, hd)
    vh = vp.reshape(Lk, N, nhead, hd)
    s = jnp.einsum("lnhd,mnhd->nhlm", qh, kh)
    a = jax.nn.softmax(s, axis=-1)
    o = jnp.einsum("nhlm,mnhd->lnhd", a, vh).reshape(Lq, N, E)
    return jnp.einsum("lne,fe->lnf", o, wo) + bo


def _ln_ref(x, g, b, eps=1e-5):
    m = jnp.mean(x, axis=-1, keepdims=True)
    v = jnp.mean(jnp.square(x - m), axis=-1, keepdims=True)
    return (x - m) * jax.lax.rsqrt(v + eps) * g + b


def _layer_ref(tgt, memory, p, pos, query_pos, nhead):
    q = tgt + query_pos
    tgt = _ln_ref(tgt + _mha_ref(q, q, tgt, p["sa_wqkv"], p["sa_bqkv"],
                                 p["sa_wo"], p["sa_bo"], nhead),
                  p["norm1_w"], p["norm1_b"])
    tgt = _ln_ref(tgt + _mha_ref(tgt + query_pos, memory + pos, memory,
                                 p["ca_wqkv"], p["ca_bqkv"], p["ca_wo"], p["ca_bo"], nhead),
                  p["norm2_w"], p["norm2_b"])
    h = jax.nn.relu(jnp.einsum("lne,fe->lnf", tgt, p["lin1_w"]) + p["lin1_b"])
    ff = jnp.einsum("lnf,ef->lne", h, p["lin2_w"]) + p["lin2_b"]
    return _ln_ref(tgt + ff, p["norm3_w"], p["norm3_b"])


def _decoder_ref(tgt, memory, layer_params, norm_params, pos, query_pos, nhead):
    output = tgt
    for p in layer_params:
        output = _layer_ref(output, memory, p, pos, query_pos, nhead)
    out0 = _ln_ref(output[0:1], norm_params["w"], norm_params["b"])
    return output.at[0:1].set(out0)


def _decoder_ref_intermediate(tgt, memory, layer_params, norm_params, pos, query_pos, nhead):
    output = tgt
    inter = []
    for p in layer_params:
        output = _layer_ref(output, memory, p, pos, query_pos, nhead)
        inter.append(_ln_ref(output, norm_params["w"], norm_params["b"]))
    out0 = _ln_ref(output[0:1], norm_params["w"], norm_params["b"])
    output = output.at[0:1].set(out0)
    inter.pop()
    inter.append(output)
    return jnp.stack(inter)


# --------------------------------- setup -----------------------------------

def init_layer_params(key, E, F):
    ks = jax.random.split(key, 8)
    s = 0.05
    f32 = jnp.float32
    return dict(
        sa_wqkv=s * jax.random.normal(ks[0], (3 * E, E), f32),
        sa_bqkv=s * jax.random.normal(ks[1], (3 * E,), f32),
        sa_wo=s * jax.random.normal(ks[2], (E, E), f32),
        sa_bo=jnp.zeros((E,), f32),
        ca_wqkv=s * jax.random.normal(ks[3], (3 * E, E), f32),
        ca_bqkv=s * jax.random.normal(ks[4], (3 * E,), f32),
        ca_wo=s * jax.random.normal(ks[5], (E, E), f32),
        ca_bo=jnp.zeros((E,), f32),
        lin1_w=s * jax.random.normal(ks[6], (F, E), f32),
        lin1_b=jnp.zeros((F,), f32),
        lin2_w=s * jax.random.normal(ks[7], (E, F), f32),
        lin2_b=jnp.zeros((E,), f32),
        norm1_w=jnp.ones((E,), f32), norm1_b=jnp.zeros((E,), f32),
        norm2_w=jnp.ones((E,), f32), norm2_b=jnp.zeros((E,), f32),
        norm3_w=jnp.ones((E,), f32), norm3_b=jnp.zeros((E,), f32),
    )


if __name__ == "__main__":
    # small decoder-consistent shapes: Lq=8 queries, Lm=16 memory tokens,
    # batch N=2, d_model E=32, nhead=4, dim_feedforward=64, num_layers=2
    Lq, Lm, N, E, NHEAD, F, NUM_LAYERS = 8, 16, 2, 32, 4, 64, 2

    key = jax.random.PRNGKey(0)
    k_in, k_mem, k_pos, k_qpos, k_nw, k_nb, *k_layers = jax.random.split(key, 6 + NUM_LAYERS)

    tgt = jax.random.normal(k_in, (Lq, N, E), jnp.float32)
    memory = jax.random.normal(k_mem, (Lm, N, E), jnp.float32)
    pos = jax.random.normal(k_pos, (Lm, N, E), jnp.float32)
    query_pos = jax.random.normal(k_qpos, (Lq, N, E), jnp.float32)

    layer_params = [init_layer_params(k_layers[i], E, F) for i in range(NUM_LAYERS)]
    norm_params = dict(w=1.0 + 0.1 * jax.random.normal(k_nw, (E,), jnp.float32),
                       b=0.05 * jax.random.normal(k_nb, (E,), jnp.float32))

    # One-time packing (parameter-load time, not per forward).
    packed = pack_decoder_params(layer_params, norm_params, NHEAD)

    # --- main output path ---
    out = transformer_decoder_forward(tgt, memory, packed, pos=pos, query_pos=query_pos,
                                      return_intermediate=False)
    out = jax.block_until_ready(out)
    ref = _decoder_ref(tgt, memory, layer_params, norm_params, pos, query_pos, NHEAD)
    assert out.shape == (Lq, N, E)
    assert jnp.allclose(out, ref, atol=5e-4, rtol=5e-4), \
        f"max abs err {float(jnp.max(jnp.abs(out - ref)))}"

    # --- return_intermediate path ---
    inter = transformer_decoder_forward(tgt, memory, packed, pos=pos, query_pos=query_pos,
                                        return_intermediate=True)
    inter = jax.block_until_ready(inter)
    inter_ref = _decoder_ref_intermediate(tgt, memory, layer_params, norm_params,
                                          pos, query_pos, NHEAD)
    assert inter.shape == (NUM_LAYERS, Lq, N, E)
    assert jnp.allclose(inter, inter_ref, atol=5e-4, rtol=5e-4), \
        f"max abs err {float(jnp.max(jnp.abs(inter - inter_ref)))}"

    print("KERNEL_OK")
</pallas_src>

<mosaic_0001>
module attributes {stable_mosaic.version = 11 : i64} {
  func.func @_decoder_layer_kernel(%arg0: i32, %arg1: memref<2x8x32xf32, #tpu.memory_space<vmem>>, %arg2: memref<2x16x32xf32, #tpu.memory_space<vmem>>, %arg3: memref<2x16x32xf32, #tpu.memory_space<vmem>>, %arg4: memref<2x8x32xf32, #tpu.memory_space<vmem>>, %arg5: memref<1x32x64xf32, #tpu.memory_space<vmem>>, %arg6: memref<1x1x64xf32, #tpu.memory_space<vmem>>, %arg7: memref<1x32x32xf32, #tpu.memory_space<vmem>>, %arg8: memref<1x1x32xf32, #tpu.memory_space<vmem>>, %arg9: memref<1x32x32xf32, #tpu.memory_space<vmem>>, %arg10: memref<1x1x32xf32, #tpu.memory_space<vmem>>, %arg11: memref<1x32x32xf32, #tpu.memory_space<vmem>>, %arg12: memref<1x1x32xf32, #tpu.memory_space<vmem>>, %arg13: memref<1x32x32xf32, #tpu.memory_space<vmem>>, %arg14: memref<1x1x32xf32, #tpu.memory_space<vmem>>, %arg15: memref<1x32x32xf32, #tpu.memory_space<vmem>>, %arg16: memref<1x1x32xf32, #tpu.memory_space<vmem>>, %arg17: memref<1x32x32xf32, #tpu.memory_space<vmem>>, %arg18: memref<1x1x32xf32, #tpu.memory_space<vmem>>, %arg19: memref<1x32x64xf32, #tpu.memory_space<vmem>>, %arg20: memref<1x1x64xf32, #tpu.memory_space<vmem>>, %arg21: memref<1x64x32xf32, #tpu.memory_space<vmem>>, %arg22: memref<1x1x32xf32, #tpu.memory_space<vmem>>, %arg23: memref<1x3x1x32xf32, #tpu.memory_space<vmem>>, %arg24: memref<1x3x1x32xf32, #tpu.memory_space<vmem>>, %arg25: memref<1x32xf32, #tpu.memory_space<vmem>>, %arg26: memref<1x32xf32, #tpu.memory_space<vmem>>, %arg27: memref<2x8x32xf32, #tpu.memory_space<vmem>>, %arg28: memref<2x8x32xf32, #tpu.memory_space<vmem>>, %arg29: memref<2x16x32xf32, #tpu.memory_space<vmem>>) attributes {dimension_semantics = [#tpu.dimension_semantics<arbitrary>], iteration_bounds = array<i64: 2>, scalar_prefetch = 0 : i64, scratch_operands = 2 : i64, tpu.core_type = #tpu.core_type<tc>, window_params = [{pipeline_mode = #tpu.pipeline_mode<synchronous>, transform_indices = @transform_0, window_bounds = array<i64: 2, 8, 32>}, {pipeline_mode = #tpu.pipeline_mode<synchronous>, transform_indices = @transform_1, window_bounds = array<i64: 2, 16, 32>}, {pipeline_mode = #tpu.pipeline_mode<synchronous>, transform_indices = @transform_2, window_bounds = array<i64: 2, 16, 32>}, {pipeline_mode = #tpu.pipeline_mode<synchronous>, transform_indices = @transform_3, window_bounds = array<i64: 2, 8, 32>}, {transform_indices = @transform_4, window_bounds = array<i64: 1, 32, 64>}, {transform_indices = @transform_5, window_bounds = array<i64: 1, 1, 64>}, {transform_indices = @transform_6, window_bounds = array<i64: 1, 32, 32>}, {transform_indices = @transform_7, window_bounds = array<i64: 1, 1, 32>}, {transform_indices = @transform_8, window_bounds = array<i64: 1, 32, 32>}, {transform_indices = @transform_9, window_bounds = array<i64: 1, 1, 32>}, {transform_indices = @transform_10, window_bounds = array<i64: 1, 32, 32>}, {transform_indices = @transform_11, window_bounds = array<i64: 1, 1, 32>}, {transform_indices = @transform_12, window_bounds = array<i64: 1, 32, 32>}, {transform_indices = @transform_13, window_bounds = array<i64: 1, 1, 32>}, {transform_indices = @transform_14, window_bounds = array<i64: 1, 32, 32>}, {transform_indices = @transform_15, window_bounds = array<i64: 1, 1, 32>}, {transform_indices = @transform_16, window_bounds = array<i64: 1, 32, 32>}, {transform_indices = @transform_17, window_bounds = array<i64: 1, 1, 32>}, {transform_indices = @transform_18, window_bounds = array<i64: 1, 32, 64>}, {transform_indices = @transform_19, window_bounds = array<i64: 1, 1, 64>}, {transform_indices = @transform_20, window_bounds = array<i64: 1, 64, 32>}, {transform_indices = @transform_21, window_bounds = array<i64: 1, 1, 32>}, {transform_indices = @transform_22, window_bounds = array<i64: 1, 3, 1, 32>}, {transform_indices = @transform_23, window_bounds = array<i64: 1, 3, 1, 32>}, {pipeline_mode = #tpu.pipeline_mode<synchronous>, transform_indices = @transform_24, window_bounds = array<i64: 1, 32>}, {pipeline_mode = #tpu.pipeline_mode<synchronous>, transform_indices = @transform_25, window_bounds = array<i64: 1, 32>}, {pipeline_mode = #tpu.pipeline_mode<synchronous>, transform_indices = @transform_26, window_bounds = array<i64: 2, 8, 32>}]} {
    %c0_i32 = arith.constant 0 : i32
    %0 = arith.cmpi eq, %arg0, %c0_i32 : i32
    %1 = arith.extui %0 : i1 to i32
    %c0_i32_0 = arith.constant 0 : i32
    %2 = arith.cmpi ne, %1, %c0_i32_0 : i32
    scf.if %2 {
      %c0_155 = arith.constant 0 : index
      %c0_156 = arith.constant 0 : index
      %c0_157 = arith.constant 0 : index
      %402 = vector.load %arg1[%c0_155, %c0_156, %c0_157] : memref<2x8x32xf32, #tpu.memory_space<vmem>>, vector<2x8x32xf32>
      %c0_158 = arith.constant 0 : index
      %c0_159 = arith.constant 0 : index
      %c0_160 = arith.constant 0 : index
      %403 = vector.load %arg28[%c0_158, %c0_159, %c0_160] : memref<2x8x32xf32, #tpu.memory_space<vmem>>, vector<2x8x32xf32>
      tpu.vector_store %arg28[%c0_158, %c0_159, %c0_160], %402 {strides = array<i32>} : memref<2x8x32xf32, #tpu.memory_space<vmem>>, vector<2x8x32xf32>,
      %c0_161 = arith.constant 0 : index
      %c0_162 = arith.constant 0 : index
      %c0_163 = arith.constant 0 : index
      %404 = vector.load %arg2[%c0_161, %c0_162, %c0_163] : memref<2x16x32xf32, #tpu.memory_space<vmem>>, vector<2x16x32xf32>
      %c0_164 = arith.constant 0 : index
      %c0_165 = arith.constant 0 : index
      %c0_166 = arith.constant 0 : index
      %405 = vector.load %arg3[%c0_164, %c0_165, %c0_166] : memref<2x16x32xf32, #tpu.memory_space<vmem>>, vector<2x16x32xf32>
      %406 = arith.addf %404, %405 : vector<2x16x32xf32>
      %c0_167 = arith.constant 0 : index
      %c0_168 = arith.constant 0 : index
      %c0_169 = arith.constant 0 : index
      %407 = vector.load %arg29[%c0_167, %c0_168, %c0_169] : memref<2x16x32xf32, #tpu.memory_space<vmem>>, vector<2x16x32xf32>
      tpu.vector_store %arg29[%c0_167, %c0_168, %c0_169], %406 {strides = array<i32>} : memref<2x16x32xf32, #tpu.memory_space<vmem>>, vector<2x16x32xf32>,
    } else {
    }
    %c0 = arith.constant 0 : index
    %c0_1 = arith.constant 0 : index
    %c0_2 = arith.constant 0 : index
    %3 = vector.load %arg28[%c0, %c0_1, %c0_2] : memref<2x8x32xf32, #tpu.memory_space<vmem>>, vector<2x8x32xf32>
    %c0_3 = arith.constant 0 : index
    %c0_4 = arith.constant 0 : index
    %c0_5 = arith.constant 0 : index
    %4 = vector.load %arg4[%c0_3, %c0_4, %c0_5] : memref<2x8x32xf32, #tpu.memory_space<vmem>>, vector<2x8x32xf32>
    %c0_6 = arith.constant 0 : index
    %c0_7 = arith.constant 0 : index
    %c0_8 = arith.constant 0 : index
    %5 = vector.load %arg2[%c0_6, %c0_7, %c0_8] : memref<2x16x32xf32, #tpu.memory_space<vmem>>, vector<2x16x32xf32>
    %c0_9 = arith.constant 0 : index
    %c0_10 = arith.constant 0 : index
    %c0_11 = arith.constant 0 : index
    %6 = vector.load %arg29[%c0_9, %c0_10, %c0_11] : memref<2x16x32xf32, #tpu.memory_space<vmem>>, vector<2x16x32xf32>
    %c0_12 = arith.constant 0 : index
    %c0_13 = arith.constant 0 : index
    %c0_14 = arith.constant 0 : index
    %c0_15 = arith.constant 0 : index
    %7 = vector.load %arg23[%c0_12, %c0_13, %c0_14, %c0_15] : memref<1x3x1x32xf32, #tpu.memory_space<vmem>>, vector<1x3x1x32xf32>
    %8 = vector.shape_cast %7 : vector<1x3x1x32xf32> to vector<3x1x32xf32>
    %c0_16 = arith.constant 0 : index
    %c0_17 = arith.constant 0 : index
    %c0_18 = arith.constant 0 : index
    %c0_19 = arith.constant 0 : index
    %9 = vector.load %arg24[%c0_16, %c0_17, %c0_18, %c0_19] : memref<1x3x1x32xf32, #tpu.memory_space<vmem>>, vector<1x3x1x32xf32>
    %10 = vector.shape_cast %9 : vector<1x3x1x32xf32> to vector<3x1x32xf32>
    %11 = arith.addf %3, %4 : vector<2x8x32xf32>
    %c0_20 = arith.constant 0 : index
    %c0_21 = arith.constant 0 : index
    %c0_22 = arith.constant 0 : index
    %12 = vector.load %arg5[%c0_20, %c0_21, %c0_22] : memref<1x32x64xf32, #tpu.memory_space<vmem>>, vector<1x32x64xf32>
    %13 = vector.shape_cast %12 : vector<1x32x64xf32> to vector<32x64xf32>
    %c0_23 = arith.constant 0 : index
    %c0_24 = arith.constant 0 : index
    %c0_25 = arith.constant 0 : index
    %14 = vector.load %arg6[%c0_23, %c0_24, %c0_25] : memref<1x1x64xf32, #tpu.memory_space<vmem>>, vector<1x1x64xf32>
    %15 = vector.shape_cast %14 : vector<1x1x64xf32> to vector<1x64xf32>
    %16 = vector.extract_strided_slice %11 {offsets = [0, 0, 0], sizes = [1, 8, 32], strides = [1, 1, 1]} : vector<2x8x32xf32> to vector<1x8x32xf32>
    %17 = vector.shape_cast %16 : vector<1x8x32xf32> to vector<8x32xf32>
    %cst = arith.constant dense<0.000000e+00> : vector<8x64xf32>
    %18 = tpu.matmul %17, %13, %cst {dimension_numbers = #tpu.dot_dimension_numbers<[1], [0], [0], [1], [0, 0, 1, 1], [], []>} : vector<8x32xf32>, vector<32x64xf32>, vector<8x64xf32> -> vector<8x64xf32>
    %19 = vector.extract_strided_slice %11 {offsets = [1, 0, 0], sizes = [1, 8, 32], strides = [1, 1, 1]} : vector<2x8x32xf32> to vector<1x8x32xf32>
    %20 = vector.shape_cast %19 : vector<1x8x32xf32> to vector<8x32xf32>
    %cst_26 = arith.constant dense<0.000000e+00> : vector<8x64xf32>
    %21 = tpu.matmul %20, %13, %cst_26 {dimension_numbers = #tpu.dot_dimension_numbers<[1], [0], [0], [1], [0, 0, 1, 1], [], []>} : vector<8x32xf32>, vector<32x64xf32>, vector<8x64xf32> -> vector<8x64xf32>
    %22 = vector.shape_cast %18 : vector<8x64xf32> to vector<1x8x64xf32>
    %23 = vector.shape_cast %21 : vector<8x64xf32> to vector<1x8x64xf32>
    %24 = tpu.concatenate %22, %23 in 0 : vector<1x8x64xf32>, vector<1x8x64xf32> -> vector<2x8x64xf32>
    %25 = vector.shape_cast %15 : vector<1x64xf32> to vector<1x1x64xf32>
    %26 = vector.broadcast %25 : vector<1x1x64xf32> to vector<2x8x64xf32>
    %27 = arith.addf %24, %26 : vector<2x8x64xf32>
    %c0_27 = arith.constant 0 : index
    %c0_28 = arith.constant 0 : index
    %c0_29 = arith.constant 0 : index
    %28 = vector.load %arg7[%c0_27, %c0_28, %c0_29] : memref<1x32x32xf32, #tpu.memory_space<vmem>>, vector<1x32x32xf32>
    %29 = vector.shape_cast %28 : vector<1x32x32xf32> to vector<32x32xf32>
    %c0_30 = arith.constant 0 : index
    %c0_31 = arith.constant 0 : index
    %c0_32 = arith.constant 0 : index
    %30 = vector.load %arg8[%c0_30, %c0_31, %c0_32] : memref<1x1x32xf32, #tpu.memory_space<vmem>>, vector<1x1x32xf32>
    %31 = vector.shape_cast %30 : vector<1x1x32xf32> to vector<1x32xf32>
    %32 = vector.extract_strided_slice %3 {offsets = [0, 0, 0], sizes = [1, 8, 32], strides = [1, 1, 1]} : vector<2x8x32xf32> to vector<1x8x32xf32>
    %33 = vector.shape_cast %32 : vector<1x8x32xf32> to vector<8x32xf32>
    %cst_33 = arith.constant dense<0.000000e+00> : vector<8x32xf32>
    %34 = tpu.matmul %33, %29, %cst_33 {dimension_numbers = #tpu.dot_dimension_numbers<[1], [0], [0], [1], [0, 0, 1, 1], [], []>} : vector<8x32xf32>, vector<32x32xf32>, vector<8x32xf32> -> vector<8x32xf32>
    %35 = vector.extract_strided_slice %3 {offsets = [1, 0, 0], sizes = [1, 8, 32], strides = [1, 1, 1]} : vector<2x8x32xf32> to vector<1x8x32xf32>
    %36 = vector.shape_cast %35 : vector<1x8x32xf32> to vector<8x32xf32>
    %cst_34 = arith.constant dense<0.000000e+00> : vector<8x32xf32>
    %37 = tpu.matmul %36, %29, %cst_34 {dimension_numbers = #tpu.dot_dimension_numbers<[1], [0], [0], [1], [0, 0, 1, 1], [], []>} : vector<8x32xf32>, vector<32x32xf32>, vector<8x32xf32> -> vector<8x32xf32>
    %38 = vector.shape_cast %34 : vector<8x32xf32> to vector<1x8x32xf32>
    %39 = vector.shape_cast %37 : vector<8x32xf32> to vector<1x8x32xf32>
    %40 = tpu.concatenate %38, %39 in 0 : vector<1x8x32xf32>, vector<1x8x32xf32> -> vector<2x8x32xf32>
    %41 = vector.shape_cast %31 : vector<1x32xf32> to vector<1x1x32xf32>
    %42 = vector.broadcast %41 : vector<1x1x32xf32> to vector<2x8x32xf32>
    %43 = arith.addf %40, %42 : vector<2x8x32xf32>
    %44 = vector.extract_strided_slice %27 {offsets = [0, 0, 0], sizes = [2, 8, 32], strides = [1, 1, 1]} : vector<2x8x64xf32> to vector<2x8x32xf32>
    %45 = vector.extract_strided_slice %27 {offsets = [0, 0, 32], sizes = [2, 8, 32], strides = [1, 1, 1]} : vector<2x8x64xf32> to vector<2x8x32xf32>
    %c0_35 = arith.constant 0 : index
    %c0_36 = arith.constant 0 : index
    %c0_37 = arith.constant 0 : index
    %46 = vector.load %arg9[%c0_35, %c0_36, %c0_37] : memref<1x32x32xf32, #tpu.memory_space<vmem>>, vector<1x32x32xf32>
    %47 = vector.shape_cast %46 : vector<1x32x32xf32> to vector<32x32xf32>
    %c0_38 = arith.constant 0 : index
    %c0_39 = arith.constant 0 : index
    %c0_40 = arith.constant 0 : index
    %48 = vector.load %arg10[%c0_38, %c0_39, %c0_40] : memref<1x1x32xf32, #tpu.memory_space<vmem>>, vector<1x1x32xf32>
    %49 = vector.shape_cast %48 : vector<1x1x32xf32> to vector<1x32xf32>
    %50 = vector.extract_strided_slice %44 {offsets = [0, 0, 0], sizes = [2, 8, 8], strides = [1, 1, 1]} : vector<2x8x32xf32> to vector<2x8x8xf32>
    %51 = vector.extract_strided_slice %45 {offsets = [0, 0, 0], sizes = [2, 8, 8], strides = [1, 1, 1]} : vector<2x8x32xf32> to vector<2x8x8xf32>
    %cst_41 = arith.constant dense<0.000000e+00> : vector<2x8x8xf32>
    %52 = tpu.matmul %50, %51, %cst_41 {dimension_numbers = #tpu.dot_dimension_numbers<[2], [2], [1], [1], [0, 0, 0, 1, 1, 1], [0], [0]>} : vector<2x8x8xf32>, vector<2x8x8xf32>, vector<2x8x8xf32> -> vector<2x8x8xf32>
    %cst_42 = arith.constant dense<0xFF800000> : vector<2x8xf32>
    %53 = vector.multi_reduction <maximumf>, %52, %cst_42 [2] : vector<2x8x8xf32> to vector<2x8xf32>
    %54 = vector.shape_cast %53 : vector<2x8xf32> to vector<2x8x1xf32>
    %55 = vector.broadcast %54 : vector<2x8x1xf32> to vector<2x8x8xf32>
    %56 = arith.subf %52, %55 : vector<2x8x8xf32>
    %57 = math.exp %56 : vector<2x8x8xf32>
    %cst_43 = arith.constant dense<0.000000e+00> : vector<2x8xf32>
    %58 = vector.multi_reduction <add>, %57, %cst_43 [2] : vector<2x8x8xf32> to vector<2x8xf32>
    %59 = vector.shape_cast %58 : vector<2x8xf32> to vector<2x8x1xf32>
    %60 = tpu.reciprocal %59 {approx = true} : vector<2x8x1xf32> -> vector<2x8x1xf32>
    %61 = arith.mulf %59, %60 : vector<2x8x1xf32>
    %cst_44 = arith.constant 2.000000e+00 : f32
    %62 = vector.broadcast %cst_44 : f32 to vector<2x8x1xf32>
    %63 = arith.subf %62, %61 : vector<2x8x1xf32>
    %64 = arith.mulf %60, %63 : vector<2x8x1xf32>
    %65 = vector.extract_strided_slice %43 {offsets = [0, 0, 0], sizes = [2, 8, 8], strides = [1, 1, 1]} : vector<2x8x32xf32> to vector<2x8x8xf32>
    %cst_45 = arith.constant dense<0.000000e+00> : vector<2x8x8xf32>
    %66 = tpu.matmul %57, %65, %cst_45 {dimension_numbers = #tpu.dot_dimension_numbers<[2], [1], [1], [2], [0, 0, 0, 1, 1, 2], [0], [0]>} : vector<2x8x8xf32>, vector<2x8x8xf32>, vector<2x8x8xf32> -> vector<2x8x8xf32>
    %67 = vector.broadcast %64 : vector<2x8x1xf32> to vector<2x8x8xf32>
    %68 = arith.mulf %66, %67 : vector<2x8x8xf32>
    %69 = vector.extract_strided_slice %44 {offsets = [0, 0, 8], sizes = [2, 8, 8], strides = [1, 1, 1]} : vector<2x8x32xf32> to vector<2x8x8xf32>
    %70 = vector.extract_strided_slice %45 {offsets = [0, 0, 8], sizes = [2, 8, 8], strides = [1, 1, 1]} : vector<2x8x32xf32> to vector<2x8x8xf32>
    %cst_46 = arith.constant dense<0.000000e+00> : vector<2x8x8xf32>
    %71 = tpu.matmul %69, %70, %cst_46 {dimension_numbers = #tpu.dot_dimension_numbers<[2], [2], [1], [1], [0, 0, 0, 1, 1, 1], [0], [0]>} : vector<2x8x8xf32>, vector<2x8x8xf32>, vector<2x8x8xf32> -> vector<2x8x8xf32>
    %cst_47 = arith.constant dense<0xFF800000> : vector<2x8xf32>
    %72 = vector.multi_reduction <maximumf>, %71, %cst_47 [2] : vector<2x8x8xf32> to vector<2x8xf32>
    %73 = vector.shape_cast %72 : vector<2x8xf32> to vector<2x8x1xf32>
    %74 = vector.broadcast %73 : vector<2x8x1xf32> to vector<2x8x8xf32>
    %75 = arith.subf %71, %74 : vector<2x8x8xf32>
    %76 = math.exp %75 : vector<2x8x8xf32>
    %cst_48 = arith.constant dense<0.000000e+00> : vector<2x8xf32>
    %77 = vector.multi_reduction <add>, %76, %cst_48 [2] : vector<2x8x8xf32> to vector<2x8xf32>
    %78 = vector.shape_cast %77 : vector<2x8xf32> to vector<2x8x1xf32>
    %79 = tpu.reciprocal %78 {approx = true} : vector<2x8x1xf32> -> vector<2x8x1xf32>
    %80 = arith.mulf %78, %79 : vector<2x8x1xf32>
    %cst_49 = arith.constant 2.000000e+00 : f32
    %81 = vector.broadcast %cst_49 : f32 to vector<2x8x1xf32>
    %82 = arith.subf %81, %80 : vector<2x8x1xf32>
    %83 = arith.mulf %79, %82 : vector<2x8x1xf32>
    %84 = vector.extract_strided_slice %43 {offsets = [0, 0, 8], sizes = [2, 8, 8], strides = [1, 1, 1]} : vector<2x8x32xf32> to vector<2x8x8xf32>
    %cst_50 = arith.constant dense<0.000000e+00> : vector<2x8x8xf32>
    %85 = tpu.matmul %76, %84, %cst_50 {dimension_numbers = #tpu.dot_dimension_numbers<[2], [1], [1], [2], [0, 0, 0, 1, 1, 2], [0], [0]>} : vector<2x8x8xf32>, vector<2x8x8xf32>, vector<2x8x8xf32> -> vector<2x8x8xf32>
    %86 = vector.broadcast %83 : vector<2x8x1xf32> to vector<2x8x8xf32>
    %87 = arith.mulf %85, %86 : vector<2x8x8xf32>
    %88 = vector.extract_strided_slice %44 {offsets = [0, 0, 16], sizes = [2, 8, 8], strides = [1, 1, 1]} : vector<2x8x32xf32> to vector<2x8x8xf32>
    %89 = vector.extract_strided_slice %45 {offsets = [0, 0, 16], sizes = [2, 8, 8], strides = [1, 1, 1]} : vector<2x8x32xf32> to vector<2x8x8xf32>
    %cst_51 = arith.constant dense<0.000000e+00> : vector<2x8x8xf32>
    %90 = tpu.matmul %88, %89, %cst_51 {dimension_numbers = #tpu.dot_dimension_numbers<[2], [2], [1], [1], [0, 0, 0, 1, 1, 1], [0], [0]>} : vector<2x8x8xf32>, vector<2x8x8xf32>, vector<2x8x8xf32> -> vector<2x8x8xf32>
    %cst_52 = arith.constant dense<0xFF800000> : vector<2x8xf32>
    %91 = vector.multi_reduction <maximumf>, %90, %cst_52 [2] : vector<2x8x8xf32> to vector<2x8xf32>
    %92 = vector.shape_cast %91 : vector<2x8xf32> to vector<2x8x1xf32>
    %93 = vector.broadcast %92 : vector<2x8x1xf32> to vector<2x8x8xf32>
    %94 = arith.subf %90, %93 : vector<2x8x8xf32>
    %95 = math.exp %94 : vector<2x8x8xf32>
    %cst_53 = arith.constant dense<0.000000e+00> : vector<2x8xf32>
    %96 = vector.multi_reduction <add>, %95, %cst_53 [2] : vector<2x8x8xf32> to vector<2x8xf32>
    %97 = vector.shape_cast %96 : vector<2x8xf32> to vector<2x8x1xf32>
    %98 = tpu.reciprocal %97 {approx = true} : vector<2x8x1xf32> -> vector<2x8x1xf32>
    %99 = arith.mulf %97, %98 : vector<2x8x1xf32>
    %cst_54 = arith.constant 2.000000e+00 : f32
    %100 = vector.broadcast %cst_54 : f32 to vector<2x8x1xf32>
    %101 = arith.subf %100, %99 : vector<2x8x1xf32>
    %102 = arith.mulf %98, %101 : vector<2x8x1xf32>
    %103 = vector.extract_strided_slice %43 {offsets = [0, 0, 16], sizes = [2, 8, 8], strides = [1, 1, 1]} : vector<2x8x32xf32> to vector<2x8x8xf32>
    %cst_55 = arith.constant dense<0.000000e+00> : vector<2x8x8xf32>
    %104 = tpu.matmul %95, %103, %cst_55 {dimension_numbers = #tpu.dot_dimension_numbers<[2], [1], [1], [2], [0, 0, 0, 1, 1, 2], [0], [0]>} : vector<2x8x8xf32>, vector<2x8x8xf32>, vector<2x8x8xf32> -> vector<2x8x8xf32>
    %105 = vector.broadcast %102 : vector<2x8x1xf32> to vector<2x8x8xf32>
    %106 = arith.mulf %104, %105 : vector<2x8x8xf32>
    %107 = vector.extract_strided_slice %44 {offsets = [0, 0, 24], sizes = [2, 8, 8], strides = [1, 1, 1]} : vector<2x8x32xf32> to vector<2x8x8xf32>
    %108 = vector.extract_strided_slice %45 {offsets = [0, 0, 24], sizes = [2, 8, 8], strides = [1, 1, 1]} : vector<2x8x32xf32> to vector<2x8x8xf32>
    %cst_56 = arith.constant dense<0.000000e+00> : vector<2x8x8xf32>
    %109 = tpu.matmul %107, %108, %cst_56 {dimension_numbers = #tpu.dot_dimension_numbers<[2], [2], [1], [1], [0, 0, 0, 1, 1, 1], [0], [0]>} : vector<2x8x8xf32>, vector<2x8x8xf32>, vector<2x8x8xf32> -> vector<2x8x8xf32>
    %cst_57 = arith.constant dense<0xFF800000> : vector<2x8xf32>
    %110 = vector.multi_reduction <maximumf>, %109, %cst_57 [2] : vector<2x8x8xf32> to vector<2x8xf32>
    %111 = vector.shape_cast %110 : vector<2x8xf32> to vector<2x8x1xf32>
    %112 = vector.broadcast %111 : vector<2x8x1xf32> to vector<2x8x8xf32>
    %113 = arith.subf %109, %112 : vector<2x8x8xf32>
    %114 = math.exp %113 : vector<2x8x8xf32>
    %cst_58 = arith.constant dense<0.000000e+00> : vector<2x8xf32>
    %115 = vector.multi_reduction <add>, %114, %cst_58 [2] : vector<2x8x8xf32> to vector<2x8xf32>
    %116 = vector.shape_cast %115 : vector<2x8xf32> to vector<2x8x1xf32>
    %117 = tpu.reciprocal %116 {approx = true} : vector<2x8x1xf32> -> vector<2x8x1xf32>
    %118 = arith.mulf %116, %117 : vector<2x8x1xf32>
    %cst_59 = arith.constant 2.000000e+00 : f32
    %119 = vector.broadcast %cst_59 : f32 to vector<2x8x1xf32>
    %120 = arith.subf %119, %118 : vector<2x8x1xf32>
    %121 = arith.mulf %117, %120 : vector<2x8x1xf32>
    %122 = vector.extract_strided_slice %43 {offsets = [0, 0, 24], sizes = [2, 8, 8], strides = [1, 1, 1]} : vector<2x8x32xf32> to vector<2x8x8xf32>
    %cst_60 = arith.constant dense<0.000000e+00> : vector<2x8x8xf32>
    %123 = tpu.matmul %114, %122, %cst_60 {dimension_numbers = #tpu.dot_dimension_numbers<[2], [1], [1], [2], [0, 0, 0, 1, 1, 2], [0], [0]>} : vector<2x8x8xf32>, vector<2x8x8xf32>, vector<2x8x8xf32> -> vector<2x8x8xf32>
    %124 = vector.broadcast %121 : vector<2x8x1xf32> to vector<2x8x8xf32>
    %125 = arith.mulf %123, %124 : vector<2x8x8xf32>
    %126 = tpu.concatenate %68, %87, %106, %125 in 2 : vector<2x8x8xf32>, vector<2x8x8xf32>, vector<2x8x8xf32>, vector<2x8x8xf32> -> vector<2x8x32xf32>
    %127 = vector.extract_strided_slice %126 {offsets = [0, 0, 0], sizes = [1, 8, 32], strides = [1, 1, 1]} : vector<2x8x32xf32> to vector<1x8x32xf32>
    %128 = vector.shape_cast %127 : vector<1x8x32xf32> to vector<8x32xf32>
    %cst_61 = arith.constant dense<0.000000e+00> : vector<8x32xf32>
    %129 = tpu.matmul %128, %47, %cst_61 {dimension_numbers = #tpu.dot_dimension_numbers<[1], [0], [0], [1], [0, 0, 1, 1], [], []>} : vector<8x32xf32>, vector<32x32xf32>, vector<8x32xf32> -> vector<8x32xf32>
    %130 = vector.extract_strided_slice %126 {offsets = [1, 0, 0], sizes = [1, 8, 32], strides = [1, 1, 1]} : vector<2x8x32xf32> to vector<1x8x32xf32>
    %131 = vector.shape_cast %130 : vector<1x8x32xf32> to vector<8x32xf32>
    %cst_62 = arith.constant dense<0.000000e+00> : vector<8x32xf32>
    %132 = tpu.matmul %131, %47, %cst_62 {dimension_numbers = #tpu.dot_dimension_numbers<[1], [0], [0], [1], [0, 0, 1, 1], [], []>} : vector<8x32xf32>, vector<32x32xf32>, vector<8x32xf32> -> vector<8x32xf32>
    %133 = vector.shape_cast %129 : vector<8x32xf32> to vector<1x8x32xf32>
    %134 = vector.shape_cast %132 : vector<8x32xf32> to vector<1x8x32xf32>
    %135 = tpu.concatenate %133, %134 in 0 : vector<1x8x32xf32>, vector<1x8x32xf32> -> vector<2x8x32xf32>
    %136 = vector.shape_cast %49 : vector<1x32xf32> to vector<1x1x32xf32>
    %137 = vector.broadcast %136 : vector<1x1x32xf32> to vector<2x8x32xf32>
    %138 = arith.addf %135, %137 : vector<2x8x32xf32>
    %139 = arith.addf %3, %138 : vector<2x8x32xf32>
    %140 = vector.extract_strided_slice %8 {offsets = [0, 0, 0], sizes = [1, 1, 32], strides = [1, 1, 1]} : vector<3x1x32xf32> to vector<1x1x32xf32>
    %141 = vector.shape_cast %140 : vector<1x1x32xf32> to vector<1x32xf32>
    %142 = vector.extract_strided_slice %10 {offsets = [0, 0, 0], sizes = [1, 1, 32], strides = [1, 1, 1]} : vector<3x1x32xf32> to vector<1x1x32xf32>
    %143 = vector.shape_cast %142 : vector<1x1x32xf32> to vector<1x32xf32>
    %cst_63 = arith.constant dense<0.000000e+00> : vector<2x8xf32>
    %144 = vector.multi_reduction <add>, %139, %cst_63 [2] : vector<2x8x32xf32> to vector<2x8xf32>
    %145 = vector.shape_cast %144 : vector<2x8xf32> to vector<2x8x1xf32>
    %cst_64 = arith.constant 3.200000e+01 : f32
    %146 = vector.broadcast %cst_64 : f32 to vector<2x8x1xf32>
    %147 = arith.divf %145, %146 : vector<2x8x1xf32>
    %148 = vector.broadcast %147 : vector<2x8x1xf32> to vector<2x8x32xf32>
    %149 = arith.subf %139, %148 : vector<2x8x32xf32>
    %150 = arith.mulf %149, %149 : vector<2x8x32xf32>
    %cst_65 = arith.constant dense<0.000000e+00> : vector<2x8xf32>
    %151 = vector.multi_reduction <add>, %150, %cst_65 [2] : vector<2x8x32xf32> to vector<2x8xf32>
    %152 = vector.shape_cast %151 : vector<2x8xf32> to vector<2x8x1xf32>
    %cst_66 = arith.constant 3.200000e+01 : f32
    %153 = vector.broadcast %cst_66 : f32 to vector<2x8x1xf32>
    %154 = arith.divf %152, %153 : vector<2x8x1xf32>
    %cst_67 = arith.constant 9.99999974E-6 : f32
    %155 = vector.broadcast %cst_67 : f32 to vector<2x8x1xf32>
    %156 = arith.addf %154, %155 : vector<2x8x1xf32>
    %157 = math.rsqrt %156 : vector<2x8x1xf32>
    %158 = vector.broadcast %157 : vector<2x8x1xf32> to vector<2x8x32xf32>
    %159 = arith.mulf %149, %158 : vector<2x8x32xf32>
    %160 = vector.shape_cast %141 : vector<1x32xf32> to vector<1x1x32xf32>
    %161 = vector.broadcast %160 : vector<1x1x32xf32> to vector<2x8x32xf32>
    %162 = arith.mulf %159, %161 : vector<2x8x32xf32>
    %163 = vector.shape_cast %143 : vector<1x32xf32> to vector<1x1x32xf32>
    %164 = vector.broadcast %163 : vector<1x1x32xf32> to vector<2x8x32xf32>
    %165 = arith.addf %162, %164 : vector<2x8x32xf32>
    %166 = arith.addf %165, %4 : vector<2x8x32xf32>
    %c0_68 = arith.constant 0 : index
    %c0_69 = arith.constant 0 : index
    %c0_70 = arith.constant 0 : index
    %167 = vector.load %arg11[%c0_68, %c0_69, %c0_70] : memref<1x32x32xf32, #tpu.memory_space<vmem>>, vector<1x32x32xf32>
    %168 = vector.shape_cast %167 : vector<1x32x32xf32> to vector<32x32xf32>
    %c0_71 = arith.constant 0 : index
    %c0_72 = arith.constant 0 : index
    %c0_73 = arith.constant 0 : index
    %169 = vector.load %arg12[%c0_71, %c0_72, %c0_73] : memref<1x1x32xf32, #tpu.memory_space<vmem>>, vector<1x1x32xf32>
    %170 = vector.shape_cast %169 : vector<1x1x32xf32> to vector<1x32xf32>
    %171 = vector.extract_strided_slice %166 {offsets = [0, 0, 0], sizes = [1, 8, 32], strides = [1, 1, 1]} : vector<2x8x32xf32> to vector<1x8x32xf32>
    %172 = vector.shape_cast %171 : vector<1x8x32xf32> to vector<8x32xf32>
    %cst_74 = arith.constant dense<0.000000e+00> : vector<8x32xf32>
    %173 = tpu.matmul %172, %168, %cst_74 {dimension_numbers = #tpu.dot_dimension_numbers<[1], [0], [0], [1], [0, 0, 1, 1], [], []>} : vector<8x32xf32>, vector<32x32xf32>, vector<8x32xf32> -> vector<8x32xf32>
    %174 = vector.extract_strided_slice %166 {offsets = [1, 0, 0], sizes = [1, 8, 32], strides = [1, 1, 1]} : vector<2x8x32xf32> to vector<1x8x32xf32>
    %175 = vector.shape_cast %174 : vector<1x8x32xf32> to vector<8x32xf32>
    %cst_75 = arith.constant dense<0.000000e+00> : vector<8x32xf32>
    %176 = tpu.matmul %175, %168, %cst_75 {dimension_numbers = #tpu.dot_dimension_numbers<[1], [0], [0], [1], [0, 0, 1, 1], [], []>} : vector<8x32xf32>, vector<32x32xf32>, vector<8x32xf32> -> vector<8x32xf32>
    %177 = vector.shape_cast %173 : vector<8x32xf32> to vector<1x8x32xf32>
    %178 = vector.shape_cast %176 : vector<8x32xf32> to vector<1x8x32xf32>
    %179 = tpu.concatenate %177, %178 in 0 : vector<1x8x32xf32>, vector<1x8x32xf32> -> vector<2x8x32xf32>
    %180 = vector.shape_cast %170 : vector<1x32xf32> to vector<1x1x32xf32>
    %181 = vector.broadcast %180 : vector<1x1x32xf32> to vector<2x8x32xf32>
    %182 = arith.addf %179, %181 : vector<2x8x32xf32>
    %c0_76 = arith.constant 0 : index
    %c0_77 = arith.constant 0 : index
    %c0_78 = arith.constant 0 : index
    %183 = vector.load %arg13[%c0_76, %c0_77, %c0_78] : memref<1x32x32xf32, #tpu.memory_space<vmem>>, vector<1x32x32xf32>
    %184 = vector.shape_cast %183 : vector<1x32x32xf32> to vector<32x32xf32>
    %c0_79 = arith.constant 0 : index
    %c0_80 = arith.constant 0 : index
    %c0_81 = arith.constant 0 : index
    %185 = vector.load %arg14[%c0_79, %c0_80, %c0_81] : memref<1x1x32xf32, #tpu.memory_space<vmem>>, vector<1x1x32xf32>
    %186 = vector.shape_cast %185 : vector<1x1x32xf32> to vector<1x32xf32>
    %187 = vector.extract_strided_slice %6 {offsets = [0, 0, 0], sizes = [1, 16, 32], strides = [1, 1, 1]} : vector<2x16x32xf32> to vector<1x16x32xf32>
    %188 = vector.shape_cast %187 : vector<1x16x32xf32> to vector<16x32xf32>
    %cst_82 = arith.constant dense<0.000000e+00> : vector<16x32xf32>
    %189 = tpu.matmul %188, %184, %cst_82 {dimension_numbers = #tpu.dot_dimension_numbers<[1], [0], [0], [1], [0, 0, 1, 1], [], []>} : vector<16x32xf32>, vector<32x32xf32>, vector<16x32xf32> -> vector<16x32xf32>
    %190 = vector.extract_strided_slice %6 {offsets = [1, 0, 0], sizes = [1, 16, 32], strides = [1, 1, 1]} : vector<2x16x32xf32> to vector<1x16x32xf32>
    %191 = vector.shape_cast %190 : vector<1x16x32xf32> to vector<16x32xf32>
    %cst_83 = arith.constant dense<0.000000e+00> : vector<16x32xf32>
    %192 = tpu.matmul %191, %184, %cst_83 {dimension_numbers = #tpu.dot_dimension_numbers<[1], [0], [0], [1], [0, 0, 1, 1], [], []>} : vector<16x32xf32>, vector<32x32xf32>, vector<16x32xf32> -> vector<16x32xf32>
    %193 = vector.shape_cast %189 : vector<16x32xf32> to vector<1x16x32xf32>
    %194 = vector.shape_cast %192 : vector<16x32xf32> to vector<1x16x32xf32>
    %195 = tpu.concatenate %193, %194 in 0 : vector<1x16x32xf32>, vector<1x16x32xf32> -> vector<2x16x32xf32>
    %196 = vector.shape_cast %186 : vector<1x32xf32> to vector<1x1x32xf32>
    %197 = vector.broadcast %196 : vector<1x1x32xf32> to vector<2x16x32xf32>
    %198 = arith.addf %195, %197 : vector<2x16x32xf32>
    %c0_84 = arith.constant 0 : index
    %c0_85 = arith.constant 0 : index
    %c0_86 = arith.constant 0 : index
    %199 = vector.load %arg15[%c0_84, %c0_85, %c0_86] : memref<1x32x32xf32, #tpu.memory_space<vmem>>, vector<1x32x32xf32>
    %200 = vector.shape_cast %199 : vector<1x32x32xf32> to vector<32x32xf32>
    %c0_87 = arith.constant 0 : index
    %c0_88 = arith.constant 0 : index
    %c0_89 = arith.constant 0 : index
    %201 = vector.load %arg16[%c0_87, %c0_88, %c0_89] : memref<1x1x32xf32, #tpu.memory_space<vmem>>, vector<1x1x32xf32>
    %202 = vector.shape_cast %201 : vector<1x1x32xf32> to vector<1x32xf32>
    %203 = vector.extract_strided_slice %5 {offsets = [0, 0, 0], sizes = [1, 16, 32], strides = [1, 1, 1]} : vector<2x16x32xf32> to vector<1x16x32xf32>
    %204 = vector.shape_cast %203 : vector<1x16x32xf32> to vector<16x32xf32>
    %cst_90 = arith.constant dense<0.000000e+00> : vector<16x32xf32>
    %205 = tpu.matmul %204, %200, %cst_90 {dimension_numbers = #tpu.dot_dimension_numbers<[1], [0], [0], [1], [0, 0, 1, 1], [], []>} : vector<16x32xf32>, vector<32x32xf32>, vector<16x32xf32> -> vector<16x32xf32>
    %206 = vector.extract_strided_slice %5 {offsets = [1, 0, 0], sizes = [1, 16, 32], strides = [1, 1, 1]} : vector<2x16x32xf32> to vector<1x16x32xf32>
    %207 = vector.shape_cast %206 : vector<1x16x32xf32> to vector<16x32xf32>
    %cst_91 = arith.constant dense<0.000000e+00> : vector<16x32xf32>
    %208 = tpu.matmul %207, %200, %cst_91 {dimension_numbers = #tpu.dot_dimension_numbers<[1], [0], [0], [1], [0, 0, 1, 1], [], []>} : vector<16x32xf32>, vector<32x32xf32>, vector<16x32xf32> -> vector<16x32xf32>
    %209 = vector.shape_cast %205 : vector<16x32xf32> to vector<1x16x32xf32>
    %210 = vector.shape_cast %208 : vector<16x32xf32> to vector<1x16x32xf32>
    %211 = tpu.concatenate %209, %210 in 0 : vector<1x16x32xf32>, vector<1x16x32xf32> -> vector<2x16x32xf32>
    %212 = vector.shape_cast %202 : vector<1x32xf32> to vector<1x1x32xf32>
    %213 = vector.broadcast %212 : vector<1x1x32xf32> to vector<2x16x32xf32>
    %214 = arith.addf %211, %213 : vector<2x16x32xf32>
    %c0_92 = arith.constant 0 : index
    %c0_93 = arith.constant 0 : index
    %c0_94 = arith.constant 0 : index
    %215 = vector.load %arg17[%c0_92, %c0_93, %c0_94] : memref<1x32x32xf32, #tpu.memory_space<vmem>>, vector<1x32x32xf32>
    %216 = vector.shape_cast %215 : vector<1x32x32xf32> to vector<32x32xf32>
    %c0_95 = arith.constant 0 : index
    %c0_96 = arith.constant 0 : index
    %c0_97 = arith.constant 0 : index
    %217 = vector.load %arg18[%c0_95, %c0_96, %c0_97] : memref<1x1x32xf32, #tpu.memory_space<vmem>>, vector<1x1x32xf32>
    %218 = vector.shape_cast %217 : vector<1x1x32xf32> to vector<1x32xf32>
    %219 = vector.extract_strided_slice %182 {offsets = [0, 0, 0], sizes = [2, 8, 8], strides = [1, 1, 1]} : vector<2x8x32xf32> to vector<2x8x8xf32>
    %220 = vector.extract_strided_slice %198 {offsets = [0, 0, 0], sizes = [2, 16, 8], strides = [1, 1, 1]} : vector<2x16x32xf32> to vector<2x16x8xf32>
    %cst_98 = arith.constant dense<0.000000e+00> : vector<2x8x16xf32>
    %221 = tpu.matmul %219, %220, %cst_98 {dimension_numbers = #tpu.dot_dimension_numbers<[2], [2], [1], [1], [0, 0, 0, 1, 1, 1], [0], [0]>} : vector<2x8x8xf32>, vector<2x16x8xf32>, vector<2x8x16xf32> -> vector<2x8x16xf32>
    %cst_99 = arith.constant dense<0xFF800000> : vector<2x8xf32>
    %222 = vector.multi_reduction <maximumf>, %221, %cst_99 [2] : vector<2x8x16xf32> to vector<2x8xf32>
    %223 = vector.shape_cast %222 : vector<2x8xf32> to vector<2x8x1xf32>
    %224 = vector.broadcast %223 : vector<2x8x1xf32> to vector<2x8x16xf32>
    %225 = arith.subf %221, %224 : vector<2x8x16xf32>
    %226 = math.exp %225 : vector<2x8x16xf32>
    %cst_100 = arith.constant dense<0.000000e+00> : vector<2x8xf32>
    %227 = vector.multi_reduction <add>, %226, %cst_100 [2] : vector<2x8x16xf32> to vector<2x8xf32>
    %228 = vector.shape_cast %227 : vector<2x8xf32> to vector<2x8x1xf32>
    %229 = tpu.reciprocal %228 {approx = true} : vector<2x8x1xf32> -> vector<2x8x1xf32>
    %230 = arith.mulf %228, %229 : vector<2x8x1xf32>
    %cst_101 = arith.constant 2.000000e+00 : f32
    %231 = vector.broadcast %cst_101 : f32 to vector<2x8x1xf32>
    %232 = arith.subf %231, %230 : vector<2x8x1xf32>
    %233 = arith.mulf %229, %232 : vector<2x8x1xf32>
    %234 = vector.extract_strided_slice %214 {offsets = [0, 0, 0], sizes = [2, 16, 8], strides = [1, 1, 1]} : vector<2x16x32xf32> to vector<2x16x8xf32>
    %cst_102 = arith.constant dense<0.000000e+00> : vector<2x8x8xf32>
    %235 = tpu.matmul %226, %234, %cst_102 {dimension_numbers = #tpu.dot_dimension_numbers<[2], [1], [1], [2], [0, 0, 0, 1, 1, 2], [0], [0]>} : vector<2x8x16xf32>, vector<2x16x8xf32>, vector<2x8x8xf32> -> vector<2x8x8xf32>
    %236 = vector.broadcast %233 : vector<2x8x1xf32> to vector<2x8x8xf32>
    %237 = arith.mulf %235, %236 : vector<2x8x8xf32>
    %238 = vector.extract_strided_slice %182 {offsets = [0, 0, 8], sizes = [2, 8, 8], strides = [1, 1, 1]} : vector<2x8x32xf32> to vector<2x8x8xf32>
    %239 = vector.extract_strided_slice %198 {offsets = [0, 0, 8], sizes = [2, 16, 8], strides = [1, 1, 1]} : vector<2x16x32xf32> to vector<2x16x8xf32>
    %cst_103 = arith.constant dense<0.000000e+00> : vector<2x8x16xf32>
    %240 = tpu.matmul %238, %239, %cst_103 {dimension_numbers = #tpu.dot_dimension_numbers<[2], [2], [1], [1], [0, 0, 0, 1, 1, 1], [0], [0]>} : vector<2x8x8xf32>, vector<2x16x8xf32>, vector<2x8x16xf32> -> vector<2x8x16xf32>
    %cst_104 = arith.constant dense<0xFF800000> : vector<2x8xf32>
    %241 = vector.multi_reduction <maximumf>, %240, %cst_104 [2] : vector<2x8x16xf32> to vector<2x8xf32>
    %242 = vector.shape_cast %241 : vector<2x8xf32> to vector<2x8x1xf32>
    %243 = vector.broadcast %242 : vector<2x8x1xf32> to vector<2x8x16xf32>
    %244 = arith.subf %240, %243 : vector<2x8x16xf32>
    %245 = math.exp %244 : vector<2x8x16xf32>
    %cst_105 = arith.constant dense<0.000000e+00> : vector<2x8xf32>
    %246 = vector.multi_reduction <add>, %245, %cst_105 [2] : vector<2x8x16xf32> to vector<2x8xf32>
    %247 = vector.shape_cast %246 : vector<2x8xf32> to vector<2x8x1xf32>
    %248 = tpu.reciprocal %247 {approx = true} : vector<2x8x1xf32> -> vector<2x8x1xf32>
    %249 = arith.mulf %247, %248 : vector<2x8x1xf32>
    %cst_106 = arith.constant 2.000000e+00 : f32
    %250 = vector.broadcast %cst_106 : f32 to vector<2x8x1xf32>
    %251 = arith.subf %250, %249 : vector<2x8x1xf32>
    %252 = arith.mulf %248, %251 : vector<2x8x1xf32>
    %253 = vector.extract_strided_slice %214 {offsets = [0, 0, 8], sizes = [2, 16, 8], strides = [1, 1, 1]} : vector<2x16x32xf32> to vector<2x16x8xf32>
    %cst_107 = arith.constant dense<0.000000e+00> : vector<2x8x8xf32>
    %254 = tpu.matmul %245, %253, %cst_107 {dimension_numbers = #tpu.dot_dimension_numbers<[2], [1], [1], [2], [0, 0, 0, 1, 1, 2], [0], [0]>} : vector<2x8x16xf32>, vector<2x16x8xf32>, vector<2x8x8xf32> -> vector<2x8x8xf32>
    %255 = vector.broadcast %252 : vector<2x8x1xf32> to vector<2x8x8xf32>
    %256 = arith.mulf %254, %255 : vector<2x8x8xf32>
    %257 = vector.extract_strided_slice %182 {offsets = [0, 0, 16], sizes = [2, 8, 8], strides = [1, 1, 1]} : vector<2x8x32xf32> to vector<2x8x8xf32>
    %258 = vector.extract_strided_slice %198 {offsets = [0, 0, 16], sizes = [2, 16, 8], strides = [1, 1, 1]} : vector<2x16x32xf32> to vector<2x16x8xf32>
    %cst_108 = arith.constant dense<0.000000e+00> : vector<2x8x16xf32>
    %259 = tpu.matmul %257, %258, %cst_108 {dimension_numbers = #tpu.dot_dimension_numbers<[2], [2], [1], [1], [0, 0, 0, 1, 1, 1], [0], [0]>} : vector<2x8x8xf32>, vector<2x16x8xf32>, vector<2x8x16xf32> -> vector<2x8x16xf32>
    %cst_109 = arith.constant dense<0xFF800000> : vector<2x8xf32>
    %260 = vector.multi_reduction <maximumf>, %259, %cst_109 [2] : vector<2x8x16xf32> to vector<2x8xf32>
    %261 = vector.shape_cast %260 : vector<2x8xf32> to vector<2x8x1xf32>
    %262 = vector.broadcast %261 : vector<2x8x1xf32> to vector<2x8x16xf32>
    %263 = arith.subf %259, %262 : vector<2x8x16xf32>
    %264 = math.exp %263 : vector<2x8x16xf32>
    %cst_110 = arith.constant dense<0.000000e+00> : vector<2x8xf32>
    %265 = vector.multi_reduction <add>, %264, %cst_110 [2] : vector<2x8x16xf32> to vector<2x8xf32>
    %266 = vector.shape_cast %265 : vector<2x8xf32> to vector<2x8x1xf32>
    %267 = tpu.reciprocal %266 {approx = true} : vector<2x8x1xf32> -> vector<2x8x1xf32>
    %268 = arith.mulf %266, %267 : vector<2x8x1xf32>
    %cst_111 = arith.constant 2.000000e+00 : f32
    %269 = vector.broadcast %cst_111 : f32 to vector<2x8x1xf32>
    %270 = arith.subf %269, %268 : vector<2x8x1xf32>
    %271 = arith.mulf %267, %270 : vector<2x8x1xf32>
    %272 = vector.extract_strided_slice %214 {offsets = [0, 0, 16], sizes = [2, 16, 8], strides = [1, 1, 1]} : vector<2x16x32xf32> to vector<2x16x8xf32>
    %cst_112 = arith.constant dense<0.000000e+00> : vector<2x8x8xf32>
    %273 = tpu.matmul %264, %272, %cst_112 {dimension_numbers = #tpu.dot_dimension_numbers<[2], [1], [1], [2], [0, 0, 0, 1, 1, 2], [0], [0]>} : vector<2x8x16xf32>, vector<2x16x8xf32>, vector<2x8x8xf32> -> vector<2x8x8xf32>
    %274 = vector.broadcast %271 : vector<2x8x1xf32> to vector<2x8x8xf32>
    %275 = arith.mulf %273, %274 : vector<2x8x8xf32>
    %276 = vector.extract_strided_slice %182 {offsets = [0, 0, 24], sizes = [2, 8, 8], strides = [1, 1, 1]} : vector<2x8x32xf32> to vector<2x8x8xf32>
    %277 = vector.extract_strided_slice %198 {offsets = [0, 0, 24], sizes = [2, 16, 8], strides = [1, 1, 1]} : vector<2x16x32xf32> to vector<2x16x8xf32>
    %cst_113 = arith.constant dense<0.000000e+00> : vector<2x8x16xf32>
    %278 = tpu.matmul %276, %277, %cst_113 {dimension_numbers = #tpu.dot_dimension_numbers<[2], [2], [1], [1], [0, 0, 0, 1, 1, 1], [0], [0]>} : vector<2x8x8xf32>, vector<2x16x8xf32>, vector<2x8x16xf32> -> vector<2x8x16xf32>
    %cst_114 = arith.constant dense<0xFF800000> : vector<2x8xf32>
    %279 = vector.multi_reduction <maximumf>, %278, %cst_114 [2] : vector<2x8x16xf32> to vector<2x8xf32>
    %280 = vector.shape_cast %279 : vector<2x8xf32> to vector<2x8x1xf32>
    %281 = vector.broadcast %280 : vector<2x8x1xf32> to vector<2x8x16xf32>
    %282 = arith.subf %278, %281 : vector<2x8x16xf32>
    %283 = math.exp %282 : vector<2x8x16xf32>
    %cst_115 = arith.constant dense<0.000000e+00> : vector<2x8xf32>
    %284 = vector.multi_reduction <add>, %283, %cst_115 [2] : vector<2x8x16xf32> to vector<2x8xf32>
    %285 = vector.shape_cast %284 : vector<2x8xf32> to vector<2x8x1xf32>
    %286 = tpu.reciprocal %285 {approx = true} : vector<2x8x1xf32> -> vector<2x8x1xf32>
    %287 = arith.mulf %285, %286 : vector<2x8x1xf32>
    %cst_116 = arith.constant 2.000000e+00 : f32
    %288 = vector.broadcast %cst_116 : f32 to vector<2x8x1xf32>
    %289 = arith.subf %288, %287 : vector<2x8x1xf32>
    %290 = arith.mulf %286, %289 : vector<2x8x1xf32>
    %291 = vector.extract_strided_slice %214 {offsets = [0, 0, 24], sizes = [2, 16, 8], strides = [1, 1, 1]} : vector<2x16x32xf32> to vector<2x16x8xf32>
    %cst_117 = arith.constant dense<0.000000e+00> : vector<2x8x8xf32>
    %292 = tpu.matmul %283, %291, %cst_117 {dimension_numbers = #tpu.dot_dimension_numbers<[2], [1], [1], [2], [0, 0, 0, 1, 1, 2], [0], [0]>} : vector<2x8x16xf32>, vector<2x16x8xf32>, vector<2x8x8xf32> -> vector<2x8x8xf32>
    %293 = vector.broadcast %290 : vector<2x8x1xf32> to vector<2x8x8xf32>
    %294 = arith.mulf %292, %293 : vector<2x8x8xf32>
    %295 = tpu.concatenate %237, %256, %275, %294 in 2 : vector<2x8x8xf32>, vector<2x8x8xf32>, vector<2x8x8xf32>, vector<2x8x8xf32> -> vector<2x8x32xf32>
    %296 = vector.extract_strided_slice %295 {offsets = [0, 0, 0], sizes = [1, 8, 32], strides = [1, 1, 1]} : vector<2x8x32xf32> to vector<1x8x32xf32>
    %297 = vector.shape_cast %296 : vector<1x8x32xf32> to vector<8x32xf32>
    %cst_118 = arith.constant dense<0.000000e+00> : vector<8x32xf32>
    %298 = tpu.matmul %297, %216, %cst_118 {dimension_numbers = #tpu.dot_dimension_numbers<[1], [0], [0], [1], [0, 0, 1, 1], [], []>} : vector<8x32xf32>, vector<32x32xf32>, vector<8x32xf32> -> vector<8x32xf32>
    %299 = vector.extract_strided_slice %295 {offsets = [1, 0, 0], sizes = [1, 8, 32], strides = [1, 1, 1]} : vector<2x8x32xf32> to vector<1x8x32xf32>
    %300 = vector.shape_cast %299 : vector<1x8x32xf32> to vector<8x32xf32>
    %cst_119 = arith.constant dense<0.000000e+00> : vector<8x32xf32>
    %301 = tpu.matmul %300, %216, %cst_119 {dimension_numbers = #tpu.dot_dimension_numbers<[1], [0], [0], [1], [0, 0, 1, 1], [], []>} : vector<8x32xf32>, vector<32x32xf32>, vector<8x32xf32> -> vector<8x32xf32>
    %302 = vector.shape_cast %298 : vector<8x32xf32> to vector<1x8x32xf32>
    %303 = vector.shape_cast %301 : vector<8x32xf32> to vector<1x8x32xf32>
    %304 = tpu.concatenate %302, %303 in 0 : vector<1x8x32xf32>, vector<1x8x32xf32> -> vector<2x8x32xf32>
    %305 = vector.shape_cast %218 : vector<1x32xf32> to vector<1x1x32xf32>
    %306 = vector.broadcast %305 : vector<1x1x32xf32> to vector<2x8x32xf32>
    %307 = arith.addf %304, %306 : vector<2x8x32xf32>
    %308 = arith.addf %165, %307 : vector<2x8x32xf32>
    %309 = vector.extract_strided_slice %8 {offsets = [1, 0, 0], sizes = [1, 1, 32], strides = [1, 1, 1]} : vector<3x1x32xf32> to vector<1x1x32xf32>
    %310 = vector.shape_cast %309 : vector<1x1x32xf32> to vector<1x32xf32>
    %311 = vector.extract_strided_slice %10 {offsets = [1, 0, 0], sizes = [1, 1, 32], strides = [1, 1, 1]} : vector<3x1x32xf32> to vector<1x1x32xf32>
    %312 = vector.shape_cast %311 : vector<1x1x32xf32> to vector<1x32xf32>
    %cst_120 = arith.constant dense<0.000000e+00> : vector<2x8xf32>
    %313 = vector.multi_reduction <add>, %308, %cst_120 [2] : vector<2x8x32xf32> to vector<2x8xf32>
    %314 = vector.shape_cast %313 : vector<2x8xf32> to vector<2x8x1xf32>
    %cst_121 = arith.constant 3.200000e+01 : f32
    %315 = vector.broadcast %cst_121 : f32 to vector<2x8x1xf32>
    %316 = arith.divf %314, %315 : vector<2x8x1xf32>
    %317 = vector.broadcast %316 : vector<2x8x1xf32> to vector<2x8x32xf32>
    %318 = arith.subf %308, %317 : vector<2x8x32xf32>
    %319 = arith.mulf %318, %318 : vector<2x8x32xf32>
    %cst_122 = arith.constant dense<0.000000e+00> : vector<2x8xf32>
    %320 = vector.multi_reduction <add>, %319, %cst_122 [2] : vector<2x8x32xf32> to vector<2x8xf32>
    %321 = vector.shape_cast %320 : vector<2x8xf32> to vector<2x8x1xf32>
    %cst_123 = arith.constant 3.200000e+01 : f32
    %322 = vector.broadcast %cst_123 : f32 to vector<2x8x1xf32>
    %323 = arith.divf %321, %322 : vector<2x8x1xf32>
    %cst_124 = arith.constant 9.99999974E-6 : f32
    %324 = vector.broadcast %cst_124 : f32 to vector<2x8x1xf32>
    %325 = arith.addf %323, %324 : vector<2x8x1xf32>
    %326 = math.rsqrt %325 : vector<2x8x1xf32>
    %327 = vector.broadcast %326 : vector<2x8x1xf32> to vector<2x8x32xf32>
    %328 = arith.mulf %318, %327 : vector<2x8x32xf32>
    %329 = vector.shape_cast %310 : vector<1x32xf32> to vector<1x1x32xf32>
    %330 = vector.broadcast %329 : vector<1x1x32xf32> to vector<2x8x32xf32>
    %331 = arith.mulf %328, %330 : vector<2x8x32xf32>
    %332 = vector.shape_cast %312 : vector<1x32xf32> to vector<1x1x32xf32>
    %333 = vector.broadcast %332 : vector<1x1x32xf32> to vector<2x8x32xf32>
    %334 = arith.addf %331, %333 : vector<2x8x32xf32>
    %c0_125 = arith.constant 0 : index
    %c0_126 = arith.constant 0 : index
    %c0_127 = arith.constant 0 : index
    %335 = vector.load %arg19[%c0_125, %c0_126, %c0_127] : memref<1x32x64xf32, #tpu.memory_space<vmem>>, vector<1x32x64xf32>
    %336 = vector.shape_cast %335 : vector<1x32x64xf32> to vector<32x64xf32>
    %c0_128 = arith.constant 0 : index
    %c0_129 = arith.constant 0 : index
    %c0_130 = arith.constant 0 : index
    %337 = vector.load %arg20[%c0_128, %c0_129, %c0_130] : memref<1x1x64xf32, #tpu.memory_space<vmem>>, vector<1x1x64xf32>
    %338 = vector.shape_cast %337 : vector<1x1x64xf32> to vector<1x64xf32>
    %339 = vector.extract_strided_slice %334 {offsets = [0, 0, 0], sizes = [1, 8, 32], strides = [1, 1, 1]} : vector<2x8x32xf32> to vector<1x8x32xf32>
    %340 = vector.shape_cast %339 : vector<1x8x32xf32> to vector<8x32xf32>
    %cst_131 = arith.constant dense<0.000000e+00> : vector<8x64xf32>
    %341 = tpu.matmul %340, %336, %cst_131 {dimension_numbers = #tpu.dot_dimension_numbers<[1], [0], [0], [1], [0, 0, 1, 1], [], []>} : vector<8x32xf32>, vector<32x64xf32>, vector<8x64xf32> -> vector<8x64xf32>
    %342 = vector.extract_strided_slice %334 {offsets = [1, 0, 0], sizes = [1, 8, 32], strides = [1, 1, 1]} : vector<2x8x32xf32> to vector<1x8x32xf32>
    %343 = vector.shape_cast %342 : vector<1x8x32xf32> to vector<8x32xf32>
    %cst_132 = arith.constant dense<0.000000e+00> : vector<8x64xf32>
    %344 = tpu.matmul %343, %336, %cst_132 {dimension_numbers = #tpu.dot_dimension_numbers<[1], [0], [0], [1], [0, 0, 1, 1], [], []>} : vector<8x32xf32>, vector<32x64xf32>, vector<8x64xf32> -> vector<8x64xf32>
    %345 = vector.shape_cast %341 : vector<8x64xf32> to vector<1x8x64xf32>
    %346 = vector.shape_cast %344 : vector<8x64xf32> to vector<1x8x64xf32>
    %347 = tpu.concatenate %345, %346 in 0 : vector<1x8x64xf32>, vector<1x8x64xf32> -> vector<2x8x64xf32>
    %348 = vector.shape_cast %338 : vector<1x64xf32> to vector<1x1x64xf32>
    %349 = vector.broadcast %348 : vector<1x1x64xf32> to vector<2x8x64xf32>
    %350 = arith.addf %347, %349 : vector<2x8x64xf32>
    %cst_133 = arith.constant 0.000000e+00 : f32
    %351 = vector.broadcast %cst_133 : f32 to vector<2x8x64xf32>
    %352 = arith.maximumf %350, %351 : vector<2x8x64xf32>
    %c0_134 = arith.constant 0 : index
    %c0_135 = arith.constant 0 : index
    %c0_136 = arith.constant 0 : index
    %353 = vector.load %arg21[%c0_134, %c0_135, %c0_136] : memref<1x64x32xf32, #tpu.memory_space<vmem>>, vector<1x64x32xf32>
    %354 = vector.shape_cast %353 : vector<1x64x32xf32> to vector<64x32xf32>
    %c0_137 = arith.constant 0 : index
    %c0_138 = arith.constant 0 : index
    %c0_139 = arith.constant 0 : index
    %355 = vector.load %arg22[%c0_137, %c0_138, %c0_139] : memref<1x1x32xf32, #tpu.memory_space<vmem>>, vector<1x1x32xf32>
    %356 = vector.shape_cast %355 : vector<1x1x32xf32> to vector<1x32xf32>
    %357 = vector.extract_strided_slice %352 {offsets = [0, 0, 0], sizes = [1, 8, 64], strides = [1, 1, 1]} : vector<2x8x64xf32> to vector<1x8x64xf32>
    %358 = vector.shape_cast %357 : vector<1x8x64xf32> to vector<8x64xf32>
    %cst_140 = arith.constant dense<0.000000e+00> : vector<8x32xf32>
    %359 = tpu.matmul %358, %354, %cst_140 {dimension_numbers = #tpu.dot_dimension_numbers<[1], [0], [0], [1], [0, 0, 1, 1], [], []>} : vector<8x64xf32>, vector<64x32xf32>, vector<8x32xf32> -> vector<8x32xf32>
    %360 = vector.extract_strided_slice %352 {offsets = [1, 0, 0], sizes = [1, 8, 64], strides = [1, 1, 1]} : vector<2x8x64xf32> to vector<1x8x64xf32>
    %361 = vector.shape_cast %360 : vector<1x8x64xf32> to vector<8x64xf32>
    %cst_141 = arith.constant dense<0.000000e+00> : vector<8x32xf32>
    %362 = tpu.matmul %361, %354, %cst_141 {dimension_numbers = #tpu.dot_dimension_numbers<[1], [0], [0], [1], [0, 0, 1, 1], [], []>} : vector<8x64xf32>, vector<64x32xf32>, vector<8x32xf32> -> vector<8x32xf32>
    %363 = vector.shape_cast %359 : vector<8x32xf32> to vector<1x8x32xf32>
    %364 = vector.shape_cast %362 : vector<8x32xf32> to vector<1x8x32xf32>
    %365 = tpu.concatenate %363, %364 in 0 : vector<1x8x32xf32>, vector<1x8x32xf32> -> vector<2x8x32xf32>
    %366 = vector.shape_cast %356 : vector<1x32xf32> to vector<1x1x32xf32>
    %367 = vector.broadcast %366 : vector<1x1x32xf32> to vector<2x8x32xf32>
    %368 = arith.addf %365, %367 : vector<2x8x32xf32>
    %369 = arith.addf %334, %368 : vector<2x8x32xf32>
    %370 = vector.extract_strided_slice %8 {offsets = [2, 0, 0], sizes = [1, 1, 32], strides = [1, 1, 1]} : vector<3x1x32xf32> to vector<1x1x32xf32>
    %371 = vector.shape_cast %370 : vector<1x1x32xf32> to vector<1x32xf32>
    %372 = vector.extract_strided_slice %10 {offsets = [2, 0, 0], sizes = [1, 1, 32], strides = [1, 1, 1]} : vector<3x1x32xf32> to vector<1x1x32xf32>
    %373 = vector.shape_cast %372 : vector<1x1x32xf32> to vector<1x32xf32>
    %cst_142 = arith.constant dense<0.000000e+00> : vector<2x8xf32>
    %374 = vector.multi_reduction <add>, %369, %cst_142 [2] : vector<2x8x32xf32> to vector<2x8xf32>
    %375 = vector.shape_cast %374 : vector<2x8xf32> to vector<2x8x1xf32>
    %cst_143 = arith.constant 3.200000e+01 : f32
    %376 = vector.broadcast %cst_143 : f32 to vector<2x8x1xf32>
    %377 = arith.divf %375, %376 : vector<2x8x1xf32>
    %378 = vector.broadcast %377 : vector<2x8x1xf32> to vector<2x8x32xf32>
    %379 = arith.subf %369, %378 : vector<2x8x32xf32>
    %380 = arith.mulf %379, %379 : vector<2x8x32xf32>
    %cst_144 = arith.constant dense<0.000000e+00> : vector<2x8xf32>
    %381 = vector.multi_reduction <add>, %380, %cst_144 [2] : vector<2x8x32xf32> to vector<2x8xf32>
    %382 = vector.shape_cast %381 : vector<2x8xf32> to vector<2x8x1xf32>
    %cst_145 = arith.constant 3.200000e+01 : f32
    %383 = vector.broadcast %cst_145 : f32 to vector<2x8x1xf32>
    %384 = arith.divf %382, %383 : vector<2x8x1xf32>
    %cst_146 = arith.constant 9.99999974E-6 : f32
    %385 = vector.broadcast %cst_146 : f32 to vector<2x8x1xf32>
    %386 = arith.addf %384, %385 : vector<2x8x1xf32>
    %387 = math.rsqrt %386 : vector<2x8x1xf32>
    %388 = vector.broadcast %387 : vector<2x8x1xf32> to vector<2x8x32xf32>
    %389 = arith.mulf %379, %388 : vector<2x8x32xf32>
    %390 = vector.shape_cast %371 : vector<1x32xf32> to vector<1x1x32xf32>
    %391 = vector.broadcast %390 : vector<1x1x32xf32> to vector<2x8x32xf32>
    %392 = arith.mulf %389, %391 : vector<2x8x32xf32>
    %393 = vector.shape_cast %373 : vector<1x32xf32> to vector<1x1x32xf32>
    %394 = vector.broadcast %393 : vector<1x1x32xf32> to vector<2x8x32xf32>
    %395 = arith.addf %392, %394 : vector<2x8x32xf32>
    %c0_147 = arith.constant 0 : index
    %c0_148 = arith.constant 0 : index
    %c0_149 = arith.constant 0 : index
    %396 = vector.load %arg28[%c0_147, %c0_148, %c0_149] : memref<2x8x32xf32, #tpu.memory_space<vmem>>, vector<2x8x32xf32>
    tpu.vector_store %arg28[%c0_147, %c0_148, %c0_149], %395 {strides = array<i32>} : memref<2x8x32xf32, #tpu.memory_space<vmem>>, vector<2x8x32xf32>,
    %c0_150 = arith.constant 0 : index
    %c0_151 = arith.constant 0 : index
    %397 = vector.load %arg25[%c0_150, %c0_151] : memref<1x32xf32, #tpu.memory_space<vmem>>, vector<1x32xf32>
    %c0_152 = arith.constant 0 : index
    %c0_153 = arith.constant 0 : index
    %398 = vector.load %arg26[%c0_152, %c0_153] : memref<1x32xf32, #tpu.memory_space<vmem>>, vector<1x32xf32>
    %c1_i32 = arith.constant 1 : i32
    %399 = arith.cmpi eq, %arg0, %c1_i32 : i32
    %400 = arith.extui %399 : i1 to i32
    %c0_i32_154 = arith.constant 0 : i32
    %401 = arith.cmpi ne, %400, %c0_i32_154 : i32
    scf.if %401 {
      %cst_155 = arith.constant dense<0.000000e+00> : vector<2x8xf32>
      %402 = vector.multi_reduction <add>, %395, %cst_155 [2] : vector<2x8x32xf32> to vector<2x8xf32>
      %403 = vector.shape_cast %402 : vector<2x8xf32> to vector<2x8x1xf32>
      %cst_156 = arith.constant 3.200000e+01 : f32
      %404 = vector.broadcast %cst_156 : f32 to vector<2x8x1xf32>
      %405 = arith.divf %403, %404 : vector<2x8x1xf32>
      %406 = vector.broadcast %405 : vector<2x8x1xf32> to vector<2x8x32xf32>
      %407 = arith.subf %395, %406 : vector<2x8x32xf32>
      %408 = arith.mulf %407, %407 : vector<2x8x32xf32>
      %cst_157 = arith.constant dense<0.000000e+00> : vector<2x8xf32>
      %409 = vector.multi_reduction <add>, %408, %cst_157 [2] : vector<2x8x32xf32> to vector<2x8xf32>
      %410 = vector.shape_cast %409 : vector<2x8xf32> to vector<2x8x1xf32>
      %cst_158 = arith.constant 3.200000e+01 : f32
      %411 = vector.broadcast %cst_158 : f32 to vector<2x8x1xf32>
      %412 = arith.divf %410, %411 : vector<2x8x1xf32>
      %cst_159 = arith.constant 9.99999974E-6 : f32
      %413 = vector.broadcast %cst_159 : f32 to vector<2x8x1xf32>
      %414 = arith.addf %412, %413 : vector<2x8x1xf32>
      %415 = math.rsqrt %414 : vector<2x8x1xf32>
      %416 = vector.broadcast %415 : vector<2x8x1xf32> to vector<2x8x32xf32>
      %417 = arith.mulf %407, %416 : vector<2x8x32xf32>
      %418 = vector.shape_cast %397 : vector<1x32xf32> to vector<1x1x32xf32>
      %419 = vector.broadcast %418 : vector<1x1x32xf32> to vector<2x8x32xf32>
      %420 = arith.mulf %417, %419 : vector<2x8x32xf32>
      %421 = vector.shape_cast %398 : vector<1x32xf32> to vector<1x1x32xf32>
      %422 = vector.broadcast %421 : vector<1x1x32xf32> to vector<2x8x32xf32>
      %423 = arith.addf %420, %422 : vector<2x8x32xf32>
      %424 = tpu.iota {dimensions = array<i32: 0>} : vector<8x32xi32>
      %c0_i32_160 = arith.constant 0 : i32
      %425 = vector.broadcast %c0_i32_160 : i32 to vector<8x32xi32>
      %426 = arith.cmpi eq, %424, %425 : vector<8x32xi32>
      %427 = vector.shape_cast %426 : vector<8x32xi1> to vector<1x8x32xi1>
      %428 = vector.broadcast %427 : vector<1x8x32xi1> to vector<2x8x32xi1>
      %429 = arith.select %428, %423, %395 : vector<2x8x32xi1>, vector<2x8x32xf32>
      %c0_161 = arith.constant 0 : index
      %c0_162 = arith.constant 0 : index
      %c0_163 = arith.constant 0 : index
      %430 = vector.load %arg27[%c0_161, %c0_162, %c0_163] : memref<2x8x32xf32, #tpu.memory_space<vmem>>, vector<2x8x32xf32>
      tpu.vector_store %arg27[%c0_161, %c0_162, %c0_163], %429 {strides = array<i32>} : memref<2x8x32xf32, #tpu.memory_space<vmem>>, vector<2x8x32xf32>,
    } else {
    }
    return
  }
  func.func @transform_0(%arg0: i32) -> (i32, i32, i32) {
    %c0_i32 = arith.constant 0 : i32
    %c0_i32_0 = arith.constant 0 : i32
    %c0_i32_1 = arith.constant 0 : i32
    %c0_i32_2 = arith.constant 0 : i32
    return %c0_i32, %c0_i32_0, %c0_i32_1 : i32, i32, i32
  }
  func.func @transform_1(%arg0: i32) -> (i32, i32, i32) {
    %c0_i32 = arith.constant 0 : i32
    %c0_i32_0 = arith.constant 0 : i32
    %c0_i32_1 = arith.constant 0 : i32
    %c0_i32_2 = arith.constant 0 : i32
    return %c0_i32, %c0_i32_0, %c0_i32_1 : i32, i32, i32
  }
  func.func @transform_2(%arg0: i32) -> (i32, i32, i32) {
    %c0_i32 = arith.constant 0 : i32
    %c0_i32_0 = arith.constant 0 : i32
    %c0_i32_1 = arith.constant 0 : i32
    %c0_i32_2 = arith.constant 0 : i32
    return %c0_i32, %c0_i32_0, %c0_i32_1 : i32, i32, i32
  }
  func.func @transform_3(%arg0: i32) -> (i32, i32, i32) {
    %c0_i32 = arith.constant 0 : i32
    %c0_i32_0 = arith.constant 0 : i32
    %c0_i32_1 = arith.constant 0 : i32
    %c0_i32_2 = arith.constant 0 : i32
    return %c0_i32, %c0_i32_0, %c0_i32_1 : i32, i32, i32
  }
  func.func @transform_4(%arg0: i32) -> (i32, i32, i32) {
    %c0_i32 = arith.constant 0 : i32
    %c0_i32_0 = arith.constant 0 : i32
    %c0_i32_1 = arith.constant 0 : i32
    return %arg0, %c0_i32, %c0_i32_0 : i32, i32, i32
  }
  func.func @transform_5(%arg0: i32) -> (i32, i32, i32) {
    %c0_i32 = arith.constant 0 : i32
    %c0_i32_0 = arith.constant 0 : i32
    %c0_i32_1 = arith.constant 0 : i32
    return %arg0, %c0_i32, %c0_i32_0 : i32, i32, i32
  }
  func.func @transform_6(%arg0: i32) -> (i32, i32, i32) {
    %c0_i32 = arith.constant 0 : i32
    %c0_i32_0 = arith.constant 0 : i32
    %c0_i32_1 = arith.constant 0 : i32
    return %arg0, %c0_i32, %c0_i32_0 : i32, i32, i32
  }
  func.func @transform_7(%arg0: i32) -> (i32, i32, i32) {
    %c0_i32 = arith.constant 0 : i32
    %c0_i32_0 = arith.constant 0 : i32
    %c0_i32_1 = arith.constant 0 : i32
    return %arg0, %c0_i32, %c0_i32_0 : i32, i32, i32
  }
  func.func @transform_8(%arg0: i32) -> (i32, i32, i32) {
    %c0_i32 = arith.constant 0 : i32
    %c0_i32_0 = arith.constant 0 : i32
    %c0_i32_1 = arith.constant 0 : i32
    return %arg0, %c0_i32, %c0_i32_0 : i32, i32, i32
  }
  func.func @transform_9(%arg0: i32) -> (i32, i32, i32) {
    %c0_i32 = arith.constant 0 : i32
    %c0_i32_0 = arith.constant 0 : i32
    %c0_i32_1 = arith.constant 0 : i32
    return %arg0, %c0_i32, %c0_i32_0 : i32, i32, i32
  }
  func.func @transform_10(%arg0: i32) -> (i32, i32, i32) {
    %c0_i32 = arith.constant 0 : i32
    %c0_i32_0 = arith.constant 0 : i32
    %c0_i32_1 = arith.constant 0 : i32
    return %arg0, %c0_i32, %c0_i32_0 : i32, i32, i32
  }
  func.func @transform_11(%arg0: i32) -> (i32, i32, i32) {
    %c0_i32 = arith.constant 0 : i32
    %c0_i32_0 = arith.constant 0 : i32
    %c0_i32_1 = arith.constant 0 : i32
    return %arg0, %c0_i32, %c0_i32_0 : i32, i32, i32
  }
  func.func @transform_12(%arg0: i32) -> (i32, i32, i32) {
    %c0_i32 = arith.constant 0 : i32
    %c0_i32_0 = arith.constant 0 : i32
    %c0_i32_1 = arith.constant 0 : i32
    return %arg0, %c0_i32, %c0_i32_0 : i32, i32, i32
  }
  func.func @transform_13(%arg0: i32) -> (i32, i32, i32) {
    %c0_i32 = arith.constant 0 : i32
    %c0_i32_0 = arith.constant 0 : i32
    %c0_i32_1 = arith.constant 0 : i32
    return %arg0, %c0_i32, %c0_i32_0 : i32, i32, i32
  }
  func.func @transform_14(%arg0: i32) -> (i32, i32, i32) {
    %c0_i32 = arith.constant 0 : i32
    %c0_i32_0 = arith.constant 0 : i32
    %c0_i32_1 = arith.constant 0 : i32
    return %arg0, %c0_i32, %c0_i32_0 : i32, i32, i32
  }
  func.func @transform_15(%arg0: i32) -> (i32, i32, i32) {
    %c0_i32 = arith.constant 0 : i32
    %c0_i32_0 = arith.constant 0 : i32
    %c0_i32_1 = arith.constant 0 : i32
    return %arg0, %c0_i32, %c0_i32_0 : i32, i32, i32
  }
  func.func @transform_16(%arg0: i32) -> (i32, i32, i32) {
    %c0_i32 = arith.constant 0 : i32
    %c0_i32_0 = arith.constant 0 : i32
    %c0_i32_1 = arith.constant 0 : i32
    return %arg0, %c0_i32, %c0_i32_0 : i32, i32, i32
  }
  func.func @transform_17(%arg0: i32) -> (i32, i32, i32) {
    %c0_i32 = arith.constant 0 : i32
    %c0_i32_0 = arith.constant 0 : i32
    %c0_i32_1 = arith.constant 0 : i32
    return %arg0, %c0_i32, %c0_i32_0 : i32, i32, i32
  }
  func.func @transform_18(%arg0: i32) -> (i32, i32, i32) {
    %c0_i32 = arith.constant 0 : i32
    %c0_i32_0 = arith.constant 0 : i32
    %c0_i32_1 = arith.constant 0 : i32
    return %arg0, %c0_i32, %c0_i32_0 : i32, i32, i32
  }
  func.func @transform_19(%arg0: i32) -> (i32, i32, i32) {
    %c0_i32 = arith.constant 0 : i32
    %c0_i32_0 = arith.constant 0 : i32
    %c0_i32_1 = arith.constant 0 : i32
    return %arg0, %c0_i32, %c0_i32_0 : i32, i32, i32
  }
  func.func @transform_20(%arg0: i32) -> (i32, i32, i32) {
    %c0_i32 = arith.constant 0 : i32
    %c0_i32_0 = arith.constant 0 : i32
    %c0_i32_1 = arith.constant 0 : i32
    return %arg0, %c0_i32, %c0_i32_0 : i32, i32, i32
  }
  func.func @transform_21(%arg0: i32) -> (i32, i32, i32) {
    %c0_i32 = arith.constant 0 : i32
    %c0_i32_0 = arith.constant 0 : i32
    %c0_i32_1 = arith.constant 0 : i32
    return %arg0, %c0_i32, %c0_i32_0 : i32, i32, i32
  }
  func.func @transform_22(%arg0: i32) -> (i32, i32, i32, i32) {
    %c0_i32 = arith.constant 0 : i32
    %c0_i32_0 = arith.constant 0 : i32
    %c0_i32_1 = arith.constant 0 : i32
    %c0_i32_2 = arith.constant 0 : i32
    return %arg0, %c0_i32, %c0_i32_0, %c0_i32_1 : i32, i32, i32, i32
  }
  func.func @transform_23(%arg0: i32) -> (i32, i32, i32, i32) {
    %c0_i32 = arith.constant 0 : i32
    %c0_i32_0 = arith.constant 0 : i32
    %c0_i32_1 = arith.constant 0 : i32
    %c0_i32_2 = arith.constant 0 : i32
    return %arg0, %c0_i32, %c0_i32_0, %c0_i32_1 : i32, i32, i32, i32
  }
  func.func @transform_24(%arg0: i32) -> (i32, i32) {
    %c0_i32 = arith.constant 0 : i32
    %c0_i32_0 = arith.constant 0 : i32
    %c0_i32_1 = arith.constant 0 : i32
    return %c0_i32, %c0_i32_0 : i32, i32
  }
  func.func @transform_25(%arg0: i32) -> (i32, i32) {
    %c0_i32 = arith.constant 0 : i32
    %c0_i32_0 = arith.constant 0 : i32
    %c0_i32_1 = arith.constant 0 : i32
    return %c0_i32, %c0_i32_0 : i32, i32
  }
  func.func @transform_26(%arg0: i32) -> (i32, i32, i32) {
    %c0_i32 = arith.constant 0 : i32
    %c0_i32_0 = arith.constant 0 : i32
    %c0_i32_1 = arith.constant 0 : i32
    %c0_i32_2 = arith.constant 0 : i32
    return %c0_i32, %c0_i32_0, %c0_i32_1 : i32, i32, i32
  }
}

</mosaic_0001>

<llo_original>
// kernel: tpu_custom_call.1
$region0: #{tpu_custom_call.1}
  #allocation0 [shape = 'u32[]', space=smem, size = 0x4, offset = 0x4, fixed_abs, tag = 'smem constant byte address 0x4 - core index']
  #allocation1 [shape = 'u32[144,128]{1,0:T(1,128)}', space=vmem, size = 0x12000, scoped, tag = 'internal scratch']
  #allocation2 [shape = 'f32[2,8,32]{2,1,0:T(8,128)}', space=vmem, size = 0x2000, scoped, tag = 'scratch operand']
  #allocation3 [shape = 'f32[2,16,32]{2,1,0:T(8,128)}', space=vmem, size = 0x4000, scoped, tag = 'scratch operand']
  %s0 = inlined_call_operand.hbm [shape: f32[2,8,32], index: 0, kind: input, shape index: {}]
  %s1 = inlined_call_operand.hbm [shape: f32[2,16,32], index: 1, kind: input, shape index: {}]
  %s2 = inlined_call_operand.hbm [shape: f32[2,16,32], index: 2, kind: input, shape index: {}]
  %s3 = inlined_call_operand.hbm [shape: f32[2,8,32], index: 3, kind: input, shape index: {}]
  %s4 = inlined_call_operand.vmem [shape: f32[2,32,64], index: 4, kind: input, shape index: {}]
  %s5 = inlined_call_operand.hbm [shape: f32[2,1,64], index: 5, kind: input, shape index: {}]
  %s6 = inlined_call_operand.vmem [shape: f32[2,32,32], index: 6, kind: input, shape index: {}]
  %s7 = inlined_call_operand.vmem [shape: f32[2,1,32], index: 7, kind: input, shape index: {}]
  %s8 = inlined_call_operand.vmem [shape: f32[2,32,32], index: 8, kind: input, shape index: {}]
  %s9 = inlined_call_operand.hbm [shape: f32[2,1,32], index: 9, kind: input, shape index: {}]
  %s10 = inlined_call_operand.hbm [shape: f32[2,32,32], index: 10, kind: input, shape index: {}]
  %s11 = inlined_call_operand.vmem [shape: f32[2,1,32], index: 11, kind: input, shape index: {}]
  %s12 = inlined_call_operand.hbm [shape: f32[2,32,32], index: 12, kind: input, shape index: {}]
  %s13 = inlined_call_operand.vmem [shape: f32[2,1,32], index: 13, kind: input, shape index: {}]
  %s14 = inlined_call_operand.hbm [shape: f32[2,32,32], index: 14, kind: input, shape index: {}]
  %s15 = inlined_call_operand.vmem [shape: f32[2,1,32], index: 15, kind: input, shape index: {}]
  %s16 = inlined_call_operand.hbm [shape: f32[2,32,32], index: 16, kind: input, shape index: {}]
  %s17 = inlined_call_operand.vmem [shape: f32[2,1,32], index: 17, kind: input, shape index: {}]
  %s18 = inlined_call_operand.hbm [shape: f32[2,32,64], index: 18, kind: input, shape index: {}]
  %s19 = inlined_call_operand.vmem [shape: f32[2,1,64], index: 19, kind: input, shape index: {}]
  %s20 = inlined_call_operand.vmem [shape: f32[2,64,32], index: 20, kind: input, shape index: {}]
  %s21 = inlined_call_operand.vmem [shape: f32[2,1,32], index: 21, kind: input, shape index: {}]
  %s22 = inlined_call_operand.vmem [shape: f32[2,3,1,32], index: 22, kind: input, shape index: {}]
  %s23 = inlined_call_operand.vmem [shape: f32[2,3,1,32], index: 23, kind: input, shape index: {}]
  %s24 = inlined_call_operand.vmem [shape: f32[1,32], index: 24, kind: input, shape index: {}]
  %s25 = inlined_call_operand.vmem [shape: f32[1,32], index: 25, kind: input, shape index: {}]
  %s26 = inlined_call_operand.hbm [shape: f32[2,8,32], index: 26, kind: output, shape index: {}]
  %s27 = sld [smem:[#allocation0]]
  $region189: #{tpu_custom_call.1} parent=0
    _
  %s29 = ssub.s32 1, %s27
  %s30 = scalar_select 0, %s29, %s27
  $region1: #{tpu_custom_call.1} parent=0
    #allocation4 [shape = 'u8[8192]{0}', space=vmem, size = 0x2000, scoped, tag = 'input window, operand 0, single buffered']
    #allocation5 [shape = 's32[2]{0}', space=sflag, size = 0x8, scoped, tag = 'scoped memory for tpu_custom_call.1']
    #allocation6 [shape = 's32[2]{0}', space=sflag, size = 0x8, scoped, tag = 'scoped memory for tpu_custom_call.1']
    #allocation7 [shape = 'u8[16384]{0}', space=vmem, size = 0x4000, scoped, tag = 'input window, operand 1, single buffered']
    #allocation8 [shape = 's32[1]{0}', space=sflag, size = 0x4, scoped, tag = 'scoped memory for tpu_custom_call.1']
    #allocation9 [shape = 'u8[16384]{0}', space=vmem, size = 0x4000, scoped, tag = 'input window, operand 2, single buffered']
    #allocation10 [shape = 'u8[8192]{0}', space=vmem, size = 0x2000, scoped, tag = 'input window, operand 3, single buffered']
    #allocation11 [shape = 's32[1]{0}', space=sflag, size = 0x4, scoped, tag = 'scoped memory for tpu_custom_call.1']
    #allocation12 [shape = 'u8[1024]{0}', space=vmem, size = 0x400, scoped, tag = 'input window, operand 5']
    #allocation13 [shape = 'u8[1024]{0}', space=vmem, size = 0x400, scoped, tag = 'input window, operand 9']
    #allocation14 [shape = 'u8[32768]{0}', space=vmem, size = 0x8000, scoped, tag = 'input window, operand 10']
    #allocation15 [shape = 'u8[32768]{0}', space=vmem, size = 0x8000, scoped, tag = 'input window, operand 12']
    #allocation16 [shape = 'u8[32768]{0}', space=vmem, size = 0x8000, scoped, tag = 'input window, operand 14']
    #allocation17 [shape = 'u8[32768]{0}', space=vmem, size = 0x8000, scoped, tag = 'input window, operand 16']
    #allocation18 [shape = 'u8[32768]{0}', space=vmem, size = 0x8000, scoped, tag = 'input window, operand 18']
    #allocation19 [shape = 'u8[8192]{0}', space=vmem, size = 0x2000, scoped, tag = 'output window, operand 0, single buffered']
    %31 = vsyncpa [#allocation5], 0
    %32 = vsyncpa [#allocation8], 0
    %33 = vsyncpa [#allocation11], 0
    %34 = vsyncpa [#allocation6], 0
    loop: start=0, step=1, limit=4
    $region2: #{tpu_custom_call.1} parent=1 // loop_pre_header
      _
    $region3: #{tpu_custom_call.1} parent=1 // loop_header
      %s36 = sphi 0, %s40
      %p37 = scmp.ge.s32.totalorder %s36, 4
      %s44 = sphi 0, %s44
      %s46 = sphi 0, %s44
      %s47 = sphi 0, %s46
      %s61 = sphi 0, %s47
      %s65 = sphi 0, %s65
      %s67 = sphi 0, %s65
      %s68 = sphi 0, %s67
      %s82 = sphi 0, %s68
      %s86 = sphi 0, %s86
      %s88 = sphi 0, %s86
      %s89 = sphi 0, %s88
      %s103 = sphi 0, %s89
      %s107 = sphi 0, %s107
      %s109 = sphi 0, %s107
      %s110 = sphi 0, %s109
      %s124 = sphi 0, %s110
      %s130 = sphi 0, %s132
      %s133 = sphi 0, %s130
      %s134 = sphi 0, %s133
      %s150 = sphi 0, %s134
      %s156 = sphi 0, %s158
      %s159 = sphi 0, %s156
      %s160 = sphi 0, %s159
      %s176 = sphi 0, %s160
      %s182 = sphi 0, %s184
      %s185 = sphi 0, %s182
      %s186 = sphi 0, %s185
      %s202 = sphi 0, %s186
      %s208 = sphi 0, %s210
      %s211 = sphi 0, %s208
      %s212 = sphi 0, %s211
      %s228 = sphi 0, %s212
      %s234 = sphi 0, %s236
      %s237 = sphi 0, %s234
      %s238 = sphi 0, %s237
      %s254 = sphi 0, %s238
      %s260 = sphi 0, %s262
      %s263 = sphi 0, %s260
      %s264 = sphi 0, %s263
      %s280 = sphi 0, %s264
      %s286 = sphi 0, %s288
      %s289 = sphi 0, %s286
      %s290 = sphi 0, %s289
      %s306 = sphi 0, %s290
      %s312 = sphi 0, %s314
      %s315 = sphi 0, %s312
      %s316 = sphi 0, %s315
      %s332 = sphi 0, %s316
      %s338 = sphi 0, %s340
      %s341 = sphi 0, %s338
      %s342 = sphi 0, %s341
      %s358 = sphi 0, %s342
      %s364 = sphi 0, %s366
      %s367 = sphi 0, %s364
      %s368 = sphi 0, %s367
      %s384 = sphi 0, %s368
      %s390 = sphi 0, %s392
      %s393 = sphi 0, %s390
      %s394 = sphi 0, %s393
      %s410 = sphi 0, %s394
      %s416 = sphi 0, %s418
      %s419 = sphi 0, %s416
      %s420 = sphi 0, %s419
      %s436 = sphi 0, %s420
      %s442 = sphi 0, %s444
      %s445 = sphi 0, %s442
      %s446 = sphi 0, %s445
      %s462 = sphi 0, %s446
      %s468 = sphi 0, %s470
      %s471 = sphi 0, %s468
      %s472 = sphi 0, %s471
      %s488 = sphi 0, %s472
      %s494 = sphi 0, %s496
      %s497 = sphi 0, %s494
      %s498 = sphi 0, %s497
      %s514 = sphi 0, %s498
      %s520 = sphi 0, %s522
      %s523 = sphi 0, %s520
      %s524 = sphi 0, %s523
      %s540 = sphi 0, %s524
      %s546 = sphi 0, %s548
      %s549 = sphi 0, %s546
      %s550 = sphi 0, %s549
      %s566 = sphi 0, %s550
      %s572 = sphi 0, %s574
      %s575 = sphi 0, %s572
      %s576 = sphi 0, %s575
      %s592 = sphi 0, %s576
      %s598 = sphi 0, %s600
      %s601 = sphi 0, %s598
      %s602 = sphi 0, %s601
      %s618 = sphi 0, %s602
      %s624 = sphi 0, %s626
      %s627 = sphi 0, %s624
      %s628 = sphi 0, %s627
      %s644 = sphi 0, %s628
      %s648 = sphi 0, %s648
      %s650 = sphi 0, %s648
      %s651 = sphi 0, %s650
      %s665 = sphi 0, %s651
      %s669 = sphi 0, %s669
      %s671 = sphi 0, %s669
      %s672 = sphi 0, %s671
      %s686 = sphi 0, %s672
      %s690 = sphi 0, %s690
      %s692 = sphi 0, %s690
      %s693 = sphi 0, %s692
      %s707 = sphi 0, %s693
    $region4: #{tpu_custom_call.1} parent=1 // loop_header_branch
      %39 = sbr.rel (%p37) target = $region8
    $region5: #{tpu_custom_call.1} parent=1 // loop_body
      %s41 = ssub.s32 %s36, 1
      %s42 = ssub.s32 %s36, 2
      %s43 = sadd.s32 %s36, 1
      %s45 = sadd.s32 %s44, 1
      %p48 = scmp.eq.s32.totalorder %s36, 1
      %p49 = scmp.ne.s32.totalorder %s44, %s46
      %p50 = scmp.eq.s32.totalorder %s36, 0
      %p51 = por %p49, %p50
      %p52 = scmp.ne.s32.totalorder %s44, %s46
      %p53 = scmp.eq.s32.totalorder %s41, 1
      %p54 = por %p52, %p53
      %p55 = scmp.ne.s32.totalorder %s46, %s47
      %p56 = scmp.eq.s32.totalorder %s41, 0
      %p57 = por %p55, %p56
      %p58 = scmp.ne.s32.totalorder %s46, %s47
      %p59 = scmp.eq.s32.totalorder %s42, 1
      %p60 = por %p58, %p59
      %p62 = scmp.ne.s32.totalorder %s47, %s61
      %p63 = scmp.eq.s32.totalorder %s42, 0
      %p64 = por %p62, %p63
      %s66 = sadd.s32 %s65, 1
      %p69 = scmp.eq.s32.totalorder %s36, 1
      %p70 = scmp.ne.s32.totalorder %s65, %s67
      %p71 = scmp.eq.s32.totalorder %s36, 0
      %p72 = por %p70, %p71
      %p73 = scmp.ne.s32.totalorder %s65, %s67
      %p74 = scmp.eq.s32.totalorder %s41, 1
      %p75 = por %p73, %p74
      %p76 = scmp.ne.s32.totalorder %s67, %s68
      %p77 = scmp.eq.s32.totalorder %s41, 0
      %p78 = por %p76, %p77
      %p79 = scmp.ne.s32.totalorder %s67, %s68
      %p80 = scmp.eq.s32.totalorder %s42, 1
      %p81 = por %p79, %p80
      %p83 = scmp.ne.s32.totalorder %s68, %s82
      %p84 = scmp.eq.s32.totalorder %s42, 0
      %p85 = por %p83, %p84
      %s87 = sadd.s32 %s86, 1
      %p90 = scmp.eq.s32.totalorder %s36, 1
      %p91 = scmp.ne.s32.totalorder %s86, %s88
      %p92 = scmp.eq.s32.totalorder %s36, 0
      %p93 = por %p91, %p92
      %p94 = scmp.ne.s32.totalorder %s86, %s88
      %p95 = scmp.eq.s32.totalorder %s41, 1
      %p96 = por %p94, %p95
      %p97 = scmp.ne.s32.totalorder %s88, %s89
      %p98 = scmp.eq.s32.totalorder %s41, 0
      %p99 = por %p97, %p98
      %p100 = scmp.ne.s32.totalorder %s88, %s89
      %p101 = scmp.eq.s32.totalorder %s42, 1
      %p102 = por %p100, %p101
      %p104 = scmp.ne.s32.totalorder %s89, %s103
      %p105 = scmp.eq.s32.totalorder %s42, 0
      %p106 = por %p104, %p105
      %s108 = sadd.s32 %s107, 1
      %p111 = scmp.eq.s32.totalorder %s36, 1
      %p112 = scmp.ne.s32.totalorder %s107, %s109
      %p113 = scmp.eq.s32.totalorder %s36, 0
      %p114 = por %p112, %p113
      %p115 = scmp.ne.s32.totalorder %s107, %s109
      %p116 = scmp.eq.s32.totalorder %s41, 1
      %p117 = por %p115, %p116
      %p118 = scmp.ne.s32.totalorder %s109, %s110
      %p119 = scmp.eq.s32.totalorder %s41, 0
      %p120 = por %p118, %p119
      %p121 = scmp.ne.s32.totalorder %s109, %s110
      %p122 = scmp.eq.s32.totalorder %s42, 1
      %p123 = por %p121, %p122
      %p125 = scmp.ne.s32.totalorder %s110, %s124
      %p126 = scmp.eq.s32.totalorder %s42, 0
      %p127 = por %p125, %p126
      %s128 = ssub.s32 %s36, %s43
      %p129 = scmp.eq.s32.totalorder %s128, 0
      %s131 = sadd.s32 %s130, 1
      %s132 = scalar_select %p129, %s130, %s131
      %p135 = pneg %p129
      %p136 = scmp.eq.s32.totalorder %s36, 1
      %p137 = por %p135, %p136
      %p138 = scmp.ne.s32.totalorder %s130, %s133
      %p139 = scmp.eq.s32.totalorder %s36, 0
      %p140 = por %p138, %p139
      %p141 = scmp.ne.s32.totalorder %s130, %s133
      %p142 = scmp.eq.s32.totalorder %s41, 1
      %p143 = por %p141, %p142
      %p144 = scmp.ne.s32.totalorder %s133, %s134
      %p145 = scmp.eq.s32.totalorder %s41, 0
      %p146 = por %p144, %p145
      %p147 = scmp.ne.s32.totalorder %s133, %s134
      %p148 = scmp.eq.s32.totalorder %s42, 1
      %p149 = por %p147, %p148
      %p151 = scmp.ne.s32.totalorder %s134, %s150
      %p152 = scmp.eq.s32.totalorder %s42, 0
      %p153 = por %p151, %p152
      %s154 = ssub.s32 %s36, %s43
      %p155 = scmp.eq.s32.totalorder %s154, 0
      %s157 = sadd.s32 %s156, 1
      %s158 = scalar_select %p155, %s156, %s157
      %p161 = pneg %p155
      %p162 = scmp.eq.s32.totalorder %s36, 1
      %p163 = por %p161, %p162
      %p164 = scmp.ne.s32.totalorder %s156, %s159
      %p165 = scmp.eq.s32.totalorder %s36, 0
      %p166 = por %p164, %p165
      %p167 = scmp.ne.s32.totalorder %s156, %s159
      %p168 = scmp.eq.s32.totalorder %s41, 1
      %p169 = por %p167, %p168
      %p170 = scmp.ne.s32.totalorder %s159, %s160
      %p171 = scmp.eq.s32.totalorder %s41, 0
      %p172 = por %p170, %p171
      %p173 = scmp.ne.s32.totalorder %s159, %s160
      %p174 = scmp.eq.s32.totalorder %s42, 1
      %p175 = por %p173, %p174
      %p177 = scmp.ne.s32.totalorder %s160, %s176
      %p178 = scmp.eq.s32.totalorder %s42, 0
      %p179 = por %p177, %p178
      %s180 = ssub.s32 %s36, %s43
      %p181 = scmp.eq.s32.totalorder %s180, 0
      %s183 = sadd.s32 %s182, 1
      %s184 = scalar_select %p181, %s182, %s183
      %p187 = pneg %p181
      %p188 = scmp.eq.s32.totalorder %s36, 1
      %p189 = por %p187, %p188
      %p190 = scmp.ne.s32.totalorder %s182, %s185
      %p191 = scmp.eq.s32.totalorder %s36, 0
      %p192 = por %p190, %p191
      %p193 = scmp.ne.s32.totalorder %s182, %s185
      %p194 = scmp.eq.s32.totalorder %s41, 1
      %p195 = por %p193, %p194
      %p196 = scmp.ne.s32.totalorder %s185, %s186
      %p197 = scmp.eq.s32.totalorder %s41, 0
      %p198 = por %p196, %p197
      %p199 = scmp.ne.s32.totalorder %s185, %s186
      %p200 = scmp.eq.s32.totalorder %s42, 1
      %p201 = por %p199, %p200
      %p203 = scmp.ne.s32.totalorder %s186, %s202
      %p204 = scmp.eq.s32.totalorder %s42, 0
      %p205 = por %p203, %p204
      %s206 = ssub.s32 %s36, %s43
      %p207 = scmp.eq.s32.totalorder %s206, 0
      %s209 = sadd.s32 %s208, 1
      %s210 = scalar_select %p207, %s208, %s209
      %p213 = pneg %p207
      %p214 = scmp.eq.s32.totalorder %s36, 1
      %p215 = por %p213, %p214
      %p216 = scmp.ne.s32.totalorder %s208, %s211
      %p217 = scmp.eq.s32.totalorder %s36, 0
      %p218 = por %p216, %p217
      %p219 = scmp.ne.s32.totalorder %s208, %s211
      %p220 = scmp.eq.s32.totalorder %s41, 1
      %p221 = por %p219, %p220
      %p222 = scmp.ne.s32.totalorder %s211, %s212
      %p223 = scmp.eq.s32.totalorder %s41, 0
      %p224 = por %p222, %p223
      %p225 = scmp.ne.s32.totalorder %s211, %s212
      %p226 = scmp.eq.s32.totalorder %s42, 1
      %p227 = por %p225, %p226
      %p229 = scmp.ne.s32.totalorder %s212, %s228
      %p230 = scmp.eq.s32.totalorder %s42, 0
      %p231 = por %p229, %p230
      %s232 = ssub.s32 %s36, %s43
      %p233 = scmp.eq.s32.totalorder %s232, 0
      %s235 = sadd.s32 %s234, 1
      %s236 = scalar_select %p233, %s234, %s235
      %p239 = pneg %p233
      %p240 = scmp.eq.s32.totalorder %s36, 1
      %p241 = por %p239, %p240
      %p242 = scmp.ne.s32.totalorder %s234, %s237
      %p243 = scmp.eq.s32.totalorder %s36, 0
      %p244 = por %p242, %p243
      %p245 = scmp.ne.s32.totalorder %s234, %s237
      %p246 = scmp.eq.s32.totalorder %s41, 1
      %p247 = por %p245, %p246
      %p248 = scmp.ne.s32.totalorder %s237, %s238
      %p249 = scmp.eq.s32.totalorder %s41, 0
      %p250 = por %p248, %p249
      %p251 = scmp.ne.s32.totalorder %s237, %s238
      %p252 = scmp.eq.s32.totalorder %s42, 1
      %p253 = por %p251, %p252
      %p255 = scmp.ne.s32.totalorder %s238, %s254
      %p256 = scmp.eq.s32.totalorder %s42, 0
      %p257 = por %p255, %p256
      %s258 = ssub.s32 %s36, %s43
      %p259 = scmp.eq.s32.totalorder %s258, 0
      %s261 = sadd.s32 %s260, 1
      %s262 = scalar_select %p259, %s260, %s261
      %p265 = pneg %p259
      %p266 = scmp.eq.s32.totalorder %s36, 1
      %p267 = por %p265, %p266
      %p268 = scmp.ne.s32.totalorder %s260, %s263
      %p269 = scmp.eq.s32.totalorder %s36, 0
      %p270 = por %p268, %p269
      %p271 = scmp.ne.s32.totalorder %s260, %s263
      %p272 = scmp.eq.s32.totalorder %s41, 1
      %p273 = por %p271, %p272
      %p274 = scmp.ne.s32.totalorder %s263, %s264
      %p275 = scmp.eq.s32.totalorder %s41, 0
      %p276 = por %p274, %p275
      %p277 = scmp.ne.s32.totalorder %s263, %s264
      %p278 = scmp.eq.s32.totalorder %s42, 1
      %p279 = por %p277, %p278
      %p281 = scmp.ne.s32.totalorder %s264, %s280
      %p282 = scmp.eq.s32.totalorder %s42, 0
      %p283 = por %p281, %p282
      %s284 = ssub.s32 %s36, %s43
      %p285 = scmp.eq.s32.totalorder %s284, 0
      %s287 = sadd.s32 %s286, 1
      %s288 = scalar_select %p285, %s286, %s287
      %p291 = pneg %p285
      %p292 = scmp.eq.s32.totalorder %s36, 1
      %p293 = por %p291, %p292
      %p294 = scmp.ne.s32.totalorder %s286, %s289
      %p295 = scmp.eq.s32.totalorder %s36, 0
      %p296 = por %p294, %p295
      %p297 = scmp.ne.s32.totalorder %s286, %s289
      %p298 = scmp.eq.s32.totalorder %s41, 1
      %p299 = por %p297, %p298
      %p300 = scmp.ne.s32.totalorder %s289, %s290
      %p301 = scmp.eq.s32.totalorder %s41, 0
      %p302 = por %p300, %p301
      %p303 = scmp.ne.s32.totalorder %s289, %s290
      %p304 = scmp.eq.s32.totalorder %s42, 1
      %p305 = por %p303, %p304
      %p307 = scmp.ne.s32.totalorder %s290, %s306
      %p308 = scmp.eq.s32.totalorder %s42, 0
      %p309 = por %p307, %p308
      %s310 = ssub.s32 %s36, %s43
      %p311 = scmp.eq.s32.totalorder %s310, 0
      %s313 = sadd.s32 %s312, 1
      %s314 = scalar_select %p311, %s312, %s313
      %p317 = pneg %p311
      %p318 = scmp.eq.s32.totalorder %s36, 1
      %p319 = por %p317, %p318
      %p320 = scmp.ne.s32.totalorder %s312, %s315
      %p321 = scmp.eq.s32.totalorder %s36, 0
      %p322 = por %p320, %p321
      %p323 = scmp.ne.s32.totalorder %s312, %s315
      %p324 = scmp.eq.s32.totalorder %s41, 1
      %p325 = por %p323, %p324
      %p326 = scmp.ne.s32.totalorder %s315, %s316
      %p327 = scmp.eq.s32.totalorder %s41, 0
      %p328 = por %p326, %p327
      %p329 = scmp.ne.s32.totalorder %s315, %s316
      %p330 = scmp.eq.s32.totalorder %s42, 1
      %p331 = por %p329, %p330
      %p333 = scmp.ne.s32.totalorder %s316, %s332
      %p334 = scmp.eq.s32.totalorder %s42, 0
      %p335 = por %p333, %p334
      %s336 = ssub.s32 %s36, %s43
      %p337 = scmp.eq.s32.totalorder %s336, 0
      %s339 = sadd.s32 %s338, 1
      %s340 = scalar_select %p337, %s338, %s339
      %p343 = pneg %p337
      %p344 = scmp.eq.s32.totalorder %s36, 1
      %p345 = por %p343, %p344
      %p346 = scmp.ne.s32.totalorder %s338, %s341
      %p347 = scmp.eq.s32.totalorder %s36, 0
      %p348 = por %p346, %p347
      %p349 = scmp.ne.s32.totalorder %s338, %s341
      %p350 = scmp.eq.s32.totalorder %s41, 1
      %p351 = por %p349, %p350
      %p352 = scmp.ne.s32.totalorder %s341, %s342
      %p353 = scmp.eq.s32.totalorder %s41, 0
      %p354 = por %p352, %p353
      %p355 = scmp.ne.s32.totalorder %s341, %s342
      %p356 = scmp.eq.s32.totalorder %s42, 1
      %p357 = por %p355, %p356
      %p359 = scmp.ne.s32.totalorder %s342, %s358
      %p360 = scmp.eq.s32.totalorder %s42, 0
      %p361 = por %p359, %p360
      %s362 = ssub.s32 %s36, %s43
      %p363 = scmp.eq.s32.totalorder %s362, 0
      %s365 = sadd.s32 %s364, 1
      %s366 = scalar_select %p363, %s364, %s365
      %p369 = pneg %p363
      %p370 = scmp.eq.s32.totalorder %s36, 1
      %p371 = por %p369, %p370
      %p372 = scmp.ne.s32.totalorder %s364, %s367
      %p373 = scmp.eq.s32.totalorder %s36, 0
      %p374 = por %p372, %p373
      %p375 = scmp.ne.s32.totalorder %s364, %s367
      %p376 = scmp.eq.s32.totalorder %s41, 1
      %p377 = por %p375, %p376
      %p378 = scmp.ne.s32.totalorder %s367, %s368
      %p379 = scmp.eq.s32.totalorder %s41, 0
      %p380 = por %p378, %p379
      %p381 = scmp.ne.s32.totalorder %s367, %s368
      %p382 = scmp.eq.s32.totalorder %s42, 1
      %p383 = por %p381, %p382
      %p385 = scmp.ne.s32.totalorder %s368, %s384
      %p386 = scmp.eq.s32.totalorder %s42, 0
      %p387 = por %p385, %p386
      %s388 = ssub.s32 %s36, %s43
      %p389 = scmp.eq.s32.totalorder %s388, 0
      %s391 = sadd.s32 %s390, 1
      %s392 = scalar_select %p389, %s390, %s391
      %p395 = pneg %p389
      %p396 = scmp.eq.s32.totalorder %s36, 1
      %p397 = por %p395, %p396
      %p398 = scmp.ne.s32.totalorder %s390, %s393
      %p399 = scmp.eq.s32.totalorder %s36, 0
      %p400 = por %p398, %p399
      %p401 = scmp.ne.s32.totalorder %s390, %s393
      %p402 = scmp.eq.s32.totalorder %s41, 1
      %p403 = por %p401, %p402
      %p404 = scmp.ne.s32.totalorder %s393, %s394
      %p405 = scmp.eq.s32.totalorder %s41, 0
      %p406 = por %p404, %p405
      %p407 = scmp.ne.s32.totalorder %s393, %s394
      %p408 = scmp.eq.s32.totalorder %s42, 1
      %p409 = por %p407, %p408
      %p411 = scmp.ne.s32.totalorder %s394, %s410
      %p412 = scmp.eq.s32.totalorder %s42, 0
      %p413 = por %p411, %p412
      %s414 = ssub.s32 %s36, %s43
      %p415 = scmp.eq.s32.totalorder %s414, 0
      %s417 = sadd.s32 %s416, 1
      %s418 = scalar_select %p415, %s416, %s417
      %p421 = pneg %p415
      %p422 = scmp.eq.s32.totalorder %s36, 1
      %p423 = por %p421, %p422
      %p424 = scmp.ne.s32.totalorder %s416, %s419
      %p425 = scmp.eq.s32.totalorder %s36, 0
      %p426 = por %p424, %p425
      %p427 = scmp.ne.s32.totalorder %s416, %s419
      %p428 = scmp.eq.s32.totalorder %s41, 1
      %p429 = por %p427, %p428
      %p430 = scmp.ne.s32.totalorder %s419, %s420
      %p431 = scmp.eq.s32.totalorder %s41, 0
      %p432 = por %p430, %p431
      %p433 = scmp.ne.s32.totalorder %s419, %s420
      %p434 = scmp.eq.s32.totalorder %s42, 1
      %p435 = por %p433, %p434
      %p437 = scmp.ne.s32.totalorder %s420, %s436
      %p438 = scmp.eq.s32.totalorder %s42, 0
      %p439 = por %p437, %p438
      %s440 = ssub.s32 %s36, %s43
      %p441 = scmp.eq.s32.totalorder %s440, 0
      %s443 = sadd.s32 %s442, 1
      %s444 = scalar_select %p441, %s442, %s443
      %p447 = pneg %p441
      %p448 = scmp.eq.s32.totalorder %s36, 1
      %p449 = por %p447, %p448
      %p450 = scmp.ne.s32.totalorder %s442, %s445
      %p451 = scmp.eq.s32.totalorder %s36, 0
      %p452 = por %p450, %p451
      %p453 = scmp.ne.s32.totalorder %s442, %s445
      %p454 = scmp.eq.s32.totalorder %s41, 1
      %p455 = por %p453, %p454
      %p456 = scmp.ne.s32.totalorder %s445, %s446
      %p457 = scmp.eq.s32.totalorder %s41, 0
      %p458 = por %p456, %p457
      %p459 = scmp.ne.s32.totalorder %s445, %s446
      %p460 = scmp.eq.s32.totalorder %s42, 1
      %p461 = por %p459, %p460
      %p463 = scmp.ne.s32.totalorder %s446, %s462
      %p464 = scmp.eq.s32.totalorder %s42, 0
      %p465 = por %p463, %p464
      %s466 = ssub.s32 %s36, %s43
      %p467 = scmp.eq.s32.totalorder %s466, 0
      %s469 = sadd.s32 %s468, 1
      %s470 = scalar_select %p467, %s468, %s469
      %p473 = pneg %p467
      %p474 = scmp.eq.s32.totalorder %s36, 1
      %p475 = por %p473, %p474
      %p476 = scmp.ne.s32.totalorder %s468, %s471
      %p477 = scmp.eq.s32.totalorder %s36, 0
      %p478 = por %p476, %p477
      %p479 = scmp.ne.s32.totalorder %s468, %s471
      %p480 = scmp.eq.s32.totalorder %s41, 1
      %p481 = por %p479, %p480
      %p482 = scmp.ne.s32.totalorder %s471, %s472
      %p483 = scmp.eq.s32.totalorder %s41, 0
      %p484 = por %p482, %p483
      %p485 = scmp.ne.s32.totalorder %s471, %s472
      %p486 = scmp.eq.s32.totalorder %s42, 1
      %p487 = por %p485, %p486
      %p489 = scmp.ne.s32.totalorder %s472, %s488
      %p490 = scmp.eq.s32.totalorder %s42, 0
      %p491 = por %p489, %p490
      %s492 = ssub.s32 %s36, %s43
      %p493 = scmp.eq.s32.totalorder %s492, 0
      %s495 = sadd.s32 %s494, 1
      %s496 = scalar_select %p493, %s494, %s495
      %p499 = pneg %p493
      %p500 = scmp.eq.s32.totalorder %s36, 1
      %p501 = por %p499, %p500
      %p502 = scmp.ne.s32.totalorder %s494, %s497
      %p503 = scmp.eq.s32.totalorder %s36, 0
      %p504 = por %p502, %p503
      %p505 = scmp.ne.s32.totalorder %s494, %s497
      %p506 = scmp.eq.s32.totalorder %s41, 1
      %p507 = por %p505, %p506
      %p508 = scmp.ne.s32.totalorder %s497, %s498
      %p509 = scmp.eq.s32.totalorder %s41, 0
      %p510 = por %p508, %p509
      %p511 = scmp.ne.s32.totalorder %s497, %s498
      %p512 = scmp.eq.s32.totalorder %s42, 1
      %p513 = por %p511, %p512
      %p515 = scmp.ne.s32.totalorder %s498, %s514
      %p516 = scmp.eq.s32.totalorder %s42, 0
      %p517 = por %p515, %p516
      %s518 = ssub.s32 %s36, %s43
      %p519 = scmp.eq.s32.totalorder %s518, 0
      %s521 = sadd.s32 %s520, 1
      %s522 = scalar_select %p519, %s520, %s521
      %p525 = pneg %p519
      %p526 = scmp.eq.s32.totalorder %s36, 1
      %p527 = por %p525, %p526
      %p528 = scmp.ne.s32.totalorder %s520, %s523
      %p529 = scmp.eq.s32.totalorder %s36, 0
      %p530 = por %p528, %p529
      %p531 = scmp.ne.s32.totalorder %s520, %s523
      %p532 = scmp.eq.s32.totalorder %s41, 1
      %p533 = por %p531, %p532
      %p534 = scmp.ne.s32.totalorder %s523, %s524
      %p535 = scmp.eq.s32.totalorder %s41, 0
      %p536 = por %p534, %p535
      %p537 = scmp.ne.s32.totalorder %s523, %s524
      %p538 = scmp.eq.s32.totalorder %s42, 1
      %p539 = por %p537, %p538
      %p541 = scmp.ne.s32.totalorder %s524, %s540
      %p542 = scmp.eq.s32.totalorder %s42, 0
      %p543 = por %p541, %p542
      %s544 = ssub.s32 %s36, %s43
      %p545 = scmp.eq.s32.totalorder %s544, 0
      %s547 = sadd.s32 %s546, 1
      %s548 = scalar_select %p545, %s546, %s547
      %p551 = pneg %p545
      %p552 = scmp.eq.s32.totalorder %s36, 1
      %p553 = por %p551, %p552
      %p554 = scmp.ne.s32.totalorder %s546, %s549
      %p555 = scmp.eq.s32.totalorder %s36, 0
      %p556 = por %p554, %p555
      %p557 = scmp.ne.s32.totalorder %s546, %s549
      %p558 = scmp.eq.s32.totalorder %s41, 1
      %p559 = por %p557, %p558
      %p560 = scmp.ne.s32.totalorder %s549, %s550
      %p561 = scmp.eq.s32.totalorder %s41, 0
      %p562 = por %p560, %p561
      %p563 = scmp.ne.s32.totalorder %s549, %s550
      %p564 = scmp.eq.s32.totalorder %s42, 1
      %p565 = por %p563, %p564
      %p567 = scmp.ne.s32.totalorder %s550, %s566
      %p568 = scmp.eq.s32.totalorder %s42, 0
      %p569 = por %p567, %p568
      %s570 = ssub.s32 %s36, %s43
      %p571 = scmp.eq.s32.totalorder %s570, 0
      %s573 = sadd.s32 %s572, 1
      %s574 = scalar_select %p571, %s572, %s573
      %p577 = pneg %p571
      %p578 = scmp.eq.s32.totalorder %s36, 1
      %p579 = por %p577, %p578
      %p580 = scmp.ne.s32.totalorder %s572, %s575
      %p581 = scmp.eq.s32.totalorder %s36, 0
      %p582 = por %p580, %p581
      %p583 = scmp.ne.s32.totalorder %s572, %s575
      %p584 = scmp.eq.s32.totalorder %s41, 1
      %p585 = por %p583, %p584
      %p586 = scmp.ne.s32.totalorder %s575, %s576
      %p587 = scmp.eq.s32.totalorder %s41, 0
      %p588 = por %p586, %p587
      %p589 = scmp.ne.s32.totalorder %s575, %s576
      %p590 = scmp.eq.s32.totalorder %s42, 1
      %p591 = por %p589, %p590
      %p593 = scmp.ne.s32.totalorder %s576, %s592
      %p594 = scmp.eq.s32.totalorder %s42, 0
      %p595 = por %p593, %p594
      %s596 = ssub.s32 %s36, %s43
      %p597 = scmp.eq.s32.totalorder %s596, 0
      %s599 = sadd.s32 %s598, 1
      %s600 = scalar_select %p597, %s598, %s599
      %p603 = pneg %p597
      %p604 = scmp.eq.s32.totalorder %s36, 1
      %p605 = por %p603, %p604
      %p606 = scmp.ne.s32.totalorder %s598, %s601
      %p607 = scmp.eq.s32.totalorder %s36, 0
      %p608 = por %p606, %p607
      %p609 = scmp.ne.s32.totalorder %s598, %s601
      %p610 = scmp.eq.s32.totalorder %s41, 1
      %p611 = por %p609, %p610
      %p612 = scmp.ne.s32.totalorder %s601, %s602
      %p613 = scmp.eq.s32.totalorder %s41, 0
      %p614 = por %p612, %p613
      %p615 = scmp.ne.s32.totalorder %s601, %s602
      %p616 = scmp.eq.s32.totalorder %s42, 1
      %p617 = por %p615, %p616
      %p619 = scmp.ne.s32.totalorder %s602, %s618
      %p620 = scmp.eq.s32.totalorder %s42, 0
      %p621 = por %p619, %p620
      %s622 = ssub.s32 %s36, %s43
      %p623 = scmp.eq.s32.totalorder %s622, 0
      %s625 = sadd.s32 %s624, 1
      %s626 = scalar_select %p623, %s624, %s625
      %p629 = pneg %p623
      %p630 = scmp.eq.s32.totalorder %s36, 1
      %p631 = por %p629, %p630
      %p632 = scmp.ne.s32.totalorder %s624, %s627
      %p633 = scmp.eq.s32.totalorder %s36, 0
      %p634 = por %p632, %p633
      %p635 = scmp.ne.s32.totalorder %s624, %s627
      %p636 = scmp.eq.s32.totalorder %s41, 1
      %p637 = por %p635, %p636
      %p638 = scmp.ne.s32.totalorder %s627, %s628
      %p639 = scmp.eq.s32.totalorder %s41, 0
      %p640 = por %p638, %p639
      %p641 = scmp.ne.s32.totalorder %s627, %s628
      %p642 = scmp.eq.s32.totalorder %s42, 1
      %p643 = por %p641, %p642
      %p645 = scmp.ne.s32.totalorder %s628, %s644
      %p646 = scmp.eq.s32.totalorder %s42, 0
      %p647 = por %p645, %p646
      %s649 = sadd.s32 %s648, 1
      %p652 = scmp.eq.s32.totalorder %s36, 1
      %p653 = scmp.ne.s32.totalorder %s648, %s650
      %p654 = scmp.eq.s32.totalorder %s36, 0
      %p655 = por %p653, %p654
      %p656 = scmp.ne.s32.totalorder %s648, %s650
      %p657 = scmp.eq.s32.totalorder %s41, 1
      %p658 = por %p656, %p657
      %p659 = scmp.ne.s32.totalorder %s650, %s651
      %p660 = scmp.eq.s32.totalorder %s41, 0
      %p661 = por %p659, %p660
      %p662 = scmp.ne.s32.totalorder %s650, %s651
      %p663 = scmp.eq.s32.totalorder %s42, 1
      %p664 = por %p662, %p663
      %p666 = scmp.ne.s32.totalorder %s651, %s665
      %p667 = scmp.eq.s32.totalorder %s42, 0
      %p668 = por %p666, %p667
      %s670 = sadd.s32 %s669, 1
      %p673 = scmp.eq.s32.totalorder %s36, 1
      %p674 = scmp.ne.s32.totalorder %s669, %s671
      %p675 = scmp.eq.s32.totalorder %s36, 0
      %p676 = por %p674, %p675
      %p677 = scmp.ne.s32.totalorder %s669, %s671
      %p678 = scmp.eq.s32.totalorder %s41, 1
      %p679 = por %p677, %p678
      %p680 = scmp.ne.s32.totalorder %s671, %s672
      %p681 = scmp.eq.s32.totalorder %s41, 0
      %p682 = por %p680, %p681
      %p683 = scmp.ne.s32.totalorder %s671, %s672
      %p684 = scmp.eq.s32.totalorder %s42, 1
      %p685 = por %p683, %p684
      %p687 = scmp.ne.s32.totalorder %s672, %s686
      %p688 = scmp.eq.s32.totalorder %s42, 0
      %p689 = por %p687, %p688
      %s691 = sadd.s32 %s690, 1
      %p694 = scmp.eq.s32.totalorder %s36, 1
      %p695 = scmp.ne.s32.totalorder %s690, %s692
      %p696 = scmp.eq.s32.totalorder %s36, 0
      %p697 = por %p695, %p696
      %p698 = scmp.ne.s32.totalorder %s690, %s692
      %p699 = scmp.eq.s32.totalorder %s41, 1
      %p700 = por %p698, %p699
      %p701 = scmp.ne.s32.totalorder %s692, %s693
      %p702 = scmp.eq.s32.totalorder %s41, 0
      %p703 = por %p701, %p702
      %p704 = scmp.ne.s32.totalorder %s692, %s693
      %p705 = scmp.eq.s32.totalorder %s42, 1
      %p706 = por %p704, %p705
      %p708 = scmp.ne.s32.totalorder %s693, %s707
      %p709 = scmp.eq.s32.totalorder %s42, 0
      %p710 = por %p708, %p709
      %p711 = scmp.le.s32.totalorder 1, %s36
      %p712 = scmp.lt.s32.totalorder %s36, 3
      %p713 = pnand %p711, %p712
      %p714 = pneg %p713
      // Predicated region
      $region9: #{tpu_custom_call.1} parent=5 // pred_check
        _
      $region10: #{tpu_custom_call.1} parent=5 // pred_check_branch
        %716 = sbr.rel (%p713) target = $region12
      $region11: #{tpu_custom_call.1} parent=5 // pred_region
        %s717 = ssub.s32 %s36, 1
        // Predicated region
        $region13: #{tpu_custom_call.1} parent=11 // pred_check
          %p718 = pneg %p57
        $region14: #{tpu_custom_call.1} parent=11 // pred_check_branch
          %720 = sbr.rel (%p718) target = $region16
        $region15: #{tpu_custom_call.1} parent=11 // pred_region
          %s722 = ssub.s32 256, 256
          %723 = vsyncadd [#allocation5], %s722
          %s724 = sshll.u32 [#allocation4], 4
          %s725 = int_to_ptr.vmem [resolvable:$true] %s724
          %730 = dma.hbm_to_vmem [thread:$0]  %s0, 256, %s725, [#allocation5], 128, 128, 8
        $region16: #{tpu_custom_call.1} parent=11 // pred_fallthru
          _
        // Predicated region
        $region17: #{tpu_custom_call.1} parent=11 // pred_check
          %p731 = pneg %p78
        $region18: #{tpu_custom_call.1} parent=11 // pred_check_branch
          %733 = sbr.rel (%p731) target = $region20
        $region19: #{tpu_custom_call.1} parent=11 // pred_region
          %s735 = ssub.s32 512, 512
          %736 = vsyncadd [#allocation8], %s735
          %s737 = sshll.u32 [#allocation7], 4
          %s738 = int_to_ptr.vmem [resolvable:$true] %s737
          %743 = dma.hbm_to_vmem [thread:$0]  %s1, 512, %s738, [#allocation8], 128, 128, 8
        $region20: #{tpu_custom_call.1} parent=11 // pred_fallthru
          _
        // Predicated region
        $region21: #{tpu_custom_call.1} parent=11 // pred_check
          %p744 = pneg %p99
        $region22: #{tpu_custom_call.1} parent=11 // pred_check_branch
          %746 = sbr.rel (%p744) target = $region24
        $region23: #{tpu_custom_call.1} parent=11 // pred_region
          %s748 = ssub.s32 512, 512
          %749 = vsyncadd [#allocation8], %s748
          %s750 = sshll.u32 [#allocation9], 4
          %s751 = int_to_ptr.vmem [resolvable:$true] %s750
          %756 = dma.hbm_to_vmem [thread:$0]  %s2, 512, %s751, [#allocation8], 128, 128, 8
        $region24: #{tpu_custom_call.1} parent=11 // pred_fallthru
          _
        // Predicated region
        $region25: #{tpu_custom_call.1} parent=11 // pred_check
          %p757 = pneg %p120
        $region26: #{tpu_custom_call.1} parent=11 // pred_check_branch
          %759 = sbr.rel (%p757) target = $region28
        $region27: #{tpu_custom_call.1} parent=11 // pred_region
          %s761 = ssub.s32 256, 256
          %762 = vsyncadd [#allocation11], %s761
          %s763 = sshll.u32 [#allocation10], 4
          %s764 = int_to_ptr.vmem [resolvable:$true] %s763
          %769 = dma.hbm_to_vmem [thread:$0]  %s3, 256, %s764, [#allocation11], 128, 128, 8
        $region28: #{tpu_custom_call.1} parent=11 // pred_fallthru
          _
        // Predicated region
        $region29: #{tpu_custom_call.1} parent=11 // pred_check
          %p770 = pneg %p661
        $region30: #{tpu_custom_call.1} parent=11 // pred_check_branch
          %772 = sbr.rel (%p770) target = $region32
        $region31: #{tpu_custom_call.1} parent=11 // pred_region
          _
        $region32: #{tpu_custom_call.1} parent=11 // pred_fallthru
          _
        // Predicated region
        $region33: #{tpu_custom_call.1} parent=11 // pred_check
          %p773 = pneg %p682
        $region34: #{tpu_custom_call.1} parent=11 // pred_check_branch
          %775 = sbr.rel (%p773) target = $region36
        $region35: #{tpu_custom_call.1} parent=11 // pred_region
          _
        $region36: #{tpu_custom_call.1} parent=11 // pred_fallthru
          _
      $region12: #{tpu_custom_call.1} parent=5 // pred_fallthru
        _
      %p776 = scmp.lt.s32.totalorder %s36, 2
      // Predicated region
      $region37: #{tpu_custom_call.1} parent=5 // pred_check
        %p777 = pneg %p776
      $region38: #{tpu_custom_call.1} parent=5 // pred_check_branch
        %779 = sbr.rel (%p777) target = $region40
      $region39: #{tpu_custom_call.1} parent=5 // pred_region
        // Predicated region
        $region41: #{tpu_custom_call.1} parent=39 // pred_check
          %p780 = pneg %p140
        $region42: #{tpu_custom_call.1} parent=39 // pred_check_branch
          %782 = sbr.rel (%p780) target = $region44
        $region43: #{tpu_custom_call.1} parent=39 // pred_region
          %p783 = scmp.lt.s32.totalorder %s36, 1
          %s784 = scalar_select %p783, %s36, 1
          %s785 = smul.addr %s784, 4
          %s786 = smul.addr %s785, 8
          %s787 = scalar_lea.vmem %s4, %s786
        $region44: #{tpu_custom_call.1} parent=39 // pred_fallthru
          _
        // Predicated region
        $region45: #{tpu_custom_call.1} parent=39 // pred_check
          %p788 = pneg %p166
        $region46: #{tpu_custom_call.1} parent=39 // pred_check_branch
          %790 = sbr.rel (%p788) target = $region48
        $region47: #{tpu_custom_call.1} parent=39 // pred_region
          %s791 = sand.u32 %s36, 1
          %s792 = scalar_lea.sflag [#allocation5], %s791
          %s793 = sand.u32 %s156, 1
          %s794 = scalar_lea.vmem [#allocation12], %s793
          %s796 = ssub.s32 16, 16
          %797 = vsyncadd %s792, %s796
          %s798 = smul.addr %s36, 16
          %s799 = scalar_lea.hbm %s5, %s798
          %s801 = sshll.u32 %s794, 4
          %s802 = int_to_ptr.vmem [resolvable:$true] %s801
          %804 = dma.hbm_to_vmem [thread:$0]  %s799, 16, %s802, %s792
        $region48: #{tpu_custom_call.1} parent=39 // pred_fallthru
          _
        // Predicated region
        $region49: #{tpu_custom_call.1} parent=39 // pred_check
          %p805 = pneg %p192
        $region50: #{tpu_custom_call.1} parent=39 // pred_check_branch
          %807 = sbr.rel (%p805) target = $region52
        $region51: #{tpu_custom_call.1} parent=39 // pred_region
          %p808 = scmp.lt.s32.totalorder %s36, 1
          %s809 = scalar_select %p808, %s36, 1
          %s810 = smul.addr %s809, 4
          %s811 = smul.addr %s810, 8
          %s812 = scalar_lea.vmem %s6, %s811
        $region52: #{tpu_custom_call.1} parent=39 // pred_fallthru
          _
        // Predicated region
        $region53: #{tpu_custom_call.1} parent=39 // pred_check
          %p813 = pneg %p218
        $region54: #{tpu_custom_call.1} parent=39 // pred_check_branch
          %815 = sbr.rel (%p813) target = $region56
        $region55: #{tpu_custom_call.1} parent=39 // pred_region
          %p816 = scmp.lt.s32.totalorder %s36, 1
          %s817 = scalar_select %p816, %s36, 1
          %s818 = scalar_lea.vmem %s7, %s817
        $region56: #{tpu_custom_call.1} parent=39 // pred_fallthru
          _
        // Predicated region
        $region57: #{tpu_custom_call.1} parent=39 // pred_check
          %p819 = pneg %p244
        $region58: #{tpu_custom_call.1} parent=39 // pred_check_branch
          %821 = sbr.rel (%p819) target = $region60
        $region59: #{tpu_custom_call.1} parent=39 // pred_region
          %p822 = scmp.lt.s32.totalorder %s36, 1
          %s823 = scalar_select %p822, %s36, 1
          %s824 = smul.addr %s823, 4
          %s825 = smul.addr %s824, 8
          %s826 = scalar_lea.vmem %s8, %s825
        $region60: #{tpu_custom_call.1} parent=39 // pred_fallthru
          _
        // Predicated region
        $region61: #{tpu_custom_call.1} parent=39 // pred_check
          %p827 = pneg %p270
        $region62: #{tpu_custom_call.1} parent=39 // pred_check_branch
          %829 = sbr.rel (%p827) target = $region64
        $region63: #{tpu_custom_call.1} parent=39 // pred_region
          %s830 = sand.u32 %s36, 1
          %s831 = scalar_lea.sflag [#allocation5], %s830
          %s832 = sand.u32 %s260, 1
          %s833 = scalar_lea.vmem [#allocation13], %s832
          %s835 = ssub.s32 16, 16
          %836 = vsyncadd %s831, %s835
          %s837 = smul.addr %s36, 16
          %s838 = scalar_lea.hbm %s9, %s837
          %s840 = sshll.u32 %s833, 4
          %s841 = int_to_ptr.vmem [resolvable:$true] %s840
          %843 = dma.hbm_to_vmem [thread:$0]  %s838, 16, %s841, %s831
        $region64: #{tpu_custom_call.1} parent=39 // pred_fallthru
          _
        // Predicated region
        $region65: #{tpu_custom_call.1} parent=39 // pred_check
          %p844 = pneg %p296
        $region66: #{tpu_custom_call.1} parent=39 // pred_check_branch
          %846 = sbr.rel (%p844) target = $region68
        $region67: #{tpu_custom_call.1} parent=39 // pred_region
          %s847 = sand.u32 %s36, 1
          %s848 = scalar_lea.sflag [#allocation5], %s847
          %s849 = sand.u32 %s286, 1
          %s850 = smul.addr %s849, 32
          %s851 = scalar_lea.vmem [#allocation14], %s850
          %s853 = ssub.s32 512, 512
          %854 = vsyncadd %s848, %s853
          %s855 = smul.addr %s36, 4
          %s856 = smul.addr %s855, 128
          %s857 = scalar_lea.hbm %s10, %s856
          %s858 = sshll.u32 %s851, 4
          %s859 = int_to_ptr.vmem [resolvable:$true] %s858
          %864 = dma.hbm_to_vmem [thread:$0]  %s857, 512, %s859, %s848, 128, 128, 8
        $region68: #{tpu_custom_call.1} parent=39 // pred_fallthru
          _
        // Predicated region
        $region69: #{tpu_custom_call.1} parent=39 // pred_check
          %p865 = pneg %p322
        $region70: #{tpu_custom_call.1} parent=39 // pred_check_branch
          %867 = sbr.rel (%p865) target = $region72
        $region71: #{tpu_custom_call.1} parent=39 // pred_region
          %p868 = scmp.lt.s32.totalorder %s36, 1
          %s869 = scalar_select %p868, %s36, 1
          %s870 = scalar_lea.vmem %s11, %s869
        $region72: #{tpu_custom_call.1} parent=39 // pred_fallthru
          _
        // Predicated region
        $region73: #{tpu_custom_call.1} parent=39 // pred_check
          %p871 = pneg %p348
        $region74: #{tpu_custom_call.1} parent=39 // pred_check_branch
          %873 = sbr.rel (%p871) target = $region76
        $region75: #{tpu_custom_call.1} parent=39 // pred_region
          %s874 = sand.u32 %s36, 1
          %s875 = scalar_lea.sflag [#allocation5], %s874
          %s876 = sand.u32 %s338, 1
          %s877 = smul.addr %s876, 32
          %s878 = scalar_lea.vmem [#allocation15], %s877
          %s880 = ssub.s32 512, 512
          %881 = vsyncadd %s875, %s880
          %s882 = smul.addr %s36, 4
          %s883 = smul.addr %s882, 128
          %s884 = scalar_lea.hbm %s12, %s883
          %s885 = sshll.u32 %s878, 4
          %s886 = int_to_ptr.vmem [resolvable:$true] %s885
          %891 = dma.hbm_to_vmem [thread:$0]  %s884, 512, %s886, %s875, 128, 128, 8
        $region76: #{tpu_custom_call.1} parent=39 // pred_fallthru
          _
        // Predicated region
        $region77: #{tpu_custom_call.1} parent=39 // pred_check
          %p892 = pneg %p374
        $region78: #{tpu_custom_call.1} parent=39 // pred_check_branch
          %894 = sbr.rel (%p892) target = $region80
        $region79: #{tpu_custom_call.1} parent=39 // pred_region
          %p895 = scmp.lt.s32.totalorder %s36, 1
          %s896 = scalar_select %p895, %s36, 1
          %s897 = scalar_lea.vmem %s13, %s896
        $region80: #{tpu_custom_call.1} parent=39 // pred_fallthru
          _
        // Predicated region
        $region81: #{tpu_custom_call.1} parent=39 // pred_check
          %p898 = pneg %p400
        $region82: #{tpu_custom_call.1} parent=39 // pred_check_branch
          %900 = sbr.rel (%p898) target = $region84
        $region83: #{tpu_custom_call.1} parent=39 // pred_region
          %s901 = sand.u32 %s36, 1
          %s902 = scalar_lea.sflag [#allocation5], %s901
          %s903 = sand.u32 %s390, 1
          %s904 = smul.addr %s903, 32
          %s905 = scalar_lea.vmem [#allocation16], %s904
          %s907 = ssub.s32 512, 512
          %908 = vsyncadd %s902, %s907
          %s909 = smul.addr %s36, 4
          %s910 = smul.addr %s909, 128
          %s911 = scalar_lea.hbm %s14, %s910
          %s912 = sshll.u32 %s905, 4
          %s913 = int_to_ptr.vmem [resolvable:$true] %s912
          %918 = dma.hbm_to_vmem [thread:$0]  %s911, 512, %s913, %s902, 128, 128, 8
        $region84: #{tpu_custom_call.1} parent=39 // pred_fallthru
          _
        // Predicated region
        $region85: #{tpu_custom_call.1} parent=39 // pred_check
          %p919 = pneg %p426
        $region86: #{tpu_custom_call.1} parent=39 // pred_check_branch
          %921 = sbr.rel (%p919) target = $region88
        $region87: #{tpu_custom_call.1} parent=39 // pred_region
          %p922 = scmp.lt.s32.totalorder %s36, 1
          %s923 = scalar_select %p922, %s36, 1
          %s924 = scalar_lea.vmem %s15, %s923
        $region88: #{tpu_custom_call.1} parent=39 // pred_fallthru
          _
        // Predicated region
        $region89: #{tpu_custom_call.1} parent=39 // pred_check
          %p925 = pneg %p452
        $region90: #{tpu_custom_call.1} parent=39 // pred_check_branch
          %927 = sbr.rel (%p925) target = $region92
        $region91: #{tpu_custom_call.1} parent=39 // pred_region
          %s928 = sand.u32 %s36, 1
          %s929 = scalar_lea.sflag [#allocation5], %s928
          %s930 = sand.u32 %s442, 1
          %s931 = smul.addr %s930, 32
          %s932 = scalar_lea.vmem [#allocation17], %s931
          %s934 = ssub.s32 512, 512
          %935 = vsyncadd %s929, %s934
          %s936 = smul.addr %s36, 4
          %s937 = smul.addr %s936, 128
          %s938 = scalar_lea.hbm %s16, %s937
          %s939 = sshll.u32 %s932, 4
          %s940 = int_to_ptr.vmem [resolvable:$true] %s939
          %945 = dma.hbm_to_vmem [thread:$0]  %s938, 512, %s940, %s929, 128, 128, 8
        $region92: #{tpu_custom_call.1} parent=39 // pred_fallthru
          _
        // Predicated region
        $region93: #{tpu_custom_call.1} parent=39 // pred_check
          %p946 = pneg %p478
        $region94: #{tpu_custom_call.1} parent=39 // pred_check_branch
          %948 = sbr.rel (%p946) target = $region96
        $region95: #{tpu_custom_call.1} parent=39 // pred_region
          %p949 = scmp.lt.s32.totalorder %s36, 1
          %s950 = scalar_select %p949, %s36, 1
          %s951 = scalar_lea.vmem %s17, %s950
        $region96: #{tpu_custom_call.1} parent=39 // pred_fallthru
          _
        // Predicated region
        $region97: #{tpu_custom_call.1} parent=39 // pred_check
          %p952 = pneg %p504
        $region98: #{tpu_custom_call.1} parent=39 // pred_check_branch
          %954 = sbr.rel (%p952) target = $region100
        $region99: #{tpu_custom_call.1} parent=39 // pred_region
          %s955 = sand.u32 %s36, 1
          %s956 = scalar_lea.sflag [#allocation5], %s955
          %s957 = sand.u32 %s494, 1
          %s958 = smul.addr %s957, 32
          %s959 = scalar_lea.vmem [#allocation18], %s958
          %s961 = ssub.s32 512, 512
          %962 = vsyncadd %s956, %s961
          %s963 = smul.addr %s36, 4
          %s964 = smul.addr %s963, 128
          %s965 = scalar_lea.hbm %s18, %s964
          %s966 = sshll.u32 %s959, 4
          %s967 = int_to_ptr.vmem [resolvable:$true] %s966
          %972 = dma.hbm_to_vmem [thread:$0]  %s965, 512, %s967, %s956, 128, 128, 8
        $region100: #{tpu_custom_call.1} parent=39 // pred_fallthru
          _
        // Predicated region
        $region101: #{tpu_custom_call.1} parent=39 // pred_check
          %p973 = pneg %p530
        $region102: #{tpu_custom_call.1} parent=39 // pred_check_branch
          %975 = sbr.rel (%p973) target = $region104
        $region103: #{tpu_custom_call.1} parent=39 // pred_region
          %p976 = scmp.lt.s32.totalorder %s36, 1
          %s977 = scalar_select %p976, %s36, 1
          %s978 = scalar_lea.vmem %s19, %s977
        $region104: #{tpu_custom_call.1} parent=39 // pred_fallthru
          _
        // Predicated region
        $region105: #{tpu_custom_call.1} parent=39 // pred_check
          %p979 = pneg %p556
        $region106: #{tpu_custom_call.1} parent=39 // pred_check_branch
          %981 = sbr.rel (%p979) target = $region108
        $region107: #{tpu_custom_call.1} parent=39 // pred_region
          %p982 = scmp.lt.s32.totalorder %s36, 1
          %s983 = scalar_select %p982, %s36, 1
          %s984 = smul.addr %s983, 8
          %s985 = smul.addr %s984, 8
          %s986 = scalar_lea.vmem %s20, %s985
        $region108: #{tpu_custom_call.1} parent=39 // pred_fallthru
          _
        // Predicated region
        $region109: #{tpu_custom_call.1} parent=39 // pred_check
          %p987 = pneg %p582
        $region110: #{tpu_custom_call.1} parent=39 // pred_check_branch
          %989 = sbr.rel (%p987) target = $region112
        $region111: #{tpu_custom_call.1} parent=39 // pred_region
          %p990 = scmp.lt.s32.totalorder %s36, 1
          %s991 = scalar_select %p990, %s36, 1
          %s992 = scalar_lea.vmem %s21, %s991
        $region112: #{tpu_custom_call.1} parent=39 // pred_fallthru
          _
        // Predicated region
        $region113: #{tpu_custom_call.1} parent=39 // pred_check
          %p993 = pneg %p608
        $region114: #{tpu_custom_call.1} parent=39 // pred_check_branch
          %995 = sbr.rel (%p993) target = $region116
        $region115: #{tpu_custom_call.1} parent=39 // pred_region
          %p996 = scmp.lt.s32.totalorder %s36, 1
          %s997 = scalar_select %p996, %s36, 1
          %s998 = smul.addr %s997, 3
          %s999 = scalar_lea.vmem %s22, %s998
        $region116: #{tpu_custom_call.1} parent=39 // pred_fallthru
          _
        // Predicated region
        $region117: #{tpu_custom_call.1} parent=39 // pred_check
          %p1000 = pneg %p634
        $region118: #{tpu_custom_call.1} parent=39 // pred_check_branch
          %1002 = sbr.rel (%p1000) target = $region120
        $region119: #{tpu_custom_call.1} parent=39 // pred_region
          %p1003 = scmp.lt.s32.totalorder %s36, 1
          %s1004 = scalar_select %p1003, %s36, 1
          %s1005 = smul.addr %s1004, 3
          %s1006 = scalar_lea.vmem %s23, %s1005
        $region120: #{tpu_custom_call.1} parent=39 // pred_fallthru
          _
      $region40: #{tpu_custom_call.1} parent=5 // pred_fallthru
        _
      %p1007 = scmp.le.s32.totalorder 1, %s36
      %p1008 = scmp.lt.s32.totalorder %s36, 3
      %p1009 = pnand %p1007, %p1008
      %p1010 = pneg %p1009
      // Predicated region
      $region121: #{tpu_custom_call.1} parent=5 // pred_check
        _
      $region122: #{tpu_custom_call.1} parent=5 // pred_check_branch
        %1012 = sbr.rel (%p1009) target = $region124
      $region123: #{tpu_custom_call.1} parent=5 // pred_region
        %s1013 = ssub.s32 %s36, 1
        // Predicated region
        $region125: #{tpu_custom_call.1} parent=123 // pred_check
          %p1014 = pneg %p57
        $region126: #{tpu_custom_call.1} parent=123 // pred_check_branch
          %1016 = sbr.rel (%p1014) target = $region128
        $region127: #{tpu_custom_call.1} parent=123 // pred_region
          %1017 = dma.done [#allocation5], 256
        $region128: #{tpu_custom_call.1} parent=123 // pred_fallthru
          _
        // Predicated region
        $region129: #{tpu_custom_call.1} parent=123 // pred_check
          %p1018 = pneg %p78
        $region130: #{tpu_custom_call.1} parent=123 // pred_check_branch
          %1020 = sbr.rel (%p1018) target = $region132
        $region131: #{tpu_custom_call.1} parent=123 // pred_region
          %1021 = dma.done [#allocation8], 512
        $region132: #{tpu_custom_call.1} parent=123 // pred_fallthru
          _
        // Predicated region
        $region133: #{tpu_custom_call.1} parent=123 // pred_check
          %p1022 = pneg %p99
        $region134: #{tpu_custom_call.1} parent=123 // pred_check_branch
          %1024 = sbr.rel (%p1022) target = $region136
        $region135: #{tpu_custom_call.1} parent=123 // pred_region
          %1025 = dma.done [#allocation8], 512
        $region136: #{tpu_custom_call.1} parent=123 // pred_fallthru
          _
        // Predicated region
        $region137: #{tpu_custom_call.1} parent=123 // pred_check
          %p1026 = pneg %p120
        $region138: #{tpu_custom_call.1} parent=123 // pred_check_branch
          %1028 = sbr.rel (%p1026) target = $region140
        $region139: #{tpu_custom_call.1} parent=123 // pred_region
          %1029 = dma.done [#allocation11], 256
        $region140: #{tpu_custom_call.1} parent=123 // pred_fallthru
          _
        %s1030 = sand.u32 %s41, 1
        %s1031 = scalar_lea.sflag [#allocation5], %s1030
        %s1032 = sand.u32 %s159, 1
        %s1033 = scalar_lea.vmem [#allocation12], %s1032
        // Predicated region
        $region141: #{tpu_custom_call.1} parent=123 // pred_check
          %p1034 = pneg %p172
        $region142: #{tpu_custom_call.1} parent=123 // pred_check_branch
          %1036 = sbr.rel (%p1034) target = $region144
        $region143: #{tpu_custom_call.1} parent=123 // pred_region
          %1037 = dma.done %s1031, 16
        $region144: #{tpu_custom_call.1} parent=123 // pred_fallthru
          _
        %s1038 = sand.u32 %s41, 1
        %s1039 = scalar_lea.sflag [#allocation5], %s1038
        %s1040 = sand.u32 %s263, 1
        %s1041 = scalar_lea.vmem [#allocation13], %s1040
        // Predicated region
        $region145: #{tpu_custom_call.1} parent=123 // pred_check
          %p1042 = pneg %p276
        $region146: #{tpu_custom_call.1} parent=123 // pred_check_branch
          %1044 = sbr.rel (%p1042) target = $region148
        $region147: #{tpu_custom_call.1} parent=123 // pred_region
          %1045 = dma.done %s1039, 16
        $region148: #{tpu_custom_call.1} parent=123 // pred_fallthru
          _
        %s1046 = sand.u32 %s41, 1
        %s1047 = scalar_lea.sflag [#allocation5], %s1046
        %s1048 = sand.u32 %s289, 1
        %s1049 = smul.addr %s1048, 32
        %s1050 = scalar_lea.vmem [#allocation14], %s1049
        // Predicated region
        $region149: #{tpu_custom_call.1} parent=123 // pred_check
          %p1051 = pneg %p302
        $region150: #{tpu_custom_call.1} parent=123 // pred_check_branch
          %1053 = sbr.rel (%p1051) target = $region152
        $region151: #{tpu_custom_call.1} parent=123 // pred_region
          %1054 = dma.done %s1047, 512
        $region152: #{tpu_custom_call.1} parent=123 // pred_fallthru
          _
        %s1055 = sand.u32 %s41, 1
        %s1056 = scalar_lea.sflag [#allocation5], %s1055
        %s1057 = sand.u32 %s341, 1
        %s1058 = smul.addr %s1057, 32
        %s1059 = scalar_lea.vmem [#allocation15], %s1058
        // Predicated region
        $region153: #{tpu_custom_call.1} parent=123 // pred_check
          %p1060 = pneg %p354
        $region154: #{tpu_custom_call.1} parent=123 // pred_check_branch
          %1062 = sbr.rel (%p1060) target = $region156
        $region155: #{tpu_custom_call.1} parent=123 // pred_region
          %1063 = dma.done %s1056, 512
        $region156: #{tpu_custom_call.1} parent=123 // pred_fallthru
          _
        %s1064 = sand.u32 %s41, 1
        %s1065 = scalar_lea.sflag [#allocation5], %s1064
        %s1066 = sand.u32 %s393, 1
        %s1067 = smul.addr %s1066, 32
        %s1068 = scalar_lea.vmem [#allocation16], %s1067
        // Predicated region
        $region157: #{tpu_custom_call.1} parent=123 // pred_check
          %p1069 = pneg %p406
        $region158: #{tpu_custom_call.1} parent=123 // pred_check_branch
          %1071 = sbr.rel (%p1069) target = $region160
        $region159: #{tpu_custom_call.1} parent=123 // pred_region
          %1072 = dma.done %s1065, 512
        $region160: #{tpu_custom_call.1} parent=123 // pred_fallthru
          _
        %s1073 = sand.u32 %s41, 1
        %s1074 = scalar_lea.sflag [#allocation5], %s1073
        %s1075 = sand.u32 %s445, 1
        %s1076 = smul.addr %s1075, 32
        %s1077 = scalar_lea.vmem [#allocation17], %s1076
        // Predicated region
        $region161: #{tpu_custom_call.1} parent=123 // pred_check
          %p1078 = pneg %p458
        $region162: #{tpu_custom_call.1} parent=123 // pred_check_branch
          %1080 = sbr.rel (%p1078) target = $region164
        $region163: #{tpu_custom_call.1} parent=123 // pred_region
          %1081 = dma.done %s1074, 512
        $region164: #{tpu_custom_call.1} parent=123 // pred_fallthru
          _
        %s1082 = sand.u32 %s41, 1
        %s1083 = scalar_lea.sflag [#allocation5], %s1082
        %s1084 = sand.u32 %s497, 1
        %s1085 = smul.addr %s1084, 32
        %s1086 = scalar_lea.vmem [#allocation18], %s1085
        // Predicated region
        $region165: #{tpu_custom_call.1} parent=123 // pred_check
          %p1087 = pneg %p510
        $region166: #{tpu_custom_call.1} parent=123 // pred_check_branch
          %1089 = sbr.rel (%p1087) target = $region168
        $region167: #{tpu_custom_call.1} parent=123 // pred_region
          %1090 = dma.done %s1083, 512
        $region168: #{tpu_custom_call.1} parent=123 // pred_fallthru
          _
        %p1091 = pneg %p57
        %p1092 = pneg %p54
        %p1093 = pneg %p78
        %p1094 = pneg %p75
        %p1095 = pneg %p99
        %p1096 = pneg %p96
        %p1097 = pneg %p120
        %p1098 = pneg %p117
        %p1099 = scmp.lt.s32.totalorder %s41, 1
        %s1100 = scalar_select %p1099, %s41, 1
        %s1101 = smul.addr %s1100, 4
        %s1102 = smul.addr %s1101, 8
        %s1103 = scalar_lea.vmem %s4, %s1102
        %p1104 = pneg %p146
        %p1105 = pneg %p143
        %s1106 = sand.u32 %s41, 1
        %s1107 = scalar_lea.sflag [#allocation5], %s1106
        %s1108 = sand.u32 %s159, 1
        %s1109 = scalar_lea.vmem [#allocation12], %s1108
        %p1110 = pneg %p172
        %p1111 = pneg %p169
        %p1112 = scmp.lt.s32.totalorder %s41, 1
        %s1113 = scalar_select %p1112, %s41, 1
        %s1114 = smul.addr %s1113, 4
        %s1115 = smul.addr %s1114, 8
        %s1116 = scalar_lea.vmem %s6, %s1115
        %p1117 = pneg %p198
        %p1118 = pneg %p195
        %p1119 = scmp.lt.s32.totalorder %s41, 1
        %s1120 = scalar_select %p1119, %s41, 1
        %s1121 = scalar_lea.vmem %s7, %s1120
        %p1122 = pneg %p224
        %p1123 = pneg %p221
        %p1124 = scmp.lt.s32.totalorder %s41, 1
        %s1125 = scalar_select %p1124, %s41, 1
        %s1126 = smul.addr %s1125, 4
        %s1127 = smul.addr %s1126, 8
        %s1128 = scalar_lea.vmem %s8, %s1127
        %p1129 = pneg %p250
        %p1130 = pneg %p247
        %s1131 = sand.u32 %s41, 1
        %s1132 = scalar_lea.sflag [#allocation5], %s1131
        %s1133 = sand.u32 %s263, 1
        %s1134 = scalar_lea.vmem [#allocation13], %s1133
        %p1135 = pneg %p276
        %p1136 = pneg %p273
        %s1137 = sand.u32 %s41, 1
        %s1138 = scalar_lea.sflag [#allocation5], %s1137
        %s1139 = sand.u32 %s289, 1
        %s1140 = smul.addr %s1139, 32
        %s1141 = scalar_lea.vmem [#allocation14], %s1140
        %p1142 = pneg %p302
        %p1143 = pneg %p299
        %p1144 = scmp.lt.s32.totalorder %s41, 1
        %s1145 = scalar_select %p1144, %s41, 1
        %s1146 = scalar_lea.vmem %s11, %s1145
        %p1147 = pneg %p328
        %p1148 = pneg %p325
        %s1149 = sand.u32 %s41, 1
        %s1150 = scalar_lea.sflag [#allocation5], %s1149
        %s1151 = sand.u32 %s341, 1
        %s1152 = smul.addr %s1151, 32
        %s1153 = scalar_lea.vmem [#allocation15], %s1152
        %p1154 = pneg %p354
        %p1155 = pneg %p351
        %p1156 = scmp.lt.s32.totalorder %s41, 1
        %s1157 = scalar_select %p1156, %s41, 1
        %s1158 = scalar_lea.vmem %s13, %s1157
        %p1159 = pneg %p380
        %p1160 = pneg %p377
        %s1161 = sand.u32 %s41, 1
        %s1162 = scalar_lea.sflag [#allocation5], %s1161
        %s1163 = sand.u32 %s393, 1
        %s1164 = smul.addr %s1163, 32
        %s1165 = scalar_lea.vmem [#allocation16], %s1164
        %p1166 = pneg %p406
        %p1167 = pneg %p403
        %p1168 = scmp.lt.s32.totalorder %s41, 1
        %s1169 = scalar_select %p1168, %s41, 1
        %s1170 = scalar_lea.vmem %s15, %s1169
        %p1171 = pneg %p432
        %p1172 = pneg %p429
        %s1173 = sand.u32 %s41, 1
        %s1174 = scalar_lea.sflag [#allocation5], %s1173
        %s1175 = sand.u32 %s445, 1
        %s1176 = smul.addr %s1175, 32
        %s1177 = scalar_lea.vmem [#allocation17], %s1176
        %p1178 = pneg %p458
        %p1179 = pneg %p455
        %p1180 = scmp.lt.s32.totalorder %s41, 1
        %s1181 = scalar_select %p1180, %s41, 1
        %s1182 = scalar_lea.vmem %s17, %s1181
        %p1183 = pneg %p484
        %p1184 = pneg %p481
        %s1185 = sand.u32 %s41, 1
        %s1186 = scalar_lea.sflag [#allocation5], %s1185
        %s1187 = sand.u32 %s497, 1
        %s1188 = smul.addr %s1187, 32
        %s1189 = scalar_lea.vmem [#allocation18], %s1188
        %p1190 = pneg %p510
        %p1191 = pneg %p507
        %p1192 = scmp.lt.s32.totalorder %s41, 1
        %s1193 = scalar_select %p1192, %s41, 1
        %s1194 = scalar_lea.vmem %s19, %s1193
        %p1195 = pneg %p536
        %p1196 = pneg %p533
        %p1197 = scmp.lt.s32.totalorder %s41, 1
        %s1198 = scalar_select %p1197, %s41, 1
        %s1199 = smul.addr %s1198, 8
        %s1200 = smul.addr %s1199, 8
        %s1201 = scalar_lea.vmem %s20, %s1200
        %p1202 = pneg %p562
        %p1203 = pneg %p559
        %p1204 = scmp.lt.s32.totalorder %s41, 1
        %s1205 = scalar_select %p1204, %s41, 1
        %s1206 = scalar_lea.vmem %s21, %s1205
        %p1207 = pneg %p588
        %p1208 = pneg %p585
        %p1209 = scmp.lt.s32.totalorder %s41, 1
        %s1210 = scalar_select %p1209, %s41, 1
        %s1211 = smul.addr %s1210, 3
        %s1212 = scalar_lea.vmem %s22, %s1211
        %p1213 = pneg %p614
        %p1214 = pneg %p611
        %p1215 = scmp.lt.s32.totalorder %s41, 1
        %s1216 = scalar_select %p1215, %s41, 1
        %s1217 = smul.addr %s1216, 3
        %s1218 = scalar_lea.vmem %s23, %s1217
        %p1219 = pneg %p640
        %p1220 = pneg %p637
        %p1221 = pneg %p661
        %p1222 = pneg %p658
        %p1223 = pneg %p682
        %p1224 = pneg %p679
        %p1225 = pneg %p703
        %p1226 = pneg %p700
        %p1227 = scmp.lt.s32.totalorder %s41, 1
        %s1228 = scalar_select %p1227, %s41, 1
        %s1229 = smul.addr %s1228, 4
        %s1230 = smul.addr %s1229, 8
        %s1231 = scalar_lea.vmem %s4, %s1230
        %p1232 = scmp.lt.s32.totalorder %s41, 1
        %s1233 = scalar_select %p1232, %s41, 1
        %s1234 = smul.addr %s1233, 4
        %s1235 = smul.addr %s1234, 8
        %s1236 = scalar_lea.vmem %s6, %s1235
        %p1237 = scmp.lt.s32.totalorder %s41, 1
        %s1238 = scalar_select %p1237, %s41, 1
        %s1239 = scalar_lea.vmem %s7, %s1238
        %p1240 = scmp.lt.s32.totalorder %s41, 1
        %s1241 = scalar_select %p1240, %s41, 1
        %s1242 = smul.addr %s1241, 4
        %s1243 = smul.addr %s1242, 8
        %s1244 = scalar_lea.vmem %s8, %s1243
        %p1245 = scmp.lt.s32.totalorder %s41, 1
        %s1246 = scalar_select %p1245, %s41, 1
        %s1247 = scalar_lea.vmem %s11, %s1246
        %p1248 = scmp.lt.s32.totalorder %s41, 1
        %s1249 = scalar_select %p1248, %s41, 1
        %s1250 = scalar_lea.vmem %s13, %s1249
        %p1251 = scmp.lt.s32.totalorder %s41, 1
        %s1252 = scalar_select %p1251, %s41, 1
        %s1253 = scalar_lea.vmem %s15, %s1252
        %p1254 = scmp.lt.s32.totalorder %s41, 1
        %s1255 = scalar_select %p1254, %s41, 1
        %s1256 = scalar_lea.vmem %s17, %s1255
        %p1257 = scmp.lt.s32.totalorder %s41, 1
        %s1258 = scalar_select %p1257, %s41, 1
        %s1259 = scalar_lea.vmem %s19, %s1258
        %p1260 = scmp.lt.s32.totalorder %s41, 1
        %s1261 = scalar_select %p1260, %s41, 1
        %s1262 = smul.addr %s1261, 8
        %s1263 = smul.addr %s1262, 8
        %s1264 = scalar_lea.vmem %s20, %s1263
        %p1265 = scmp.lt.s32.totalorder %s41, 1
        %s1266 = scalar_select %p1265, %s41, 1
        %s1267 = scalar_lea.vmem %s21, %s1266
        %p1268 = scmp.lt.s32.totalorder %s41, 1
        %s1269 = scalar_select %p1268, %s41, 1
        %s1270 = smul.addr %s1269, 3
        %s1271 = scalar_lea.vmem %s22, %s1270
        %p1272 = scmp.lt.s32.totalorder %s41, 1
        %s1273 = scalar_select %p1272, %s41, 1
        %s1274 = smul.addr %s1273, 3
        %s1275 = scalar_lea.vmem %s23, %s1274
        %p1276 = scmp.eq.s32.totalorder %s41, 0
        // Predicated region
        $region169: #{tpu_custom_call.1} parent=123 // pred_check
          %p1277 = pneg %p1276
        $region170: #{tpu_custom_call.1} parent=123 // pred_check_branch
          %1279 = sbr.rel (%p1277) target = $region172
        $region171: #{tpu_custom_call.1} parent=123 // pred_region
          %v1280 = vld [vmem:[#allocation4] sm:$0xff]
          %v1281 = vld [vmem:[#allocation4 + $0x8] sm:$0xff]
          %vm1282 = vcmask 261120
          %1283 = vst.msk [vmem:[#allocation2] sm:$0xff] %vm1282, %v1280
          %1284 = vst.msk [vmem:[#allocation2 + $0x8] sm:$0xff] %vm1282, %v1281
          %v1285 = vld [vmem:[#allocation7] sm:$0xff]
          %v1286 = vld [vmem:[#allocation7 + $0x8] sm:$0xff]
          %v1287 = vld [vmem:[#allocation7 + $0x10] sm:$0xff]
          %v1288 = vld [vmem:[#allocation7 + $0x18] sm:$0xff]
          %v1289 = vld [vmem:[#allocation9] sm:$0xff]
          %v1290 = vld [vmem:[#allocation9 + $0x8] sm:$0xff]
          %v1291 = vld [vmem:[#allocation9 + $0x10] sm:$0xff]
          %v1292 = vld [vmem:[#allocation9 + $0x18] sm:$0xff]
          %v1293 = vadd.f32 %v1285, %v1289
          %v1294 = vadd.f32 %v1286, %v1290
          %v1295 = vadd.f32 %v1287, %v1291
          %v1296 = vadd.f32 %v1288, %v1292
          %1297 = vst.msk [vmem:[#allocation3] sm:$0xff] %vm1282, %v1293
          %1298 = vst.msk [vmem:[#allocation3 + $0x8] sm:$0xff] %vm1282, %v1294
          %1299 = vst.msk [vmem:[#allocation3 + $0x10] sm:$0xff] %vm1282, %v1295
          %1300 = vst.msk [vmem:[#allocation3 + $0x18] sm:$0xff] %vm1282, %v1296
        $region172: #{tpu_custom_call.1} parent=123 // pred_fallthru
          _
        %v1301 = vld [vmem:[#allocation2] sm:$0xff]
        %v1302 = vld [vmem:[#allocation2 + $0x8] sm:$0xff]
        %v1303 = vld [vmem:[#allocation10] sm:$0xff]
        %v1304 = vld [vmem:[#allocation10 + $0x8] sm:$0xff]
        %v1305 = vld [vmem:[#allocation7] sm:$0xff]
        %v1306 = vld [vmem:[#allocation7 + $0x8] sm:$0xff]
        %v1307 = vld [vmem:[#allocation7 + $0x10] sm:$0xff]
        %v1308 = vld [vmem:[#allocation7 + $0x18] sm:$0xff]
        %v1309 = vld [vmem:[#allocation3] sm:$0xff]
        %v1310 = vld [vmem:[#allocation3 + $0x8] sm:$0xff]
        %v1311 = vld [vmem:[#allocation3 + $0x10] sm:$0xff]
        %v1312 = vld [vmem:[#allocation3 + $0x18] sm:$0xff]
        %v1313 = vld [vmem:[%s1271] sm:$0x1]
        %v1314 = vld [vmem:[%s1271 + $0x1] sm:$0x1]
        %v1315 = vld [vmem:[%s1271 + $0x2] sm:$0x1]
        %v1316 = vld [vmem:[%s1275] sm:$0x1]
        %v1317 = vld [vmem:[%s1275 + $0x1] sm:$0x1]
        %v1318 = vld [vmem:[%s1275 + $0x2] sm:$0x1]
        %v1319 = vadd.f32 %v1301, %v1303
        %v1320 = vadd.f32 %v1302, %v1304
        %v1321 = vld [vmem:[%s1231] sm:$0xff]
        %v1322 = vld [vmem:[%s1231 + $0x8] sm:$0xff]
        %v1323 = vld [vmem:[%s1231 + $0x10] sm:$0xff]
        %v1324 = vld [vmem:[%s1231 + $0x18] sm:$0xff]
        %v1325 = vld [vmem:[%s1033] sm:$0x1]
        %vm1326 = vcmask 261120
        %v1328 = vsel %vm1326, %v1319, 0
        %1330 = vmatprep.subr.mxu0 0.0
        %1331 = vmatpush1.msra.mxu0 0.0
        %1332 = vmatprep.subr.mxu0 0.0
        %1333 = vmatpush1.msra.mxu0 0.0
        %1334 = vmatprep.subr.mxu0 0.0
        %1335 = vmatpush1.msra.mxu0 0.0
        %1336 = vmatprep.subr.mxu0 0.0
        %1337 = vmatpush1.msra.mxu0 0.0
        %1338 = vmatprep.subr.mxu0 0.0
        %1339 = vmatpush1.msra.mxu0 0.0
        %1340 = vmatprep.subr.mxu0 0.0
        %1341 = vmatpush1.msra.mxu0 0.0
        %1342 = vmatprep.subr.mxu0 0.0
        %1343 = vmatpush1.msra.mxu0 0.0
        %1344 = vmatprep.subr.mxu0 0.0
        %1345 = vmatpush1.msra.mxu0 0.0
        %1346 = vmatprep.subr.mxu0 0.0
        %1347 = vmatpush1.msra.mxu0 0.0
        %1348 = vmatprep.subr.mxu0 0.0
        %1349 = vmatpush1.msra.mxu0 0.0
        %1350 = vmatprep.subr.mxu0 0.0
        %1351 = vmatpush1.msra.mxu0 0.0
        %1352 = vmatprep.subr.mxu0 0.0
        %1353 = vmatpush1.msra.mxu0 0.0
        %1354 = vmatprep.subr.mxu0 0.0
        %1355 = vmatpush1.msra.mxu0 %v1324
        %1356 = vmatprep.subr.mxu0 0.0
        %1357 = vmatpush1.msra.mxu0 %v1323
        %1358 = vmatprep.subr.mxu0 0.0
        %1359 = vmatpush1.msra.mxu0 %v1322
        %1360 = vmatprep.subr.mxu0 0.0
        %1361 = vmatpush1.msra.mxu0 %v1321
        %1362 = vmatprep.subr.mxu0 0.0
        %1363 = vmatpush2.msra.mxu0 0.0
        %1364 = vmatprep.subr.mxu0 0.0
        %1365 = vmatpush2.msra.mxu0 0.0
        %1366 = vmatprep.subr.mxu0 0.0
        %1367 = vmatpush2.msra.mxu0 0.0
        %1368 = vmatprep.subr.mxu0 0.0
        %1369 = vmatpush2.msra.mxu0 0.0
        %1370 = vmatprep.subr.mxu0 0.0
        %1371 = vmatpush2.msra.mxu0 0.0
        %1372 = vmatprep.subr.mxu0 0.0
        %1373 = vmatpush2.msra.mxu0 0.0
        %1374 = vmatprep.subr.mxu0 0.0
        %1375 = vmatpush2.msra.mxu0 0.0
        %1376 = vmatprep.subr.mxu0 0.0
        %1377 = vmatpush2.msra.mxu0 0.0
        %1378 = vmatprep.subr.mxu0 0.0
        %1379 = vmatpush2.msra.mxu0 0.0
        %1380 = vmatprep.subr.mxu0 0.0
        %1381 = vmatpush2.msra.mxu0 0.0
        %1382 = vmatprep.subr.mxu0 0.0
        %1383 = vmatpush2.msra.mxu0 0.0
        %1384 = vmatprep.subr.mxu0 0.0
        %1385 = vmatpush2.msra.mxu0 0.0
        %1386 = vmatprep.subr.mxu0 0.0
        %1387 = vmatpush2.msra.mxu0 0.0
        %1388 = vmatprep.subr.mxu0 0.0
        %1389 = vmatpush2.msra.mxu0 0.0
        %1390 = vmatprep.subr.mxu0 0.0
        %1391 = vmatpush2.msra.mxu0 0.0
        %1392 = vmatprep.subr.mxu0 0.0
        %1393 = vmatpush2.msra.mxu0 0.0
        %1394 = vmatprep.mubr.f32.mxu0 0.0
        %1395 = vmatmul.mubr.f32.gmra.mxu0 %v1328
        %v1396 = vpop.f32.mrf.mxu0
        %v1397 = vadd.f32 0.0, %v1396
        %v1398 = vpop.f32.mrf.mxu0
        %1399 = vdwg.mxu0
        %v1401 = vsel %vm1326, %v1320, 0
        %1403 = vmatprep.subr.mxu0 0.0
        %1404 = vmatpush1.msra.mxu0 0.0
        %1405 = vmatprep.subr.mxu0 0.0
        %1406 = vmatpush1.msra.mxu0 0.0
        %1407 = vmatprep.subr.mxu0 0.0
        %1408 = vmatpush1.msra.mxu0 0.0
        %1409 = vmatprep.subr.mxu0 0.0
        %1410 = vmatpush1.msra.mxu0 0.0
        %1411 = vmatprep.subr.mxu0 0.0
        %1412 = vmatpush1.msra.mxu0 0.0
        %1413 = vmatprep.subr.mxu0 0.0
        %1414 = vmatpush1.msra.mxu0 0.0
        %1415 = vmatprep.subr.mxu0 0.0
        %1416 = vmatpush1.msra.mxu0 0.0
        %1417 = vmatprep.subr.mxu0 0.0
        %1418 = vmatpush1.msra.mxu0 0.0
        %1419 = vmatprep.subr.mxu0 0.0
        %1420 = vmatpush1.msra.mxu0 0.0
        %1421 = vmatprep.subr.mxu0 0.0
        %1422 = vmatpush1.msra.mxu0 0.0
        %1423 = vmatprep.subr.mxu0 0.0
        %1424 = vmatpush1.msra.mxu0 0.0
        %1425 = vmatprep.subr.mxu0 0.0
        %1426 = vmatpush1.msra.mxu0 0.0
        %1427 = vmatprep.subr.mxu0 0.0
        %1428 = vmatpush1.msra.mxu0 %v1324
        %1429 = vmatprep.subr.mxu0 0.0
        %1430 = vmatpush1.msra.mxu0 %v1323
        %1431 = vmatprep.subr.mxu0 0.0
        %1432 = vmatpush1.msra.mxu0 %v1322
        %1433 = vmatprep.subr.mxu0 0.0
        %1434 = vmatpush1.msra.mxu0 %v1321
        %1435 = vmatprep.subr.mxu0 0.0
        %1436 = vmatpush2.msra.mxu0 0.0
        %1437 = vmatprep.subr.mxu0 0.0
        %1438 = vmatpush2.msra.mxu0 0.0
        %1439 = vmatprep.subr.mxu0 0.0
        %1440 = vmatpush2.msra.mxu0 0.0
        %1441 = vmatprep.subr.mxu0 0.0
        %1442 = vmatpush2.msra.mxu0 0.0
        %1443 = vmatprep.subr.mxu0 0.0
        %1444 = vmatpush2.msra.mxu0 0.0
        %1445 = vmatprep.subr.mxu0 0.0
        %1446 = vmatpush2.msra.mxu0 0.0
        %1447 = vmatprep.subr.mxu0 0.0
        %1448 = vmatpush2.msra.mxu0 0.0
        %1449 = vmatprep.subr.mxu0 0.0
        %1450 = vmatpush2.msra.mxu0 0.0
        %1451 = vmatprep.subr.mxu0 0.0
        %1452 = vmatpush2.msra.mxu0 0.0
        %1453 = vmatprep.subr.mxu0 0.0
        %1454 = vmatpush2.msra.mxu0 0.0
        %1455 = vmatprep.subr.mxu0 0.0
        %1456 = vmatpush2.msra.mxu0 0.0
        %1457 = vmatprep.subr.mxu0 0.0
        %1458 = vmatpush2.msra.mxu0 0.0
        %1459 = vmatprep.subr.mxu0 0.0
        %1460 = vmatpush2.msra.mxu0 0.0
        %1461 = vmatprep.subr.mxu0 0.0
        %1462 = vmatpush2.msra.mxu0 0.0
        %1463 = vmatprep.subr.mxu0 0.0
        %1464 = vmatpush2.msra.mxu0 0.0
        %1465 = vmatprep.subr.mxu0 0.0
        %1466 = vmatpush2.msra.mxu0 0.0
        %1467 = vmatprep.mubr.f32.mxu0 0.0
        %1468 = vmatmul.mubr.f32.gmra.mxu0 %v1401
        %v1469 = vpop.f32.mrf.mxu0
        %v1470 = vadd.f32 0.0, %v1469
        %v1471 = vpop.f32.mrf.mxu0
        %1472 = vdwg.mxu0
        %v1474 = vlaneseq
        %v1475 = vshrl.u32 %v1474, 7
        %v1476 = vsub.s32 0, %v1475
        %v1477 = vrot.slane %v1325, %v1476
        %v1479 = vadd.f32 %v1397, %v1477
        %v1480 = vadd.f32 %v1470, %v1477
        %v1481 = vld [vmem:[%s1236] sm:$0xff]
        %v1482 = vld [vmem:[%s1236 + $0x8] sm:$0xff]
        %v1483 = vld [vmem:[%s1236 + $0x10] sm:$0xff]
        %v1484 = vld [vmem:[%s1236 + $0x18] sm:$0xff]
        %v1485 = vld [vmem:[%s1239] sm:$0x1]
        %v1487 = vsel %vm1326, %v1301, 0
        %1489 = vmatprep.subr.mxu0 0.0
        %1490 = vmatpush1.msra.mxu0 0.0
        %1491 = vmatprep.subr.mxu0 0.0
        %1492 = vmatpush1.msra.mxu0 0.0
        %1493 = vmatprep.subr.mxu0 0.0
        %1494 = vmatpush1.msra.mxu0 0.0
        %1495 = vmatprep.subr.mxu0 0.0
        %1496 = vmatpush1.msra.mxu0 0.0
        %1497 = vmatprep.subr.mxu0 0.0
        %1498 = vmatpush1.msra.mxu0 0.0
        %1499 = vmatprep.subr.mxu0 0.0
        %1500 = vmatpush1.msra.mxu0 0.0
        %1501 = vmatprep.subr.mxu0 0.0
        %1502 = vmatpush1.msra.mxu0 0.0
        %1503 = vmatprep.subr.mxu0 0.0
        %1504 = vmatpush1.msra.mxu0 0.0
        %1505 = vmatprep.subr.mxu0 0.0
        %1506 = vmatpush1.msra.mxu0 0.0
        %1507 = vmatprep.subr.mxu0 0.0
        %1508 = vmatpush1.msra.mxu0 0.0
        %1509 = vmatprep.subr.mxu0 0.0
        %1510 = vmatpush1.msra.mxu0 0.0
        %1511 = vmatprep.subr.mxu0 0.0
        %1512 = vmatpush1.msra.mxu0 0.0
        %1513 = vmatprep.subr.mxu0 0.0
        %1514 = vmatpush1.msra.mxu0 %v1484
        %1515 = vmatprep.subr.mxu0 0.0
        %1516 = vmatpush1.msra.mxu0 %v1483
        %1517 = vmatprep.subr.mxu0 0.0
        %1518 = vmatpush1.msra.mxu0 %v1482
        %1519 = vmatprep.subr.mxu0 0.0
        %1520 = vmatpush1.msra.mxu0 %v1481
        %1521 = vmatprep.subr.mxu0 0.0
        %1522 = vmatpush2.msra.mxu0 0.0
        %1523 = vmatprep.subr.mxu0 0.0
        %1524 = vmatpush2.msra.mxu0 0.0
        %1525 = vmatprep.subr.mxu0 0.0
        %1526 = vmatpush2.msra.mxu0 0.0
        %1527 = vmatprep.subr.mxu0 0.0
        %1528 = vmatpush2.msra.mxu0 0.0
        %1529 = vmatprep.subr.mxu0 0.0
        %1530 = vmatpush2.msra.mxu0 0.0
        %1531 = vmatprep.subr.mxu0 0.0
        %1532 = vmatpush2.msra.mxu0 0.0
        %1533 = vmatprep.subr.mxu0 0.0
        %1534 = vmatpush2.msra.mxu0 0.0
        %1535 = vmatprep.subr.mxu0 0.0
        %1536 = vmatpush2.msra.mxu0 0.0
        %1537 = vmatprep.subr.mxu0 0.0
        %1538 = vmatpush2.msra.mxu0 0.0
        %1539 = vmatprep.subr.mxu0 0.0
        %1540 = vmatpush2.msra.mxu0 0.0
        %1541 = vmatprep.subr.mxu0 0.0
        %1542 = vmatpush2.msra.mxu0 0.0
        %1543 = vmatprep.subr.mxu0 0.0
        %1544 = vmatpush2.msra.mxu0 0.0
        %1545 = vmatprep.subr.mxu0 0.0
        %1546 = vmatpush2.msra.mxu0 0.0
        %1547 = vmatprep.subr.mxu0 0.0
        %1548 = vmatpush2.msra.mxu0 0.0
        %1549 = vmatprep.subr.mxu0 0.0
        %1550 = vmatpush2.msra.mxu0 0.0
        %1551 = vmatprep.subr.mxu0 0.0
        %1552 = vmatpush2.msra.mxu0 0.0
        %1553 = vmatprep.mubr.f32.mxu0 0.0
        %1554 = vmatmul.mubr.f32.gmra.mxu0 %v1487
        %v1555 = vpop.f32.mrf.mxu0
        %v1556 = vadd.f32 0.0, %v1555
        %v1557 = vpop.f32.mrf.mxu0
        %1558 = vdwg.mxu0
        %v1560 = vsel %vm1326, %v1302, 0
        %1562 = vmatprep.subr.mxu0 0.0
        %1563 = vmatpush1.msra.mxu0 0.0
        %1564 = vmatprep.subr.mxu0 0.0
        %1565 = vmatpush1.msra.mxu0 0.0
        %1566 = vmatprep.subr.mxu0 0.0
        %1567 = vmatpush1.msra.mxu0 0.0
        %1568 = vmatprep.subr.mxu0 0.0
        %1569 = vmatpush1.msra.mxu0 0.0
        %1570 = vmatprep.subr.mxu0 0.0
        %1571 = vmatpush1.msra.mxu0 0.0
        %1572 = vmatprep.subr.mxu0 0.0
        %1573 = vmatpush1.msra.mxu0 0.0
        %1574 = vmatprep.subr.mxu0 0.0
        %1575 = vmatpush1.msra.mxu0 0.0
        %1576 = vmatprep.subr.mxu0 0.0
        %1577 = vmatpush1.msra.mxu0 0.0
        %1578 = vmatprep.subr.mxu0 0.0
        %1579 = vmatpush1.msra.mxu0 0.0
        %1580 = vmatprep.subr.mxu0 0.0
        %1581 = vmatpush1.msra.mxu0 0.0
        %1582 = vmatprep.subr.mxu0 0.0
        %1583 = vmatpush1.msra.mxu0 0.0
        %1584 = vmatprep.subr.mxu0 0.0
        %1585 = vmatpush1.msra.mxu0 0.0
        %1586 = vmatprep.subr.mxu0 0.0
        %1587 = vmatpush1.msra.mxu0 %v1484
        %1588 = vmatprep.subr.mxu0 0.0
        %1589 = vmatpush1.msra.mxu0 %v1483
        %1590 = vmatprep.subr.mxu0 0.0
        %1591 = vmatpush1.msra.mxu0 %v1482
        %1592 = vmatprep.subr.mxu0 0.0
        %1593 = vmatpush1.msra.mxu0 %v1481
        %1594 = vmatprep.subr.mxu0 0.0
        %1595 = vmatpush2.msra.mxu0 0.0
        %1596 = vmatprep.subr.mxu0 0.0
        %1597 = vmatpush2.msra.mxu0 0.0
        %1598 = vmatprep.subr.mxu0 0.0
        %1599 = vmatpush2.msra.mxu0 0.0
        %1600 = vmatprep.subr.mxu0 0.0
        %1601 = vmatpush2.msra.mxu0 0.0
        %1602 = vmatprep.subr.mxu0 0.0
        %1603 = vmatpush2.msra.mxu0 0.0
        %1604 = vmatprep.subr.mxu0 0.0
        %1605 = vmatpush2.msra.mxu0 0.0
        %1606 = vmatprep.subr.mxu0 0.0
        %1607 = vmatpush2.msra.mxu0 0.0
        %1608 = vmatprep.subr.mxu0 0.0
        %1609 = vmatpush2.msra.mxu0 0.0
        %1610 = vmatprep.subr.mxu0 0.0
        %1611 = vmatpush2.msra.mxu0 0.0
        %1612 = vmatprep.subr.mxu0 0.0
        %1613 = vmatpush2.msra.mxu0 0.0
        %1614 = vmatprep.subr.mxu0 0.0
        %1615 = vmatpush2.msra.mxu0 0.0
        %1616 = vmatprep.subr.mxu0 0.0
        %1617 = vmatpush2.msra.mxu0 0.0
        %1618 = vmatprep.subr.mxu0 0.0
        %1619 = vmatpush2.msra.mxu0 0.0
        %1620 = vmatprep.subr.mxu0 0.0
        %1621 = vmatpush2.msra.mxu0 0.0
        %1622 = vmatprep.subr.mxu0 0.0
        %1623 = vmatpush2.msra.mxu0 0.0
        %1624 = vmatprep.subr.mxu0 0.0
        %1625 = vmatpush2.msra.mxu0 0.0
        %1626 = vmatprep.mubr.f32.mxu0 0.0
        %1627 = vmatmul.mubr.f32.gmra.mxu0 %v1560
        %v1628 = vpop.f32.mrf.mxu0
        %v1629 = vadd.f32 0.0, %v1628
        %v1630 = vpop.f32.mrf.mxu0
        %1631 = vdwg.mxu0
        %v1633 = vlaneseq
        %v1634 = vshrl.u32 %v1633, 7
        %v1635 = vsub.s32 0, %v1634
        %v1636 = vrot.slane %v1485, %v1635
        %v1638 = vadd.f32 %v1556, %v1636
        %v1639 = vadd.f32 %v1629, %v1636
        %v1640 = vld [vmem:[%s1244] sm:$0xff]
        %v1641 = vld [vmem:[%s1244 + $0x8] sm:$0xff]
        %v1642 = vld [vmem:[%s1244 + $0x10] sm:$0xff]
        %v1643 = vld [vmem:[%s1244 + $0x18] sm:$0xff]
        %v1644 = vld [vmem:[%s1041] sm:$0x1]
        %1646 = vrot.lane.b32.xlu0 %v1479, 96
        %v1647 = vpop.permute.xlu0 %1646
        %vm1648 = vcmask 64512
        %v1649 = vsel %vm1648, %v1479, 0
        %v1651 = vsel %vm1648, %v1647, 0
        %1653 = vmatprep.subr.mxu0 0.0
        %1654 = vmatpush1.xpose.msra.mxu0 0.0
        %1655 = vmatprep.subr.mxu0 0.0
        %1656 = vmatpush1.xpose.msra.mxu0 0.0
        %1657 = vmatprep.subr.mxu0 0.0
        %1658 = vmatpush1.xpose.msra.mxu0 0.0
        %1659 = vmatprep.subr.mxu0 0.0
        %1660 = vmatpush1.xpose.msra.mxu0 0.0
        %1661 = vmatprep.subr.mxu0 0.0
        %1662 = vmatpush1.xpose.msra.mxu0 0.0
        %1663 = vmatprep.subr.mxu0 0.0
        %1664 = vmatpush1.xpose.msra.mxu0 0.0
        %1665 = vmatprep.subr.mxu0 0.0
        %1666 = vmatpush1.xpose.msra.mxu0 0.0
        %1667 = vmatprep.subr.mxu0 0.0
        %1668 = vmatpush1.xpose.msra.mxu0 0.0
        %1669 = vmatprep.subr.mxu0 0.0
        %1670 = vmatpush1.xpose.msra.mxu0 0.0
        %1671 = vmatprep.subr.mxu0 0.0
        %1672 = vmatpush1.xpose.msra.mxu0 0.0
        %1673 = vmatprep.subr.mxu0 0.0
        %1674 = vmatpush1.xpose.msra.mxu0 0.0
        %1675 = vmatprep.subr.mxu0 0.0
        %1676 = vmatpush1.xpose.msra.mxu0 0.0
        %1677 = vmatprep.subr.mxu0 0.0
        %1678 = vmatpush1.xpose.msra.mxu0 0.0
        %1679 = vmatprep.subr.mxu0 0.0
        %1680 = vmatpush1.xpose.msra.mxu0 0.0
        %1681 = vmatprep.subr.mxu0 0.0
        %1682 = vmatpush1.xpose.msra.mxu0 0.0
        %1683 = vmatprep.subr.mxu0 0.0
        %1684 = vmatpush1.xpose.msra.mxu0 %v1651
        %1685 = vmatprep.subr.mxu0 0.0
        %1686 = vmatpush2.xpose.msra.mxu0 0.0
        %1687 = vmatprep.subr.mxu0 0.0
        %1688 = vmatpush2.xpose.msra.mxu0 0.0
        %1689 = vmatprep.subr.mxu0 0.0
        %1690 = vmatpush2.xpose.msra.mxu0 0.0
        %1691 = vmatprep.subr.mxu0 0.0
        %1692 = vmatpush2.xpose.msra.mxu0 0.0
        %1693 = vmatprep.subr.mxu0 0.0
        %1694 = vmatpush2.xpose.msra.mxu0 0.0
        %1695 = vmatprep.subr.mxu0 0.0
        %1696 = vmatpush2.xpose.msra.mxu0 0.0
        %1697 = vmatprep.subr.mxu0 0.0
        %1698 = vmatpush2.xpose.msra.mxu0 0.0
        %1699 = vmatprep.subr.mxu0 0.0
        %1700 = vmatpush2.xpose.msra.mxu0 0.0
        %1701 = vmatprep.subr.mxu0 0.0
        %1702 = vmatpush2.xpose.msra.mxu0 0.0
        %1703 = vmatprep.subr.mxu0 0.0
        %1704 = vmatpush2.xpose.msra.mxu0 0.0
        %1705 = vmatprep.subr.mxu0 0.0
        %1706 = vmatpush2.xpose.msra.mxu0 0.0
        %1707 = vmatprep.subr.mxu0 0.0
        %1708 = vmatpush2.xpose.msra.mxu0 0.0
        %1709 = vmatprep.subr.mxu0 0.0
        %1710 = vmatpush2.xpose.msra.mxu0 0.0
        %1711 = vmatprep.subr.mxu0 0.0
        %1712 = vmatpush2.xpose.msra.mxu0 0.0
        %1713 = vmatprep.subr.mxu0 0.0
        %1714 = vmatpush2.xpose.msra.mxu0 0.0
        %1715 = vmatprep.subr.mxu0 0.0
        %1716 = vmatpush2.xpose.msra.mxu0 0.0
        %1717 = vmatprep.mubr.f32.mxu0 0.0
        %1718 = vmatmul.mubr.f32.gmra.mxu0 %v1649
        %v1719 = vpop.f32.mrf.mxu0
        %v1720 = vadd.f32 0.0, %v1719
        %v1721 = vpop.f32.mrf.mxu0
        %1722 = vdwg.mxu0
        %1724 = vrot.lane.b32.xlu0 %v1480, 96
        %v1725 = vpop.permute.xlu0 %1724
        %v1726 = vsel %vm1648, %v1480, 0
        %v1728 = vsel %vm1648, %v1725, 0
        %1730 = vmatprep.subr.mxu0 0.0
        %1731 = vmatpush1.xpose.msra.mxu0 0.0
        %1732 = vmatprep.subr.mxu0 0.0
        %1733 = vmatpush1.xpose.msra.mxu0 0.0
        %1734 = vmatprep.subr.mxu0 0.0
        %1735 = vmatpush1.xpose.msra.mxu0 0.0
        %1736 = vmatprep.subr.mxu0 0.0
        %1737 = vmatpush1.xpose.msra.mxu0 0.0
        %1738 = vmatprep.subr.mxu0 0.0
        %1739 = vmatpush1.xpose.msra.mxu0 0.0
        %1740 = vmatprep.subr.mxu0 0.0
        %1741 = vmatpush1.xpose.msra.mxu0 0.0
        %1742 = vmatprep.subr.mxu0 0.0
        %1743 = vmatpush1.xpose.msra.mxu0 0.0
        %1744 = vmatprep.subr.mxu0 0.0
        %1745 = vmatpush1.xpose.msra.mxu0 0.0
        %1746 = vmatprep.subr.mxu0 0.0
        %1747 = vmatpush1.xpose.msra.mxu0 0.0
        %1748 = vmatprep.subr.mxu0 0.0
        %1749 = vmatpush1.xpose.msra.mxu0 0.0
        %1750 = vmatprep.subr.mxu0 0.0
        %1751 = vmatpush1.xpose.msra.mxu0 0.0
        %1752 = vmatprep.subr.mxu0 0.0
        %1753 = vmatpush1.xpose.msra.mxu0 0.0
        %1754 = vmatprep.subr.mxu0 0.0
        %1755 = vmatpush1.xpose.msra.mxu0 0.0
        %1756 = vmatprep.subr.mxu0 0.0
        %1757 = vmatpush1.xpose.msra.mxu0 0.0
        %1758 = vmatprep.subr.mxu0 0.0
        %1759 = vmatpush1.xpose.msra.mxu0 0.0
        %1760 = vmatprep.subr.mxu0 0.0
        %1761 = vmatpush1.xpose.msra.mxu0 %v1728
        %1762 = vmatprep.subr.mxu0 0.0
        %1763 = vmatpush2.xpose.msra.mxu0 0.0
        %1764 = vmatprep.subr.mxu0 0.0
        %1765 = vmatpush2.xpose.msra.mxu0 0.0
        %1766 = vmatprep.subr.mxu0 0.0
        %1767 = vmatpush2.xpose.msra.mxu0 0.0
        %1768 = vmatprep.subr.mxu0 0.0
        %1769 = vmatpush2.xpose.msra.mxu0 0.0
        %1770 = vmatprep.subr.mxu0 0.0
        %1771 = vmatpush2.xpose.msra.mxu0 0.0
        %1772 = vmatprep.subr.mxu0 0.0
        %1773 = vmatpush2.xpose.msra.mxu0 0.0
        %1774 = vmatprep.subr.mxu0 0.0
        %1775 = vmatpush2.xpose.msra.mxu0 0.0
        %1776 = vmatprep.subr.mxu0 0.0
        %1777 = vmatpush2.xpose.msra.mxu0 0.0
        %1778 = vmatprep.subr.mxu0 0.0
        %1779 = vmatpush2.xpose.msra.mxu0 0.0
        %1780 = vmatprep.subr.mxu0 0.0
        %1781 = vmatpush2.xpose.msra.mxu0 0.0
        %1782 = vmatprep.subr.mxu0 0.0
        %1783 = vmatpush2.xpose.msra.mxu0 0.0
        %1784 = vmatprep.subr.mxu0 0.0
        %1785 = vmatpush2.xpose.msra.mxu0 0.0
        %1786 = vmatprep.subr.mxu0 0.0
        %1787 = vmatpush2.xpose.msra.mxu0 0.0
        %1788 = vmatprep.subr.mxu0 0.0
        %1789 = vmatpush2.xpose.msra.mxu0 0.0
        %1790 = vmatprep.subr.mxu0 0.0
        %1791 = vmatpush2.xpose.msra.mxu0 0.0
        %1792 = vmatprep.subr.mxu0 0.0
        %1793 = vmatpush2.xpose.msra.mxu0 0.0
        %1794 = vmatprep.mubr.f32.mxu0 0.0
        %1795 = vmatmul.mubr.f32.gmra.mxu0 %v1726
        %v1796 = vpop.f32.mrf.mxu0
        %v1797 = vadd.f32 0.0, %v1796
        %v1798 = vpop.f32.mrf.mxu0
        %1799 = vdwg.mxu0
        %v1800 = vsel %vm1648, %v1720, -inf
        %1801 = vmax.xlane.f32.xlu0 %v1800
        %v1802 = vpop.xlane.xlu0 %1801
        %v1803 = vsel %vm1648, %v1797, -inf
        %1804 = vmax.xlane.f32.xlu0 %v1803
        %v1805 = vpop.xlane.xlu0 %1804
        %v1806 = vsub.f32 %v1720, %v1802
        %v1807 = vsub.f32 %v1797, %v1805
        %v1808 = vmul.f32 %v1806, 1.442695
        %v1809 = vpow.pop %v1808
        %v1810 = vmul.f32 %v1807, 1.442695
        %v1811 = vpow.pop %v1810
        %v1812 = vsel %vm1648, %v1809, 0.0
        %1813 = vadd.xlane.f32.xlu0 %v1812
        %v1814 = vpop.xlane.xlu0 %1813
        %v1815 = vsel %vm1648, %v1811, 0.0
        %1816 = vadd.xlane.f32.xlu0 %v1815
        %v1817 = vpop.xlane.xlu0 %1816
        %v1818 = vrcp.pop %v1814
        %v1819 = vrcp.pop %v1817
        %v1820 = vmul.f32 %v1814, %v1818
        %v1821 = vmul.f32 %v1817, %v1819
        %v1822 = vsub.f32 2.0, %v1820
        %v1823 = vsub.f32 2.0, %v1821
        %v1824 = vmul.f32 %v1818, %v1822
        %v1825 = vmul.f32 %v1819, %v1823
        %v1827 = vsel %vm1648, %v1809, 0
        %1829 = vmatprep.subr.mxu0 0.0
        %1830 = vmatpush1.msra.mxu0 0.0
        %1831 = vmatprep.subr.mxu0 0.0
        %1832 = vmatpush1.msra.mxu0 0.0
        %1833 = vmatprep.subr.mxu0 0.0
        %1834 = vmatpush1.msra.mxu0 0.0
        %1835 = vmatprep.subr.mxu0 0.0
        %1836 = vmatpush1.msra.mxu0 0.0
        %1837 = vmatprep.subr.mxu0 0.0
        %1838 = vmatpush1.msra.mxu0 0.0
        %1839 = vmatprep.subr.mxu0 0.0
        %1840 = vmatpush1.msra.mxu0 0.0
        %1841 = vmatprep.subr.mxu0 0.0
        %1842 = vmatpush1.msra.mxu0 0.0
        %1843 = vmatprep.subr.mxu0 0.0
        %1844 = vmatpush1.msra.mxu0 0.0
        %1845 = vmatprep.subr.mxu0 0.0
        %1846 = vmatpush1.msra.mxu0 0.0
        %1847 = vmatprep.subr.mxu0 0.0
        %1848 = vmatpush1.msra.mxu0 0.0
        %1849 = vmatprep.subr.mxu0 0.0
        %1850 = vmatpush1.msra.mxu0 0.0
        %1851 = vmatprep.subr.mxu0 0.0
        %1852 = vmatpush1.msra.mxu0 0.0
        %1853 = vmatprep.subr.mxu0 0.0
        %1854 = vmatpush1.msra.mxu0 0.0
        %1855 = vmatprep.subr.mxu0 0.0
        %1856 = vmatpush1.msra.mxu0 0.0
        %1857 = vmatprep.subr.mxu0 0.0
        %1858 = vmatpush1.msra.mxu0 0.0
        %1859 = vmatprep.subr.mxu0 0.0
        %1860 = vmatpush1.msra.mxu0 %v1638
        %1861 = vmatprep.subr.mxu0 0.0
        %1862 = vmatpush2.msra.mxu0 0.0
        %1863 = vmatprep.subr.mxu0 0.0
        %1864 = vmatpush2.msra.mxu0 0.0
        %1865 = vmatprep.subr.mxu0 0.0
        %1866 = vmatpush2.msra.mxu0 0.0
        %1867 = vmatprep.subr.mxu0 0.0
        %1868 = vmatpush2.msra.mxu0 0.0
        %1869 = vmatprep.subr.mxu0 0.0
        %1870 = vmatpush2.msra.mxu0 0.0
        %1871 = vmatprep.subr.mxu0 0.0
        %1872 = vmatpush2.msra.mxu0 0.0
        %1873 = vmatprep.subr.mxu0 0.0
        %1874 = vmatpush2.msra.mxu0 0.0
        %1875 = vmatprep.subr.mxu0 0.0
        %1876 = vmatpush2.msra.mxu0 0.0
        %1877 = vmatprep.subr.mxu0 0.0
        %1878 = vmatpush2.msra.mxu0 0.0
        %1879 = vmatprep.subr.mxu0 0.0
        %1880 = vmatpush2.msra.mxu0 0.0
        %1881 = vmatprep.subr.mxu0 0.0
        %1882 = vmatpush2.msra.mxu0 0.0
        %1883 = vmatprep.subr.mxu0 0.0
        %1884 = vmatpush2.msra.mxu0 0.0
        %1885 = vmatprep.subr.mxu0 0.0
        %1886 = vmatpush2.msra.mxu0 0.0
        %1887 = vmatprep.subr.mxu0 0.0
        %1888 = vmatpush2.msra.mxu0 0.0
        %1889 = vmatprep.subr.mxu0 0.0
        %1890 = vmatpush2.msra.mxu0 0.0
        %1891 = vmatprep.subr.mxu0 0.0
        %1892 = vmatpush2.msra.mxu0 0.0
        %1893 = vmatprep.mubr.f32.mxu0 0.0
        %1894 = vmatmul.mubr.f32.gmra.mxu0 %v1827
        %v1895 = vpop.f32.mrf.mxu0
        %v1896 = vadd.f32 0.0, %v1895
        %v1897 = vpop.f32.mrf.mxu0
        %1898 = vdwg.mxu0
        %v1900 = vsel %vm1648, %v1811, 0
        %1902 = vmatprep.subr.mxu0 0.0
        %1903 = vmatpush1.msra.mxu0 0.0
        %1904 = vmatprep.subr.mxu0 0.0
        %1905 = vmatpush1.msra.mxu0 0.0
        %1906 = vmatprep.subr.mxu0 0.0
        %1907 = vmatpush1.msra.mxu0 0.0
        %1908 = vmatprep.subr.mxu0 0.0
        %1909 = vmatpush1.msra.mxu0 0.0
        %1910 = vmatprep.subr.mxu0 0.0
        %1911 = vmatpush1.msra.mxu0 0.0
        %1912 = vmatprep.subr.mxu0 0.0
        %1913 = vmatpush1.msra.mxu0 0.0
        %1914 = vmatprep.subr.mxu0 0.0
        %1915 = vmatpush1.msra.mxu0 0.0
        %1916 = vmatprep.subr.mxu0 0.0
        %1917 = vmatpush1.msra.mxu0 0.0
        %1918 = vmatprep.subr.mxu0 0.0
        %1919 = vmatpush1.msra.mxu0 0.0
        %1920 = vmatprep.subr.mxu0 0.0
        %1921 = vmatpush1.msra.mxu0 0.0
        %1922 = vmatprep.subr.mxu0 0.0
        %1923 = vmatpush1.msra.mxu0 0.0
        %1924 = vmatprep.subr.mxu0 0.0
        %1925 = vmatpush1.msra.mxu0 0.0
        %1926 = vmatprep.subr.mxu0 0.0
        %1927 = vmatpush1.msra.mxu0 0.0
        %1928 = vmatprep.subr.mxu0 0.0
        %1929 = vmatpush1.msra.mxu0 0.0
        %1930 = vmatprep.subr.mxu0 0.0
        %1931 = vmatpush1.msra.mxu0 0.0
        %1932 = vmatprep.subr.mxu0 0.0
        %1933 = vmatpush1.msra.mxu0 %v1639
        %1934 = vmatprep.subr.mxu0 0.0
        %1935 = vmatpush2.msra.mxu0 0.0
        %1936 = vmatprep.subr.mxu0 0.0
        %1937 = vmatpush2.msra.mxu0 0.0
        %1938 = vmatprep.subr.mxu0 0.0
        %1939 = vmatpush2.msra.mxu0 0.0
        %1940 = vmatprep.subr.mxu0 0.0
        %1941 = vmatpush2.msra.mxu0 0.0
        %1942 = vmatprep.subr.mxu0 0.0
        %1943 = vmatpush2.msra.mxu0 0.0
        %1944 = vmatprep.subr.mxu0 0.0
        %1945 = vmatpush2.msra.mxu0 0.0
        %1946 = vmatprep.subr.mxu0 0.0
        %1947 = vmatpush2.msra.mxu0 0.0
        %1948 = vmatprep.subr.mxu0 0.0
        %1949 = vmatpush2.msra.mxu0 0.0
        %1950 = vmatprep.subr.mxu0 0.0
        %1951 = vmatpush2.msra.mxu0 0.0
        %1952 = vmatprep.subr.mxu0 0.0
        %1953 = vmatpush2.msra.mxu0 0.0
        %1954 = vmatprep.subr.mxu0 0.0
        %1955 = vmatpush2.msra.mxu0 0.0
        %1956 = vmatprep.subr.mxu0 0.0
        %1957 = vmatpush2.msra.mxu0 0.0
        %1958 = vmatprep.subr.mxu0 0.0
        %1959 = vmatpush2.msra.mxu0 0.0
        %1960 = vmatprep.subr.mxu0 0.0
        %1961 = vmatpush2.msra.mxu0 0.0
        %1962 = vmatprep.subr.mxu0 0.0
        %1963 = vmatpush2.msra.mxu0 0.0
        %1964 = vmatprep.subr.mxu0 0.0
        %1965 = vmatpush2.msra.mxu0 0.0
        %1966 = vmatprep.mubr.f32.mxu0 0.0
        %1967 = vmatmul.mubr.f32.gmra.mxu0 %v1900
        %v1968 = vpop.f32.mrf.mxu0
        %v1969 = vadd.f32 0.0, %v1968
        %v1970 = vpop.f32.mrf.mxu0
        %1971 = vdwg.mxu0
        %v1972 = vmul.f32 %v1896, %v1824
        %v1973 = vmul.f32 %v1969, %v1825
        %1974 = vrot.lane.b32.xlu0 %v1479, 120
        %v1975 = vpop.permute.xlu0 %1974
        %1976 = vrot.lane.b32.xlu0 %v1479, 88
        %v1977 = vpop.permute.xlu0 %1976
        %v1978 = vsel %vm1648, %v1975, 0
        %v1980 = vsel %vm1648, %v1977, 0
        %1982 = vmatprep.subr.mxu0 0.0
        %1983 = vmatpush1.xpose.msra.mxu0 0.0
        %1984 = vmatprep.subr.mxu0 0.0
        %1985 = vmatpush1.xpose.msra.mxu0 0.0
        %1986 = vmatprep.subr.mxu0 0.0
        %1987 = vmatpush1.xpose.msra.mxu0 0.0
        %1988 = vmatprep.subr.mxu0 0.0
        %1989 = vmatpush1.xpose.msra.mxu0 0.0
        %1990 = vmatprep.subr.mxu0 0.0
        %1991 = vmatpush1.xpose.msra.mxu0 0.0
        %1992 = vmatprep.subr.mxu0 0.0
        %1993 = vmatpush1.xpose.msra.mxu0 0.0
        %1994 = vmatprep.subr.mxu0 0.0
        %1995 = vmatpush1.xpose.msra.mxu0 0.0
        %1996 = vmatprep.subr.mxu0 0.0
        %1997 = vmatpush1.xpose.msra.mxu0 0.0
        %1998 = vmatprep.subr.mxu0 0.0
        %1999 = vmatpush1.xpose.msra.mxu0 0.0
        %2000 = vmatprep.subr.mxu0 0.0
        %2001 = vmatpush1.xpose.msra.mxu0 0.0
        %2002 = vmatprep.subr.mxu0 0.0
        %2003 = vmatpush1.xpose.msra.mxu0 0.0
        %2004 = vmatprep.subr.mxu0 0.0
        %2005 = vmatpush1.xpose.msra.mxu0 0.0
        %2006 = vmatprep.subr.mxu0 0.0
        %2007 = vmatpush1.xpose.msra.mxu0 0.0
        %2008 = vmatprep.subr.mxu0 0.0
        %2009 = vmatpush1.xpose.msra.mxu0 0.0
        %2010 = vmatprep.subr.mxu0 0.0
        %2011 = vmatpush1.xpose.msra.mxu0 0.0
        %2012 = vmatprep.subr.mxu0 0.0
        %2013 = vmatpush1.xpose.msra.mxu0 %v1980
        %2014 = vmatprep.subr.mxu0 0.0
        %2015 = vmatpush2.xpose.msra.mxu0 0.0
        %2016 = vmatprep.subr.mxu0 0.0
        %2017 = vmatpush2.xpose.msra.mxu0 0.0
        %2018 = vmatprep.subr.mxu0 0.0
        %2019 = vmatpush2.xpose.msra.mxu0 0.0
        %2020 = vmatprep.subr.mxu0 0.0
        %2021 = vmatpush2.xpose.msra.mxu0 0.0
        %2022 = vmatprep.subr.mxu0 0.0
        %2023 = vmatpush2.xpose.msra.mxu0 0.0
        %2024 = vmatprep.subr.mxu0 0.0
        %2025 = vmatpush2.xpose.msra.mxu0 0.0
        %2026 = vmatprep.subr.mxu0 0.0
        %2027 = vmatpush2.xpose.msra.mxu0 0.0
        %2028 = vmatprep.subr.mxu0 0.0
        %2029 = vmatpush2.xpose.msra.mxu0 0.0
        %2030 = vmatprep.subr.mxu0 0.0
        %2031 = vmatpush2.xpose.msra.mxu0 0.0
        %2032 = vmatprep.subr.mxu0 0.0
        %2033 = vmatpush2.xpose.msra.mxu0 0.0
        %2034 = vmatprep.subr.mxu0 0.0
        %2035 = vmatpush2.xpose.msra.mxu0 0.0
        %2036 = vmatprep.subr.mxu0 0.0
        %2037 = vmatpush2.xpose.msra.mxu0 0.0
        %2038 = vmatprep.subr.mxu0 0.0
        %2039 = vmatpush2.xpose.msra.mxu0 0.0
        %2040 = vmatprep.subr.mxu0 0.0
        %2041 = vmatpush2.xpose.msra.mxu0 0.0
        %2042 = vmatprep.subr.mxu0 0.0
        %2043 = vmatpush2.xpose.msra.mxu0 0.0
        %2044 = vmatprep.subr.mxu0 0.0
        %2045 = vmatpush2.xpose.msra.mxu0 0.0
        %2046 = vmatprep.mubr.f32.mxu0 0.0
        %2047 = vmatmul.mubr.f32.gmra.mxu0 %v1978
        %v2048 = vpop.f32.mrf.mxu0
        %v2049 = vadd.f32 0.0, %v2048
        %v2050 = vpop.f32.mrf.mxu0
        %2051 = vdwg.mxu0
        %2052 = vrot.lane.b32.xlu0 %v1480, 120
        %v2053 = vpop.permute.xlu0 %2052
        %2054 = vrot.lane.b32.xlu0 %v1480, 88
        %v2055 = vpop.permute.xlu0 %2054
        %v2056 = vsel %vm1648, %v2053, 0
        %v2058 = vsel %vm1648, %v2055, 0
        %2060 = vmatprep.subr.mxu0 0.0
        %2061 = vmatpush1.xpose.msra.mxu0 0.0
        %2062 = vmatprep.subr.mxu0 0.0
        %2063 = vmatpush1.xpose.msra.mxu0 0.0
        %2064 = vmatprep.subr.mxu0 0.0
        %2065 = vmatpush1.xpose.msra.mxu0 0.0
        %2066 = vmatprep.subr.mxu0 0.0
        %2067 = vmatpush1.xpose.msra.mxu0 0.0
        %2068 = vmatprep.subr.mxu0 0.0
        %2069 = vmatpush1.xpose.msra.mxu0 0.0
        %2070 = vmatprep.subr.mxu0 0.0
        %2071 = vmatpush1.xpose.msra.mxu0 0.0
        %2072 = vmatprep.subr.mxu0 0.0
        %2073 = vmatpush1.xpose.msra.mxu0 0.0
        %2074 = vmatprep.subr.mxu0 0.0
        %2075 = vmatpush1.xpose.msra.mxu0 0.0
        %2076 = vmatprep.subr.mxu0 0.0
        %2077 = vmatpush1.xpose.msra.mxu0 0.0
        %2078 = vmatprep.subr.mxu0 0.0
        %2079 = vmatpush1.xpose.msra.mxu0 0.0
        %2080 = vmatprep.subr.mxu0 0.0
        %2081 = vmatpush1.xpose.msra.mxu0 0.0
        %2082 = vmatprep.subr.mxu0 0.0
        %2083 = vmatpush1.xpose.msra.mxu0 0.0
        %2084 = vmatprep.subr.mxu0 0.0
        %2085 = vmatpush1.xpose.msra.mxu0 0.0
        %2086 = vmatprep.subr.mxu0 0.0
        %2087 = vmatpush1.xpose.msra.mxu0 0.0
        %2088 = vmatprep.subr.mxu0 0.0
        %2089 = vmatpush1.xpose.msra.mxu0 0.0
        %2090 = vmatprep.subr.mxu0 0.0
        %2091 = vmatpush1.xpose.msra.mxu0 %v2058
        %2092 = vmatprep.subr.mxu0 0.0
        %2093 = vmatpush2.xpose.msra.mxu0 0.0
        %2094 = vmatprep.subr.mxu0 0.0
        %2095 = vmatpush2.xpose.msra.mxu0 0.0
        %2096 = vmatprep.subr.mxu0 0.0
        %2097 = vmatpush2.xpose.msra.mxu0 0.0
        %2098 = vmatprep.subr.mxu0 0.0
        %2099 = vmatpush2.xpose.msra.mxu0 0.0
        %2100 = vmatprep.subr.mxu0 0.0
        %2101 = vmatpush2.xpose.msra.mxu0 0.0
        %2102 = vmatprep.subr.mxu0 0.0
        %2103 = vmatpush2.xpose.msra.mxu0 0.0
        %2104 = vmatprep.subr.mxu0 0.0
        %2105 = vmatpush2.xpose.msra.mxu0 0.0
        %2106 = vmatprep.subr.mxu0 0.0
        %2107 = vmatpush2.xpose.msra.mxu0 0.0
        %2108 = vmatprep.subr.mxu0 0.0
        %2109 = vmatpush2.xpose.msra.mxu0 0.0
        %2110 = vmatprep.subr.mxu0 0.0
        %2111 = vmatpush2.xpose.msra.mxu0 0.0
        %2112 = vmatprep.subr.mxu0 0.0
        %2113 = vmatpush2.xpose.msra.mxu0 0.0
        %2114 = vmatprep.subr.mxu0 0.0
        %2115 = vmatpush2.xpose.msra.mxu0 0.0
        %2116 = vmatprep.subr.mxu0 0.0
        %2117 = vmatpush2.xpose.msra.mxu0 0.0
        %2118 = vmatprep.subr.mxu0 0.0
        %2119 = vmatpush2.xpose.msra.mxu0 0.0
        %2120 = vmatprep.subr.mxu0 0.0
        %2121 = vmatpush2.xpose.msra.mxu0 0.0
        %2122 = vmatprep.subr.mxu0 0.0
        %2123 = vmatpush2.xpose.msra.mxu0 0.0
        %2124 = vmatprep.mubr.f32.mxu0 0.0
        %2125 = vmatmul.mubr.f32.gmra.mxu0 %v2056
        %v2126 = vpop.f32.mrf.mxu0
        %v2127 = vadd.f32 0.0, %v2126
        %v2128 = vpop.f32.mrf.mxu0
        %2129 = vdwg.mxu0
        %v2130 = vsel %vm1648, %v2049, -inf
        %2131 = vmax.xlane.f32.xlu0 %v2130
        %v2132 = vpop.xlane.xlu0 %2131
        %v2133 = vsel %vm1648, %v2127, -inf
        %2134 = vmax.xlane.f32.xlu0 %v2133
        %v2135 = vpop.xlane.xlu0 %2134
        %v2136 = vsub.f32 %v2049, %v2132
        %v2137 = vsub.f32 %v2127, %v2135
        %v2138 = vmul.f32 %v2136, 1.442695
        %v2139 = vpow.pop %v2138
        %v2140 = vmul.f32 %v2137, 1.442695
        %v2141 = vpow.pop %v2140
        %v2142 = vsel %vm1648, %v2139, 0.0
        %2143 = vadd.xlane.f32.xlu0 %v2142
        %v2144 = vpop.xlane.xlu0 %2143
        %v2145 = vsel %vm1648, %v2141, 0.0
        %2146 = vadd.xlane.f32.xlu0 %v2145
        %v2147 = vpop.xlane.xlu0 %2146
        %v2148 = vrcp.pop %v2144
        %v2149 = vrcp.pop %v2147
        %v2150 = vmul.f32 %v2144, %v2148
        %v2151 = vmul.f32 %v2147, %v2149
        %v2152 = vsub.f32 2.0, %v2150
        %v2153 = vsub.f32 2.0, %v2151
        %v2154 = vmul.f32 %v2148, %v2152
        %v2155 = vmul.f32 %v2149, %v2153
        %2157 = vrot.lane.b32.xlu0 %v1638, 120
        %v2158 = vpop.permute.xlu0 %2157
        %v2161 = vsel %vm1648, %v2139, 0
        %2163 = vmatprep.subr.mxu0 0.0
        %2164 = vmatpush1.msra.mxu0 0.0
        %2165 = vmatprep.subr.mxu0 0.0
        %2166 = vmatpush1.msra.mxu0 0.0
        %2167 = vmatprep.subr.mxu0 0.0
        %2168 = vmatpush1.msra.mxu0 0.0
        %2169 = vmatprep.subr.mxu0 0.0
        %2170 = vmatpush1.msra.mxu0 0.0
        %2171 = vmatprep.subr.mxu0 0.0
        %2172 = vmatpush1.msra.mxu0 0.0
        %2173 = vmatprep.subr.mxu0 0.0
        %2174 = vmatpush1.msra.mxu0 0.0
        %2175 = vmatprep.subr.mxu0 0.0
        %2176 = vmatpush1.msra.mxu0 0.0
        %2177 = vmatprep.subr.mxu0 0.0
        %2178 = vmatpush1.msra.mxu0 0.0
        %2179 = vmatprep.subr.mxu0 0.0
        %2180 = vmatpush1.msra.mxu0 0.0
        %2181 = vmatprep.subr.mxu0 0.0
        %2182 = vmatpush1.msra.mxu0 0.0
        %2183 = vmatprep.subr.mxu0 0.0
        %2184 = vmatpush1.msra.mxu0 0.0
        %2185 = vmatprep.subr.mxu0 0.0
        %2186 = vmatpush1.msra.mxu0 0.0
        %2187 = vmatprep.subr.mxu0 0.0
        %2188 = vmatpush1.msra.mxu0 0.0
        %2189 = vmatprep.subr.mxu0 0.0
        %2190 = vmatpush1.msra.mxu0 0.0
        %2191 = vmatprep.subr.mxu0 0.0
        %2192 = vmatpush1.msra.mxu0 0.0
        %2193 = vmatprep.subr.mxu0 0.0
        %2194 = vmatpush1.msra.mxu0 %v2158
        %2195 = vmatprep.subr.mxu0 0.0
        %2196 = vmatpush2.msra.mxu0 0.0
        %2197 = vmatprep.subr.mxu0 0.0
        %2198 = vmatpush2.msra.mxu0 0.0
        %2199 = vmatprep.subr.mxu0 0.0
        %2200 = vmatpush2.msra.mxu0 0.0
        %2201 = vmatprep.subr.mxu0 0.0
        %2202 = vmatpush2.msra.mxu0 0.0
        %2203 = vmatprep.subr.mxu0 0.0
        %2204 = vmatpush2.msra.mxu0 0.0
        %2205 = vmatprep.subr.mxu0 0.0
        %2206 = vmatpush2.msra.mxu0 0.0
        %2207 = vmatprep.subr.mxu0 0.0
        %2208 = vmatpush2.msra.mxu0 0.0
        %2209 = vmatprep.subr.mxu0 0.0
        %2210 = vmatpush2.msra.mxu0 0.0
        %2211 = vmatprep.subr.mxu0 0.0
        %2212 = vmatpush2.msra.mxu0 0.0
        %2213 = vmatprep.subr.mxu0 0.0
        %2214 = vmatpush2.msra.mxu0 0.0
        %2215 = vmatprep.subr.mxu0 0.0
        %2216 = vmatpush2.msra.mxu0 0.0
        %2217 = vmatprep.subr.mxu0 0.0
        %2218 = vmatpush2.msra.mxu0 0.0
        %2219 = vmatprep.subr.mxu0 0.0
        %2220 = vmatpush2.msra.mxu0 0.0
        %2221 = vmatprep.subr.mxu0 0.0
        %2222 = vmatpush2.msra.mxu0 0.0
        %2223 = vmatprep.subr.mxu0 0.0
        %2224 = vmatpush2.msra.mxu0 0.0
        %2225 = vmatprep.subr.mxu0 0.0
        %2226 = vmatpush2.msra.mxu0 0.0
        %2227 = vmatprep.mubr.f32.mxu0 0.0
        %2228 = vmatmul.mubr.f32.gmra.mxu0 %v2161
        %v2229 = vpop.f32.mrf.mxu0
        %v2230 = vadd.f32 0.0, %v2229
        %v2231 = vpop.f32.mrf.mxu0
        %2232 = vdwg.mxu0
        %2234 = vrot.lane.b32.xlu0 %v1639, 120
        %v2235 = vpop.permute.xlu0 %2234
        %v2238 = vsel %vm1648, %v2141, 0
        %2240 = vmatprep.subr.mxu0 0.0
        %2241 = vmatpush1.msra.mxu0 0.0
        %2242 = vmatprep.subr.mxu0 0.0
        %2243 = vmatpush1.msra.mxu0 0.0
        %2244 = vmatprep.subr.mxu0 0.0
        %2245 = vmatpush1.msra.mxu0 0.0
        %2246 = vmatprep.subr.mxu0 0.0
        %2247 = vmatpush1.msra.mxu0 0.0
        %2248 = vmatprep.subr.mxu0 0.0
        %2249 = vmatpush1.msra.mxu0 0.0
        %2250 = vmatprep.subr.mxu0 0.0
        %2251 = vmatpush1.msra.mxu0 0.0
        %2252 = vmatprep.subr.mxu0 0.0
        %2253 = vmatpush1.msra.mxu0 0.0
        %2254 = vmatprep.subr.mxu0 0.0
        %2255 = vmatpush1.msra.mxu0 0.0
        %2256 = vmatprep.subr.mxu0 0.0
        %2257 = vmatpush1.msra.mxu0 0.0
        %2258 = vmatprep.subr.mxu0 0.0
        %2259 = vmatpush1.msra.mxu0 0.0
        %2260 = vmatprep.subr.mxu0 0.0
        %2261 = vmatpush1.msra.mxu0 0.0
        %2262 = vmatprep.subr.mxu0 0.0
        %2263 = vmatpush1.msra.mxu0 0.0
        %2264 = vmatprep.subr.mxu0 0.0
        %2265 = vmatpush1.msra.mxu0 0.0
        %2266 = vmatprep.subr.mxu0 0.0
        %2267 = vmatpush1.msra.mxu0 0.0
        %2268 = vmatprep.subr.mxu0 0.0
        %2269 = vmatpush1.msra.mxu0 0.0
        %2270 = vmatprep.subr.mxu0 0.0
        %2271 = vmatpush1.msra.mxu0 %v2235
        %2272 = vmatprep.subr.mxu0 0.0
        %2273 = vmatpush2.msra.mxu0 0.0
        %2274 = vmatprep.subr.mxu0 0.0
        %2275 = vmatpush2.msra.mxu0 0.0
        %2276 = vmatprep.subr.mxu0 0.0
        %2277 = vmatpush2.msra.mxu0 0.0
        %2278 = vmatprep.subr.mxu0 0.0
        %2279 = vmatpush2.msra.mxu0 0.0
        %2280 = vmatprep.subr.mxu0 0.0
        %2281 = vmatpush2.msra.mxu0 0.0
        %2282 = vmatprep.subr.mxu0 0.0
        %2283 = vmatpush2.msra.mxu0 0.0
        %2284 = vmatprep.subr.mxu0 0.0
        %2285 = vmatpush2.msra.mxu0 0.0
        %2286 = vmatprep.subr.mxu0 0.0
        %2287 = vmatpush2.msra.mxu0 0.0
        %2288 = vmatprep.subr.mxu0 0.0
        %2289 = vmatpush2.msra.mxu0 0.0
        %2290 = vmatprep.subr.mxu0 0.0
        %2291 = vmatpush2.msra.mxu0 0.0
        %2292 = vmatprep.subr.mxu0 0.0
        %2293 = vmatpush2.msra.mxu0 0.0
        %2294 = vmatprep.subr.mxu0 0.0
        %2295 = vmatpush2.msra.mxu0 0.0
        %2296 = vmatprep.subr.mxu0 0.0
        %2297 = vmatpush2.msra.mxu0 0.0
        %2298 = vmatprep.subr.mxu0 0.0
        %2299 = vmatpush2.msra.mxu0 0.0
        %2300 = vmatprep.subr.mxu0 0.0
        %2301 = vmatpush2.msra.mxu0 0.0
        %2302 = vmatprep.subr.mxu0 0.0
        %2303 = vmatpush2.msra.mxu0 0.0
        %2304 = vmatprep.mubr.f32.mxu0 0.0
        %2305 = vmatmul.mubr.f32.gmra.mxu0 %v2238
        %v2306 = vpop.f32.mrf.mxu0
        %v2307 = vadd.f32 0.0, %v2306
        %v2308 = vpop.f32.mrf.mxu0
        %2309 = vdwg.mxu0
        %v2310 = vmul.f32 %v2230, %v2154
        %v2311 = vmul.f32 %v2307, %v2155
        %2312 = vrot.lane.b32.xlu0 %v1479, 112
        %v2313 = vpop.permute.xlu0 %2312
        %2314 = vrot.lane.b32.xlu0 %v1479, 80
        %v2315 = vpop.permute.xlu0 %2314
        %v2316 = vsel %vm1648, %v2313, 0
        %v2318 = vsel %vm1648, %v2315, 0
        %2320 = vmatprep.subr.mxu0 0.0
        %2321 = vmatpush1.xpose.msra.mxu0 0.0
        %2322 = vmatprep.subr.mxu0 0.0
        %2323 = vmatpush1.xpose.msra.mxu0 0.0
        %2324 = vmatprep.subr.mxu0 0.0
        %2325 = vmatpush1.xpose.msra.mxu0 0.0
        %2326 = vmatprep.subr.mxu0 0.0
        %2327 = vmatpush1.xpose.msra.mxu0 0.0
        %2328 = vmatprep.subr.mxu0 0.0
        %2329 = vmatpush1.xpose.msra.mxu0 0.0
        %2330 = vmatprep.subr.mxu0 0.0
        %2331 = vmatpush1.xpose.msra.mxu0 0.0
        %2332 = vmatprep.subr.mxu0 0.0
        %2333 = vmatpush1.xpose.msra.mxu0 0.0
        %2334 = vmatprep.subr.mxu0 0.0
        %2335 = vmatpush1.xpose.msra.mxu0 0.0
        %2336 = vmatprep.subr.mxu0 0.0
        %2337 = vmatpush1.xpose.msra.mxu0 0.0
        %2338 = vmatprep.subr.mxu0 0.0
        %2339 = vmatpush1.xpose.msra.mxu0 0.0
        %2340 = vmatprep.subr.mxu0 0.0
        %2341 = vmatpush1.xpose.msra.mxu0 0.0
        %2342 = vmatprep.subr.mxu0 0.0
        %2343 = vmatpush1.xpose.msra.mxu0 0.0
        %2344 = vmatprep.subr.mxu0 0.0
        %2345 = vmatpush1.xpose.msra.mxu0 0.0
        %2346 = vmatprep.subr.mxu0 0.0
        %2347 = vmatpush1.xpose.msra.mxu0 0.0
        %2348 = vmatprep.subr.mxu0 0.0
        %2349 = vmatpush1.xpose.msra.mxu0 0.0
        %2350 = vmatprep.subr.mxu0 0.0
        %2351 = vmatpush1.xpose.msra.mxu0 %v2318
        %2352 = vmatprep.subr.mxu0 0.0
        %2353 = vmatpush2.xpose.msra.mxu0 0.0
        %2354 = vmatprep.subr.mxu0 0.0
        %2355 = vmatpush2.xpose.msra.mxu0 0.0
        %2356 = vmatprep.subr.mxu0 0.0
        %2357 = vmatpush2.xpose.msra.mxu0 0.0
        %2358 = vmatprep.subr.mxu0 0.0
        %2359 = vmatpush2.xpose.msra.mxu0 0.0
        %2360 = vmatprep.subr.mxu0 0.0
        %2361 = vmatpush2.xpose.msra.mxu0 0.0
        %2362 = vmatprep.subr.mxu0 0.0
        %2363 = vmatpush2.xpose.msra.mxu0 0.0
        %2364 = vmatprep.subr.mxu0 0.0
        %2365 = vmatpush2.xpose.msra.mxu0 0.0
        %2366 = vmatprep.subr.mxu0 0.0
        %2367 = vmatpush2.xpose.msra.mxu0 0.0
        %2368 = vmatprep.subr.mxu0 0.0
        %2369 = vmatpush2.xpose.msra.mxu0 0.0
        %2370 = vmatprep.subr.mxu0 0.0
        %2371 = vmatpush2.xpose.msra.mxu0 0.0
        %2372 = vmatprep.subr.mxu0 0.0
        %2373 = vmatpush2.xpose.msra.mxu0 0.0
        %2374 = vmatprep.subr.mxu0 0.0
        %2375 = vmatpush2.xpose.msra.mxu0 0.0
        %2376 = vmatprep.subr.mxu0 0.0
        %2377 = vmatpush2.xpose.msra.mxu0 0.0
        %2378 = vmatprep.subr.mxu0 0.0
        %2379 = vmatpush2.xpose.msra.mxu0 0.0
        %2380 = vmatprep.subr.mxu0 0.0
        %2381 = vmatpush2.xpose.msra.mxu0 0.0
        %2382 = vmatprep.subr.mxu0 0.0
        %2383 = vmatpush2.xpose.msra.mxu0 0.0
        %2384 = vmatprep.mubr.f32.mxu0 0.0
        %2385 = vmatmul.mubr.f32.gmra.mxu0 %v2316
        %v2386 = vpop.f32.mrf.mxu0
        %v2387 = vadd.f32 0.0, %v2386
        %v2388 = vpop.f32.mrf.mxu0
        %2389 = vdwg.mxu0
        %2390 = vrot.lane.b32.xlu0 %v1480, 112
        %v2391 = vpop.permute.xlu0 %2390
        %2392 = vrot.lane.b32.xlu0 %v1480, 80
        %v2393 = vpop.permute.xlu0 %2392
        %v2394 = vsel %vm1648, %v2391, 0
        %v2396 = vsel %vm1648, %v2393, 0
        %2398 = vmatprep.subr.mxu0 0.0
        %2399 = vmatpush1.xpose.msra.mxu0 0.0
        %2400 = vmatprep.subr.mxu0 0.0
        %2401 = vmatpush1.xpose.msra.mxu0 0.0
        %2402 = vmatprep.subr.mxu0 0.0
        %2403 = vmatpush1.xpose.msra.mxu0 0.0
        %2404 = vmatprep.subr.mxu0 0.0
        %2405 = vmatpush1.xpose.msra.mxu0 0.0
        %2406 = vmatprep.subr.mxu0 0.0
        %2407 = vmatpush1.xpose.msra.mxu0 0.0
        %2408 = vmatprep.subr.mxu0 0.0
        %2409 = vmatpush1.xpose.msra.mxu0 0.0
        %2410 = vmatprep.subr.mxu0 0.0
        %2411 = vmatpush1.xpose.msra.mxu0 0.0
        %2412 = vmatprep.subr.mxu0 0.0
        %2413 = vmatpush1.xpose.msra.mxu0 0.0
        %2414 = vmatprep.subr.mxu0 0.0
        %2415 = vmatpush1.xpose.msra.mxu0 0.0
        %2416 = vmatprep.subr.mxu0 0.0
        %2417 = vmatpush1.xpose.msra.mxu0 0.0
        %2418 = vmatprep.subr.mxu0 0.0
        %2419 = vmatpush1.xpose.msra.mxu0 0.0
        %2420 = vmatprep.subr.mxu0 0.0
        %2421 = vmatpush1.xpose.msra.mxu0 0.0
        %2422 = vmatprep.subr.mxu0 0.0
        %2423 = vmatpush1.xpose.msra.mxu0 0.0
        %2424 = vmatprep.subr.mxu0 0.0
        %2425 = vmatpush1.xpose.msra.mxu0 0.0
        %2426 = vmatprep.subr.mxu0 0.0
        %2427 = vmatpush1.xpose.msra.mxu0 0.0
        %2428 = vmatprep.subr.mxu0 0.0
        %2429 = vmatpush1.xpose.msra.mxu0 %v2396
        %2430 = vmatprep.subr.mxu0 0.0
        %2431 = vmatpush2.xpose.msra.mxu0 0.0
        %2432 = vmatprep.subr.mxu0 0.0
        %2433 = vmatpush2.xpose.msra.mxu0 0.0
        %2434 = vmatprep.subr.mxu0 0.0
        %2435 = vmatpush2.xpose.msra.mxu0 0.0
        %2436 = vmatprep.subr.mxu0 0.0
        %2437 = vmatpush2.xpose.msra.mxu0 0.0
        %2438 = vmatprep.subr.mxu0 0.0
        %2439 = vmatpush2.xpose.msra.mxu0 0.0
        %2440 = vmatprep.subr.mxu0 0.0
        %2441 = vmatpush2.xpose.msra.mxu0 0.0
        %2442 = vmatprep.subr.mxu0 0.0
        %2443 = vmatpush2.xpose.msra.mxu0 0.0
        %2444 = vmatprep.subr.mxu0 0.0
        %2445 = vmatpush2.xpose.msra.mxu0 0.0
        %2446 = vmatprep.subr.mxu0 0.0
        %2447 = vmatpush2.xpose.msra.mxu0 0.0
        %2448 = vmatprep.subr.mxu0 0.0
        %2449 = vmatpush2.xpose.msra.mxu0 0.0
        %2450 = vmatprep.subr.mxu0 0.0
        %2451 = vmatpush2.xpose.msra.mxu0 0.0
        %2452 = vmatprep.subr.mxu0 0.0
        %2453 = vmatpush2.xpose.msra.mxu0 0.0
        %2454 = vmatprep.subr.mxu0 0.0
        %2455 = vmatpush2.xpose.msra.mxu0 0.0
        %2456 = vmatprep.subr.mxu0 0.0
        %2457 = vmatpush2.xpose.msra.mxu0 0.0
        %2458 = vmatprep.subr.mxu0 0.0
        %2459 = vmatpush2.xpose.msra.mxu0 0.0
        %2460 = vmatprep.subr.mxu0 0.0
        %2461 = vmatpush2.xpose.msra.mxu0 0.0
        %2462 = vmatprep.mubr.f32.mxu0 0.0
        %2463 = vmatmul.mubr.f32.gmra.mxu0 %v2394
        %v2464 = vpop.f32.mrf.mxu0
        %v2465 = vadd.f32 0.0, %v2464
        %v2466 = vpop.f32.mrf.mxu0
        %2467 = vdwg.mxu0
        %v2468 = vsel %vm1648, %v2387, -inf
        %2469 = vmax.xlane.f32.xlu0 %v2468
        %v2470 = vpop.xlane.xlu0 %2469
        %v2471 = vsel %vm1648, %v2465, -inf
        %2472 = vmax.xlane.f32.xlu0 %v2471
        %v2473 = vpop.xlane.xlu0 %2472
        %v2474 = vsub.f32 %v2387, %v2470
        %v2475 = vsub.f32 %v2465, %v2473
        %v2476 = vmul.f32 %v2474, 1.442695
        %v2477 = vpow.pop %v2476
        %v2478 = vmul.f32 %v2475, 1.442695
        %v2479 = vpow.pop %v2478
        %v2480 = vsel %vm1648, %v2477, 0.0
        %2481 = vadd.xlane.f32.xlu0 %v2480
        %v2482 = vpop.xlane.xlu0 %2481
        %v2483 = vsel %vm1648, %v2479, 0.0
        %2484 = vadd.xlane.f32.xlu0 %v2483
        %v2485 = vpop.xlane.xlu0 %2484
        %v2486 = vrcp.pop %v2482
        %v2487 = vrcp.pop %v2485
        %v2488 = vmul.f32 %v2482, %v2486
        %v2489 = vmul.f32 %v2485, %v2487
        %v2490 = vsub.f32 2.0, %v2488
        %v2491 = vsub.f32 2.0, %v2489
        %v2492 = vmul.f32 %v2486, %v2490
        %v2493 = vmul.f32 %v2487, %v2491
        %2494 = vrot.lane.b32.xlu0 %v1638, 112
        %v2495 = vpop.permute.xlu0 %2494
        %v2498 = vsel %vm1648, %v2477, 0
        %2500 = vmatprep.subr.mxu0 0.0
        %2501 = vmatpush1.msra.mxu0 0.0
        %2502 = vmatprep.subr.mxu0 0.0
        %2503 = vmatpush1.msra.mxu0 0.0
        %2504 = vmatprep.subr.mxu0 0.0
        %2505 = vmatpush1.msra.mxu0 0.0
        %2506 = vmatprep.subr.mxu0 0.0
        %2507 = vmatpush1.msra.mxu0 0.0
        %2508 = vmatprep.subr.mxu0 0.0
        %2509 = vmatpush1.msra.mxu0 0.0
        %2510 = vmatprep.subr.mxu0 0.0
        %2511 = vmatpush1.msra.mxu0 0.0
        %2512 = vmatprep.subr.mxu0 0.0
        %2513 = vmatpush1.msra.mxu0 0.0
        %2514 = vmatprep.subr.mxu0 0.0
        %2515 = vmatpush1.msra.mxu0 0.0
        %2516 = vmatprep.subr.mxu0 0.0
        %2517 = vmatpush1.msra.mxu0 0.0
        %2518 = vmatprep.subr.mxu0 0.0
        %2519 = vmatpush1.msra.mxu0 0.0
        %2520 = vmatprep.subr.mxu0 0.0
        %2521 = vmatpush1.msra.mxu0 0.0
        %2522 = vmatprep.subr.mxu0 0.0
        %2523 = vmatpush1.msra.mxu0 0.0
        %2524 = vmatprep.subr.mxu0 0.0
        %2525 = vmatpush1.msra.mxu0 0.0
        %2526 = vmatprep.subr.mxu0 0.0
        %2527 = vmatpush1.msra.mxu0 0.0
        %2528 = vmatprep.subr.mxu0 0.0
        %2529 = vmatpush1.msra.mxu0 0.0
        %2530 = vmatprep.subr.mxu0 0.0
        %2531 = vmatpush1.msra.mxu0 %v2495
        %2532 = vmatprep.subr.mxu0 0.0
        %2533 = vmatpush2.msra.mxu0 0.0
        %2534 = vmatprep.subr.mxu0 0.0
        %2535 = vmatpush2.msra.mxu0 0.0
        %2536 = vmatprep.subr.mxu0 0.0
        %2537 = vmatpush2.msra.mxu0 0.0
        %2538 = vmatprep.subr.mxu0 0.0
        %2539 = vmatpush2.msra.mxu0 0.0
        %2540 = vmatprep.subr.mxu0 0.0
        %2541 = vmatpush2.msra.mxu0 0.0
        %2542 = vmatprep.subr.mxu0 0.0
        %2543 = vmatpush2.msra.mxu0 0.0
        %2544 = vmatprep.subr.mxu0 0.0
        %2545 = vmatpush2.msra.mxu0 0.0
        %2546 = vmatprep.subr.mxu0 0.0
        %2547 = vmatpush2.msra.mxu0 0.0
        %2548 = vmatprep.subr.mxu0 0.0
        %2549 = vmatpush2.msra.mxu0 0.0
        %2550 = vmatprep.subr.mxu0 0.0
        %2551 = vmatpush2.msra.mxu0 0.0
        %2552 = vmatprep.subr.mxu0 0.0
        %2553 = vmatpush2.msra.mxu0 0.0
        %2554 = vmatprep.subr.mxu0 0.0
        %2555 = vmatpush2.msra.mxu0 0.0
        %2556 = vmatprep.subr.mxu0 0.0
        %2557 = vmatpush2.msra.mxu0 0.0
        %2558 = vmatprep.subr.mxu0 0.0
        %2559 = vmatpush2.msra.mxu0 0.0
        %2560 = vmatprep.subr.mxu0 0.0
        %2561 = vmatpush2.msra.mxu0 0.0
        %2562 = vmatprep.subr.mxu0 0.0
        %2563 = vmatpush2.msra.mxu0 0.0
        %2564 = vmatprep.mubr.f32.mxu0 0.0
        %2565 = vmatmul.mubr.f32.gmra.mxu0 %v2498
        %v2566 = vpop.f32.mrf.mxu0
        %v2567 = vadd.f32 0.0, %v2566
        %v2568 = vpop.f32.mrf.mxu0
        %2569 = vdwg.mxu0
        %2570 = vrot.lane.b32.xlu0 %v1639, 112
        %v2571 = vpop.permute.xlu0 %2570
        %v2574 = vsel %vm1648, %v2479, 0
        %2576 = vmatprep.subr.mxu0 0.0
        %2577 = vmatpush1.msra.mxu0 0.0
        %2578 = vmatprep.subr.mxu0 0.0
        %2579 = vmatpush1.msra.mxu0 0.0
        %2580 = vmatprep.subr.mxu0 0.0
        %2581 = vmatpush1.msra.mxu0 0.0
        %2582 = vmatprep.subr.mxu0 0.0
        %2583 = vmatpush1.msra.mxu0 0.0
        %2584 = vmatprep.subr.mxu0 0.0
        %2585 = vmatpush1.msra.mxu0 0.0
        %2586 = vmatprep.subr.mxu0 0.0
        %2587 = vmatpush1.msra.mxu0 0.0
        %2588 = vmatprep.subr.mxu0 0.0
        %2589 = vmatpush1.msra.mxu0 0.0
        %2590 = vmatprep.subr.mxu0 0.0
        %2591 = vmatpush1.msra.mxu0 0.0
        %2592 = vmatprep.subr.mxu0 0.0
        %2593 = vmatpush1.msra.mxu0 0.0
        %2594 = vmatprep.subr.mxu0 0.0
        %2595 = vmatpush1.msra.mxu0 0.0
        %2596 = vmatprep.subr.mxu0 0.0
        %2597 = vmatpush1.msra.mxu0 0.0
        %2598 = vmatprep.subr.mxu0 0.0
        %2599 = vmatpush1.msra.mxu0 0.0
        %2600 = vmatprep.subr.mxu0 0.0
        %2601 = vmatpush1.msra.mxu0 0.0
        %2602 = vmatprep.subr.mxu0 0.0
        %2603 = vmatpush1.msra.mxu0 0.0
        %2604 = vmatprep.subr.mxu0 0.0
        %2605 = vmatpush1.msra.mxu0 0.0
        %2606 = vmatprep.subr.mxu0 0.0
        %2607 = vmatpush1.msra.mxu0 %v2571
        %2608 = vmatprep.subr.mxu0 0.0
        %2609 = vmatpush2.msra.mxu0 0.0
        %2610 = vmatprep.subr.mxu0 0.0
        %2611 = vmatpush2.msra.mxu0 0.0
        %2612 = vmatprep.subr.mxu0 0.0
        %2613 = vmatpush2.msra.mxu0 0.0
        %2614 = vmatprep.subr.mxu0 0.0
        %2615 = vmatpush2.msra.mxu0 0.0
        %2616 = vmatprep.subr.mxu0 0.0
        %2617 = vmatpush2.msra.mxu0 0.0
        %2618 = vmatprep.subr.mxu0 0.0
        %2619 = vmatpush2.msra.mxu0 0.0
        %2620 = vmatprep.subr.mxu0 0.0
        %2621 = vmatpush2.msra.mxu0 0.0
        %2622 = vmatprep.subr.mxu0 0.0
        %2623 = vmatpush2.msra.mxu0 0.0
        %2624 = vmatprep.subr.mxu0 0.0
        %2625 = vmatpush2.msra.mxu0 0.0
        %2626 = vmatprep.subr.mxu0 0.0
        %2627 = vmatpush2.msra.mxu0 0.0
        %2628 = vmatprep.subr.mxu0 0.0
        %2629 = vmatpush2.msra.mxu0 0.0
        %2630 = vmatprep.subr.mxu0 0.0
        %2631 = vmatpush2.msra.mxu0 0.0
        %2632 = vmatprep.subr.mxu0 0.0
        %2633 = vmatpush2.msra.mxu0 0.0
        %2634 = vmatprep.subr.mxu0 0.0
        %2635 = vmatpush2.msra.mxu0 0.0
        %2636 = vmatprep.subr.mxu0 0.0
        %2637 = vmatpush2.msra.mxu0 0.0
        %2638 = vmatprep.subr.mxu0 0.0
        %2639 = vmatpush2.msra.mxu0 0.0
        %2640 = vmatprep.mubr.f32.mxu0 0.0
        %2641 = vmatmul.mubr.f32.gmra.mxu0 %v2574
        %v2642 = vpop.f32.mrf.mxu0
        %v2643 = vadd.f32 0.0, %v2642
        %v2644 = vpop.f32.mrf.mxu0
        %2645 = vdwg.mxu0
        %v2646 = vmul.f32 %v2567, %v2492
        %v2647 = vmul.f32 %v2643, %v2493
        %2648 = vrot.lane.b32.xlu0 %v1479, 104
        %v2649 = vpop.permute.xlu0 %2648
        %2650 = vrot.lane.b32.xlu0 %v1479, 72
        %v2651 = vpop.permute.xlu0 %2650
        %v2652 = vsel %vm1648, %v2649, 0
        %v2654 = vsel %vm1648, %v2651, 0
        %2656 = vmatprep.subr.mxu0 0.0
        %2657 = vmatpush1.xpose.msra.mxu0 0.0
        %2658 = vmatprep.subr.mxu0 0.0
        %2659 = vmatpush1.xpose.msra.mxu0 0.0
        %2660 = vmatprep.subr.mxu0 0.0
        %2661 = vmatpush1.xpose.msra.mxu0 0.0
        %2662 = vmatprep.subr.mxu0 0.0
        %2663 = vmatpush1.xpose.msra.mxu0 0.0
        %2664 = vmatprep.subr.mxu0 0.0
        %2665 = vmatpush1.xpose.msra.mxu0 0.0
        %2666 = vmatprep.subr.mxu0 0.0
        %2667 = vmatpush1.xpose.msra.mxu0 0.0
        %2668 = vmatprep.subr.mxu0 0.0
        %2669 = vmatpush1.xpose.msra.mxu0 0.0
        %2670 = vmatprep.subr.mxu0 0.0
        %2671 = vmatpush1.xpose.msra.mxu0 0.0
        %2672 = vmatprep.subr.mxu0 0.0
        %2673 = vmatpush1.xpose.msra.mxu0 0.0
        %2674 = vmatprep.subr.mxu0 0.0
        %2675 = vmatpush1.xpose.msra.mxu0 0.0
        %2676 = vmatprep.subr.mxu0 0.0
        %2677 = vmatpush1.xpose.msra.mxu0 0.0
        %2678 = vmatprep.subr.mxu0 0.0
        %2679 = vmatpush1.xpose.msra.mxu0 0.0
        %2680 = vmatprep.subr.mxu0 0.0
        %2681 = vmatpush1.xpose.msra.mxu0 0.0
        %2682 = vmatprep.subr.mxu0 0.0
        %2683 = vmatpush1.xpose.msra.mxu0 0.0
        %2684 = vmatprep.subr.mxu0 0.0
        %2685 = vmatpush1.xpose.msra.mxu0 0.0
        %2686 = vmatprep.subr.mxu0 0.0
        %2687 = vmatpush1.xpose.msra.mxu0 %v2654
        %2688 = vmatprep.subr.mxu0 0.0
        %2689 = vmatpush2.xpose.msra.mxu0 0.0
        %2690 = vmatprep.subr.mxu0 0.0
        %2691 = vmatpush2.xpose.msra.mxu0 0.0
        %2692 = vmatprep.subr.mxu0 0.0
        %2693 = vmatpush2.xpose.msra.mxu0 0.0
        %2694 = vmatprep.subr.mxu0 0.0
        %2695 = vmatpush2.xpose.msra.mxu0 0.0
        %2696 = vmatprep.subr.mxu0 0.0
        %2697 = vmatpush2.xpose.msra.mxu0 0.0
        %2698 = vmatprep.subr.mxu0 0.0
        %2699 = vmatpush2.xpose.msra.mxu0 0.0
        %2700 = vmatprep.subr.mxu0 0.0
        %2701 = vmatpush2.xpose.msra.mxu0 0.0
        %2702 = vmatprep.subr.mxu0 0.0
        %2703 = vmatpush2.xpose.msra.mxu0 0.0
        %2704 = vmatprep.subr.mxu0 0.0
        %2705 = vmatpush2.xpose.msra.mxu0 0.0
        %2706 = vmatprep.subr.mxu0 0.0
        %2707 = vmatpush2.xpose.msra.mxu0 0.0
        %2708 = vmatprep.subr.mxu0 0.0
        %2709 = vmatpush2.xpose.msra.mxu0 0.0
        %2710 = vmatprep.subr.mxu0 0.0
        %2711 = vmatpush2.xpose.msra.mxu0 0.0
        %2712 = vmatprep.subr.mxu0 0.0
        %2713 = vmatpush2.xpose.msra.mxu0 0.0
        %2714 = vmatprep.subr.mxu0 0.0
        %2715 = vmatpush2.xpose.msra.mxu0 0.0
        %2716 = vmatprep.subr.mxu0 0.0
        %2717 = vmatpush2.xpose.msra.mxu0 0.0
        %2718 = vmatprep.subr.mxu0 0.0
        %2719 = vmatpush2.xpose.msra.mxu0 0.0
        %2720 = vmatprep.mubr.f32.mxu0 0.0
        %2721 = vmatmul.mubr.f32.gmra.mxu0 %v2652
        %v2722 = vpop.f32.mrf.mxu0
        %v2723 = vadd.f32 0.0, %v2722
        %v2724 = vpop.f32.mrf.mxu0
        %2725 = vdwg.mxu0
        %2726 = vrot.lane.b32.xlu0 %v1480, 104
        %v2727 = vpop.permute.xlu0 %2726
        %2728 = vrot.lane.b32.xlu0 %v1480, 72
        %v2729 = vpop.permute.xlu0 %2728
        %v2730 = vsel %vm1648, %v2727, 0
        %v2732 = vsel %vm1648, %v2729, 0
        %2734 = vmatprep.subr.mxu0 0.0
        %2735 = vmatpush1.xpose.msra.mxu0 0.0
        %2736 = vmatprep.subr.mxu0 0.0
        %2737 = vmatpush1.xpose.msra.mxu0 0.0
        %2738 = vmatprep.subr.mxu0 0.0
        %2739 = vmatpush1.xpose.msra.mxu0 0.0
        %2740 = vmatprep.subr.mxu0 0.0
        %2741 = vmatpush1.xpose.msra.mxu0 0.0
        %2742 = vmatprep.subr.mxu0 0.0
        %2743 = vmatpush1.xpose.msra.mxu0 0.0
        %2744 = vmatprep.subr.mxu0 0.0
        %2745 = vmatpush1.xpose.msra.mxu0 0.0
        %2746 = vmatprep.subr.mxu0 0.0
        %2747 = vmatpush1.xpose.msra.mxu0 0.0
        %2748 = vmatprep.subr.mxu0 0.0
        %2749 = vmatpush1.xpose.msra.mxu0 0.0
        %2750 = vmatprep.subr.mxu0 0.0
        %2751 = vmatpush1.xpose.msra.mxu0 0.0
        %2752 = vmatprep.subr.mxu0 0.0
        %2753 = vmatpush1.xpose.msra.mxu0 0.0
        %2754 = vmatprep.subr.mxu0 0.0
        %2755 = vmatpush1.xpose.msra.mxu0 0.0
        %2756 = vmatprep.subr.mxu0 0.0
        %2757 = vmatpush1.xpose.msra.mxu0 0.0
        %2758 = vmatprep.subr.mxu0 0.0
        %2759 = vmatpush1.xpose.msra.mxu0 0.0
        %2760 = vmatprep.subr.mxu0 0.0
        %2761 = vmatpush1.xpose.msra.mxu0 0.0
        %2762 = vmatprep.subr.mxu0 0.0
        %2763 = vmatpush1.xpose.msra.mxu0 0.0
        %2764 = vmatprep.subr.mxu0 0.0
        %2765 = vmatpush1.xpose.msra.mxu0 %v2732
        %2766 = vmatprep.subr.mxu0 0.0
        %2767 = vmatpush2.xpose.msra.mxu0 0.0
        %2768 = vmatprep.subr.mxu0 0.0
        %2769 = vmatpush2.xpose.msra.mxu0 0.0
        %2770 = vmatprep.subr.mxu0 0.0
        %2771 = vmatpush2.xpose.msra.mxu0 0.0
        %2772 = vmatprep.subr.mxu0 0.0
        %2773 = vmatpush2.xpose.msra.mxu0 0.0
        %2774 = vmatprep.subr.mxu0 0.0
        %2775 = vmatpush2.xpose.msra.mxu0 0.0
        %2776 = vmatprep.subr.mxu0 0.0
        %2777 = vmatpush2.xpose.msra.mxu0 0.0
        %2778 = vmatprep.subr.mxu0 0.0
        %2779 = vmatpush2.xpose.msra.mxu0 0.0
        %2780 = vmatprep.subr.mxu0 0.0
        %2781 = vmatpush2.xpose.msra.mxu0 0.0
        %2782 = vmatprep.subr.mxu0 0.0
        %2783 = vmatpush2.xpose.msra.mxu0 0.0
        %2784 = vmatprep.subr.mxu0 0.0
        %2785 = vmatpush2.xpose.msra.mxu0 0.0
        %2786 = vmatprep.subr.mxu0 0.0
        %2787 = vmatpush2.xpose.msra.mxu0 0.0
        %2788 = vmatprep.subr.mxu0 0.0
        %2789 = vmatpush2.xpose.msra.mxu0 0.0
        %2790 = vmatprep.subr.mxu0 0.0
        %2791 = vmatpush2.xpose.msra.mxu0 0.0
        %2792 = vmatprep.subr.mxu0 0.0
        %2793 = vmatpush2.xpose.msra.mxu0 0.0
        %2794 = vmatprep.subr.mxu0 0.0
        %2795 = vmatpush2.xpose.msra.mxu0 0.0
        %2796 = vmatprep.subr.mxu0 0.0
        %2797 = vmatpush2.xpose.msra.mxu0 0.0
        %2798 = vmatprep.mubr.f32.mxu0 0.0
        %2799 = vmatmul.mubr.f32.gmra.mxu0 %v2730
        %v2800 = vpop.f32.mrf.mxu0
        %v2801 = vadd.f32 0.0, %v2800
        %v2802 = vpop.f32.mrf.mxu0
        %2803 = vdwg.mxu0
        %v2804 = vsel %vm1648, %v2723, -inf
        %2805 = vmax.xlane.f32.xlu0 %v2804
        %v2806 = vpop.xlane.xlu0 %2805
        %v2807 = vsel %vm1648, %v2801, -inf
        %2808 = vmax.xlane.f32.xlu0 %v2807
        %v2809 = vpop.xlane.xlu0 %2808
        %v2810 = vsub.f32 %v2723, %v2806
        %v2811 = vsub.f32 %v2801, %v2809
        %v2812 = vmul.f32 %v2810, 1.442695
        %v2813 = vpow.pop %v2812
        %v2814 = vmul.f32 %v2811, 1.442695
        %v2815 = vpow.pop %v2814
        %v2816 = vsel %vm1648, %v2813, 0.0
        %2817 = vadd.xlane.f32.xlu0 %v2816
        %v2818 = vpop.xlane.xlu0 %2817
        %v2819 = vsel %vm1648, %v2815, 0.0
        %2820 = vadd.xlane.f32.xlu0 %v2819
        %v2821 = vpop.xlane.xlu0 %2820
        %v2822 = vrcp.pop %v2818
        %v2823 = vrcp.pop %v2821
        %v2824 = vmul.f32 %v2818, %v2822
        %v2825 = vmul.f32 %v2821, %v2823
        %v2826 = vsub.f32 2.0, %v2824
        %v2827 = vsub.f32 2.0, %v2825
        %v2828 = vmul.f32 %v2822, %v2826
        %v2829 = vmul.f32 %v2823, %v2827
        %2830 = vrot.lane.b32.xlu0 %v1638, 104
        %v2831 = vpop.permute.xlu0 %2830
        %v2834 = vsel %vm1648, %v2813, 0
        %2836 = vmatprep.subr.mxu0 0.0
        %2837 = vmatpush1.msra.mxu0 0.0
        %2838 = vmatprep.subr.mxu0 0.0
        %2839 = vmatpush1.msra.mxu0 0.0
        %2840 = vmatprep.subr.mxu0 0.0
        %2841 = vmatpush1.msra.mxu0 0.0
        %2842 = vmatprep.subr.mxu0 0.0
        %2843 = vmatpush1.msra.mxu0 0.0
        %2844 = vmatprep.subr.mxu0 0.0
        %2845 = vmatpush1.msra.mxu0 0.0
        %2846 = vmatprep.subr.mxu0 0.0
        %2847 = vmatpush1.msra.mxu0 0.0
        %2848 = vmatprep.subr.mxu0 0.0
        %2849 = vmatpush1.msra.mxu0 0.0
        %2850 = vmatprep.subr.mxu0 0.0
        %2851 = vmatpush1.msra.mxu0 0.0
        %2852 = vmatprep.subr.mxu0 0.0
        %2853 = vmatpush1.msra.mxu0 0.0
        %2854 = vmatprep.subr.mxu0 0.0
        %2855 = vmatpush1.msra.mxu0 0.0
        %2856 = vmatprep.subr.mxu0 0.0
        %2857 = vmatpush1.msra.mxu0 0.0
        %2858 = vmatprep.subr.mxu0 0.0
        %2859 = vmatpush1.msra.mxu0 0.0
        %2860 = vmatprep.subr.mxu0 0.0
        %2861 = vmatpush1.msra.mxu0 0.0
        %2862 = vmatprep.subr.mxu0 0.0
        %2863 = vmatpush1.msra.mxu0 0.0
        %2864 = vmatprep.subr.mxu0 0.0
        %2865 = vmatpush1.msra.mxu0 0.0
        %2866 = vmatprep.subr.mxu0 0.0
        %2867 = vmatpush1.msra.mxu0 %v2831
        %2868 = vmatprep.subr.mxu0 0.0
        %2869 = vmatpush2.msra.mxu0 0.0
        %2870 = vmatprep.subr.mxu0 0.0
        %2871 = vmatpush2.msra.mxu0 0.0
        %2872 = vmatprep.subr.mxu0 0.0
        %2873 = vmatpush2.msra.mxu0 0.0
        %2874 = vmatprep.subr.mxu0 0.0
        %2875 = vmatpush2.msra.mxu0 0.0
        %2876 = vmatprep.subr.mxu0 0.0
        %2877 = vmatpush2.msra.mxu0 0.0
        %2878 = vmatprep.subr.mxu0 0.0
        %2879 = vmatpush2.msra.mxu0 0.0
        %2880 = vmatprep.subr.mxu0 0.0
        %2881 = vmatpush2.msra.mxu0 0.0
        %2882 = vmatprep.subr.mxu0 0.0
        %2883 = vmatpush2.msra.mxu0 0.0
        %2884 = vmatprep.subr.mxu0 0.0
        %2885 = vmatpush2.msra.mxu0 0.0
        %2886 = vmatprep.subr.mxu0 0.0
        %2887 = vmatpush2.msra.mxu0 0.0
        %2888 = vmatprep.subr.mxu0 0.0
        %2889 = vmatpush2.msra.mxu0 0.0
        %2890 = vmatprep.subr.mxu0 0.0
        %2891 = vmatpush2.msra.mxu0 0.0
        %2892 = vmatprep.subr.mxu0 0.0
        %2893 = vmatpush2.msra.mxu0 0.0
        %2894 = vmatprep.subr.mxu0 0.0
        %2895 = vmatpush2.msra.mxu0 0.0
        %2896 = vmatprep.subr.mxu0 0.0
        %2897 = vmatpush2.msra.mxu0 0.0
        %2898 = vmatprep.subr.mxu0 0.0
        %2899 = vmatpush2.msra.mxu0 0.0
        %2900 = vmatprep.mubr.f32.mxu0 0.0
        %2901 = vmatmul.mubr.f32.gmra.mxu0 %v2834
        %v2902 = vpop.f32.mrf.mxu0
        %v2903 = vadd.f32 0.0, %v2902
        %v2904 = vpop.f32.mrf.mxu0
        %2905 = vdwg.mxu0
        %2906 = vrot.lane.b32.xlu0 %v1639, 104
        %v2907 = vpop.permute.xlu0 %2906
        %v2910 = vsel %vm1648, %v2815, 0
        %2912 = vmatprep.subr.mxu0 0.0
        %2913 = vmatpush1.msra.mxu0 0.0
        %2914 = vmatprep.subr.mxu0 0.0
        %2915 = vmatpush1.msra.mxu0 0.0
        %2916 = vmatprep.subr.mxu0 0.0
        %2917 = vmatpush1.msra.mxu0 0.0
        %2918 = vmatprep.subr.mxu0 0.0
        %2919 = vmatpush1.msra.mxu0 0.0
        %2920 = vmatprep.subr.mxu0 0.0
        %2921 = vmatpush1.msra.mxu0 0.0
        %2922 = vmatprep.subr.mxu0 0.0
        %2923 = vmatpush1.msra.mxu0 0.0
        %2924 = vmatprep.subr.mxu0 0.0
        %2925 = vmatpush1.msra.mxu0 0.0
        %2926 = vmatprep.subr.mxu0 0.0
        %2927 = vmatpush1.msra.mxu0 0.0
        %2928 = vmatprep.subr.mxu0 0.0
        %2929 = vmatpush1.msra.mxu0 0.0
        %2930 = vmatprep.subr.mxu0 0.0
        %2931 = vmatpush1.msra.mxu0 0.0
        %2932 = vmatprep.subr.mxu0 0.0
        %2933 = vmatpush1.msra.mxu0 0.0
        %2934 = vmatprep.subr.mxu0 0.0
        %2935 = vmatpush1.msra.mxu0 0.0
        %2936 = vmatprep.subr.mxu0 0.0
        %2937 = vmatpush1.msra.mxu0 0.0
        %2938 = vmatprep.subr.mxu0 0.0
        %2939 = vmatpush1.msra.mxu0 0.0
        %2940 = vmatprep.subr.mxu0 0.0
        %2941 = vmatpush1.msra.mxu0 0.0
        %2942 = vmatprep.subr.mxu0 0.0
        %2943 = vmatpush1.msra.mxu0 %v2907
        %2944 = vmatprep.subr.mxu0 0.0
        %2945 = vmatpush2.msra.mxu0 0.0
        %2946 = vmatprep.subr.mxu0 0.0
        %2947 = vmatpush2.msra.mxu0 0.0
        %2948 = vmatprep.subr.mxu0 0.0
        %2949 = vmatpush2.msra.mxu0 0.0
        %2950 = vmatprep.subr.mxu0 0.0
        %2951 = vmatpush2.msra.mxu0 0.0
        %2952 = vmatprep.subr.mxu0 0.0
        %2953 = vmatpush2.msra.mxu0 0.0
        %2954 = vmatprep.subr.mxu0 0.0
        %2955 = vmatpush2.msra.mxu0 0.0
        %2956 = vmatprep.subr.mxu0 0.0
        %2957 = vmatpush2.msra.mxu0 0.0
        %2958 = vmatprep.subr.mxu0 0.0
        %2959 = vmatpush2.msra.mxu0 0.0
        %2960 = vmatprep.subr.mxu0 0.0
        %2961 = vmatpush2.msra.mxu0 0.0
        %2962 = vmatprep.subr.mxu0 0.0
        %2963 = vmatpush2.msra.mxu0 0.0
        %2964 = vmatprep.subr.mxu0 0.0
        %2965 = vmatpush2.msra.mxu0 0.0
        %2966 = vmatprep.subr.mxu0 0.0
        %2967 = vmatpush2.msra.mxu0 0.0
        %2968 = vmatprep.subr.mxu0 0.0
        %2969 = vmatpush2.msra.mxu0 0.0
        %2970 = vmatprep.subr.mxu0 0.0
        %2971 = vmatpush2.msra.mxu0 0.0
        %2972 = vmatprep.subr.mxu0 0.0
        %2973 = vmatpush2.msra.mxu0 0.0
        %2974 = vmatprep.subr.mxu0 0.0
        %2975 = vmatpush2.msra.mxu0 0.0
        %2976 = vmatprep.mubr.f32.mxu0 0.0
        %2977 = vmatmul.mubr.f32.gmra.mxu0 %v2910
        %v2978 = vpop.f32.mrf.mxu0
        %v2979 = vadd.f32 0.0, %v2978
        %v2980 = vpop.f32.mrf.mxu0
        %2981 = vdwg.mxu0
        %v2982 = vmul.f32 %v2903, %v2828
        %v2983 = vmul.f32 %v2979, %v2829
        %2986 = vrot.lane.b32.xlu0 %v2310, 8
        %v2987 = vpop.permute.xlu0 %2986
        %2988 = vrot.lane.b32.xlu0 %v2311, 8
        %v2989 = vpop.permute.xlu0 %2988
        %2994 = vrot.lane.b32.xlu0 %v2646, 16
        %v2995 = vpop.permute.xlu0 %2994
        %2996 = vrot.lane.b32.xlu0 %v2647, 16
        %v2997 = vpop.permute.xlu0 %2996
        %3002 = vrot.lane.b32.xlu0 %v2982, 24
        %v3003 = vpop.permute.xlu0 %3002
        %3004 = vrot.lane.b32.xlu0 %v2983, 24
        %v3005 = vpop.permute.xlu0 %3004
        %v3008 = vsel %vm1648, %v1972, %v2987
        %v3009 = vsel %vm1648, %v1973, %v2989
        %vm3010 = vcmask 130048
        %v3011 = vsel %vm3010, %v3008, %v2995
        %v3012 = vsel %vm3010, %v3009, %v2997
        %vm3013 = vcmask 195584
        %v3014 = vsel %vm3013, %v3011, %v3003
        %v3015 = vsel %vm3013, %v3012, %v3005
        %v3017 = vsel %vm1326, %v3014, 0
        %3019 = vmatprep.subr.mxu0 0.0
        %3020 = vmatpush1.msra.mxu0 0.0
        %3021 = vmatprep.subr.mxu0 0.0
        %3022 = vmatpush1.msra.mxu0 0.0
        %3023 = vmatprep.subr.mxu0 0.0
        %3024 = vmatpush1.msra.mxu0 0.0
        %3025 = vmatprep.subr.mxu0 0.0
        %3026 = vmatpush1.msra.mxu0 0.0
        %3027 = vmatprep.subr.mxu0 0.0
        %3028 = vmatpush1.msra.mxu0 0.0
        %3029 = vmatprep.subr.mxu0 0.0
        %3030 = vmatpush1.msra.mxu0 0.0
        %3031 = vmatprep.subr.mxu0 0.0
        %3032 = vmatpush1.msra.mxu0 0.0
        %3033 = vmatprep.subr.mxu0 0.0
        %3034 = vmatpush1.msra.mxu0 0.0
        %3035 = vmatprep.subr.mxu0 0.0
        %3036 = vmatpush1.msra.mxu0 0.0
        %3037 = vmatprep.subr.mxu0 0.0
        %3038 = vmatpush1.msra.mxu0 0.0
        %3039 = vmatprep.subr.mxu0 0.0
        %3040 = vmatpush1.msra.mxu0 0.0
        %3041 = vmatprep.subr.mxu0 0.0
        %3042 = vmatpush1.msra.mxu0 0.0
        %3043 = vmatprep.subr.mxu0 0.0
        %3044 = vmatpush1.msra.mxu0 %v1643
        %3045 = vmatprep.subr.mxu0 0.0
        %3046 = vmatpush1.msra.mxu0 %v1642
        %3047 = vmatprep.subr.mxu0 0.0
        %3048 = vmatpush1.msra.mxu0 %v1641
        %3049 = vmatprep.subr.mxu0 0.0
        %3050 = vmatpush1.msra.mxu0 %v1640
        %3051 = vmatprep.subr.mxu0 0.0
        %3052 = vmatpush2.msra.mxu0 0.0
        %3053 = vmatprep.subr.mxu0 0.0
        %3054 = vmatpush2.msra.mxu0 0.0
        %3055 = vmatprep.subr.mxu0 0.0
        %3056 = vmatpush2.msra.mxu0 0.0
        %3057 = vmatprep.subr.mxu0 0.0
        %3058 = vmatpush2.msra.mxu0 0.0
        %3059 = vmatprep.subr.mxu0 0.0
        %3060 = vmatpush2.msra.mxu0 0.0
        %3061 = vmatprep.subr.mxu0 0.0
        %3062 = vmatpush2.msra.mxu0 0.0
        %3063 = vmatprep.subr.mxu0 0.0
        %3064 = vmatpush2.msra.mxu0 0.0
        %3065 = vmatprep.subr.mxu0 0.0
        %3066 = vmatpush2.msra.mxu0 0.0
        %3067 = vmatprep.subr.mxu0 0.0
        %3068 = vmatpush2.msra.mxu0 0.0
        %3069 = vmatprep.subr.mxu0 0.0
        %3070 = vmatpush2.msra.mxu0 0.0
        %3071 = vmatprep.subr.mxu0 0.0
        %3072 = vmatpush2.msra.mxu0 0.0
        %3073 = vmatprep.subr.mxu0 0.0
        %3074 = vmatpush2.msra.mxu0 0.0
        %3075 = vmatprep.subr.mxu0 0.0
        %3076 = vmatpush2.msra.mxu0 0.0
        %3077 = vmatprep.subr.mxu0 0.0
        %3078 = vmatpush2.msra.mxu0 0.0
        %3079 = vmatprep.subr.mxu0 0.0
        %3080 = vmatpush2.msra.mxu0 0.0
        %3081 = vmatprep.subr.mxu0 0.0
        %3082 = vmatpush2.msra.mxu0 0.0
        %3083 = vmatprep.mubr.f32.mxu0 0.0
        %3084 = vmatmul.mubr.f32.gmra.mxu0 %v3017
        %v3085 = vpop.f32.mrf.mxu0
        %v3086 = vadd.f32 0.0, %v3085
        %v3087 = vpop.f32.mrf.mxu0
        %3088 = vdwg.mxu0
        %v3090 = vsel %vm1326, %v3015, 0
        %3092 = vmatprep.subr.mxu0 0.0
        %3093 = vmatpush1.msra.mxu0 0.0
        %3094 = vmatprep.subr.mxu0 0.0
        %3095 = vmatpush1.msra.mxu0 0.0
        %3096 = vmatprep.subr.mxu0 0.0
        %3097 = vmatpush1.msra.mxu0 0.0
        %3098 = vmatprep.subr.mxu0 0.0
        %3099 = vmatpush1.msra.mxu0 0.0
        %3100 = vmatprep.subr.mxu0 0.0
        %3101 = vmatpush1.msra.mxu0 0.0
        %3102 = vmatprep.subr.mxu0 0.0
        %3103 = vmatpush1.msra.mxu0 0.0
        %3104 = vmatprep.subr.mxu0 0.0
        %3105 = vmatpush1.msra.mxu0 0.0
        %3106 = vmatprep.subr.mxu0 0.0
        %3107 = vmatpush1.msra.mxu0 0.0
        %3108 = vmatprep.subr.mxu0 0.0
        %3109 = vmatpush1.msra.mxu0 0.0
        %3110 = vmatprep.subr.mxu0 0.0
        %3111 = vmatpush1.msra.mxu0 0.0
        %3112 = vmatprep.subr.mxu0 0.0
        %3113 = vmatpush1.msra.mxu0 0.0
        %3114 = vmatprep.subr.mxu0 0.0
        %3115 = vmatpush1.msra.mxu0 0.0
        %3116 = vmatprep.subr.mxu0 0.0
        %3117 = vmatpush1.msra.mxu0 %v1643
        %3118 = vmatprep.subr.mxu0 0.0
        %3119 = vmatpush1.msra.mxu0 %v1642
        %3120 = vmatprep.subr.mxu0 0.0
        %3121 = vmatpush1.msra.mxu0 %v1641
        %3122 = vmatprep.subr.mxu0 0.0
        %3123 = vmatpush1.msra.mxu0 %v1640
        %3124 = vmatprep.subr.mxu0 0.0
        %3125 = vmatpush2.msra.mxu0 0.0
        %3126 = vmatprep.subr.mxu0 0.0
        %3127 = vmatpush2.msra.mxu0 0.0
        %3128 = vmatprep.subr.mxu0 0.0
        %3129 = vmatpush2.msra.mxu0 0.0
        %3130 = vmatprep.subr.mxu0 0.0
        %3131 = vmatpush2.msra.mxu0 0.0
        %3132 = vmatprep.subr.mxu0 0.0
        %3133 = vmatpush2.msra.mxu0 0.0
        %3134 = vmatprep.subr.mxu0 0.0
        %3135 = vmatpush2.msra.mxu0 0.0
        %3136 = vmatprep.subr.mxu0 0.0
        %3137 = vmatpush2.msra.mxu0 0.0
        %3138 = vmatprep.subr.mxu0 0.0
        %3139 = vmatpush2.msra.mxu0 0.0
        %3140 = vmatprep.subr.mxu0 0.0
        %3141 = vmatpush2.msra.mxu0 0.0
        %3142 = vmatprep.subr.mxu0 0.0
        %3143 = vmatpush2.msra.mxu0 0.0
        %3144 = vmatprep.subr.mxu0 0.0
        %3145 = vmatpush2.msra.mxu0 0.0
        %3146 = vmatprep.subr.mxu0 0.0
        %3147 = vmatpush2.msra.mxu0 0.0
        %3148 = vmatprep.subr.mxu0 0.0
        %3149 = vmatpush2.msra.mxu0 0.0
        %3150 = vmatprep.subr.mxu0 0.0
        %3151 = vmatpush2.msra.mxu0 0.0
        %3152 = vmatprep.subr.mxu0 0.0
        %3153 = vmatpush2.msra.mxu0 0.0
        %3154 = vmatprep.subr.mxu0 0.0
        %3155 = vmatpush2.msra.mxu0 0.0
        %3156 = vmatprep.mubr.f32.mxu0 0.0
        %3157 = vmatmul.mubr.f32.gmra.mxu0 %v3090
        %v3158 = vpop.f32.mrf.mxu0
        %v3159 = vadd.f32 0.0, %v3158
        %v3160 = vpop.f32.mrf.mxu0
        %3161 = vdwg.mxu0
        %v3163 = vlaneseq
        %v3164 = vshrl.u32 %v3163, 7
        %v3165 = vsub.s32 0, %v3164
        %v3166 = vrot.slane %v1644, %v3165
        %v3168 = vadd.f32 %v3086, %v3166
        %v3169 = vadd.f32 %v3159, %v3166
        %v3170 = vadd.f32 %v1301, %v3168
        %v3171 = vadd.f32 %v1302, %v3169
        %v3172 = vsel %vm1326, %v3170, 0.0
        %3173 = vadd.xlane.f32.xlu0 %v3172
        %v3174 = vpop.xlane.xlu0 %3173
        %v3175 = vsel %vm1326, %v3171, 0.0
        %3176 = vadd.xlane.f32.xlu0 %v3175
        %v3177 = vpop.xlane.xlu0 %3176
        %v3178 = vrcp.pop 32.0
        %v3179 = vmul.f32 %v3174, %v3178
        %v3180 = vmul.f32 %v3177, %v3178
        %v3181 = vsub.f32 %v3170, %v3179
        %v3182 = vsub.f32 %v3171, %v3180
        %v3183 = vmul.f32 %v3181, %v3181
        %v3184 = vmul.f32 %v3182, %v3182
        %v3185 = vsel %vm1326, %v3183, 0.0
        %3186 = vadd.xlane.f32.xlu0 %v3185
        %v3187 = vpop.xlane.xlu0 %3186
        %v3188 = vsel %vm1326, %v3184, 0.0
        %3189 = vadd.xlane.f32.xlu0 %v3188
        %v3190 = vpop.xlane.xlu0 %3189
        %v3191 = vmul.f32 %v3187, %v3178
        %v3192 = vmul.f32 %v3190, %v3178
        %v3193 = vadd.f32 %v3191, 1e-05
        %v3194 = vadd.f32 %v3192, 1e-05
        %v3195 = vrsqrt.pop %v3193
        %v3196 = vrsqrt.pop %v3194
        %v3197 = vmul.f32 %v3181, %v3195
        %v3198 = vmul.f32 %v3182, %v3196
        %v3200 = vlaneseq
        %v3201 = vshrl.u32 %v3200, 7
        %v3202 = vsub.s32 0, %v3201
        %v3203 = vrot.slane %v1313, %v3202
        %v3205 = vmul.f32 %v3197, %v3203
        %v3206 = vmul.f32 %v3198, %v3203
        %v3208 = vlaneseq
        %v3209 = vshrl.u32 %v3208, 7
        %v3210 = vsub.s32 0, %v3209
        %v3211 = vrot.slane %v1316, %v3210
        %v3213 = vadd.f32 %v3205, %v3211
        %v3214 = vadd.f32 %v3206, %v3211
        %v3215 = vadd.f32 %v3213, %v1303
        %v3216 = vadd.f32 %v3214, %v1304
        %v3217 = vld [vmem:[%s1050] sm:$0xff]
        %v3218 = vld [vmem:[%s1050 + $0x8] sm:$0xff]
        %v3219 = vld [vmem:[%s1050 + $0x10] sm:$0xff]
        %v3220 = vld [vmem:[%s1050 + $0x18] sm:$0xff]
        %v3221 = vld [vmem:[%s1247] sm:$0x1]
        %v3223 = vsel %vm1326, %v3215, 0
        %3225 = vmatprep.subr.mxu0 0.0
        %3226 = vmatpush1.msra.mxu0 0.0
        %3227 = vmatprep.subr.mxu0 0.0
        %3228 = vmatpush1.msra.mxu0 0.0
        %3229 = vmatprep.subr.mxu0 0.0
        %3230 = vmatpush1.msra.mxu0 0.0
        %3231 = vmatprep.subr.mxu0 0.0
        %3232 = vmatpush1.msra.mxu0 0.0
        %3233 = vmatprep.subr.mxu0 0.0
        %3234 = vmatpush1.msra.mxu0 0.0
        %3235 = vmatprep.subr.mxu0 0.0
        %3236 = vmatpush1.msra.mxu0 0.0
        %3237 = vmatprep.subr.mxu0 0.0
        %3238 = vmatpush1.msra.mxu0 0.0
        %3239 = vmatprep.subr.mxu0 0.0
        %3240 = vmatpush1.msra.mxu0 0.0
        %3241 = vmatprep.subr.mxu0 0.0
        %3242 = vmatpush1.msra.mxu0 0.0
        %3243 = vmatprep.subr.mxu0 0.0
        %3244 = vmatpush1.msra.mxu0 0.0
        %3245 = vmatprep.subr.mxu0 0.0
        %3246 = vmatpush1.msra.mxu0 0.0
        %3247 = vmatprep.subr.mxu0 0.0
        %3248 = vmatpush1.msra.mxu0 0.0
        %3249 = vmatprep.subr.mxu0 0.0
        %3250 = vmatpush1.msra.mxu0 %v3220
        %3251 = vmatprep.subr.mxu0 0.0
        %3252 = vmatpush1.msra.mxu0 %v3219
        %3253 = vmatprep.subr.mxu0 0.0
        %3254 = vmatpush1.msra.mxu0 %v3218
        %3255 = vmatprep.subr.mxu0 0.0
        %3256 = vmatpush1.msra.mxu0 %v3217
        %3257 = vmatprep.subr.mxu0 0.0
        %3258 = vmatpush2.msra.mxu0 0.0
        %3259 = vmatprep.subr.mxu0 0.0
        %3260 = vmatpush2.msra.mxu0 0.0
        %3261 = vmatprep.subr.mxu0 0.0
        %3262 = vmatpush2.msra.mxu0 0.0
        %3263 = vmatprep.subr.mxu0 0.0
        %3264 = vmatpush2.msra.mxu0 0.0
        %3265 = vmatprep.subr.mxu0 0.0
        %3266 = vmatpush2.msra.mxu0 0.0
        %3267 = vmatprep.subr.mxu0 0.0
        %3268 = vmatpush2.msra.mxu0 0.0
        %3269 = vmatprep.subr.mxu0 0.0
        %3270 = vmatpush2.msra.mxu0 0.0
        %3271 = vmatprep.subr.mxu0 0.0
        %3272 = vmatpush2.msra.mxu0 0.0
        %3273 = vmatprep.subr.mxu0 0.0
        %3274 = vmatpush2.msra.mxu0 0.0
        %3275 = vmatprep.subr.mxu0 0.0
        %3276 = vmatpush2.msra.mxu0 0.0
        %3277 = vmatprep.subr.mxu0 0.0
        %3278 = vmatpush2.msra.mxu0 0.0
        %3279 = vmatprep.subr.mxu0 0.0
        %3280 = vmatpush2.msra.mxu0 0.0
        %3281 = vmatprep.subr.mxu0 0.0
        %3282 = vmatpush2.msra.mxu0 0.0
        %3283 = vmatprep.subr.mxu0 0.0
        %3284 = vmatpush2.msra.mxu0 0.0
        %3285 = vmatprep.subr.mxu0 0.0
        %3286 = vmatpush2.msra.mxu0 0.0
        %3287 = vmatprep.subr.mxu0 0.0
        %3288 = vmatpush2.msra.mxu0 0.0
        %3289 = vmatprep.mubr.f32.mxu0 0.0
        %3290 = vmatmul.mubr.f32.gmra.mxu0 %v3223
        %v3291 = vpop.f32.mrf.mxu0
        %v3292 = vadd.f32 0.0, %v3291
        %v3293 = vpop.f32.mrf.mxu0
        %3294 = vdwg.mxu0
        %v3296 = vsel %vm1326, %v3216, 0
        %3298 = vmatprep.subr.mxu0 0.0
        %3299 = vmatpush1.msra.mxu0 0.0
        %3300 = vmatprep.subr.mxu0 0.0
        %3301 = vmatpush1.msra.mxu0 0.0
        %3302 = vmatprep.subr.mxu0 0.0
        %3303 = vmatpush1.msra.mxu0 0.0
        %3304 = vmatprep.subr.mxu0 0.0
        %3305 = vmatpush1.msra.mxu0 0.0
        %3306 = vmatprep.subr.mxu0 0.0
        %3307 = vmatpush1.msra.mxu0 0.0
        %3308 = vmatprep.subr.mxu0 0.0
        %3309 = vmatpush1.msra.mxu0 0.0
        %3310 = vmatprep.subr.mxu0 0.0
        %3311 = vmatpush1.msra.mxu0 0.0
        %3312 = vmatprep.subr.mxu0 0.0
        %3313 = vmatpush1.msra.mxu0 0.0
        %3314 = vmatprep.subr.mxu0 0.0
        %3315 = vmatpush1.msra.mxu0 0.0
        %3316 = vmatprep.subr.mxu0 0.0
        %3317 = vmatpush1.msra.mxu0 0.0
        %3318 = vmatprep.subr.mxu0 0.0
        %3319 = vmatpush1.msra.mxu0 0.0
        %3320 = vmatprep.subr.mxu0 0.0
        %3321 = vmatpush1.msra.mxu0 0.0
        %3322 = vmatprep.subr.mxu0 0.0
        %3323 = vmatpush1.msra.mxu0 %v3220
        %3324 = vmatprep.subr.mxu0 0.0
        %3325 = vmatpush1.msra.mxu0 %v3219
        %3326 = vmatprep.subr.mxu0 0.0
        %3327 = vmatpush1.msra.mxu0 %v3218
        %3328 = vmatprep.subr.mxu0 0.0
        %3329 = vmatpush1.msra.mxu0 %v3217
        %3330 = vmatprep.subr.mxu0 0.0
        %3331 = vmatpush2.msra.mxu0 0.0
        %3332 = vmatprep.subr.mxu0 0.0
        %3333 = vmatpush2.msra.mxu0 0.0
        %3334 = vmatprep.subr.mxu0 0.0
        %3335 = vmatpush2.msra.mxu0 0.0
        %3336 = vmatprep.subr.mxu0 0.0
        %3337 = vmatpush2.msra.mxu0 0.0
        %3338 = vmatprep.subr.mxu0 0.0
        %3339 = vmatpush2.msra.mxu0 0.0
        %3340 = vmatprep.subr.mxu0 0.0
        %3341 = vmatpush2.msra.mxu0 0.0
        %3342 = vmatprep.subr.mxu0 0.0
        %3343 = vmatpush2.msra.mxu0 0.0
        %3344 = vmatprep.subr.mxu0 0.0
        %3345 = vmatpush2.msra.mxu0 0.0
        %3346 = vmatprep.subr.mxu0 0.0
        %3347 = vmatpush2.msra.mxu0 0.0
        %3348 = vmatprep.subr.mxu0 0.0
        %3349 = vmatpush2.msra.mxu0 0.0
        %3350 = vmatprep.subr.mxu0 0.0
        %3351 = vmatpush2.msra.mxu0 0.0
        %3352 = vmatprep.subr.mxu0 0.0
        %3353 = vmatpush2.msra.mxu0 0.0
        %3354 = vmatprep.subr.mxu0 0.0
        %3355 = vmatpush2.msra.mxu0 0.0
        %3356 = vmatprep.subr.mxu0 0.0
        %3357 = vmatpush2.msra.mxu0 0.0
        %3358 = vmatprep.subr.mxu0 0.0
        %3359 = vmatpush2.msra.mxu0 0.0
        %3360 = vmatprep.subr.mxu0 0.0
        %3361 = vmatpush2.msra.mxu0 0.0
        %3362 = vmatprep.mubr.f32.mxu0 0.0
        %3363 = vmatmul.mubr.f32.gmra.mxu0 %v3296
        %v3364 = vpop.f32.mrf.mxu0
        %v3365 = vadd.f32 0.0, %v3364
        %v3366 = vpop.f32.mrf.mxu0
        %3367 = vdwg.mxu0
        %v3369 = vlaneseq
        %v3370 = vshrl.u32 %v3369, 7
        %v3371 = vsub.s32 0, %v3370
        %v3372 = vrot.slane %v3221, %v3371
        %v3374 = vadd.f32 %v3292, %v3372
        %v3375 = vadd.f32 %v3365, %v3372
        %v3376 = vld [vmem:[%s1059] sm:$0xff]
        %v3377 = vld [vmem:[%s1059 + $0x8] sm:$0xff]
        %v3378 = vld [vmem:[%s1059 + $0x10] sm:$0xff]
        %v3379 = vld [vmem:[%s1059 + $0x18] sm:$0xff]
        %v3380 = vld [vmem:[%s1250] sm:$0x1]
        %v3382 = vsel %vm1326, %v1309, 0
        %v3385 = vsel %vm1326, %v1310, 0
        %3387 = vmatprep.subr.mxu0 0.0
        %3388 = vmatpush1.msra.mxu0 0.0
        %3389 = vmatprep.subr.mxu0 0.0
        %3390 = vmatpush1.msra.mxu0 0.0
        %3391 = vmatprep.subr.mxu0 0.0
        %3392 = vmatpush1.msra.mxu0 0.0
        %3393 = vmatprep.subr.mxu0 0.0
        %3394 = vmatpush1.msra.mxu0 0.0
        %3395 = vmatprep.subr.mxu0 0.0
        %3396 = vmatpush1.msra.mxu0 0.0
        %3397 = vmatprep.subr.mxu0 0.0
        %3398 = vmatpush1.msra.mxu0 0.0
        %3399 = vmatprep.subr.mxu0 0.0
        %3400 = vmatpush1.msra.mxu0 0.0
        %3401 = vmatprep.subr.mxu0 0.0
        %3402 = vmatpush1.msra.mxu0 0.0
        %3403 = vmatprep.subr.mxu0 0.0
        %3404 = vmatpush1.msra.mxu0 0.0
        %3405 = vmatprep.subr.mxu0 0.0
        %3406 = vmatpush1.msra.mxu0 0.0
        %3407 = vmatprep.subr.mxu0 0.0
        %3408 = vmatpush1.msra.mxu0 0.0
        %3409 = vmatprep.subr.mxu0 0.0
        %3410 = vmatpush1.msra.mxu0 0.0
        %3411 = vmatprep.subr.mxu0 0.0
        %3412 = vmatpush1.msra.mxu0 %v3379
        %3413 = vmatprep.subr.mxu0 0.0
        %3414 = vmatpush1.msra.mxu0 %v3378
        %3415 = vmatprep.subr.mxu0 0.0
        %3416 = vmatpush1.msra.mxu0 %v3377
        %3417 = vmatprep.subr.mxu0 0.0
        %3418 = vmatpush1.msra.mxu0 %v3376
        %3419 = vmatprep.subr.mxu0 0.0
        %3420 = vmatpush2.msra.mxu0 0.0
        %3421 = vmatprep.subr.mxu0 0.0
        %3422 = vmatpush2.msra.mxu0 0.0
        %3423 = vmatprep.subr.mxu0 0.0
        %3424 = vmatpush2.msra.mxu0 0.0
        %3425 = vmatprep.subr.mxu0 0.0
        %3426 = vmatpush2.msra.mxu0 0.0
        %3427 = vmatprep.subr.mxu0 0.0
        %3428 = vmatpush2.msra.mxu0 0.0
        %3429 = vmatprep.subr.mxu0 0.0
        %3430 = vmatpush2.msra.mxu0 0.0
        %3431 = vmatprep.subr.mxu0 0.0
        %3432 = vmatpush2.msra.mxu0 0.0
        %3433 = vmatprep.subr.mxu0 0.0
        %3434 = vmatpush2.msra.mxu0 0.0
        %3435 = vmatprep.subr.mxu0 0.0
        %3436 = vmatpush2.msra.mxu0 0.0
        %3437 = vmatprep.subr.mxu0 0.0
        %3438 = vmatpush2.msra.mxu0 0.0
        %3439 = vmatprep.subr.mxu0 0.0
        %3440 = vmatpush2.msra.mxu0 0.0
        %3441 = vmatprep.subr.mxu0 0.0
        %3442 = vmatpush2.msra.mxu0 0.0
        %3443 = vmatprep.subr.mxu0 0.0
        %3444 = vmatpush2.msra.mxu0 0.0
        %3445 = vmatprep.subr.mxu0 0.0
        %3446 = vmatpush2.msra.mxu0 0.0
        %3447 = vmatprep.subr.mxu0 0.0
        %3448 = vmatpush2.msra.mxu0 0.0
        %3449 = vmatprep.subr.mxu0 0.0
        %3450 = vmatpush2.msra.mxu0 0.0
        %3451 = vmatprep.mubr.f32.mxu0 0.0
        %3452 = vmatmul.mubr.f32.gmra.mxu0 %v3382
        %v3453 = vpop.f32.mrf.mxu0
        %v3454 = vadd.f32 0.0, %v3453
        %v3455 = vpop.f32.mrf.mxu0
        %3456 = vmatprep.mubr.f32.mxu0 0.0
        %3457 = vmatmul.mubr.f32.gmra.mxu0 %v3385
        %v3458 = vpop.f32.mrf.mxu0
        %v3459 = vadd.f32 0.0, %v3458
        %v3460 = vpop.f32.mrf.mxu0
        %3461 = vdwg.mxu0
        %v3463 = vsel %vm1326, %v1311, 0
        %v3466 = vsel %vm1326, %v1312, 0
        %3468 = vmatprep.subr.mxu0 0.0
        %3469 = vmatpush1.msra.mxu0 0.0
        %3470 = vmatprep.subr.mxu0 0.0
        %3471 = vmatpush1.msra.mxu0 0.0
        %3472 = vmatprep.subr.mxu0 0.0
        %3473 = vmatpush1.msra.mxu0 0.0
        %3474 = vmatprep.subr.mxu0 0.0
        %3475 = vmatpush1.msra.mxu0 0.0
        %3476 = vmatprep.subr.mxu0 0.0
        %3477 = vmatpush1.msra.mxu0 0.0
        %3478 = vmatprep.subr.mxu0 0.0
        %3479 = vmatpush1.msra.mxu0 0.0
        %3480 = vmatprep.subr.mxu0 0.0
        %3481 = vmatpush1.msra.mxu0 0.0
        %3482 = vmatprep.subr.mxu0 0.0
        %3483 = vmatpush1.msra.mxu0 0.0
        %3484 = vmatprep.subr.mxu0 0.0
        %3485 = vmatpush1.msra.mxu0 0.0
        %3486 = vmatprep.subr.mxu0 0.0
        %3487 = vmatpush1.msra.mxu0 0.0
        %3488 = vmatprep.subr.mxu0 0.0
        %3489 = vmatpush1.msra.mxu0 0.0
        %3490 = vmatprep.subr.mxu0 0.0
        %3491 = vmatpush1.msra.mxu0 0.0
        %3492 = vmatprep.subr.mxu0 0.0
        %3493 = vmatpush1.msra.mxu0 %v3379
        %3494 = vmatprep.subr.mxu0 0.0
        %3495 = vmatpush1.msra.mxu0 %v3378
        %3496 = vmatprep.subr.mxu0 0.0
        %3497 = vmatpush1.msra.mxu0 %v3377
        %3498 = vmatprep.subr.mxu0 0.0
        %3499 = vmatpush1.msra.mxu0 %v3376
        %3500 = vmatprep.subr.mxu0 0.0
        %3501 = vmatpush2.msra.mxu0 0.0
        %3502 = vmatprep.subr.mxu0 0.0
        %3503 = vmatpush2.msra.mxu0 0.0
        %3504 = vmatprep.subr.mxu0 0.0
        %3505 = vmatpush2.msra.mxu0 0.0
        %3506 = vmatprep.subr.mxu0 0.0
        %3507 = vmatpush2.msra.mxu0 0.0
        %3508 = vmatprep.subr.mxu0 0.0
        %3509 = vmatpush2.msra.mxu0 0.0
        %3510 = vmatprep.subr.mxu0 0.0
        %3511 = vmatpush2.msra.mxu0 0.0
        %3512 = vmatprep.subr.mxu0 0.0
        %3513 = vmatpush2.msra.mxu0 0.0
        %3514 = vmatprep.subr.mxu0 0.0
        %3515 = vmatpush2.msra.mxu0 0.0
        %3516 = vmatprep.subr.mxu0 0.0
        %3517 = vmatpush2.msra.mxu0 0.0
        %3518 = vmatprep.subr.mxu0 0.0
        %3519 = vmatpush2.msra.mxu0 0.0
        %3520 = vmatprep.subr.mxu0 0.0
        %3521 = vmatpush2.msra.mxu0 0.0
        %3522 = vmatprep.subr.mxu0 0.0
        %3523 = vmatpush2.msra.mxu0 0.0
        %3524 = vmatprep.subr.mxu0 0.0
        %3525 = vmatpush2.msra.mxu0 0.0
        %3526 = vmatprep.subr.mxu0 0.0
        %3527 = vmatpush2.msra.mxu0 0.0
        %3528 = vmatprep.subr.mxu0 0.0
        %3529 = vmatpush2.msra.mxu0 0.0
        %3530 = vmatprep.subr.mxu0 0.0
        %3531 = vmatpush2.msra.mxu0 0.0
        %3532 = vmatprep.mubr.f32.mxu0 0.0
        %3533 = vmatmul.mubr.f32.gmra.mxu0 %v3463
        %v3534 = vpop.f32.mrf.mxu0
        %v3535 = vadd.f32 0.0, %v3534
        %v3536 = vpop.f32.mrf.mxu0
        %3537 = vmatprep.mubr.f32.mxu0 0.0
        %3538 = vmatmul.mubr.f32.gmra.mxu0 %v3466
        %v3539 = vpop.f32.mrf.mxu0
        %v3540 = vadd.f32 0.0, %v3539
        %v3541 = vpop.f32.mrf.mxu0
        %3542 = vdwg.mxu0
        %v3544 = vlaneseq
        %v3545 = vshrl.u32 %v3544, 7
        %v3546 = vsub.s32 0, %v3545
        %v3547 = vrot.slane %v3380, %v3546
        %v3549 = vadd.f32 %v3454, %v3547
        %v3550 = vadd.f32 %v3459, %v3547
        %v3551 = vadd.f32 %v3535, %v3547
        %v3552 = vadd.f32 %v3540, %v3547
        %v3553 = vld [vmem:[%s1068] sm:$0xff]
        %v3554 = vld [vmem:[%s1068 + $0x8] sm:$0xff]
        %v3555 = vld [vmem:[%s1068 + $0x10] sm:$0xff]
        %v3556 = vld [vmem:[%s1068 + $0x18] sm:$0xff]
        %v3557 = vld [vmem:[%s1253] sm:$0x1]
        %v3559 = vsel %vm1326, %v1305, 0
        %v3562 = vsel %vm1326, %v1306, 0
        %3564 = vmatprep.subr.mxu0 0.0
        %3565 = vmatpush1.msra.mxu0 0.0
        %3566 = vmatprep.subr.mxu0 0.0
        %3567 = vmatpush1.msra.mxu0 0.0
        %3568 = vmatprep.subr.mxu0 0.0
        %3569 = vmatpush1.msra.mxu0 0.0
        %3570 = vmatprep.subr.mxu0 0.0
        %3571 = vmatpush1.msra.mxu0 0.0
        %3572 = vmatprep.subr.mxu0 0.0
        %3573 = vmatpush1.msra.mxu0 0.0
        %3574 = vmatprep.subr.mxu0 0.0
        %3575 = vmatpush1.msra.mxu0 0.0
        %3576 = vmatprep.subr.mxu0 0.0
        %3577 = vmatpush1.msra.mxu0 0.0
        %3578 = vmatprep.subr.mxu0 0.0
        %3579 = vmatpush1.msra.mxu0 0.0
        %3580 = vmatprep.subr.mxu0 0.0
        %3581 = vmatpush1.msra.mxu0 0.0
        %3582 = vmatprep.subr.mxu0 0.0
        %3583 = vmatpush1.msra.mxu0 0.0
        %3584 = vmatprep.subr.mxu0 0.0
        %3585 = vmatpush1.msra.mxu0 0.0
        %3586 = vmatprep.subr.mxu0 0.0
        %3587 = vmatpush1.msra.mxu0 0.0
        %3588 = vmatprep.subr.mxu0 0.0
        %3589 = vmatpush1.msra.mxu0 %v3556
        %3590 = vmatprep.subr.mxu0 0.0
        %3591 = vmatpush1.msra.mxu0 %v3555
        %3592 = vmatprep.subr.mxu0 0.0
        %3593 = vmatpush1.msra.mxu0 %v3554
        %3594 = vmatprep.subr.mxu0 0.0
        %3595 = vmatpush1.msra.mxu0 %v3553
        %3596 = vmatprep.subr.mxu0 0.0
        %3597 = vmatpush2.msra.mxu0 0.0
        %3598 = vmatprep.subr.mxu0 0.0
        %3599 = vmatpush2.msra.mxu0 0.0
        %3600 = vmatprep.subr.mxu0 0.0
        %3601 = vmatpush2.msra.mxu0 0.0
        %3602 = vmatprep.subr.mxu0 0.0
        %3603 = vmatpush2.msra.mxu0 0.0
        %3604 = vmatprep.subr.mxu0 0.0
        %3605 = vmatpush2.msra.mxu0 0.0
        %3606 = vmatprep.subr.mxu0 0.0
        %3607 = vmatpush2.msra.mxu0 0.0
        %3608 = vmatprep.subr.mxu0 0.0
        %3609 = vmatpush2.msra.mxu0 0.0
        %3610 = vmatprep.subr.mxu0 0.0
        %3611 = vmatpush2.msra.mxu0 0.0
        %3612 = vmatprep.subr.mxu0 0.0
        %3613 = vmatpush2.msra.mxu0 0.0
        %3614 = vmatprep.subr.mxu0 0.0
        %3615 = vmatpush2.msra.mxu0 0.0
        %3616 = vmatprep.subr.mxu0 0.0
        %3617 = vmatpush2.msra.mxu0 0.0
        %3618 = vmatprep.subr.mxu0 0.0
        %3619 = vmatpush2.msra.mxu0 0.0
        %3620 = vmatprep.subr.mxu0 0.0
        %3621 = vmatpush2.msra.mxu0 0.0
        %3622 = vmatprep.subr.mxu0 0.0
        %3623 = vmatpush2.msra.mxu0 0.0
        %3624 = vmatprep.subr.mxu0 0.0
        %3625 = vmatpush2.msra.mxu0 0.0
        %3626 = vmatprep.subr.mxu0 0.0
        %3627 = vmatpush2.msra.mxu0 0.0
        %3628 = vmatprep.mubr.f32.mxu0 0.0
        %3629 = vmatmul.mubr.f32.gmra.mxu0 %v3559
        %v3630 = vpop.f32.mrf.mxu0
        %v3631 = vadd.f32 0.0, %v3630
        %v3632 = vpop.f32.mrf.mxu0
        %3633 = vmatprep.mubr.f32.mxu0 0.0
        %3634 = vmatmul.mubr.f32.gmra.mxu0 %v3562
        %v3635 = vpop.f32.mrf.mxu0
        %v3636 = vadd.f32 0.0, %v3635
        %v3637 = vpop.f32.mrf.mxu0
        %3638 = vdwg.mxu0
        %v3640 = vsel %vm1326, %v1307, 0
        %v3643 = vsel %vm1326, %v1308, 0
        %3645 = vmatprep.subr.mxu0 0.0
        %3646 = vmatpush1.msra.mxu0 0.0
        %3647 = vmatprep.subr.mxu0 0.0
        %3648 = vmatpush1.msra.mxu0 0.0
        %3649 = vmatprep.subr.mxu0 0.0
        %3650 = vmatpush1.msra.mxu0 0.0
        %3651 = vmatprep.subr.mxu0 0.0
        %3652 = vmatpush1.msra.mxu0 0.0
        %3653 = vmatprep.subr.mxu0 0.0
        %3654 = vmatpush1.msra.mxu0 0.0
        %3655 = vmatprep.subr.mxu0 0.0
        %3656 = vmatpush1.msra.mxu0 0.0
        %3657 = vmatprep.subr.mxu0 0.0
        %3658 = vmatpush1.msra.mxu0 0.0
        %3659 = vmatprep.subr.mxu0 0.0
        %3660 = vmatpush1.msra.mxu0 0.0
        %3661 = vmatprep.subr.mxu0 0.0
        %3662 = vmatpush1.msra.mxu0 0.0
        %3663 = vmatprep.subr.mxu0 0.0
        %3664 = vmatpush1.msra.mxu0 0.0
        %3665 = vmatprep.subr.mxu0 0.0
        %3666 = vmatpush1.msra.mxu0 0.0
        %3667 = vmatprep.subr.mxu0 0.0
        %3668 = vmatpush1.msra.mxu0 0.0
        %3669 = vmatprep.subr.mxu0 0.0
        %3670 = vmatpush1.msra.mxu0 %v3556
        %3671 = vmatprep.subr.mxu0 0.0
        %3672 = vmatpush1.msra.mxu0 %v3555
        %3673 = vmatprep.subr.mxu0 0.0
        %3674 = vmatpush1.msra.mxu0 %v3554
        %3675 = vmatprep.subr.mxu0 0.0
        %3676 = vmatpush1.msra.mxu0 %v3553
        %3677 = vmatprep.subr.mxu0 0.0
        %3678 = vmatpush2.msra.mxu0 0.0
        %3679 = vmatprep.subr.mxu0 0.0
        %3680 = vmatpush2.msra.mxu0 0.0
        %3681 = vmatprep.subr.mxu0 0.0
        %3682 = vmatpush2.msra.mxu0 0.0
        %3683 = vmatprep.subr.mxu0 0.0
        %3684 = vmatpush2.msra.mxu0 0.0
        %3685 = vmatprep.subr.mxu0 0.0
        %3686 = vmatpush2.msra.mxu0 0.0
        %3687 = vmatprep.subr.mxu0 0.0
        %3688 = vmatpush2.msra.mxu0 0.0
        %3689 = vmatprep.subr.mxu0 0.0
        %3690 = vmatpush2.msra.mxu0 0.0
        %3691 = vmatprep.subr.mxu0 0.0
        %3692 = vmatpush2.msra.mxu0 0.0
        %3693 = vmatprep.subr.mxu0 0.0
        %3694 = vmatpush2.msra.mxu0 0.0
        %3695 = vmatprep.subr.mxu0 0.0
        %3696 = vmatpush2.msra.mxu0 0.0
        %3697 = vmatprep.subr.mxu0 0.0
        %3698 = vmatpush2.msra.mxu0 0.0
        %3699 = vmatprep.subr.mxu0 0.0
        %3700 = vmatpush2.msra.mxu0 0.0
        %3701 = vmatprep.subr.mxu0 0.0
        %3702 = vmatpush2.msra.mxu0 0.0
        %3703 = vmatprep.subr.mxu0 0.0
        %3704 = vmatpush2.msra.mxu0 0.0
        %3705 = vmatprep.subr.mxu0 0.0
        %3706 = vmatpush2.msra.mxu0 0.0
        %3707 = vmatprep.subr.mxu0 0.0
        %3708 = vmatpush2.msra.mxu0 0.0
        %3709 = vmatprep.mubr.f32.mxu0 0.0
        %3710 = vmatmul.mubr.f32.gmra.mxu0 %v3640
        %v3711 = vpop.f32.mrf.mxu0
        %v3712 = vadd.f32 0.0, %v3711
        %v3713 = vpop.f32.mrf.mxu0
        %3714 = vmatprep.mubr.f32.mxu0 0.0
        %3715 = vmatmul.mubr.f32.gmra.mxu0 %v3643
        %v3716 = vpop.f32.mrf.mxu0
        %v3717 = vadd.f32 0.0, %v3716
        %v3718 = vpop.f32.mrf.mxu0
        %3719 = vdwg.mxu0
        %v3721 = vlaneseq
        %v3722 = vshrl.u32 %v3721, 7
        %v3723 = vsub.s32 0, %v3722
        %v3724 = vrot.slane %v3557, %v3723
        %v3726 = vadd.f32 %v3631, %v3724
        %v3727 = vadd.f32 %v3636, %v3724
        %v3728 = vadd.f32 %v3712, %v3724
        %v3729 = vadd.f32 %v3717, %v3724
        %v3730 = vld [vmem:[%s1077] sm:$0xff]
        %v3731 = vld [vmem:[%s1077 + $0x8] sm:$0xff]
        %v3732 = vld [vmem:[%s1077 + $0x10] sm:$0xff]
        %v3733 = vld [vmem:[%s1077 + $0x18] sm:$0xff]
        %v3734 = vld [vmem:[%s1256] sm:$0x1]
        %v3736 = vsel %vm1648, %v3374, 0
        %v3739 = vsel %vm1648, %v3549, 0
        %v3742 = vsel %vm1648, %v3550, 0
        %3744 = vmatprep.subr.mxu0 0.0
        %3745 = vmatpush1.xpose.msra.mxu0 0.0
        %3746 = vmatprep.subr.mxu0 0.0
        %3747 = vmatpush1.xpose.msra.mxu0 0.0
        %3748 = vmatprep.subr.mxu0 0.0
        %3749 = vmatpush1.xpose.msra.mxu0 0.0
        %3750 = vmatprep.subr.mxu0 0.0
        %3751 = vmatpush1.xpose.msra.mxu0 0.0
        %3752 = vmatprep.subr.mxu0 0.0
        %3753 = vmatpush1.xpose.msra.mxu0 0.0
        %3754 = vmatprep.subr.mxu0 0.0
        %3755 = vmatpush1.xpose.msra.mxu0 0.0
        %3756 = vmatprep.subr.mxu0 0.0
        %3757 = vmatpush1.xpose.msra.mxu0 0.0
        %3758 = vmatprep.subr.mxu0 0.0
        %3759 = vmatpush1.xpose.msra.mxu0 0.0
        %3760 = vmatprep.subr.mxu0 0.0
        %3761 = vmatpush1.xpose.msra.mxu0 0.0
        %3762 = vmatprep.subr.mxu0 0.0
        %3763 = vmatpush1.xpose.msra.mxu0 0.0
        %3764 = vmatprep.subr.mxu0 0.0
        %3765 = vmatpush1.xpose.msra.mxu0 0.0
        %3766 = vmatprep.subr.mxu0 0.0
        %3767 = vmatpush1.xpose.msra.mxu0 0.0
        %3768 = vmatprep.subr.mxu0 0.0
        %3769 = vmatpush1.xpose.msra.mxu0 0.0
        %3770 = vmatprep.subr.mxu0 0.0
        %3771 = vmatpush1.xpose.msra.mxu0 0.0
        %3772 = vmatprep.subr.mxu0 0.0
        %3773 = vmatpush1.xpose.msra.mxu0 %v3742
        %3774 = vmatprep.subr.mxu0 0.0
        %3775 = vmatpush1.xpose.msra.mxu0 %v3739
        %3776 = vmatprep.subr.mxu0 0.0
        %3777 = vmatpush2.xpose.msra.mxu0 0.0
        %3778 = vmatprep.subr.mxu0 0.0
        %3779 = vmatpush2.xpose.msra.mxu0 0.0
        %3780 = vmatprep.subr.mxu0 0.0
        %3781 = vmatpush2.xpose.msra.mxu0 0.0
        %3782 = vmatprep.subr.mxu0 0.0
        %3783 = vmatpush2.xpose.msra.mxu0 0.0
        %3784 = vmatprep.subr.mxu0 0.0
        %3785 = vmatpush2.xpose.msra.mxu0 0.0
        %3786 = vmatprep.subr.mxu0 0.0
        %3787 = vmatpush2.xpose.msra.mxu0 0.0
        %3788 = vmatprep.subr.mxu0 0.0
        %3789 = vmatpush2.xpose.msra.mxu0 0.0
        %3790 = vmatprep.subr.mxu0 0.0
        %3791 = vmatpush2.xpose.msra.mxu0 0.0
        %3792 = vmatprep.subr.mxu0 0.0
        %3793 = vmatpush2.xpose.msra.mxu0 0.0
        %3794 = vmatprep.subr.mxu0 0.0
        %3795 = vmatpush2.xpose.msra.mxu0 0.0
        %3796 = vmatprep.subr.mxu0 0.0
        %3797 = vmatpush2.xpose.msra.mxu0 0.0
        %3798 = vmatprep.subr.mxu0 0.0
        %3799 = vmatpush2.xpose.msra.mxu0 0.0
        %3800 = vmatprep.subr.mxu0 0.0
        %3801 = vmatpush2.xpose.msra.mxu0 0.0
        %3802 = vmatprep.subr.mxu0 0.0
        %3803 = vmatpush2.xpose.msra.mxu0 0.0
        %3804 = vmatprep.subr.mxu0 0.0
        %3805 = vmatpush2.xpose.msra.mxu0 0.0
        %3806 = vmatprep.subr.mxu0 0.0
        %3807 = vmatpush2.xpose.msra.mxu0 0.0
        %3808 = vmatprep.mubr.f32.mxu0 0.0
        %3809 = vmatmul.mubr.f32.gmra.mxu0 %v3736
        %v3810 = vpop.f32.mrf.mxu0
        %v3811 = vadd.f32 0.0, %v3810
        %v3812 = vpop.f32.mrf.mxu0
        %3813 = vdwg.mxu0
        %v3815 = vsel %vm1648, %v3375, 0
        %v3818 = vsel %vm1648, %v3551, 0
        %v3821 = vsel %vm1648, %v3552, 0
        %3823 = vmatprep.subr.mxu0 0.0
        %3824 = vmatpush1.xpose.msra.mxu0 0.0
        %3825 = vmatprep.subr.mxu0 0.0
        %3826 = vmatpush1.xpose.msra.mxu0 0.0
        %3827 = vmatprep.subr.mxu0 0.0
        %3828 = vmatpush1.xpose.msra.mxu0 0.0
        %3829 = vmatprep.subr.mxu0 0.0
        %3830 = vmatpush1.xpose.msra.mxu0 0.0
        %3831 = vmatprep.subr.mxu0 0.0
        %3832 = vmatpush1.xpose.msra.mxu0 0.0
        %3833 = vmatprep.subr.mxu0 0.0
        %3834 = vmatpush1.xpose.msra.mxu0 0.0
        %3835 = vmatprep.subr.mxu0 0.0
        %3836 = vmatpush1.xpose.msra.mxu0 0.0
        %3837 = vmatprep.subr.mxu0 0.0
        %3838 = vmatpush1.xpose.msra.mxu0 0.0
        %3839 = vmatprep.subr.mxu0 0.0
        %3840 = vmatpush1.xpose.msra.mxu0 0.0
        %3841 = vmatprep.subr.mxu0 0.0
        %3842 = vmatpush1.xpose.msra.mxu0 0.0
        %3843 = vmatprep.subr.mxu0 0.0
        %3844 = vmatpush1.xpose.msra.mxu0 0.0
        %3845 = vmatprep.subr.mxu0 0.0
        %3846 = vmatpush1.xpose.msra.mxu0 0.0
        %3847 = vmatprep.subr.mxu0 0.0
        %3848 = vmatpush1.xpose.msra.mxu0 0.0
        %3849 = vmatprep.subr.mxu0 0.0
        %3850 = vmatpush1.xpose.msra.mxu0 0.0
        %3851 = vmatprep.subr.mxu0 0.0
        %3852 = vmatpush1.xpose.msra.mxu0 %v3821
        %3853 = vmatprep.subr.mxu0 0.0
        %3854 = vmatpush1.xpose.msra.mxu0 %v3818
        %3855 = vmatprep.subr.mxu0 0.0
        %3856 = vmatpush2.xpose.msra.mxu0 0.0
        %3857 = vmatprep.subr.mxu0 0.0
        %3858 = vmatpush2.xpose.msra.mxu0 0.0
        %3859 = vmatprep.subr.mxu0 0.0
        %3860 = vmatpush2.xpose.msra.mxu0 0.0
        %3861 = vmatprep.subr.mxu0 0.0
        %3862 = vmatpush2.xpose.msra.mxu0 0.0
        %3863 = vmatprep.subr.mxu0 0.0
        %3864 = vmatpush2.xpose.msra.mxu0 0.0
        %3865 = vmatprep.subr.mxu0 0.0
        %3866 = vmatpush2.xpose.msra.mxu0 0.0
        %3867 = vmatprep.subr.mxu0 0.0
        %3868 = vmatpush2.xpose.msra.mxu0 0.0
        %3869 = vmatprep.subr.mxu0 0.0
        %3870 = vmatpush2.xpose.msra.mxu0 0.0
        %3871 = vmatprep.subr.mxu0 0.0
        %3872 = vmatpush2.xpose.msra.mxu0 0.0
        %3873 = vmatprep.subr.mxu0 0.0
        %3874 = vmatpush2.xpose.msra.mxu0 0.0
        %3875 = vmatprep.subr.mxu0 0.0
        %3876 = vmatpush2.xpose.msra.mxu0 0.0
        %3877 = vmatprep.subr.mxu0 0.0
        %3878 = vmatpush2.xpose.msra.mxu0 0.0
        %3879 = vmatprep.subr.mxu0 0.0
        %3880 = vmatpush2.xpose.msra.mxu0 0.0
        %3881 = vmatprep.subr.mxu0 0.0
        %3882 = vmatpush2.xpose.msra.mxu0 0.0
        %3883 = vmatprep.subr.mxu0 0.0
        %3884 = vmatpush2.xpose.msra.mxu0 0.0
        %3885 = vmatprep.subr.mxu0 0.0
        %3886 = vmatpush2.xpose.msra.mxu0 0.0
        %3887 = vmatprep.mubr.f32.mxu0 0.0
        %3888 = vmatmul.mubr.f32.gmra.mxu0 %v3815
        %v3889 = vpop.f32.mrf.mxu0
        %v3890 = vadd.f32 0.0, %v3889
        %v3891 = vpop.f32.mrf.mxu0
        %3892 = vdwg.mxu0
        %v3893 = vsel %vm3010, %v3811, -inf
        %3894 = vmax.xlane.f32.xlu0 %v3893
        %v3895 = vpop.xlane.xlu0 %3894
        %v3896 = vsel %vm3010, %v3890, -inf
        %3897 = vmax.xlane.f32.xlu0 %v3896
        %v3898 = vpop.xlane.xlu0 %3897
        %v3899 = vsub.f32 %v3811, %v3895
        %v3900 = vsub.f32 %v3890, %v3898
        %v3901 = vmul.f32 %v3899, 1.442695
        %v3902 = vpow.pop %v3901
        %v3903 = vmul.f32 %v3900, 1.442695
        %v3904 = vpow.pop %v3903
        %v3905 = vsel %vm3010, %v3902, 0.0
        %3906 = vadd.xlane.f32.xlu0 %v3905
        %v3907 = vpop.xlane.xlu0 %3906
        %v3908 = vsel %vm3010, %v3904, 0.0
        %3909 = vadd.xlane.f32.xlu0 %v3908
        %v3910 = vpop.xlane.xlu0 %3909
        %v3911 = vrcp.pop %v3907
        %v3912 = vrcp.pop %v3910
        %v3913 = vmul.f32 %v3907, %v3911
        %v3914 = vmul.f32 %v3910, %v3912
        %v3915 = vsub.f32 2.0, %v3913
        %v3916 = vsub.f32 2.0, %v3914
        %v3917 = vmul.f32 %v3911, %v3915
        %v3918 = vmul.f32 %v3912, %v3916
        %v3920 = vsel %vm3010, %v3902, 0
        %3922 = vmatprep.subr.mxu0 0.0
        %3923 = vmatpush1.msra.mxu0 0.0
        %3924 = vmatprep.subr.mxu0 0.0
        %3925 = vmatpush1.msra.mxu0 0.0
        %3926 = vmatprep.subr.mxu0 0.0
        %3927 = vmatpush1.msra.mxu0 0.0
        %3928 = vmatprep.subr.mxu0 0.0
        %3929 = vmatpush1.msra.mxu0 0.0
        %3930 = vmatprep.subr.mxu0 0.0
        %3931 = vmatpush1.msra.mxu0 0.0
        %3932 = vmatprep.subr.mxu0 0.0
        %3933 = vmatpush1.msra.mxu0 0.0
        %3934 = vmatprep.subr.mxu0 0.0
        %3935 = vmatpush1.msra.mxu0 0.0
        %3936 = vmatprep.subr.mxu0 0.0
        %3937 = vmatpush1.msra.mxu0 0.0
        %3938 = vmatprep.subr.mxu0 0.0
        %3939 = vmatpush1.msra.mxu0 0.0
        %3940 = vmatprep.subr.mxu0 0.0
        %3941 = vmatpush1.msra.mxu0 0.0
        %3942 = vmatprep.subr.mxu0 0.0
        %3943 = vmatpush1.msra.mxu0 0.0
        %3944 = vmatprep.subr.mxu0 0.0
        %3945 = vmatpush1.msra.mxu0 0.0
        %3946 = vmatprep.subr.mxu0 0.0
        %3947 = vmatpush1.msra.mxu0 0.0
        %3948 = vmatprep.subr.mxu0 0.0
        %3949 = vmatpush1.msra.mxu0 0.0
        %3950 = vmatprep.subr.mxu0 0.0
        %3951 = vmatpush1.msra.mxu0 %v3727
        %3952 = vmatprep.subr.mxu0 0.0
        %3953 = vmatpush1.msra.mxu0 %v3726
        %3954 = vmatprep.subr.mxu0 0.0
        %3955 = vmatpush2.msra.mxu0 0.0
        %3956 = vmatprep.subr.mxu0 0.0
        %3957 = vmatpush2.msra.mxu0 0.0
        %3958 = vmatprep.subr.mxu0 0.0
        %3959 = vmatpush2.msra.mxu0 0.0
        %3960 = vmatprep.subr.mxu0 0.0
        %3961 = vmatpush2.msra.mxu0 0.0
        %3962 = vmatprep.subr.mxu0 0.0
        %3963 = vmatpush2.msra.mxu0 0.0
        %3964 = vmatprep.subr.mxu0 0.0
        %3965 = vmatpush2.msra.mxu0 0.0
        %3966 = vmatprep.subr.mxu0 0.0
        %3967 = vmatpush2.msra.mxu0 0.0
        %3968 = vmatprep.subr.mxu0 0.0
        %3969 = vmatpush2.msra.mxu0 0.0
        %3970 = vmatprep.subr.mxu0 0.0
        %3971 = vmatpush2.msra.mxu0 0.0
        %3972 = vmatprep.subr.mxu0 0.0
        %3973 = vmatpush2.msra.mxu0 0.0
        %3974 = vmatprep.subr.mxu0 0.0
        %3975 = vmatpush2.msra.mxu0 0.0
        %3976 = vmatprep.subr.mxu0 0.0
        %3977 = vmatpush2.msra.mxu0 0.0
        %3978 = vmatprep.subr.mxu0 0.0
        %3979 = vmatpush2.msra.mxu0 0.0
        %3980 = vmatprep.subr.mxu0 0.0
        %3981 = vmatpush2.msra.mxu0 0.0
        %3982 = vmatprep.subr.mxu0 0.0
        %3983 = vmatpush2.msra.mxu0 0.0
        %3984 = vmatprep.subr.mxu0 0.0
        %3985 = vmatpush2.msra.mxu0 0.0
        %3986 = vmatprep.mubr.f32.mxu0 0.0
        %3987 = vmatmul.mubr.f32.gmra.mxu0 %v3920
        %v3988 = vpop.f32.mrf.mxu0
        %v3989 = vadd.f32 0.0, %v3988
        %v3990 = vpop.f32.mrf.mxu0
        %3991 = vdwg.mxu0
        %v3993 = vsel %vm3010, %v3904, 0
        %3995 = vmatprep.subr.mxu0 0.0
        %3996 = vmatpush1.msra.mxu0 0.0
        %3997 = vmatprep.subr.mxu0 0.0
        %3998 = vmatpush1.msra.mxu0 0.0
        %3999 = vmatprep.subr.mxu0 0.0
        %4000 = vmatpush1.msra.mxu0 0.0
        %4001 = vmatprep.subr.mxu0 0.0
        %4002 = vmatpush1.msra.mxu0 0.0
        %4003 = vmatprep.subr.mxu0 0.0
        %4004 = vmatpush1.msra.mxu0 0.0
        %4005 = vmatprep.subr.mxu0 0.0
        %4006 = vmatpush1.msra.mxu0 0.0
        %4007 = vmatprep.subr.mxu0 0.0
        %4008 = vmatpush1.msra.mxu0 0.0
        %4009 = vmatprep.subr.mxu0 0.0
        %4010 = vmatpush1.msra.mxu0 0.0
        %4011 = vmatprep.subr.mxu0 0.0
        %4012 = vmatpush1.msra.mxu0 0.0
        %4013 = vmatprep.subr.mxu0 0.0
        %4014 = vmatpush1.msra.mxu0 0.0
        %4015 = vmatprep.subr.mxu0 0.0
        %4016 = vmatpush1.msra.mxu0 0.0
        %4017 = vmatprep.subr.mxu0 0.0
        %4018 = vmatpush1.msra.mxu0 0.0
        %4019 = vmatprep.subr.mxu0 0.0
        %4020 = vmatpush1.msra.mxu0 0.0
        %4021 = vmatprep.subr.mxu0 0.0
        %4022 = vmatpush1.msra.mxu0 0.0
        %4023 = vmatprep.subr.mxu0 0.0
        %4024 = vmatpush1.msra.mxu0 %v3729
        %4025 = vmatprep.subr.mxu0 0.0
        %4026 = vmatpush1.msra.mxu0 %v3728
        %4027 = vmatprep.subr.mxu0 0.0
        %4028 = vmatpush2.msra.mxu0 0.0
        %4029 = vmatprep.subr.mxu0 0.0
        %4030 = vmatpush2.msra.mxu0 0.0
        %4031 = vmatprep.subr.mxu0 0.0
        %4032 = vmatpush2.msra.mxu0 0.0
        %4033 = vmatprep.subr.mxu0 0.0
        %4034 = vmatpush2.msra.mxu0 0.0
        %4035 = vmatprep.subr.mxu0 0.0
        %4036 = vmatpush2.msra.mxu0 0.0
        %4037 = vmatprep.subr.mxu0 0.0
        %4038 = vmatpush2.msra.mxu0 0.0
        %4039 = vmatprep.subr.mxu0 0.0
        %4040 = vmatpush2.msra.mxu0 0.0
        %4041 = vmatprep.subr.mxu0 0.0
        %4042 = vmatpush2.msra.mxu0 0.0
        %4043 = vmatprep.subr.mxu0 0.0
        %4044 = vmatpush2.msra.mxu0 0.0
        %4045 = vmatprep.subr.mxu0 0.0
        %4046 = vmatpush2.msra.mxu0 0.0
        %4047 = vmatprep.subr.mxu0 0.0
        %4048 = vmatpush2.msra.mxu0 0.0
        %4049 = vmatprep.subr.mxu0 0.0
        %4050 = vmatpush2.msra.mxu0 0.0
        %4051 = vmatprep.subr.mxu0 0.0
        %4052 = vmatpush2.msra.mxu0 0.0
        %4053 = vmatprep.subr.mxu0 0.0
        %4054 = vmatpush2.msra.mxu0 0.0
        %4055 = vmatprep.subr.mxu0 0.0
        %4056 = vmatpush2.msra.mxu0 0.0
        %4057 = vmatprep.subr.mxu0 0.0
        %4058 = vmatpush2.msra.mxu0 0.0
        %4059 = vmatprep.mubr.f32.mxu0 0.0
        %4060 = vmatmul.mubr.f32.gmra.mxu0 %v3993
        %v4061 = vpop.f32.mrf.mxu0
        %v4062 = vadd.f32 0.0, %v4061
        %v4063 = vpop.f32.mrf.mxu0
        %4064 = vdwg.mxu0
        %v4065 = vmul.f32 %v3989, %v3917
        %v4066 = vmul.f32 %v4062, %v3918
        %4067 = vrot.lane.b32.xlu0 %v3374, 120
        %v4068 = vpop.permute.xlu0 %4067
        %4069 = vrot.lane.b32.xlu0 %v3549, 120
        %v4070 = vpop.permute.xlu0 %4069
        %4071 = vrot.lane.b32.xlu0 %v3550, 120
        %v4072 = vpop.permute.xlu0 %4071
        %v4073 = vsel %vm1648, %v4068, 0
        %v4075 = vsel %vm1648, %v4070, 0
        %v4077 = vsel %vm1648, %v4072, 0
        %4079 = vmatprep.subr.mxu0 0.0
        %4080 = vmatpush1.xpose.msra.mxu0 0.0
        %4081 = vmatprep.subr.mxu0 0.0
        %4082 = vmatpush1.xpose.msra.mxu0 0.0
        %4083 = vmatprep.subr.mxu0 0.0
        %4084 = vmatpush1.xpose.msra.mxu0 0.0
        %4085 = vmatprep.subr.mxu0 0.0
        %4086 = vmatpush1.xpose.msra.mxu0 0.0
        %4087 = vmatprep.subr.mxu0 0.0
        %4088 = vmatpush1.xpose.msra.mxu0 0.0
        %4089 = vmatprep.subr.mxu0 0.0
        %4090 = vmatpush1.xpose.msra.mxu0 0.0
        %4091 = vmatprep.subr.mxu0 0.0
        %4092 = vmatpush1.xpose.msra.mxu0 0.0
        %4093 = vmatprep.subr.mxu0 0.0
        %4094 = vmatpush1.xpose.msra.mxu0 0.0
        %4095 = vmatprep.subr.mxu0 0.0
        %4096 = vmatpush1.xpose.msra.mxu0 0.0
        %4097 = vmatprep.subr.mxu0 0.0
        %4098 = vmatpush1.xpose.msra.mxu0 0.0
        %4099 = vmatprep.subr.mxu0 0.0
        %4100 = vmatpush1.xpose.msra.mxu0 0.0
        %4101 = vmatprep.subr.mxu0 0.0
        %4102 = vmatpush1.xpose.msra.mxu0 0.0
        %4103 = vmatprep.subr.mxu0 0.0
        %4104 = vmatpush1.xpose.msra.mxu0 0.0
        %4105 = vmatprep.subr.mxu0 0.0
        %4106 = vmatpush1.xpose.msra.mxu0 0.0
        %4107 = vmatprep.subr.mxu0 0.0
        %4108 = vmatpush1.xpose.msra.mxu0 %v4077
        %4109 = vmatprep.subr.mxu0 0.0
        %4110 = vmatpush1.xpose.msra.mxu0 %v4075
        %4111 = vmatprep.subr.mxu0 0.0
        %4112 = vmatpush2.xpose.msra.mxu0 0.0
        %4113 = vmatprep.subr.mxu0 0.0
        %4114 = vmatpush2.xpose.msra.mxu0 0.0
        %4115 = vmatprep.subr.mxu0 0.0
        %4116 = vmatpush2.xpose.msra.mxu0 0.0
        %4117 = vmatprep.subr.mxu0 0.0
        %4118 = vmatpush2.xpose.msra.mxu0 0.0
        %4119 = vmatprep.subr.mxu0 0.0
        %4120 = vmatpush2.xpose.msra.mxu0 0.0
        %4121 = vmatprep.subr.mxu0 0.0
        %4122 = vmatpush2.xpose.msra.mxu0 0.0
        %4123 = vmatprep.subr.mxu0 0.0
        %4124 = vmatpush2.xpose.msra.mxu0 0.0
        %4125 = vmatprep.subr.mxu0 0.0
        %4126 = vmatpush2.xpose.msra.mxu0 0.0
        %4127 = vmatprep.subr.mxu0 0.0
        %4128 = vmatpush2.xpose.msra.mxu0 0.0
        %4129 = vmatprep.subr.mxu0 0.0
        %4130 = vmatpush2.xpose.msra.mxu0 0.0
        %4131 = vmatprep.subr.mxu0 0.0
        %4132 = vmatpush2.xpose.msra.mxu0 0.0
        %4133 = vmatprep.subr.mxu0 0.0
        %4134 = vmatpush2.xpose.msra.mxu0 0.0
        %4135 = vmatprep.subr.mxu0 0.0
        %4136 = vmatpush2.xpose.msra.mxu0 0.0
        %4137 = vmatprep.subr.mxu0 0.0
        %4138 = vmatpush2.xpose.msra.mxu0 0.0
        %4139 = vmatprep.subr.mxu0 0.0
        %4140 = vmatpush2.xpose.msra.mxu0 0.0
        %4141 = vmatprep.subr.mxu0 0.0
        %4142 = vmatpush2.xpose.msra.mxu0 0.0
        %4143 = vmatprep.mubr.f32.mxu0 0.0
        %4144 = vmatmul.mubr.f32.gmra.mxu0 %v4073
        %v4145 = vpop.f32.mrf.mxu0
        %v4146 = vadd.f32 0.0, %v4145
        %v4147 = vpop.f32.mrf.mxu0
        %4148 = vdwg.mxu0
        %4149 = vrot.lane.b32.xlu0 %v3375, 120
        %v4150 = vpop.permute.xlu0 %4149
        %4151 = vrot.lane.b32.xlu0 %v3551, 120
        %v4152 = vpop.permute.xlu0 %4151
        %4153 = vrot.lane.b32.xlu0 %v3552, 120
        %v4154 = vpop.permute.xlu0 %4153
        %v4155 = vsel %vm1648, %v4150, 0
        %v4157 = vsel %vm1648, %v4152, 0
        %v4159 = vsel %vm1648, %v4154, 0
        %4161 = vmatprep.subr.mxu0 0.0
        %4162 = vmatpush1.xpose.msra.mxu0 0.0
        %4163 = vmatprep.subr.mxu0 0.0
        %4164 = vmatpush1.xpose.msra.mxu0 0.0
        %4165 = vmatprep.subr.mxu0 0.0
        %4166 = vmatpush1.xpose.msra.mxu0 0.0
        %4167 = vmatprep.subr.mxu0 0.0
        %4168 = vmatpush1.xpose.msra.mxu0 0.0
        %4169 = vmatprep.subr.mxu0 0.0
        %4170 = vmatpush1.xpose.msra.mxu0 0.0
        %4171 = vmatprep.subr.mxu0 0.0
        %4172 = vmatpush1.xpose.msra.mxu0 0.0
        %4173 = vmatprep.subr.mxu0 0.0
        %4174 = vmatpush1.xpose.msra.mxu0 0.0
        %4175 = vmatprep.subr.mxu0 0.0
        %4176 = vmatpush1.xpose.msra.mxu0 0.0
        %4177 = vmatprep.subr.mxu0 0.0
        %4178 = vmatpush1.xpose.msra.mxu0 0.0
        %4179 = vmatprep.subr.mxu0 0.0
        %4180 = vmatpush1.xpose.msra.mxu0 0.0
        %4181 = vmatprep.subr.mxu0 0.0
        %4182 = vmatpush1.xpose.msra.mxu0 0.0
        %4183 = vmatprep.subr.mxu0 0.0
        %4184 = vmatpush1.xpose.msra.mxu0 0.0
        %4185 = vmatprep.subr.mxu0 0.0
        %4186 = vmatpush1.xpose.msra.mxu0 0.0
        %4187 = vmatprep.subr.mxu0 0.0
        %4188 = vmatpush1.xpose.msra.mxu0 0.0
        %4189 = vmatprep.subr.mxu0 0.0
        %4190 = vmatpush1.xpose.msra.mxu0 %v4159
        %4191 = vmatprep.subr.mxu0 0.0
        %4192 = vmatpush1.xpose.msra.mxu0 %v4157
        %4193 = vmatprep.subr.mxu0 0.0
        %4194 = vmatpush2.xpose.msra.mxu0 0.0
        %4195 = vmatprep.subr.mxu0 0.0
        %4196 = vmatpush2.xpose.msra.mxu0 0.0
        %4197 = vmatprep.subr.mxu0 0.0
        %4198 = vmatpush2.xpose.msra.mxu0 0.0
        %4199 = vmatprep.subr.mxu0 0.0
        %4200 = vmatpush2.xpose.msra.mxu0 0.0
        %4201 = vmatprep.subr.mxu0 0.0
        %4202 = vmatpush2.xpose.msra.mxu0 0.0
        %4203 = vmatprep.subr.mxu0 0.0
        %4204 = vmatpush2.xpose.msra.mxu0 0.0
        %4205 = vmatprep.subr.mxu0 0.0
        %4206 = vmatpush2.xpose.msra.mxu0 0.0
        %4207 = vmatprep.subr.mxu0 0.0
        %4208 = vmatpush2.xpose.msra.mxu0 0.0
        %4209 = vmatprep.subr.mxu0 0.0
        %4210 = vmatpush2.xpose.msra.mxu0 0.0
        %4211 = vmatprep.subr.mxu0 0.0
        %4212 = vmatpush2.xpose.msra.mxu0 0.0
        %4213 = vmatprep.subr.mxu0 0.0
        %4214 = vmatpush2.xpose.msra.mxu0 0.0
        %4215 = vmatprep.subr.mxu0 0.0
        %4216 = vmatpush2.xpose.msra.mxu0 0.0
        %4217 = vmatprep.subr.mxu0 0.0
        %4218 = vmatpush2.xpose.msra.mxu0 0.0
        %4219 = vmatprep.subr.mxu0 0.0
        %4220 = vmatpush2.xpose.msra.mxu0 0.0
        %4221 = vmatprep.subr.mxu0 0.0
        %4222 = vmatpush2.xpose.msra.mxu0 0.0
        %4223 = vmatprep.subr.mxu0 0.0
        %4224 = vmatpush2.xpose.msra.mxu0 0.0
        %4225 = vmatprep.mubr.f32.mxu0 0.0
        %4226 = vmatmul.mubr.f32.gmra.mxu0 %v4155
        %v4227 = vpop.f32.mrf.mxu0
        %v4228 = vadd.f32 0.0, %v4227
        %v4229 = vpop.f32.mrf.mxu0
        %4230 = vdwg.mxu0
        %v4231 = vsel %vm3010, %v4146, -inf
        %4232 = vmax.xlane.f32.xlu0 %v4231
        %v4233 = vpop.xlane.xlu0 %4232
        %v4234 = vsel %vm3010, %v4228, -inf
        %4235 = vmax.xlane.f32.xlu0 %v4234
        %v4236 = vpop.xlane.xlu0 %4235
        %v4237 = vsub.f32 %v4146, %v4233
        %v4238 = vsub.f32 %v4228, %v4236
        %v4239 = vmul.f32 %v4237, 1.442695
        %v4240 = vpow.pop %v4239
        %v4241 = vmul.f32 %v4238, 1.442695
        %v4242 = vpow.pop %v4241
        %v4243 = vsel %vm3010, %v4240, 0.0
        %4244 = vadd.xlane.f32.xlu0 %v4243
        %v4245 = vpop.xlane.xlu0 %4244
        %v4246 = vsel %vm3010, %v4242, 0.0
        %4247 = vadd.xlane.f32.xlu0 %v4246
        %v4248 = vpop.xlane.xlu0 %4247
        %v4249 = vrcp.pop %v4245
        %v4250 = vrcp.pop %v4248
        %v4251 = vmul.f32 %v4245, %v4249
        %v4252 = vmul.f32 %v4248, %v4250
        %v4253 = vsub.f32 2.0, %v4251
        %v4254 = vsub.f32 2.0, %v4252
        %v4255 = vmul.f32 %v4249, %v4253
        %v4256 = vmul.f32 %v4250, %v4254
        %4259 = vrot.lane.b32.xlu0 %v3726, 120
        %v4260 = vpop.permute.xlu0 %4259
        %4261 = vrot.lane.b32.xlu0 %v3727, 120
        %v4262 = vpop.permute.xlu0 %4261
        %v4266 = vsel %vm3010, %v4240, 0
        %4268 = vmatprep.subr.mxu0 0.0
        %4269 = vmatpush1.msra.mxu0 0.0
        %4270 = vmatprep.subr.mxu0 0.0
        %4271 = vmatpush1.msra.mxu0 0.0
        %4272 = vmatprep.subr.mxu0 0.0
        %4273 = vmatpush1.msra.mxu0 0.0
        %4274 = vmatprep.subr.mxu0 0.0
        %4275 = vmatpush1.msra.mxu0 0.0
        %4276 = vmatprep.subr.mxu0 0.0
        %4277 = vmatpush1.msra.mxu0 0.0
        %4278 = vmatprep.subr.mxu0 0.0
        %4279 = vmatpush1.msra.mxu0 0.0
        %4280 = vmatprep.subr.mxu0 0.0
        %4281 = vmatpush1.msra.mxu0 0.0
        %4282 = vmatprep.subr.mxu0 0.0
        %4283 = vmatpush1.msra.mxu0 0.0
        %4284 = vmatprep.subr.mxu0 0.0
        %4285 = vmatpush1.msra.mxu0 0.0
        %4286 = vmatprep.subr.mxu0 0.0
        %4287 = vmatpush1.msra.mxu0 0.0
        %4288 = vmatprep.subr.mxu0 0.0
        %4289 = vmatpush1.msra.mxu0 0.0
        %4290 = vmatprep.subr.mxu0 0.0
        %4291 = vmatpush1.msra.mxu0 0.0
        %4292 = vmatprep.subr.mxu0 0.0
        %4293 = vmatpush1.msra.mxu0 0.0
        %4294 = vmatprep.subr.mxu0 0.0
        %4295 = vmatpush1.msra.mxu0 0.0
        %4296 = vmatprep.subr.mxu0 0.0
        %4297 = vmatpush1.msra.mxu0 %v4262
        %4298 = vmatprep.subr.mxu0 0.0
        %4299 = vmatpush1.msra.mxu0 %v4260
        %4300 = vmatprep.subr.mxu0 0.0
        %4301 = vmatpush2.msra.mxu0 0.0
        %4302 = vmatprep.subr.mxu0 0.0
        %4303 = vmatpush2.msra.mxu0 0.0
        %4304 = vmatprep.subr.mxu0 0.0
        %4305 = vmatpush2.msra.mxu0 0.0
        %4306 = vmatprep.subr.mxu0 0.0
        %4307 = vmatpush2.msra.mxu0 0.0
        %4308 = vmatprep.subr.mxu0 0.0
        %4309 = vmatpush2.msra.mxu0 0.0
        %4310 = vmatprep.subr.mxu0 0.0
        %4311 = vmatpush2.msra.mxu0 0.0
        %4312 = vmatprep.subr.mxu0 0.0
        %4313 = vmatpush2.msra.mxu0 0.0
        %4314 = vmatprep.subr.mxu0 0.0
        %4315 = vmatpush2.msra.mxu0 0.0
        %4316 = vmatprep.subr.mxu0 0.0
        %4317 = vmatpush2.msra.mxu0 0.0
        %4318 = vmatprep.subr.mxu0 0.0
        %4319 = vmatpush2.msra.mxu0 0.0
        %4320 = vmatprep.subr.mxu0 0.0
        %4321 = vmatpush2.msra.mxu0 0.0
        %4322 = vmatprep.subr.mxu0 0.0
        %4323 = vmatpush2.msra.mxu0 0.0
        %4324 = vmatprep.subr.mxu0 0.0
        %4325 = vmatpush2.msra.mxu0 0.0
        %4326 = vmatprep.subr.mxu0 0.0
        %4327 = vmatpush2.msra.mxu0 0.0
        %4328 = vmatprep.subr.mxu0 0.0
        %4329 = vmatpush2.msra.mxu0 0.0
        %4330 = vmatprep.subr.mxu0 0.0
        %4331 = vmatpush2.msra.mxu0 0.0
        %4332 = vmatprep.mubr.f32.mxu0 0.0
        %4333 = vmatmul.mubr.f32.gmra.mxu0 %v4266
        %v4334 = vpop.f32.mrf.mxu0
        %v4335 = vadd.f32 0.0, %v4334
        %v4336 = vpop.f32.mrf.mxu0
        %4337 = vdwg.mxu0
        %4340 = vrot.lane.b32.xlu0 %v3728, 120
        %v4341 = vpop.permute.xlu0 %4340
        %4342 = vrot.lane.b32.xlu0 %v3729, 120
        %v4343 = vpop.permute.xlu0 %4342
        %v4347 = vsel %vm3010, %v4242, 0
        %4349 = vmatprep.subr.mxu0 0.0
        %4350 = vmatpush1.msra.mxu0 0.0
        %4351 = vmatprep.subr.mxu0 0.0
        %4352 = vmatpush1.msra.mxu0 0.0
        %4353 = vmatprep.subr.mxu0 0.0
        %4354 = vmatpush1.msra.mxu0 0.0
        %4355 = vmatprep.subr.mxu0 0.0
        %4356 = vmatpush1.msra.mxu0 0.0
        %4357 = vmatprep.subr.mxu0 0.0
        %4358 = vmatpush1.msra.mxu0 0.0
        %4359 = vmatprep.subr.mxu0 0.0
        %4360 = vmatpush1.msra.mxu0 0.0
        %4361 = vmatprep.subr.mxu0 0.0
        %4362 = vmatpush1.msra.mxu0 0.0
        %4363 = vmatprep.subr.mxu0 0.0
        %4364 = vmatpush1.msra.mxu0 0.0
        %4365 = vmatprep.subr.mxu0 0.0
        %4366 = vmatpush1.msra.mxu0 0.0
        %4367 = vmatprep.subr.mxu0 0.0
        %4368 = vmatpush1.msra.mxu0 0.0
        %4369 = vmatprep.subr.mxu0 0.0
        %4370 = vmatpush1.msra.mxu0 0.0
        %4371 = vmatprep.subr.mxu0 0.0
        %4372 = vmatpush1.msra.mxu0 0.0
        %4373 = vmatprep.subr.mxu0 0.0
        %4374 = vmatpush1.msra.mxu0 0.0
        %4375 = vmatprep.subr.mxu0 0.0
        %4376 = vmatpush1.msra.mxu0 0.0
        %4377 = vmatprep.subr.mxu0 0.0
        %4378 = vmatpush1.msra.mxu0 %v4343
        %4379 = vmatprep.subr.mxu0 0.0
        %4380 = vmatpush1.msra.mxu0 %v4341
        %4381 = vmatprep.subr.mxu0 0.0
        %4382 = vmatpush2.msra.mxu0 0.0
        %4383 = vmatprep.subr.mxu0 0.0
        %4384 = vmatpush2.msra.mxu0 0.0
        %4385 = vmatprep.subr.mxu0 0.0
        %4386 = vmatpush2.msra.mxu0 0.0
        %4387 = vmatprep.subr.mxu0 0.0
        %4388 = vmatpush2.msra.mxu0 0.0
        %4389 = vmatprep.subr.mxu0 0.0
        %4390 = vmatpush2.msra.mxu0 0.0
        %4391 = vmatprep.subr.mxu0 0.0
        %4392 = vmatpush2.msra.mxu0 0.0
        %4393 = vmatprep.subr.mxu0 0.0
        %4394 = vmatpush2.msra.mxu0 0.0
        %4395 = vmatprep.subr.mxu0 0.0
        %4396 = vmatpush2.msra.mxu0 0.0
        %4397 = vmatprep.subr.mxu0 0.0
        %4398 = vmatpush2.msra.mxu0 0.0
        %4399 = vmatprep.subr.mxu0 0.0
        %4400 = vmatpush2.msra.mxu0 0.0
        %4401 = vmatprep.subr.mxu0 0.0
        %4402 = vmatpush2.msra.mxu0 0.0
        %4403 = vmatprep.subr.mxu0 0.0
        %4404 = vmatpush2.msra.mxu0 0.0
        %4405 = vmatprep.subr.mxu0 0.0
        %4406 = vmatpush2.msra.mxu0 0.0
        %4407 = vmatprep.subr.mxu0 0.0
        %4408 = vmatpush2.msra.mxu0 0.0
        %4409 = vmatprep.subr.mxu0 0.0
        %4410 = vmatpush2.msra.mxu0 0.0
        %4411 = vmatprep.subr.mxu0 0.0
        %4412 = vmatpush2.msra.mxu0 0.0
        %4413 = vmatprep.mubr.f32.mxu0 0.0
        %4414 = vmatmul.mubr.f32.gmra.mxu0 %v4347
        %v4415 = vpop.f32.mrf.mxu0
        %v4416 = vadd.f32 0.0, %v4415
        %v4417 = vpop.f32.mrf.mxu0
        %4418 = vdwg.mxu0
        %v4419 = vmul.f32 %v4335, %v4255
        %v4420 = vmul.f32 %v4416, %v4256
        %4421 = vrot.lane.b32.xlu0 %v3374, 112
        %v4422 = vpop.permute.xlu0 %4421
        %4423 = vrot.lane.b32.xlu0 %v3549, 112
        %v4424 = vpop.permute.xlu0 %4423
        %4425 = vrot.lane.b32.xlu0 %v3550, 112
        %v4426 = vpop.permute.xlu0 %4425
        %v4427 = vsel %vm1648, %v4422, 0
        %v4429 = vsel %vm1648, %v4424, 0
        %v4431 = vsel %vm1648, %v4426, 0
        %4433 = vmatprep.subr.mxu0 0.0
        %4434 = vmatpush1.xpose.msra.mxu0 0.0
        %4435 = vmatprep.subr.mxu0 0.0
        %4436 = vmatpush1.xpose.msra.mxu0 0.0
        %4437 = vmatprep.subr.mxu0 0.0
        %4438 = vmatpush1.xpose.msra.mxu0 0.0
        %4439 = vmatprep.subr.mxu0 0.0
        %4440 = vmatpush1.xpose.msra.mxu0 0.0
        %4441 = vmatprep.subr.mxu0 0.0
        %4442 = vmatpush1.xpose.msra.mxu0 0.0
        %4443 = vmatprep.subr.mxu0 0.0
        %4444 = vmatpush1.xpose.msra.mxu0 0.0
        %4445 = vmatprep.subr.mxu0 0.0
        %4446 = vmatpush1.xpose.msra.mxu0 0.0
        %4447 = vmatprep.subr.mxu0 0.0
        %4448 = vmatpush1.xpose.msra.mxu0 0.0
        %4449 = vmatprep.subr.mxu0 0.0
        %4450 = vmatpush1.xpose.msra.mxu0 0.0
        %4451 = vmatprep.subr.mxu0 0.0
        %4452 = vmatpush1.xpose.msra.mxu0 0.0
        %4453 = vmatprep.subr.mxu0 0.0
        %4454 = vmatpush1.xpose.msra.mxu0 0.0
        %4455 = vmatprep.subr.mxu0 0.0
        %4456 = vmatpush1.xpose.msra.mxu0 0.0
        %4457 = vmatprep.subr.mxu0 0.0
        %4458 = vmatpush1.xpose.msra.mxu0 0.0
        %4459 = vmatprep.subr.mxu0 0.0
        %4460 = vmatpush1.xpose.msra.mxu0 0.0
        %4461 = vmatprep.subr.mxu0 0.0
        %4462 = vmatpush1.xpose.msra.mxu0 %v4431
        %4463 = vmatprep.subr.mxu0 0.0
        %4464 = vmatpush1.xpose.msra.mxu0 %v4429
        %4465 = vmatprep.subr.mxu0 0.0
        %4466 = vmatpush2.xpose.msra.mxu0 0.0
        %4467 = vmatprep.subr.mxu0 0.0
        %4468 = vmatpush2.xpose.msra.mxu0 0.0
        %4469 = vmatprep.subr.mxu0 0.0
        %4470 = vmatpush2.xpose.msra.mxu0 0.0
        %4471 = vmatprep.subr.mxu0 0.0
        %4472 = vmatpush2.xpose.msra.mxu0 0.0
        %4473 = vmatprep.subr.mxu0 0.0
        %4474 = vmatpush2.xpose.msra.mxu0 0.0
        %4475 = vmatprep.subr.mxu0 0.0
        %4476 = vmatpush2.xpose.msra.mxu0 0.0
        %4477 = vmatprep.subr.mxu0 0.0
        %4478 = vmatpush2.xpose.msra.mxu0 0.0
        %4479 = vmatprep.subr.mxu0 0.0
        %4480 = vmatpush2.xpose.msra.mxu0 0.0
        %4481 = vmatprep.subr.mxu0 0.0
        %4482 = vmatpush2.xpose.msra.mxu0 0.0
        %4483 = vmatprep.subr.mxu0 0.0
        %4484 = vmatpush2.xpose.msra.mxu0 0.0
        %4485 = vmatprep.subr.mxu0 0.0
        %4486 = vmatpush2.xpose.msra.mxu0 0.0
        %4487 = vmatprep.subr.mxu0 0.0
        %4488 = vmatpush2.xpose.msra.mxu0 0.0
        %4489 = vmatprep.subr.mxu0 0.0
        %4490 = vmatpush2.xpose.msra.mxu0 0.0
        %4491 = vmatprep.subr.mxu0 0.0
        %4492 = vmatpush2.xpose.msra.mxu0 0.0
        %4493 = vmatprep.subr.mxu0 0.0
        %4494 = vmatpush2.xpose.msra.mxu0 0.0
        %4495 = vmatprep.subr.mxu0 0.0
        %4496 = vmatpush2.xpose.msra.mxu0 0.0
        %4497 = vmatprep.mubr.f32.mxu0 0.0
        %4498 = vmatmul.mubr.f32.gmra.mxu0 %v4427
        %v4499 = vpop.f32.mrf.mxu0
        %v4500 = vadd.f32 0.0, %v4499
        %v4501 = vpop.f32.mrf.mxu0
        %4502 = vdwg.mxu0
        %4503 = vrot.lane.b32.xlu0 %v3375, 112
        %v4504 = vpop.permute.xlu0 %4503
        %4505 = vrot.lane.b32.xlu0 %v3551, 112
        %v4506 = vpop.permute.xlu0 %4505
        %4507 = vrot.lane.b32.xlu0 %v3552, 112
        %v4508 = vpop.permute.xlu0 %4507
        %v4509 = vsel %vm1648, %v4504, 0
        %v4511 = vsel %vm1648, %v4506, 0
        %v4513 = vsel %vm1648, %v4508, 0
        %4515 = vmatprep.subr.mxu0 0.0
        %4516 = vmatpush1.xpose.msra.mxu0 0.0
        %4517 = vmatprep.subr.mxu0 0.0
        %4518 = vmatpush1.xpose.msra.mxu0 0.0
        %4519 = vmatprep.subr.mxu0 0.0
        %4520 = vmatpush1.xpose.msra.mxu0 0.0
        %4521 = vmatprep.subr.mxu0 0.0
        %4522 = vmatpush1.xpose.msra.mxu0 0.0
        %4523 = vmatprep.subr.mxu0 0.0
        %4524 = vmatpush1.xpose.msra.mxu0 0.0
        %4525 = vmatprep.subr.mxu0 0.0
        %4526 = vmatpush1.xpose.msra.mxu0 0.0
        %4527 = vmatprep.subr.mxu0 0.0
        %4528 = vmatpush1.xpose.msra.mxu0 0.0
        %4529 = vmatprep.subr.mxu0 0.0
        %4530 = vmatpush1.xpose.msra.mxu0 0.0
        %4531 = vmatprep.subr.mxu0 0.0
        %4532 = vmatpush1.xpose.msra.mxu0 0.0
        %4533 = vmatprep.subr.mxu0 0.0
        %4534 = vmatpush1.xpose.msra.mxu0 0.0
        %4535 = vmatprep.subr.mxu0 0.0
        %4536 = vmatpush1.xpose.msra.mxu0 0.0
        %4537 = vmatprep.subr.mxu0 0.0
        %4538 = vmatpush1.xpose.msra.mxu0 0.0
        %4539 = vmatprep.subr.mxu0 0.0
        %4540 = vmatpush1.xpose.msra.mxu0 0.0
        %4541 = vmatprep.subr.mxu0 0.0
        %4542 = vmatpush1.xpose.msra.mxu0 0.0
        %4543 = vmatprep.subr.mxu0 0.0
        %4544 = vmatpush1.xpose.msra.mxu0 %v4513
        %4545 = vmatprep.subr.mxu0 0.0
        %4546 = vmatpush1.xpose.msra.mxu0 %v4511
        %4547 = vmatprep.subr.mxu0 0.0
        %4548 = vmatpush2.xpose.msra.mxu0 0.0
        %4549 = vmatprep.subr.mxu0 0.0
        %4550 = vmatpush2.xpose.msra.mxu0 0.0
        %4551 = vmatprep.subr.mxu0 0.0
        %4552 = vmatpush2.xpose.msra.mxu0 0.0
        %4553 = vmatprep.subr.mxu0 0.0
        %4554 = vmatpush2.xpose.msra.mxu0 0.0
        %4555 = vmatprep.subr.mxu0 0.0
        %4556 = vmatpush2.xpose.msra.mxu0 0.0
        %4557 = vmatprep.subr.mxu0 0.0
        %4558 = vmatpush2.xpose.msra.mxu0 0.0
        %4559 = vmatprep.subr.mxu0 0.0
        %4560 = vmatpush2.xpose.msra.mxu0 0.0
        %4561 = vmatprep.subr.mxu0 0.0
        %4562 = vmatpush2.xpose.msra.mxu0 0.0
        %4563 = vmatprep.subr.mxu0 0.0
        %4564 = vmatpush2.xpose.msra.mxu0 0.0
        %4565 = vmatprep.subr.mxu0 0.0
        %4566 = vmatpush2.xpose.msra.mxu0 0.0
        %4567 = vmatprep.subr.mxu0 0.0
        %4568 = vmatpush2.xpose.msra.mxu0 0.0
        %4569 = vmatprep.subr.mxu0 0.0
        %4570 = vmatpush2.xpose.msra.mxu0 0.0
        %4571 = vmatprep.subr.mxu0 0.0
        %4572 = vmatpush2.xpose.msra.mxu0 0.0
        %4573 = vmatprep.subr.mxu0 0.0
        %4574 = vmatpush2.xpose.msra.mxu0 0.0
        %4575 = vmatprep.subr.mxu0 0.0
        %4576 = vmatpush2.xpose.msra.mxu0 0.0
        %4577 = vmatprep.subr.mxu0 0.0
        %4578 = vmatpush2.xpose.msra.mxu0 0.0
        %4579 = vmatprep.mubr.f32.mxu0 0.0
        %4580 = vmatmul.mubr.f32.gmra.mxu0 %v4509
        %v4581 = vpop.f32.mrf.mxu0
        %v4582 = vadd.f32 0.0, %v4581
        %v4583 = vpop.f32.mrf.mxu0
        %4584 = vdwg.mxu0
        %v4585 = vsel %vm3010, %v4500, -inf
        %4586 = vmax.xlane.f32.xlu0 %v4585
        %v4587 = vpop.xlane.xlu0 %4586
        %v4588 = vsel %vm3010, %v4582, -inf
        %4589 = vmax.xlane.f32.xlu0 %v4588
        %v4590 = vpop.xlane.xlu0 %4589
        %v4591 = vsub.f32 %v4500, %v4587
        %v4592 = vsub.f32 %v4582, %v4590
        %v4593 = vmul.f32 %v4591, 1.442695
        %v4594 = vpow.pop %v4593
        %v4595 = vmul.f32 %v4592, 1.442695
        %v4596 = vpow.pop %v4595
        %v4597 = vsel %vm3010, %v4594, 0.0
        %4598 = vadd.xlane.f32.xlu0 %v4597
        %v4599 = vpop.xlane.xlu0 %4598
        %v4600 = vsel %vm3010, %v4596, 0.0
        %4601 = vadd.xlane.f32.xlu0 %v4600
        %v4602 = vpop.xlane.xlu0 %4601
        %v4603 = vrcp.pop %v4599
        %v4604 = vrcp.pop %v4602
        %v4605 = vmul.f32 %v4599, %v4603
        %v4606 = vmul.f32 %v4602, %v4604
        %v4607 = vsub.f32 2.0, %v4605
        %v4608 = vsub.f32 2.0, %v4606
        %v4609 = vmul.f32 %v4603, %v4607
        %v4610 = vmul.f32 %v4604, %v4608
        %4611 = vrot.lane.b32.xlu0 %v3726, 112
        %v4612 = vpop.permute.xlu0 %4611
        %4613 = vrot.lane.b32.xlu0 %v3727, 112
        %v4614 = vpop.permute.xlu0 %4613
        %v4618 = vsel %vm3010, %v4594, 0
        %4620 = vmatprep.subr.mxu0 0.0
        %4621 = vmatpush1.msra.mxu0 0.0
        %4622 = vmatprep.subr.mxu0 0.0
        %4623 = vmatpush1.msra.mxu0 0.0
        %4624 = vmatprep.subr.mxu0 0.0
        %4625 = vmatpush1.msra.mxu0 0.0
        %4626 = vmatprep.subr.mxu0 0.0
        %4627 = vmatpush1.msra.mxu0 0.0
        %4628 = vmatprep.subr.mxu0 0.0
        %4629 = vmatpush1.msra.mxu0 0.0
        %4630 = vmatprep.subr.mxu0 0.0
        %4631 = vmatpush1.msra.mxu0 0.0
        %4632 = vmatprep.subr.mxu0 0.0
        %4633 = vmatpush1.msra.mxu0 0.0
        %4634 = vmatprep.subr.mxu0 0.0
        %4635 = vmatpush1.msra.mxu0 0.0
        %4636 = vmatprep.subr.mxu0 0.0
        %4637 = vmatpush1.msra.mxu0 0.0
        %4638 = vmatprep.subr.mxu0 0.0
        %4639 = vmatpush1.msra.mxu0 0.0
        %4640 = vmatprep.subr.mxu0 0.0
        %4641 = vmatpush1.msra.mxu0 0.0
        %4642 = vmatprep.subr.mxu0 0.0
        %4643 = vmatpush1.msra.mxu0 0.0
        %4644 = vmatprep.subr.mxu0 0.0
        %4645 = vmatpush1.msra.mxu0 0.0
        %4646 = vmatprep.subr.mxu0 0.0
        %4647 = vmatpush1.msra.mxu0 0.0
        %4648 = vmatprep.subr.mxu0 0.0
        %4649 = vmatpush1.msra.mxu0 %v4614
        %4650 = vmatprep.subr.mxu0 0.0
        %4651 = vmatpush1.msra.mxu0 %v4612
        %4652 = vmatprep.subr.mxu0 0.0
        %4653 = vmatpush2.msra.mxu0 0.0
        %4654 = vmatprep.subr.mxu0 0.0
        %4655 = vmatpush2.msra.mxu0 0.0
        %4656 = vmatprep.subr.mxu0 0.0
        %4657 = vmatpush2.msra.mxu0 0.0
        %4658 = vmatprep.subr.mxu0 0.0
        %4659 = vmatpush2.msra.mxu0 0.0
        %4660 = vmatprep.subr.mxu0 0.0
        %4661 = vmatpush2.msra.mxu0 0.0
        %4662 = vmatprep.subr.mxu0 0.0
        %4663 = vmatpush2.msra.mxu0 0.0
        %4664 = vmatprep.subr.mxu0 0.0
        %4665 = vmatpush2.msra.mxu0 0.0
        %4666 = vmatprep.subr.mxu0 0.0
        %4667 = vmatpush2.msra.mxu0 0.0
        %4668 = vmatprep.subr.mxu0 0.0
        %4669 = vmatpush2.msra.mxu0 0.0
        %4670 = vmatprep.subr.mxu0 0.0
        %4671 = vmatpush2.msra.mxu0 0.0
        %4672 = vmatprep.subr.mxu0 0.0
        %4673 = vmatpush2.msra.mxu0 0.0
        %4674 = vmatprep.subr.mxu0 0.0
        %4675 = vmatpush2.msra.mxu0 0.0
        %4676 = vmatprep.subr.mxu0 0.0
        %4677 = vmatpush2.msra.mxu0 0.0
        %4678 = vmatprep.subr.mxu0 0.0
        %4679 = vmatpush2.msra.mxu0 0.0
        %4680 = vmatprep.subr.mxu0 0.0
        %4681 = vmatpush2.msra.mxu0 0.0
        %4682 = vmatprep.subr.mxu0 0.0
        %4683 = vmatpush2.msra.mxu0 0.0
        %4684 = vmatprep.mubr.f32.mxu0 0.0
        %4685 = vmatmul.mubr.f32.gmra.mxu0 %v4618
        %v4686 = vpop.f32.mrf.mxu0
        %v4687 = vadd.f32 0.0, %v4686
        %v4688 = vpop.f32.mrf.mxu0
        %4689 = vdwg.mxu0
        %4690 = vrot.lane.b32.xlu0 %v3728, 112
        %v4691 = vpop.permute.xlu0 %4690
        %4692 = vrot.lane.b32.xlu0 %v3729, 112
        %v4693 = vpop.permute.xlu0 %4692
        %v4697 = vsel %vm3010, %v4596, 0
        %4699 = vmatprep.subr.mxu0 0.0
        %4700 = vmatpush1.msra.mxu0 0.0
        %4701 = vmatprep.subr.mxu0 0.0
        %4702 = vmatpush1.msra.mxu0 0.0
        %4703 = vmatprep.subr.mxu0 0.0
        %4704 = vmatpush1.msra.mxu0 0.0
        %4705 = vmatprep.subr.mxu0 0.0
        %4706 = vmatpush1.msra.mxu0 0.0
        %4707 = vmatprep.subr.mxu0 0.0
        %4708 = vmatpush1.msra.mxu0 0.0
        %4709 = vmatprep.subr.mxu0 0.0
        %4710 = vmatpush1.msra.mxu0 0.0
        %4711 = vmatprep.subr.mxu0 0.0
        %4712 = vmatpush1.msra.mxu0 0.0
        %4713 = vmatprep.subr.mxu0 0.0
        %4714 = vmatpush1.msra.mxu0 0.0
        %4715 = vmatprep.subr.mxu0 0.0
        %4716 = vmatpush1.msra.mxu0 0.0
        %4717 = vmatprep.subr.mxu0 0.0
        %4718 = vmatpush1.msra.mxu0 0.0
        %4719 = vmatprep.subr.mxu0 0.0
        %4720 = vmatpush1.msra.mxu0 0.0
        %4721 = vmatprep.subr.mxu0 0.0
        %4722 = vmatpush1.msra.mxu0 0.0
        %4723 = vmatprep.subr.mxu0 0.0
        %4724 = vmatpush1.msra.mxu0 0.0
        %4725 = vmatprep.subr.mxu0 0.0
        %4726 = vmatpush1.msra.mxu0 0.0
        %4727 = vmatprep.subr.mxu0 0.0
        %4728 = vmatpush1.msra.mxu0 %v4693
        %4729 = vmatprep.subr.mxu0 0.0
        %4730 = vmatpush1.msra.mxu0 %v4691
        %4731 = vmatprep.subr.mxu0 0.0
        %4732 = vmatpush2.msra.mxu0 0.0
        %4733 = vmatprep.subr.mxu0 0.0
        %4734 = vmatpush2.msra.mxu0 0.0
        %4735 = vmatprep.subr.mxu0 0.0
        %4736 = vmatpush2.msra.mxu0 0.0
        %4737 = vmatprep.subr.mxu0 0.0
        %4738 = vmatpush2.msra.mxu0 0.0
        %4739 = vmatprep.subr.mxu0 0.0
        %4740 = vmatpush2.msra.mxu0 0.0
        %4741 = vmatprep.subr.mxu0 0.0
        %4742 = vmatpush2.msra.mxu0 0.0
        %4743 = vmatprep.subr.mxu0 0.0
        %4744 = vmatpush2.msra.mxu0 0.0
        %4745 = vmatprep.subr.mxu0 0.0
        %4746 = vmatpush2.msra.mxu0 0.0
        %4747 = vmatprep.subr.mxu0 0.0
        %4748 = vmatpush2.msra.mxu0 0.0
        %4749 = vmatprep.subr.mxu0 0.0
        %4750 = vmatpush2.msra.mxu0 0.0
        %4751 = vmatprep.subr.mxu0 0.0
        %4752 = vmatpush2.msra.mxu0 0.0
        %4753 = vmatprep.subr.mxu0 0.0
        %4754 = vmatpush2.msra.mxu0 0.0
        %4755 = vmatprep.subr.mxu0 0.0
        %4756 = vmatpush2.msra.mxu0 0.0
        %4757 = vmatprep.subr.mxu0 0.0
        %4758 = vmatpush2.msra.mxu0 0.0
        %4759 = vmatprep.subr.mxu0 0.0
        %4760 = vmatpush2.msra.mxu0 0.0
        %4761 = vmatprep.subr.mxu0 0.0
        %4762 = vmatpush2.msra.mxu0 0.0
        %4763 = vmatprep.mubr.f32.mxu0 0.0
        %4764 = vmatmul.mubr.f32.gmra.mxu0 %v4697
        %v4765 = vpop.f32.mrf.mxu0
        %v4766 = vadd.f32 0.0, %v4765
        %v4767 = vpop.f32.mrf.mxu0
        %4768 = vdwg.mxu0
        %v4769 = vmul.f32 %v4687, %v4609
        %v4770 = vmul.f32 %v4766, %v4610
        %4771 = vrot.lane.b32.xlu0 %v3374, 104
        %v4772 = vpop.permute.xlu0 %4771
        %4773 = vrot.lane.b32.xlu0 %v3549, 104
        %v4774 = vpop.permute.xlu0 %4773
        %4775 = vrot.lane.b32.xlu0 %v3550, 104
        %v4776 = vpop.permute.xlu0 %4775
        %v4777 = vsel %vm1648, %v4772, 0
        %v4779 = vsel %vm1648, %v4774, 0
        %v4781 = vsel %vm1648, %v4776, 0
        %4783 = vmatprep.subr.mxu0 0.0
        %4784 = vmatpush1.xpose.msra.mxu0 0.0
        %4785 = vmatprep.subr.mxu0 0.0
        %4786 = vmatpush1.xpose.msra.mxu0 0.0
        %4787 = vmatprep.subr.mxu0 0.0
        %4788 = vmatpush1.xpose.msra.mxu0 0.0
        %4789 = vmatprep.subr.mxu0 0.0
        %4790 = vmatpush1.xpose.msra.mxu0 0.0
        %4791 = vmatprep.subr.mxu0 0.0
        %4792 = vmatpush1.xpose.msra.mxu0 0.0
        %4793 = vmatprep.subr.mxu0 0.0
        %4794 = vmatpush1.xpose.msra.mxu0 0.0
        %4795 = vmatprep.subr.mxu0 0.0
        %4796 = vmatpush1.xpose.msra.mxu0 0.0
        %4797 = vmatprep.subr.mxu0 0.0
        %4798 = vmatpush1.xpose.msra.mxu0 0.0
        %4799 = vmatprep.subr.mxu0 0.0
        %4800 = vmatpush1.xpose.msra.mxu0 0.0
        %4801 = vmatprep.subr.mxu0 0.0
        %4802 = vmatpush1.xpose.msra.mxu0 0.0
        %4803 = vmatprep.subr.mxu0 0.0
        %4804 = vmatpush1.xpose.msra.mxu0 0.0
        %4805 = vmatprep.subr.mxu0 0.0
        %4806 = vmatpush1.xpose.msra.mxu0 0.0
        %4807 = vmatprep.subr.mxu0 0.0
        %4808 = vmatpush1.xpose.msra.mxu0 0.0
        %4809 = vmatprep.subr.mxu0 0.0
        %4810 = vmatpush1.xpose.msra.mxu0 0.0
        %4811 = vmatprep.subr.mxu0 0.0
        %4812 = vmatpush1.xpose.msra.mxu0 %v4781
        %4813 = vmatprep.subr.mxu0 0.0
        %4814 = vmatpush1.xpose.msra.mxu0 %v4779
        %4815 = vmatprep.subr.mxu0 0.0
        %4816 = vmatpush2.xpose.msra.mxu0 0.0
        %4817 = vmatprep.subr.mxu0 0.0
        %4818 = vmatpush2.xpose.msra.mxu0 0.0
        %4819 = vmatprep.subr.mxu0 0.0
        %4820 = vmatpush2.xpose.msra.mxu0 0.0
        %4821 = vmatprep.subr.mxu0 0.0
        %4822 = vmatpush2.xpose.msra.mxu0 0.0
        %4823 = vmatprep.subr.mxu0 0.0
        %4824 = vmatpush2.xpose.msra.mxu0 0.0
        %4825 = vmatprep.subr.mxu0 0.0
        %4826 = vmatpush2.xpose.msra.mxu0 0.0
        %4827 = vmatprep.subr.mxu0 0.0
        %4828 = vmatpush2.xpose.msra.mxu0 0.0
        %4829 = vmatprep.subr.mxu0 0.0
        %4830 = vmatpush2.xpose.msra.mxu0 0.0
        %4831 = vmatprep.subr.mxu0 0.0
        %4832 = vmatpush2.xpose.msra.mxu0 0.0
        %4833 = vmatprep.subr.mxu0 0.0
        %4834 = vmatpush2.xpose.msra.mxu0 0.0
        %4835 = vmatprep.subr.mxu0 0.0
        %4836 = vmatpush2.xpose.msra.mxu0 0.0
        %4837 = vmatprep.subr.mxu0 0.0
        %4838 = vmatpush2.xpose.msra.mxu0 0.0
        %4839 = vmatprep.subr.mxu0 0.0
        %4840 = vmatpush2.xpose.msra.mxu0 0.0
        %4841 = vmatprep.subr.mxu0 0.0
        %4842 = vmatpush2.xpose.msra.mxu0 0.0
        %4843 = vmatprep.subr.mxu0 0.0
        %4844 = vmatpush2.xpose.msra.mxu0 0.0
        %4845 = vmatprep.subr.mxu0 0.0
        %4846 = vmatpush2.xpose.msra.mxu0 0.0
        %4847 = vmatprep.mubr.f32.mxu0 0.0
        %4848 = vmatmul.mubr.f32.gmra.mxu0 %v4777
        %v4849 = vpop.f32.mrf.mxu0
        %v4850 = vadd.f32 0.0, %v4849
        %v4851 = vpop.f32.mrf.mxu0
        %4852 = vdwg.mxu0
        %4853 = vrot.lane.b32.xlu0 %v3375, 104
        %v4854 = vpop.permute.xlu0 %4853
        %4855 = vrot.lane.b32.xlu0 %v3551, 104
        %v4856 = vpop.permute.xlu0 %4855
        %4857 = vrot.lane.b32.xlu0 %v3552, 104
        %v4858 = vpop.permute.xlu0 %4857
        %v4859 = vsel %vm1648, %v4854, 0
        %v4861 = vsel %vm1648, %v4856, 0
        %v4863 = vsel %vm1648, %v4858, 0
        %4865 = vmatprep.subr.mxu0 0.0
        %4866 = vmatpush1.xpose.msra.mxu0 0.0
        %4867 = vmatprep.subr.mxu0 0.0
        %4868 = vmatpush1.xpose.msra.mxu0 0.0
        %4869 = vmatprep.subr.mxu0 0.0
        %4870 = vmatpush1.xpose.msra.mxu0 0.0
        %4871 = vmatprep.subr.mxu0 0.0
        %4872 = vmatpush1.xpose.msra.mxu0 0.0
        %4873 = vmatprep.subr.mxu0 0.0
        %4874 = vmatpush1.xpose.msra.mxu0 0.0
        %4875 = vmatprep.subr.mxu0 0.0
        %4876 = vmatpush1.xpose.msra.mxu0 0.0
        %4877 = vmatprep.subr.mxu0 0.0
        %4878 = vmatpush1.xpose.msra.mxu0 0.0
        %4879 = vmatprep.subr.mxu0 0.0
        %4880 = vmatpush1.xpose.msra.mxu0 0.0
        %4881 = vmatprep.subr.mxu0 0.0
        %4882 = vmatpush1.xpose.msra.mxu0 0.0
        %4883 = vmatprep.subr.mxu0 0.0
        %4884 = vmatpush1.xpose.msra.mxu0 0.0
        %4885 = vmatprep.subr.mxu0 0.0
        %4886 = vmatpush1.xpose.msra.mxu0 0.0
        %4887 = vmatprep.subr.mxu0 0.0
        %4888 = vmatpush1.xpose.msra.mxu0 0.0
        %4889 = vmatprep.subr.mxu0 0.0
        %4890 = vmatpush1.xpose.msra.mxu0 0.0
        %4891 = vmatprep.subr.mxu0 0.0
        %4892 = vmatpush1.xpose.msra.mxu0 0.0
        %4893 = vmatprep.subr.mxu0 0.0
        %4894 = vmatpush1.xpose.msra.mxu0 %v4863
        %4895 = vmatprep.subr.mxu0 0.0
        %4896 = vmatpush1.xpose.msra.mxu0 %v4861
        %4897 = vmatprep.subr.mxu0 0.0
        %4898 = vmatpush2.xpose.msra.mxu0 0.0
        %4899 = vmatprep.subr.mxu0 0.0
        %4900 = vmatpush2.xpose.msra.mxu0 0.0
        %4901 = vmatprep.subr.mxu0 0.0
        %4902 = vmatpush2.xpose.msra.mxu0 0.0
        %4903 = vmatprep.subr.mxu0 0.0
        %4904 = vmatpush2.xpose.msra.mxu0 0.0
        %4905 = vmatprep.subr.mxu0 0.0
        %4906 = vmatpush2.xpose.msra.mxu0 0.0
        %4907 = vmatprep.subr.mxu0 0.0
        %4908 = vmatpush2.xpose.msra.mxu0 0.0
        %4909 = vmatprep.subr.mxu0 0.0
        %4910 = vmatpush2.xpose.msra.mxu0 0.0
        %4911 = vmatprep.subr.mxu0 0.0
        %4912 = vmatpush2.xpose.msra.mxu0 0.0
        %4913 = vmatprep.subr.mxu0 0.0
        %4914 = vmatpush2.xpose.msra.mxu0 0.0
        %4915 = vmatprep.subr.mxu0 0.0
        %4916 = vmatpush2.xpose.msra.mxu0 0.0
        %4917 = vmatprep.subr.mxu0 0.0
        %4918 = vmatpush2.xpose.msra.mxu0 0.0
        %4919 = vmatprep.subr.mxu0 0.0
        %4920 = vmatpush2.xpose.msra.mxu0 0.0
        %4921 = vmatprep.subr.mxu0 0.0
        %4922 = vmatpush2.xpose.msra.mxu0 0.0
        %4923 = vmatprep.subr.mxu0 0.0
        %4924 = vmatpush2.xpose.msra.mxu0 0.0
        %4925 = vmatprep.subr.mxu0 0.0
        %4926 = vmatpush2.xpose.msra.mxu0 0.0
        %4927 = vmatprep.subr.mxu0 0.0
        %4928 = vmatpush2.xpose.msra.mxu0 0.0
        %4929 = vmatprep.mubr.f32.mxu0 0.0
        %4930 = vmatmul.mubr.f32.gmra.mxu0 %v4859
        %v4931 = vpop.f32.mrf.mxu0
        %v4932 = vadd.f32 0.0, %v4931
        %v4933 = vpop.f32.mrf.mxu0
        %4934 = vdwg.mxu0
        %v4935 = vsel %vm3010, %v4850, -inf
        %4936 = vmax.xlane.f32.xlu0 %v4935
        %v4937 = vpop.xlane.xlu0 %4936
        %v4938 = vsel %vm3010, %v4932, -inf
        %4939 = vmax.xlane.f32.xlu0 %v4938
        %v4940 = vpop.xlane.xlu0 %4939
        %v4941 = vsub.f32 %v4850, %v4937
        %v4942 = vsub.f32 %v4932, %v4940
        %v4943 = vmul.f32 %v4941, 1.442695
        %v4944 = vpow.pop %v4943
        %v4945 = vmul.f32 %v4942, 1.442695
        %v4946 = vpow.pop %v4945
        %v4947 = vsel %vm3010, %v4944, 0.0
        %4948 = vadd.xlane.f32.xlu0 %v4947
        %v4949 = vpop.xlane.xlu0 %4948
        %v4950 = vsel %vm3010, %v4946, 0.0
        %4951 = vadd.xlane.f32.xlu0 %v4950
        %v4952 = vpop.xlane.xlu0 %4951
        %v4953 = vrcp.pop %v4949
        %v4954 = vrcp.pop %v4952
        %v4955 = vmul.f32 %v4949, %v4953
        %v4956 = vmul.f32 %v4952, %v4954
        %v4957 = vsub.f32 2.0, %v4955
        %v4958 = vsub.f32 2.0, %v4956
        %v4959 = vmul.f32 %v4953, %v4957
        %v4960 = vmul.f32 %v4954, %v4958
        %4961 = vrot.lane.b32.xlu0 %v3726, 104
        %v4962 = vpop.permute.xlu0 %4961
        %4963 = vrot.lane.b32.xlu0 %v3727, 104
        %v4964 = vpop.permute.xlu0 %4963
        %v4968 = vsel %vm3010, %v4944, 0
        %4970 = vmatprep.subr.mxu0 0.0
        %4971 = vmatpush1.msra.mxu0 0.0
        %4972 = vmatprep.subr.mxu0 0.0
        %4973 = vmatpush1.msra.mxu0 0.0
        %4974 = vmatprep.subr.mxu0 0.0
        %4975 = vmatpush1.msra.mxu0 0.0
        %4976 = vmatprep.subr.mxu0 0.0
        %4977 = vmatpush1.msra.mxu0 0.0
        %4978 = vmatprep.subr.mxu0 0.0
        %4979 = vmatpush1.msra.mxu0 0.0
        %4980 = vmatprep.subr.mxu0 0.0
        %4981 = vmatpush1.msra.mxu0 0.0
        %4982 = vmatprep.subr.mxu0 0.0
        %4983 = vmatpush1.msra.mxu0 0.0
        %4984 = vmatprep.subr.mxu0 0.0
        %4985 = vmatpush1.msra.mxu0 0.0
        %4986 = vmatprep.subr.mxu0 0.0
        %4987 = vmatpush1.msra.mxu0 0.0
        %4988 = vmatprep.subr.mxu0 0.0
        %4989 = vmatpush1.msra.mxu0 0.0
        %4990 = vmatprep.subr.mxu0 0.0
        %4991 = vmatpush1.msra.mxu0 0.0
        %4992 = vmatprep.subr.mxu0 0.0
        %4993 = vmatpush1.msra.mxu0 0.0
        %4994 = vmatprep.subr.mxu0 0.0
        %4995 = vmatpush1.msra.mxu0 0.0
        %4996 = vmatprep.subr.mxu0 0.0
        %4997 = vmatpush1.msra.mxu0 0.0
        %4998 = vmatprep.subr.mxu0 0.0
        %4999 = vmatpush1.msra.mxu0 %v4964
        %5000 = vmatprep.subr.mxu0 0.0
        %5001 = vmatpush1.msra.mxu0 %v4962
        %5002 = vmatprep.subr.mxu0 0.0
        %5003 = vmatpush2.msra.mxu0 0.0
        %5004 = vmatprep.subr.mxu0 0.0
        %5005 = vmatpush2.msra.mxu0 0.0
        %5006 = vmatprep.subr.mxu0 0.0
        %5007 = vmatpush2.msra.mxu0 0.0
        %5008 = vmatprep.subr.mxu0 0.0
        %5009 = vmatpush2.msra.mxu0 0.0
        %5010 = vmatprep.subr.mxu0 0.0
        %5011 = vmatpush2.msra.mxu0 0.0
        %5012 = vmatprep.subr.mxu0 0.0
        %5013 = vmatpush2.msra.mxu0 0.0
        %5014 = vmatprep.subr.mxu0 0.0
        %5015 = vmatpush2.msra.mxu0 0.0
        %5016 = vmatprep.subr.mxu0 0.0
        %5017 = vmatpush2.msra.mxu0 0.0
        %5018 = vmatprep.subr.mxu0 0.0
        %5019 = vmatpush2.msra.mxu0 0.0
        %5020 = vmatprep.subr.mxu0 0.0
        %5021 = vmatpush2.msra.mxu0 0.0
        %5022 = vmatprep.subr.mxu0 0.0
        %5023 = vmatpush2.msra.mxu0 0.0
        %5024 = vmatprep.subr.mxu0 0.0
        %5025 = vmatpush2.msra.mxu0 0.0
        %5026 = vmatprep.subr.mxu0 0.0
        %5027 = vmatpush2.msra.mxu0 0.0
        %5028 = vmatprep.subr.mxu0 0.0
        %5029 = vmatpush2.msra.mxu0 0.0
        %5030 = vmatprep.subr.mxu0 0.0
        %5031 = vmatpush2.msra.mxu0 0.0
        %5032 = vmatprep.subr.mxu0 0.0
        %5033 = vmatpush2.msra.mxu0 0.0
        %5034 = vmatprep.mubr.f32.mxu0 0.0
        %5035 = vmatmul.mubr.f32.gmra.mxu0 %v4968
        %v5036 = vpop.f32.mrf.mxu0
        %v5037 = vadd.f32 0.0, %v5036
        %v5038 = vpop.f32.mrf.mxu0
        %5039 = vdwg.mxu0
        %5040 = vrot.lane.b32.xlu0 %v3728, 104
        %v5041 = vpop.permute.xlu0 %5040
        %5042 = vrot.lane.b32.xlu0 %v3729, 104
        %v5043 = vpop.permute.xlu0 %5042
        %v5047 = vsel %vm3010, %v4946, 0
        %5049 = vmatprep.subr.mxu0 0.0
        %5050 = vmatpush1.msra.mxu0 0.0
        %5051 = vmatprep.subr.mxu0 0.0
        %5052 = vmatpush1.msra.mxu0 0.0
        %5053 = vmatprep.subr.mxu0 0.0
        %5054 = vmatpush1.msra.mxu0 0.0
        %5055 = vmatprep.subr.mxu0 0.0
        %5056 = vmatpush1.msra.mxu0 0.0
        %5057 = vmatprep.subr.mxu0 0.0
        %5058 = vmatpush1.msra.mxu0 0.0
        %5059 = vmatprep.subr.mxu0 0.0
        %5060 = vmatpush1.msra.mxu0 0.0
        %5061 = vmatprep.subr.mxu0 0.0
        %5062 = vmatpush1.msra.mxu0 0.0
        %5063 = vmatprep.subr.mxu0 0.0
        %5064 = vmatpush1.msra.mxu0 0.0
        %5065 = vmatprep.subr.mxu0 0.0
        %5066 = vmatpush1.msra.mxu0 0.0
        %5067 = vmatprep.subr.mxu0 0.0
        %5068 = vmatpush1.msra.mxu0 0.0
        %5069 = vmatprep.subr.mxu0 0.0
        %5070 = vmatpush1.msra.mxu0 0.0
        %5071 = vmatprep.subr.mxu0 0.0
        %5072 = vmatpush1.msra.mxu0 0.0
        %5073 = vmatprep.subr.mxu0 0.0
        %5074 = vmatpush1.msra.mxu0 0.0
        %5075 = vmatprep.subr.mxu0 0.0
        %5076 = vmatpush1.msra.mxu0 0.0
        %5077 = vmatprep.subr.mxu0 0.0
        %5078 = vmatpush1.msra.mxu0 %v5043
        %5079 = vmatprep.subr.mxu0 0.0
        %5080 = vmatpush1.msra.mxu0 %v5041
        %5081 = vmatprep.subr.mxu0 0.0
        %5082 = vmatpush2.msra.mxu0 0.0
        %5083 = vmatprep.subr.mxu0 0.0
        %5084 = vmatpush2.msra.mxu0 0.0
        %5085 = vmatprep.subr.mxu0 0.0
        %5086 = vmatpush2.msra.mxu0 0.0
        %5087 = vmatprep.subr.mxu0 0.0
        %5088 = vmatpush2.msra.mxu0 0.0
        %5089 = vmatprep.subr.mxu0 0.0
        %5090 = vmatpush2.msra.mxu0 0.0
        %5091 = vmatprep.subr.mxu0 0.0
        %5092 = vmatpush2.msra.mxu0 0.0
        %5093 = vmatprep.subr.mxu0 0.0
        %5094 = vmatpush2.msra.mxu0 0.0
        %5095 = vmatprep.subr.mxu0 0.0
        %5096 = vmatpush2.msra.mxu0 0.0
        %5097 = vmatprep.subr.mxu0 0.0
        %5098 = vmatpush2.msra.mxu0 0.0
        %5099 = vmatprep.subr.mxu0 0.0
        %5100 = vmatpush2.msra.mxu0 0.0
        %5101 = vmatprep.subr.mxu0 0.0
        %5102 = vmatpush2.msra.mxu0 0.0
        %5103 = vmatprep.subr.mxu0 0.0
        %5104 = vmatpush2.msra.mxu0 0.0
        %5105 = vmatprep.subr.mxu0 0.0
        %5106 = vmatpush2.msra.mxu0 0.0
        %5107 = vmatprep.subr.mxu0 0.0
        %5108 = vmatpush2.msra.mxu0 0.0
        %5109 = vmatprep.subr.mxu0 0.0
        %5110 = vmatpush2.msra.mxu0 0.0
        %5111 = vmatprep.subr.mxu0 0.0
        %5112 = vmatpush2.msra.mxu0 0.0
        %5113 = vmatprep.mubr.f32.mxu0 0.0
        %5114 = vmatmul.mubr.f32.gmra.mxu0 %v5047
        %v5115 = vpop.f32.mrf.mxu0
        %v5116 = vadd.f32 0.0, %v5115
        %v5117 = vpop.f32.mrf.mxu0
        %5118 = vdwg.mxu0
        %v5119 = vmul.f32 %v5037, %v4959
        %v5120 = vmul.f32 %v5116, %v4960
        %5123 = vrot.lane.b32.xlu0 %v4419, 8
        %v5124 = vpop.permute.xlu0 %5123
        %5125 = vrot.lane.b32.xlu0 %v4420, 8
        %v5126 = vpop.permute.xlu0 %5125
        %5131 = vrot.lane.b32.xlu0 %v4769, 16
        %v5132 = vpop.permute.xlu0 %5131
        %5133 = vrot.lane.b32.xlu0 %v4770, 16
        %v5134 = vpop.permute.xlu0 %5133
        %5139 = vrot.lane.b32.xlu0 %v5119, 24
        %v5140 = vpop.permute.xlu0 %5139
        %5141 = vrot.lane.b32.xlu0 %v5120, 24
        %v5142 = vpop.permute.xlu0 %5141
        %v5145 = vsel %vm1648, %v4065, %v5124
        %v5146 = vsel %vm1648, %v4066, %v5126
        %v5147 = vsel %vm3010, %v5145, %v5132
        %v5148 = vsel %vm3010, %v5146, %v5134
        %v5149 = vsel %vm3013, %v5147, %v5140
        %v5150 = vsel %vm3013, %v5148, %v5142
        %v5152 = vsel %vm1326, %v5149, 0
        %5154 = vmatprep.subr.mxu0 0.0
        %5155 = vmatpush1.msra.mxu0 0.0
        %5156 = vmatprep.subr.mxu0 0.0
        %5157 = vmatpush1.msra.mxu0 0.0
        %5158 = vmatprep.subr.mxu0 0.0
        %5159 = vmatpush1.msra.mxu0 0.0
        %5160 = vmatprep.subr.mxu0 0.0
        %5161 = vmatpush1.msra.mxu0 0.0
        %5162 = vmatprep.subr.mxu0 0.0
        %5163 = vmatpush1.msra.mxu0 0.0
        %5164 = vmatprep.subr.mxu0 0.0
        %5165 = vmatpush1.msra.mxu0 0.0
        %5166 = vmatprep.subr.mxu0 0.0
        %5167 = vmatpush1.msra.mxu0 0.0
        %5168 = vmatprep.subr.mxu0 0.0
        %5169 = vmatpush1.msra.mxu0 0.0
        %5170 = vmatprep.subr.mxu0 0.0
        %5171 = vmatpush1.msra.mxu0 0.0
        %5172 = vmatprep.subr.mxu0 0.0
        %5173 = vmatpush1.msra.mxu0 0.0
        %5174 = vmatprep.subr.mxu0 0.0
        %5175 = vmatpush1.msra.mxu0 0.0
        %5176 = vmatprep.subr.mxu0 0.0
        %5177 = vmatpush1.msra.mxu0 0.0
        %5178 = vmatprep.subr.mxu0 0.0
        %5179 = vmatpush1.msra.mxu0 %v3733
        %5180 = vmatprep.subr.mxu0 0.0
        %5181 = vmatpush1.msra.mxu0 %v3732
        %5182 = vmatprep.subr.mxu0 0.0
        %5183 = vmatpush1.msra.mxu0 %v3731
        %5184 = vmatprep.subr.mxu0 0.0
        %5185 = vmatpush1.msra.mxu0 %v3730
        %5186 = vmatprep.subr.mxu0 0.0
        %5187 = vmatpush2.msra.mxu0 0.0
        %5188 = vmatprep.subr.mxu0 0.0
        %5189 = vmatpush2.msra.mxu0 0.0
        %5190 = vmatprep.subr.mxu0 0.0
        %5191 = vmatpush2.msra.mxu0 0.0
        %5192 = vmatprep.subr.mxu0 0.0
        %5193 = vmatpush2.msra.mxu0 0.0
        %5194 = vmatprep.subr.mxu0 0.0
        %5195 = vmatpush2.msra.mxu0 0.0
        %5196 = vmatprep.subr.mxu0 0.0
        %5197 = vmatpush2.msra.mxu0 0.0
        %5198 = vmatprep.subr.mxu0 0.0
        %5199 = vmatpush2.msra.mxu0 0.0
        %5200 = vmatprep.subr.mxu0 0.0
        %5201 = vmatpush2.msra.mxu0 0.0
        %5202 = vmatprep.subr.mxu0 0.0
        %5203 = vmatpush2.msra.mxu0 0.0
        %5204 = vmatprep.subr.mxu0 0.0
        %5205 = vmatpush2.msra.mxu0 0.0
        %5206 = vmatprep.subr.mxu0 0.0
        %5207 = vmatpush2.msra.mxu0 0.0
        %5208 = vmatprep.subr.mxu0 0.0
        %5209 = vmatpush2.msra.mxu0 0.0
        %5210 = vmatprep.subr.mxu0 0.0
        %5211 = vmatpush2.msra.mxu0 0.0
        %5212 = vmatprep.subr.mxu0 0.0
        %5213 = vmatpush2.msra.mxu0 0.0
        %5214 = vmatprep.subr.mxu0 0.0
        %5215 = vmatpush2.msra.mxu0 0.0
        %5216 = vmatprep.subr.mxu0 0.0
        %5217 = vmatpush2.msra.mxu0 0.0
        %5218 = vmatprep.mubr.f32.mxu0 0.0
        %5219 = vmatmul.mubr.f32.gmra.mxu0 %v5152
        %v5220 = vpop.f32.mrf.mxu0
        %v5221 = vadd.f32 0.0, %v5220
        %v5222 = vpop.f32.mrf.mxu0
        %5223 = vdwg.mxu0
        %v5225 = vsel %vm1326, %v5150, 0
        %5227 = vmatprep.subr.mxu0 0.0
        %5228 = vmatpush1.msra.mxu0 0.0
        %5229 = vmatprep.subr.mxu0 0.0
        %5230 = vmatpush1.msra.mxu0 0.0
        %5231 = vmatprep.subr.mxu0 0.0
        %5232 = vmatpush1.msra.mxu0 0.0
        %5233 = vmatprep.subr.mxu0 0.0
        %5234 = vmatpush1.msra.mxu0 0.0
        %5235 = vmatprep.subr.mxu0 0.0
        %5236 = vmatpush1.msra.mxu0 0.0
        %5237 = vmatprep.subr.mxu0 0.0
        %5238 = vmatpush1.msra.mxu0 0.0
        %5239 = vmatprep.subr.mxu0 0.0
        %5240 = vmatpush1.msra.mxu0 0.0
        %5241 = vmatprep.subr.mxu0 0.0
        %5242 = vmatpush1.msra.mxu0 0.0
        %5243 = vmatprep.subr.mxu0 0.0
        %5244 = vmatpush1.msra.mxu0 0.0
        %5245 = vmatprep.subr.mxu0 0.0
        %5246 = vmatpush1.msra.mxu0 0.0
        %5247 = vmatprep.subr.mxu0 0.0
        %5248 = vmatpush1.msra.mxu0 0.0
        %5249 = vmatprep.subr.mxu0 0.0
        %5250 = vmatpush1.msra.mxu0 0.0
        %5251 = vmatprep.subr.mxu0 0.0
        %5252 = vmatpush1.msra.mxu0 %v3733
        %5253 = vmatprep.subr.mxu0 0.0
        %5254 = vmatpush1.msra.mxu0 %v3732
        %5255 = vmatprep.subr.mxu0 0.0
        %5256 = vmatpush1.msra.mxu0 %v3731
        %5257 = vmatprep.subr.mxu0 0.0
        %5258 = vmatpush1.msra.mxu0 %v3730
        %5259 = vmatprep.subr.mxu0 0.0
        %5260 = vmatpush2.msra.mxu0 0.0
        %5261 = vmatprep.subr.mxu0 0.0
        %5262 = vmatpush2.msra.mxu0 0.0
        %5263 = vmatprep.subr.mxu0 0.0
        %5264 = vmatpush2.msra.mxu0 0.0
        %5265 = vmatprep.subr.mxu0 0.0
        %5266 = vmatpush2.msra.mxu0 0.0
        %5267 = vmatprep.subr.mxu0 0.0
        %5268 = vmatpush2.msra.mxu0 0.0
        %5269 = vmatprep.subr.mxu0 0.0
        %5270 = vmatpush2.msra.mxu0 0.0
        %5271 = vmatprep.subr.mxu0 0.0
        %5272 = vmatpush2.msra.mxu0 0.0
        %5273 = vmatprep.subr.mxu0 0.0
        %5274 = vmatpush2.msra.mxu0 0.0
        %5275 = vmatprep.subr.mxu0 0.0
        %5276 = vmatpush2.msra.mxu0 0.0
        %5277 = vmatprep.subr.mxu0 0.0
        %5278 = vmatpush2.msra.mxu0 0.0
        %5279 = vmatprep.subr.mxu0 0.0
        %5280 = vmatpush2.msra.mxu0 0.0
        %5281 = vmatprep.subr.mxu0 0.0
        %5282 = vmatpush2.msra.mxu0 0.0
        %5283 = vmatprep.subr.mxu0 0.0
        %5284 = vmatpush2.msra.mxu0 0.0
        %5285 = vmatprep.subr.mxu0 0.0
        %5286 = vmatpush2.msra.mxu0 0.0
        %5287 = vmatprep.subr.mxu0 0.0
        %5288 = vmatpush2.msra.mxu0 0.0
        %5289 = vmatprep.subr.mxu0 0.0
        %5290 = vmatpush2.msra.mxu0 0.0
        %5291 = vmatprep.mubr.f32.mxu0 0.0
        %5292 = vmatmul.mubr.f32.gmra.mxu0 %v5225
        %v5293 = vpop.f32.mrf.mxu0
        %v5294 = vadd.f32 0.0, %v5293
        %v5295 = vpop.f32.mrf.mxu0
        %5296 = vdwg.mxu0
        %v5298 = vlaneseq
        %v5299 = vshrl.u32 %v5298, 7
        %v5300 = vsub.s32 0, %v5299
        %v5301 = vrot.slane %v3734, %v5300
        %v5303 = vadd.f32 %v5221, %v5301
        %v5304 = vadd.f32 %v5294, %v5301
        %v5305 = vadd.f32 %v3213, %v5303
        %v5306 = vadd.f32 %v3214, %v5304
        %v5307 = vsel %vm1326, %v5305, 0.0
        %5308 = vadd.xlane.f32.xlu0 %v5307
        %v5309 = vpop.xlane.xlu0 %5308
        %v5310 = vsel %vm1326, %v5306, 0.0
        %5311 = vadd.xlane.f32.xlu0 %v5310
        %v5312 = vpop.xlane.xlu0 %5311
        %v5313 = vmul.f32 %v5309, %v3178
        %v5314 = vmul.f32 %v5312, %v3178
        %v5315 = vsub.f32 %v5305, %v5313
        %v5316 = vsub.f32 %v5306, %v5314
        %v5317 = vmul.f32 %v5315, %v5315
        %v5318 = vmul.f32 %v5316, %v5316
        %v5319 = vsel %vm1326, %v5317, 0.0
        %5320 = vadd.xlane.f32.xlu0 %v5319
        %v5321 = vpop.xlane.xlu0 %5320
        %v5322 = vsel %vm1326, %v5318, 0.0
        %5323 = vadd.xlane.f32.xlu0 %v5322
        %v5324 = vpop.xlane.xlu0 %5323
        %v5325 = vmul.f32 %v5321, %v3178
        %v5326 = vmul.f32 %v5324, %v3178
        %v5327 = vadd.f32 %v5325, 1e-05
        %v5328 = vadd.f32 %v5326, 1e-05
        %v5329 = vrsqrt.pop %v5327
        %v5330 = vrsqrt.pop %v5328
        %v5331 = vmul.f32 %v5315, %v5329
        %v5332 = vmul.f32 %v5316, %v5330
        %v5334 = vlaneseq
        %v5335 = vshrl.u32 %v5334, 7
        %v5336 = vsub.s32 0, %v5335
        %v5337 = vrot.slane %v1314, %v5336
        %v5339 = vmul.f32 %v5331, %v5337
        %v5340 = vmul.f32 %v5332, %v5337
        %v5342 = vlaneseq
        %v5343 = vshrl.u32 %v5342, 7
        %v5344 = vsub.s32 0, %v5343
        %v5345 = vrot.slane %v1317, %v5344
        %v5347 = vadd.f32 %v5339, %v5345
        %v5348 = vadd.f32 %v5340, %v5345
        %v5349 = vld [vmem:[%s1086] sm:$0xff]
        %v5350 = vld [vmem:[%s1086 + $0x8] sm:$0xff]
        %v5351 = vld [vmem:[%s1086 + $0x10] sm:$0xff]
        %v5352 = vld [vmem:[%s1086 + $0x18] sm:$0xff]
        %v5353 = vld [vmem:[%s1259] sm:$0x1]
        %v5355 = vsel %vm1326, %v5347, 0
        %5357 = vmatprep.subr.mxu0 0.0
        %5358 = vmatpush1.msra.mxu0 0.0
        %5359 = vmatprep.subr.mxu0 0.0
        %5360 = vmatpush1.msra.mxu0 0.0
        %5361 = vmatprep.subr.mxu0 0.0
        %5362 = vmatpush1.msra.mxu0 0.0
        %5363 = vmatprep.subr.mxu0 0.0
        %5364 = vmatpush1.msra.mxu0 0.0
        %5365 = vmatprep.subr.mxu0 0.0
        %5366 = vmatpush1.msra.mxu0 0.0
        %5367 = vmatprep.subr.mxu0 0.0
        %5368 = vmatpush1.msra.mxu0 0.0
        %5369 = vmatprep.subr.mxu0 0.0
        %5370 = vmatpush1.msra.mxu0 0.0
        %5371 = vmatprep.subr.mxu0 0.0
        %5372 = vmatpush1.msra.mxu0 0.0
        %5373 = vmatprep.subr.mxu0 0.0
        %5374 = vmatpush1.msra.mxu0 0.0
        %5375 = vmatprep.subr.mxu0 0.0
        %5376 = vmatpush1.msra.mxu0 0.0
        %5377 = vmatprep.subr.mxu0 0.0
        %5378 = vmatpush1.msra.mxu0 0.0
        %5379 = vmatprep.subr.mxu0 0.0
        %5380 = vmatpush1.msra.mxu0 0.0
        %5381 = vmatprep.subr.mxu0 0.0
        %5382 = vmatpush1.msra.mxu0 %v5352
        %5383 = vmatprep.subr.mxu0 0.0
        %5384 = vmatpush1.msra.mxu0 %v5351
        %5385 = vmatprep.subr.mxu0 0.0
        %5386 = vmatpush1.msra.mxu0 %v5350
        %5387 = vmatprep.subr.mxu0 0.0
        %5388 = vmatpush1.msra.mxu0 %v5349
        %5389 = vmatprep.subr.mxu0 0.0
        %5390 = vmatpush2.msra.mxu0 0.0
        %5391 = vmatprep.subr.mxu0 0.0
        %5392 = vmatpush2.msra.mxu0 0.0
        %5393 = vmatprep.subr.mxu0 0.0
        %5394 = vmatpush2.msra.mxu0 0.0
        %5395 = vmatprep.subr.mxu0 0.0
        %5396 = vmatpush2.msra.mxu0 0.0
        %5397 = vmatprep.subr.mxu0 0.0
        %5398 = vmatpush2.msra.mxu0 0.0
        %5399 = vmatprep.subr.mxu0 0.0
        %5400 = vmatpush2.msra.mxu0 0.0
        %5401 = vmatprep.subr.mxu0 0.0
        %5402 = vmatpush2.msra.mxu0 0.0
        %5403 = vmatprep.subr.mxu0 0.0
        %5404 = vmatpush2.msra.mxu0 0.0
        %5405 = vmatprep.subr.mxu0 0.0
        %5406 = vmatpush2.msra.mxu0 0.0
        %5407 = vmatprep.subr.mxu0 0.0
        %5408 = vmatpush2.msra.mxu0 0.0
        %5409 = vmatprep.subr.mxu0 0.0
        %5410 = vmatpush2.msra.mxu0 0.0
        %5411 = vmatprep.subr.mxu0 0.0
        %5412 = vmatpush2.msra.mxu0 0.0
        %5413 = vmatprep.subr.mxu0 0.0
        %5414 = vmatpush2.msra.mxu0 0.0
        %5415 = vmatprep.subr.mxu0 0.0
        %5416 = vmatpush2.msra.mxu0 0.0
        %5417 = vmatprep.subr.mxu0 0.0
        %5418 = vmatpush2.msra.mxu0 0.0
        %5419 = vmatprep.subr.mxu0 0.0
        %5420 = vmatpush2.msra.mxu0 0.0
        %5421 = vmatprep.mubr.f32.mxu0 0.0
        %5422 = vmatmul.mubr.f32.gmra.mxu0 %v5355
        %v5423 = vpop.f32.mrf.mxu0
        %v5424 = vadd.f32 0.0, %v5423
        %v5425 = vpop.f32.mrf.mxu0
        %5426 = vdwg.mxu0
        %v5428 = vsel %vm1326, %v5348, 0
        %5430 = vmatprep.subr.mxu0 0.0
        %5431 = vmatpush1.msra.mxu0 0.0
        %5432 = vmatprep.subr.mxu0 0.0
        %5433 = vmatpush1.msra.mxu0 0.0
        %5434 = vmatprep.subr.mxu0 0.0
        %5435 = vmatpush1.msra.mxu0 0.0
        %5436 = vmatprep.subr.mxu0 0.0
        %5437 = vmatpush1.msra.mxu0 0.0
        %5438 = vmatprep.subr.mxu0 0.0
        %5439 = vmatpush1.msra.mxu0 0.0
        %5440 = vmatprep.subr.mxu0 0.0
        %5441 = vmatpush1.msra.mxu0 0.0
        %5442 = vmatprep.subr.mxu0 0.0
        %5443 = vmatpush1.msra.mxu0 0.0
        %5444 = vmatprep.subr.mxu0 0.0
        %5445 = vmatpush1.msra.mxu0 0.0
        %5446 = vmatprep.subr.mxu0 0.0
        %5447 = vmatpush1.msra.mxu0 0.0
        %5448 = vmatprep.subr.mxu0 0.0
        %5449 = vmatpush1.msra.mxu0 0.0
        %5450 = vmatprep.subr.mxu0 0.0
        %5451 = vmatpush1.msra.mxu0 0.0
        %5452 = vmatprep.subr.mxu0 0.0
        %5453 = vmatpush1.msra.mxu0 0.0
        %5454 = vmatprep.subr.mxu0 0.0
        %5455 = vmatpush1.msra.mxu0 %v5352
        %5456 = vmatprep.subr.mxu0 0.0
        %5457 = vmatpush1.msra.mxu0 %v5351
        %5458 = vmatprep.subr.mxu0 0.0
        %5459 = vmatpush1.msra.mxu0 %v5350
        %5460 = vmatprep.subr.mxu0 0.0
        %5461 = vmatpush1.msra.mxu0 %v5349
        %5462 = vmatprep.subr.mxu0 0.0
        %5463 = vmatpush2.msra.mxu0 0.0
        %5464 = vmatprep.subr.mxu0 0.0
        %5465 = vmatpush2.msra.mxu0 0.0
        %5466 = vmatprep.subr.mxu0 0.0
        %5467 = vmatpush2.msra.mxu0 0.0
        %5468 = vmatprep.subr.mxu0 0.0
        %5469 = vmatpush2.msra.mxu0 0.0
        %5470 = vmatprep.subr.mxu0 0.0
        %5471 = vmatpush2.msra.mxu0 0.0
        %5472 = vmatprep.subr.mxu0 0.0
        %5473 = vmatpush2.msra.mxu0 0.0
        %5474 = vmatprep.subr.mxu0 0.0
        %5475 = vmatpush2.msra.mxu0 0.0
        %5476 = vmatprep.subr.mxu0 0.0
        %5477 = vmatpush2.msra.mxu0 0.0
        %5478 = vmatprep.subr.mxu0 0.0
        %5479 = vmatpush2.msra.mxu0 0.0
        %5480 = vmatprep.subr.mxu0 0.0
        %5481 = vmatpush2.msra.mxu0 0.0
        %5482 = vmatprep.subr.mxu0 0.0
        %5483 = vmatpush2.msra.mxu0 0.0
        %5484 = vmatprep.subr.mxu0 0.0
        %5485 = vmatpush2.msra.mxu0 0.0
        %5486 = vmatprep.subr.mxu0 0.0
        %5487 = vmatpush2.msra.mxu0 0.0
        %5488 = vmatprep.subr.mxu0 0.0
        %5489 = vmatpush2.msra.mxu0 0.0
        %5490 = vmatprep.subr.mxu0 0.0
        %5491 = vmatpush2.msra.mxu0 0.0
        %5492 = vmatprep.subr.mxu0 0.0
        %5493 = vmatpush2.msra.mxu0 0.0
        %5494 = vmatprep.mubr.f32.mxu0 0.0
        %5495 = vmatmul.mubr.f32.gmra.mxu0 %v5428
        %v5496 = vpop.f32.mrf.mxu0
        %v5497 = vadd.f32 0.0, %v5496
        %v5498 = vpop.f32.mrf.mxu0
        %5499 = vdwg.mxu0
        %v5501 = vlaneseq
        %v5502 = vshrl.u32 %v5501, 7
        %v5503 = vsub.s32 0, %v5502
        %v5504 = vrot.slane %v5353, %v5503
        %v5506 = vadd.f32 %v5424, %v5504
        %v5507 = vadd.f32 %v5497, %v5504
        %v5508 = vmax.f32 %v5506, 0.0
        %v5509 = vmax.f32 %v5507, 0.0
        %v5510 = vld [vmem:[%s1264] sm:$0xff]
        %v5511 = vld [vmem:[%s1264 + $0x8] sm:$0xff]
        %v5512 = vld [vmem:[%s1264 + $0x10] sm:$0xff]
        %v5513 = vld [vmem:[%s1264 + $0x18] sm:$0xff]
        %v5514 = vld [vmem:[%s1264 + $0x20] sm:$0xff]
        %v5515 = vld [vmem:[%s1264 + $0x28] sm:$0xff]
        %v5516 = vld [vmem:[%s1264 + $0x30] sm:$0xff]
        %v5517 = vld [vmem:[%s1264 + $0x38] sm:$0xff]
        %v5518 = vld [vmem:[%s1267] sm:$0x1]
        %vm5519 = vcmask 523264
        %v5521 = vsel %vm5519, %v5508, 0
        %5523 = vmatprep.subr.mxu0 0.0
        %5524 = vmatpush1.msra.mxu0 0.0
        %5525 = vmatprep.subr.mxu0 0.0
        %5526 = vmatpush1.msra.mxu0 0.0
        %5527 = vmatprep.subr.mxu0 0.0
        %5528 = vmatpush1.msra.mxu0 0.0
        %5529 = vmatprep.subr.mxu0 0.0
        %5530 = vmatpush1.msra.mxu0 0.0
        %5531 = vmatprep.subr.mxu0 0.0
        %5532 = vmatpush1.msra.mxu0 0.0
        %5533 = vmatprep.subr.mxu0 0.0
        %5534 = vmatpush1.msra.mxu0 0.0
        %5535 = vmatprep.subr.mxu0 0.0
        %5536 = vmatpush1.msra.mxu0 0.0
        %5537 = vmatprep.subr.mxu0 0.0
        %5538 = vmatpush1.msra.mxu0 0.0
        %5539 = vmatprep.subr.mxu0 0.0
        %5540 = vmatpush1.msra.mxu0 %v5517
        %5541 = vmatprep.subr.mxu0 0.0
        %5542 = vmatpush1.msra.mxu0 %v5516
        %5543 = vmatprep.subr.mxu0 0.0
        %5544 = vmatpush1.msra.mxu0 %v5515
        %5545 = vmatprep.subr.mxu0 0.0
        %5546 = vmatpush1.msra.mxu0 %v5514
        %5547 = vmatprep.subr.mxu0 0.0
        %5548 = vmatpush1.msra.mxu0 %v5513
        %5549 = vmatprep.subr.mxu0 0.0
        %5550 = vmatpush1.msra.mxu0 %v5512
        %5551 = vmatprep.subr.mxu0 0.0
        %5552 = vmatpush1.msra.mxu0 %v5511
        %5553 = vmatprep.subr.mxu0 0.0
        %5554 = vmatpush1.msra.mxu0 %v5510
        %5555 = vmatprep.subr.mxu0 0.0
        %5556 = vmatpush2.msra.mxu0 0.0
        %5557 = vmatprep.subr.mxu0 0.0
        %5558 = vmatpush2.msra.mxu0 0.0
        %5559 = vmatprep.subr.mxu0 0.0
        %5560 = vmatpush2.msra.mxu0 0.0
        %5561 = vmatprep.subr.mxu0 0.0
        %5562 = vmatpush2.msra.mxu0 0.0
        %5563 = vmatprep.subr.mxu0 0.0
        %5564 = vmatpush2.msra.mxu0 0.0
        %5565 = vmatprep.subr.mxu0 0.0
        %5566 = vmatpush2.msra.mxu0 0.0
        %5567 = vmatprep.subr.mxu0 0.0
        %5568 = vmatpush2.msra.mxu0 0.0
        %5569 = vmatprep.subr.mxu0 0.0
        %5570 = vmatpush2.msra.mxu0 0.0
        %5571 = vmatprep.subr.mxu0 0.0
        %5572 = vmatpush2.msra.mxu0 0.0
        %5573 = vmatprep.subr.mxu0 0.0
        %5574 = vmatpush2.msra.mxu0 0.0
        %5575 = vmatprep.subr.mxu0 0.0
        %5576 = vmatpush2.msra.mxu0 0.0
        %5577 = vmatprep.subr.mxu0 0.0
        %5578 = vmatpush2.msra.mxu0 0.0
        %5579 = vmatprep.subr.mxu0 0.0
        %5580 = vmatpush2.msra.mxu0 0.0
        %5581 = vmatprep.subr.mxu0 0.0
        %5582 = vmatpush2.msra.mxu0 0.0
        %5583 = vmatprep.subr.mxu0 0.0
        %5584 = vmatpush2.msra.mxu0 0.0
        %5585 = vmatprep.subr.mxu0 0.0
        %5586 = vmatpush2.msra.mxu0 0.0
        %5587 = vmatprep.mubr.f32.mxu0 0.0
        %5588 = vmatmul.mubr.f32.gmra.mxu0 %v5521
        %v5589 = vpop.f32.mrf.mxu0
        %v5590 = vadd.f32 0.0, %v5589
        %v5591 = vpop.f32.mrf.mxu0
        %5592 = vdwg.mxu0
        %v5594 = vsel %vm5519, %v5509, 0
        %5596 = vmatprep.subr.mxu0 0.0
        %5597 = vmatpush1.msra.mxu0 0.0
        %5598 = vmatprep.subr.mxu0 0.0
        %5599 = vmatpush1.msra.mxu0 0.0
        %5600 = vmatprep.subr.mxu0 0.0
        %5601 = vmatpush1.msra.mxu0 0.0
        %5602 = vmatprep.subr.mxu0 0.0
        %5603 = vmatpush1.msra.mxu0 0.0
        %5604 = vmatprep.subr.mxu0 0.0
        %5605 = vmatpush1.msra.mxu0 0.0
        %5606 = vmatprep.subr.mxu0 0.0
        %5607 = vmatpush1.msra.mxu0 0.0
        %5608 = vmatprep.subr.mxu0 0.0
        %5609 = vmatpush1.msra.mxu0 0.0
        %5610 = vmatprep.subr.mxu0 0.0
        %5611 = vmatpush1.msra.mxu0 0.0
        %5612 = vmatprep.subr.mxu0 0.0
        %5613 = vmatpush1.msra.mxu0 %v5517
        %5614 = vmatprep.subr.mxu0 0.0
        %5615 = vmatpush1.msra.mxu0 %v5516
        %5616 = vmatprep.subr.mxu0 0.0
        %5617 = vmatpush1.msra.mxu0 %v5515
        %5618 = vmatprep.subr.mxu0 0.0
        %5619 = vmatpush1.msra.mxu0 %v5514
        %5620 = vmatprep.subr.mxu0 0.0
        %5621 = vmatpush1.msra.mxu0 %v5513
        %5622 = vmatprep.subr.mxu0 0.0
        %5623 = vmatpush1.msra.mxu0 %v5512
        %5624 = vmatprep.subr.mxu0 0.0
        %5625 = vmatpush1.msra.mxu0 %v5511
        %5626 = vmatprep.subr.mxu0 0.0
        %5627 = vmatpush1.msra.mxu0 %v5510
        %5628 = vmatprep.subr.mxu0 0.0
        %5629 = vmatpush2.msra.mxu0 0.0
        %5630 = vmatprep.subr.mxu0 0.0
        %5631 = vmatpush2.msra.mxu0 0.0
        %5632 = vmatprep.subr.mxu0 0.0
        %5633 = vmatpush2.msra.mxu0 0.0
        %5634 = vmatprep.subr.mxu0 0.0
        %5635 = vmatpush2.msra.mxu0 0.0
        %5636 = vmatprep.subr.mxu0 0.0
        %5637 = vmatpush2.msra.mxu0 0.0
        %5638 = vmatprep.subr.mxu0 0.0
        %5639 = vmatpush2.msra.mxu0 0.0
        %5640 = vmatprep.subr.mxu0 0.0
        %5641 = vmatpush2.msra.mxu0 0.0
        %5642 = vmatprep.subr.mxu0 0.0
        %5643 = vmatpush2.msra.mxu0 0.0
        %5644 = vmatprep.subr.mxu0 0.0
        %5645 = vmatpush2.msra.mxu0 0.0
        %5646 = vmatprep.subr.mxu0 0.0
        %5647 = vmatpush2.msra.mxu0 0.0
        %5648 = vmatprep.subr.mxu0 0.0
        %5649 = vmatpush2.msra.mxu0 0.0
        %5650 = vmatprep.subr.mxu0 0.0
        %5651 = vmatpush2.msra.mxu0 0.0
        %5652 = vmatprep.subr.mxu0 0.0
        %5653 = vmatpush2.msra.mxu0 0.0
        %5654 = vmatprep.subr.mxu0 0.0
        %5655 = vmatpush2.msra.mxu0 0.0
        %5656 = vmatprep.subr.mxu0 0.0
        %5657 = vmatpush2.msra.mxu0 0.0
        %5658 = vmatprep.subr.mxu0 0.0
        %5659 = vmatpush2.msra.mxu0 0.0
        %5660 = vmatprep.mubr.f32.mxu0 0.0
        %5661 = vmatmul.mubr.f32.gmra.mxu0 %v5594
        %v5662 = vpop.f32.mrf.mxu0
        %v5663 = vadd.f32 0.0, %v5662
        %v5664 = vpop.f32.mrf.mxu0
        %5665 = vdwg.mxu0
        %v5667 = vlaneseq
        %v5668 = vshrl.u32 %v5667, 7
        %v5669 = vsub.s32 0, %v5668
        %v5670 = vrot.slane %v5518, %v5669
        %v5672 = vadd.f32 %v5590, %v5670
        %v5673 = vadd.f32 %v5663, %v5670
        %v5674 = vadd.f32 %v5347, %v5672
        %v5675 = vadd.f32 %v5348, %v5673
        %v5676 = vsel %vm1326, %v5674, 0.0
        %5677 = vadd.xlane.f32.xlu0 %v5676
        %v5678 = vpop.xlane.xlu0 %5677
        %v5679 = vsel %vm1326, %v5675, 0.0
        %5680 = vadd.xlane.f32.xlu0 %v5679
        %v5681 = vpop.xlane.xlu0 %5680
        %v5682 = vmul.f32 %v5678, %v3178
        %v5683 = vmul.f32 %v5681, %v3178
        %v5684 = vsub.f32 %v5674, %v5682
        %v5685 = vsub.f32 %v5675, %v5683
        %v5686 = vmul.f32 %v5684, %v5684
        %v5687 = vmul.f32 %v5685, %v5685
        %v5688 = vsel %vm1326, %v5686, 0.0
        %5689 = vadd.xlane.f32.xlu0 %v5688
        %v5690 = vpop.xlane.xlu0 %5689
        %v5691 = vsel %vm1326, %v5687, 0.0
        %5692 = vadd.xlane.f32.xlu0 %v5691
        %v5693 = vpop.xlane.xlu0 %5692
        %v5694 = vmul.f32 %v5690, %v3178
        %v5695 = vmul.f32 %v5693, %v3178
        %v5696 = vadd.f32 %v5694, 1e-05
        %v5697 = vadd.f32 %v5695, 1e-05
        %v5698 = vrsqrt.pop %v5696
        %v5699 = vrsqrt.pop %v5697
        %v5700 = vmul.f32 %v5684, %v5698
        %v5701 = vmul.f32 %v5685, %v5699
        %v5703 = vlaneseq
        %v5704 = vshrl.u32 %v5703, 7
        %v5705 = vsub.s32 0, %v5704
        %v5706 = vrot.slane %v1315, %v5705
        %v5708 = vmul.f32 %v5700, %v5706
        %v5709 = vmul.f32 %v5701, %v5706
        %v5711 = vlaneseq
        %v5712 = vshrl.u32 %v5711, 7
        %v5713 = vsub.s32 0, %v5712
        %v5714 = vrot.slane %v1318, %v5713
        %v5716 = vadd.f32 %v5708, %v5714
        %v5717 = vadd.f32 %v5709, %v5714
        %5718 = vst.msk [vmem:[#allocation2] sm:$0xff] %vm1326, %v5716
        %5719 = vst.msk [vmem:[#allocation2 + $0x8] sm:$0xff] %vm1326, %v5717
        %v5720 = vld [vmem:[%s24] sm:$0x1]
        %v5721 = vld [vmem:[%s25] sm:$0x1]
        %p5722 = scmp.eq.s32.totalorder %s41, 1
        // Predicated region
        $region173: #{tpu_custom_call.1} parent=123 // pred_check
          %p5723 = pneg %p5722
        $region174: #{tpu_custom_call.1} parent=123 // pred_check_branch
          %5725 = sbr.rel (%p5723) target = $region176
        $region175: #{tpu_custom_call.1} parent=123 // pred_region
          %v5726 = vsel %vm1326, %v5716, 0.0
          %5727 = vadd.xlane.f32.xlu0 %v5726
          %v5728 = vpop.xlane.xlu0 %5727
          %v5729 = vsel %vm1326, %v5717, 0.0
          %5730 = vadd.xlane.f32.xlu0 %v5729
          %v5731 = vpop.xlane.xlu0 %5730
          %v5732 = vmul.f32 %v5728, %v3178
          %v5733 = vmul.f32 %v5731, %v3178
          %v5734 = vsub.f32 %v5716, %v5732
          %v5735 = vsub.f32 %v5717, %v5733
          %v5736 = vmul.f32 %v5734, %v5734
          %v5737 = vmul.f32 %v5735, %v5735
          %v5738 = vsel %vm1326, %v5736, 0.0
          %5739 = vadd.xlane.f32.xlu0 %v5738
          %v5740 = vpop.xlane.xlu0 %5739
          %v5741 = vsel %vm1326, %v5737, 0.0
          %5742 = vadd.xlane.f32.xlu0 %v5741
          %v5743 = vpop.xlane.xlu0 %5742
          %v5744 = vmul.f32 %v5740, %v3178
          %v5745 = vmul.f32 %v5743, %v3178
          %v5746 = vadd.f32 %v5744, 1e-05
          %v5747 = vadd.f32 %v5745, 1e-05
          %v5748 = vrsqrt.pop %v5746
          %v5749 = vrsqrt.pop %v5747
          %v5750 = vmul.f32 %v5734, %v5748
          %v5751 = vmul.f32 %v5735, %v5749
          %v5753 = vlaneseq
          %v5754 = vshrl.u32 %v5753, 7
          %v5755 = vsub.s32 0, %v5754
          %v5756 = vrot.slane %v5720, %v5755
          %v5758 = vmul.f32 %v5750, %v5756
          %v5759 = vmul.f32 %v5751, %v5756
          %v5761 = vlaneseq
          %v5762 = vshrl.u32 %v5761, 7
          %v5763 = vsub.s32 0, %v5762
          %v5764 = vrot.slane %v5721, %v5763
          %v5766 = vadd.f32 %v5758, %v5764
          %v5767 = vadd.f32 %v5759, %v5764
          %v5768 = vlaneseq
          %v5769 = vshrl.u32 %v5768, 7
          %vm5770 = vcmp.eq.s32.totalorder %v5769, 0
          %v5771 = vsel %vm5770, 1, 0
          %vm5772 = vcmp.eq.s32.totalorder %v5771, 1
          %v5773 = vsel %vm5772, %v5766, %v5716
          %v5774 = vsel %vm5772, %v5767, %v5717
          %5775 = vst.msk [vmem:[#allocation19] sm:$0xff] %vm1326, %v5773
          %5776 = vst.msk [vmem:[#allocation19 + $0x8] sm:$0xff] %vm1326, %v5774
        $region176: #{tpu_custom_call.1} parent=123 // pred_fallthru
          _
        // Predicated region
        $region177: #{tpu_custom_call.1} parent=123 // pred_check
          %p5777 = pneg %p700
        $region178: #{tpu_custom_call.1} parent=123 // pred_check_branch
          %5779 = sbr.rel (%p5777) target = $region180
        $region179: #{tpu_custom_call.1} parent=123 // pred_region
          %s5781 = ssub.s32 256, 256
          %5782 = vsyncadd [#allocation6], %s5781
          %s5783 = sshll.u32 [#allocation19], 4
          %s5784 = int_to_ptr.vmem [resolvable:$true] %s5783
          %5789 = dma.vmem_to_hbm [thread:$0]  %s5784, 256, %s26, [#allocation6], 128, 128, 8
        $region180: #{tpu_custom_call.1} parent=123 // pred_fallthru
          _
        // Predicated region
        $region181: #{tpu_custom_call.1} parent=123 // pred_check
          %p5790 = pneg %p700
        $region182: #{tpu_custom_call.1} parent=123 // pred_check_branch
          %5792 = sbr.rel (%p5790) target = $region184
        $region183: #{tpu_custom_call.1} parent=123 // pred_region
          %5793 = dma.done [#allocation6], 256
        $region184: #{tpu_custom_call.1} parent=123 // pred_fallthru
          _
      $region124: #{tpu_custom_call.1} parent=5 // pred_fallthru
        _
      %p5794 = scmp.le.s32.totalorder 2, %s36
      // Predicated region
      $region185: #{tpu_custom_call.1} parent=5 // pred_check
        %p5795 = pneg %p5794
      $region186: #{tpu_custom_call.1} parent=5 // pred_check_branch
        %5797 = sbr.rel (%p5795) target = $region188
      $region187: #{tpu_custom_call.1} parent=5 // pred_region
        %s5798 = ssub.s32 %s36, 2
      $region188: #{tpu_custom_call.1} parent=5 // pred_fallthru
        _
    $region6: #{tpu_custom_call.1} parent=1 // loop_footer
      %s40 = sadd.s32 1, %s36
    $region7: #{tpu_custom_call.1} parent=1 // loop_footer_branch
      %35 = sbr.rel target = $region3
    $region8: #{tpu_custom_call.1} parent=1 // loop_exit
      _
    %5799 = vsyncpa [#allocation5], 1
    %s5800 = scalar_lea.sflag [#allocation5], 1
    %5801 = vsyncpa %s5800, 1
    %5802 = vsyncpa [#allocation8], 1
    %5803 = vsyncpa [#allocation11], 1
    %5804 = vsyncpa [#allocation6], 1
    %s5805 = scalar_lea.sflag [#allocation6], 1
    %5806 = vsyncpa %s5805, 1

</llo_original>
